<compile_context>
chip_gen: v5e
topology: v5e:2x2
jax: 0.10.0
libtpu: 0.0.40
codegen_flags: <defaults>
</compile_context>

<pallas_src>
import functools

import jax
import jax.numpy as jnp
from jax import lax
from jax.experimental import pallas as pl
from jax.experimental.pallas import tpu as pltpu

_BF16 = jnp.bfloat16
_GATE_PAD = 128          # each 64-wide gate padded to a 128-lane block (tile-aligned slices)


# ----------------------------------------------------------------------------
# small helpers
# ----------------------------------------------------------------------------
def _vmem():
    return pl.BlockSpec(memory_space=pltpu.MemorySpace.VMEM)


def _dot(a, b):
    return jnp.dot(a, b, preferred_element_type=jnp.float32)


def _nbytes(*arrays):
    return int(sum(int(a.size) * a.dtype.itemsize for a in arrays))


def _fuse_gates(stack, pad=_GATE_PAD, dtype=_BF16):
    """(G, K, D) per-gate weights -> (K, G*pad); gate g occupies cols [g*pad, g*pad+D)."""
    g_, k_, d_ = stack.shape
    cols = [jnp.pad(stack[g], ((0, 0), (0, pad - d_))) for g in range(g_)]
    return jnp.concatenate(cols, axis=1).astype(dtype)


def _fuse_bias(stack, pad=_GATE_PAD):
    """(G, 1, D) per-gate biases -> (1, G*pad) float32."""
    g_, _, d_ = stack.shape
    cols = [jnp.pad(stack[g], ((0, 0), (0, pad - d_))) for g in range(g_)]
    return jnp.concatenate(cols, axis=1).astype(jnp.float32)


# ----------------------------------------------------------------------------
# Kernel A: fused edge-net + lin0 + n_atom_jumps x (NNConv(mean) + ReLU + GRU)
# ----------------------------------------------------------------------------
def _mp_kernel(x_ref, ea_ref, src_ref, dst_ref,
               l0w_ref, l0b_ref, e1w_ref, e1b_ref, e2w_ref, e2b_ref,
               root_ref, cb_ref, gwi_ref, gwh_ref, gbi_ref, gbh_ref,
               o_ref, wf_ref, *, n_steps):
    N = x_ref.shape[0]
    E = ea_ref.shape[0]
    D = root_ref.shape[0]
    P = _GATE_PAD

    # ---- in-kernel one-hot gather/scatter operands (no O(E*N) HBM traffic) ----
    src = src_ref[...]                                                   # (E, 1) int32
    dst = dst_ref[...]                                                   # (1, E) int32
    onehot_src = (src == lax.broadcasted_iota(jnp.int32, (E, N), 1))
    onehot_src = onehot_src.astype(jnp.float32).astype(_BF16)            # (E, N) 0/1
    oh_dst_f = (lax.broadcasted_iota(jnp.int32, (N, E), 0) == dst).astype(jnp.float32)
    deg = jnp.sum(oh_dst_f, axis=1, keepdims=True)                       # (N, 1)
    inv_deg = jnp.where(deg > 0.0, 1.0 / jnp.maximum(deg, 1.0), 0.0)     # f32, post-matmul
    scat = oh_dst_f.astype(_BF16)                                        # (N, E) 0/1

    # ---- edge network fused in: Linear(.,128)+ReLU+Linear(128, D*D) -> VMEM scratch ----
    he = jnp.maximum(_dot(ea_ref[...].astype(_BF16), e1w_ref[...]) + e1b_ref[...], 0.0)
    wf_ref[...] = _dot(he.astype(_BF16), e2w_ref[...]) + e2b_ref[...]    # (E, D*D) f32

    # ---- lin0 + ReLU ----
    out = jnp.maximum(_dot(x_ref[...].astype(_BF16), l0w_ref[...]) + l0b_ref[...], 0.0)
    h = out                                                              # GRU hidden init

    root_b = root_ref[...]
    cb = cb_ref[...]
    gwi = gwi_ref[...]
    gwh = gwh_ref[...]
    gbi = gbi_ref[...]
    gbh = gbh_ref[...]

    for _ in range(n_steps):
        out_b = out.astype(_BF16)
        # gather x_j = out[src[e]] with a compact (E, N) one-hot matmul (MXU)
        xs = _dot(onehot_src, out_b)                                     # (E, D) f32
        # per-edge message msg[e, j] = sum_d xs[e, d] * W_e[d, j]  (VPU column-broadcasts,
        # no ones-matmul, no (E*D, N) gather, no (E, D, D) intermediate)
        msg = jnp.zeros((E, D), jnp.float32)
        for d in range(D):
            msg = msg + xs[:, d:d + 1] * wf_ref[:, d * D:(d + 1) * D]
        # mean scatter to destination nodes (bf16 MXU, f32 1/deg applied after) + root + bias
        agg = inv_deg * _dot(scat, msg.astype(_BF16))                    # (N, D) f32
        m = jnp.maximum(agg + _dot(out_b, root_b) + cb, 0.0)             # ReLU(NNConv(out))

        # ---- GRU cell: 3 gates fused into one (D, 3*128) RHS per path ----
        gi = _dot(m.astype(_BF16), gwi) + gbi                            # (N, 3*128) f32
        gh = _dot(h.astype(_BF16), gwh) + gbh
        r = jax.nn.sigmoid(gi[:, 0:D] + gh[:, 0:D])
        z = jax.nn.sigmoid(gi[:, P:P + D] + gh[:, P:P + D])
        n = jnp.tanh(gi[:, 2 * P:2 * P + D] + r * gh[:, 2 * P:2 * P + D])
        h = (1.0 - z) * n + z * h
        out = h

    o_ref[...] = out


def message_passing(x, edge_attr, src_col, dst_row, l0w, l0b, e1w, e1b, e2w, e2b,
                    root, cb, gwi, gwh, gbi, gbh, *, n_steps, dim):
    N, E = x.shape[0], edge_attr.shape[0]
    inputs = (x, edge_attr, src_col, dst_row, l0w, l0b, e1w, e1b, e2w, e2b,
              root, cb, gwi, gwh, gbi, gbh)
    flops = int(2 * E * edge_attr.shape[1] * 128 + 2 * E * 128 * dim * dim
                + 2 * N * x.shape[1] * dim
                + n_steps * (2 * E * N * dim + 2 * E * dim * dim + 2 * N * E * dim
                             + 2 * N * dim * dim + 4 * N * dim * 3 * _GATE_PAD))
    cost = pl.CostEstimate(flops=flops,
                           transcendentals=int(n_steps * 3 * N * dim),
                           bytes_accessed=_nbytes(*inputs) + N * dim * 4)
    # TODO(synk): at realistic E, tile the edge MLP / message loop over an edge grid with
    # dimension_semantics=("parallel", ...) so v7x can use both TensorCores.
    return pl.pallas_call(
        functools.partial(_mp_kernel, n_steps=n_steps),
        out_shape=jax.ShapeDtypeStruct((N, dim), jnp.float32),
        in_specs=[_vmem()] * len(inputs),
        out_specs=_vmem(),
        scratch_shapes=[pltpu.VMEM((E, dim * dim), jnp.float32)],
        compiler_params=pltpu.CompilerParams(vmem_limit_bytes=32 * 1024 * 1024),
        cost_estimate=cost,
    )(*inputs)


# ----------------------------------------------------------------------------
# Kernel B: Set2Set (LSTM + per-graph softmax attention) + readout MLP,
#           gridded over graphs (dimension_semantics = "parallel")
# ----------------------------------------------------------------------------
def _s2s_kernel(xn_ref, batch_ref, ga_ref,
                wq_ref, wr_ref, wh_ref, lb_ref,
                w1q_ref, w1r_ref, w1g_ref, b1_ref, w2_ref, b2_ref,
                o_ref, *, n_steps):
    D = w1q_ref.shape[0]
    P = _GATE_PAD
    xn = xn_ref[...]                                                     # (N, D) f32
    bidx = pl.program_id(0)
    member = batch_ref[...] == bidx                                      # (N, 1) bool

    wq = wq_ref[...]
    wr = wr_ref[...]
    wh = wh_ref[...]
    lb = lb_ref[...]

    q = jnp.zeros((1, D), jnp.float32)       # left half of q_star
    r = jnp.zeros((1, D), jnp.float32)       # right half of q_star (readout)
    lh = jnp.zeros((1, D), jnp.float32)
    lc = jnp.zeros((1, D), jnp.float32)

    for _ in range(n_steps):
        # ---- LSTM cell on q_star = [q | r]; 4 gates fused into one (D, 4*128) RHS ----
        gates = (_dot(q.astype(_BF16), wq) + _dot(r.astype(_BF16), wr)
                 + _dot(lh.astype(_BF16), wh) + lb)                      # (1, 4*128) f32
        gi = jax.nn.sigmoid(gates[:, 0:D])
        gf = jax.nn.sigmoid(gates[:, P:P + D])
        gg = jnp.tanh(gates[:, 2 * P:2 * P + D])
        go = jax.nn.sigmoid(gates[:, 3 * P:3 * P + D])
        lc = gf * lc + gi * gg
        lh = go * jnp.tanh(lc)
        q = lh                                                           # (1, D)

        # ---- softmax attention over this graph's member nodes (no transposes) ----
        scores = jnp.sum(xn * q, axis=1, keepdims=True)                  # (N, 1)
        masked = jnp.where(member, scores, -1e30)
        gmax = jnp.max(masked, axis=0, keepdims=True)                    # (1, 1)
        ex = jnp.where(member, jnp.exp(scores - gmax), 0.0)              # (N, 1)
        denom = jnp.maximum(jnp.sum(ex, axis=0, keepdims=True), 1e-30)   # (1, 1)
        a = ex / denom                                                   # exact softmax
        r = jnp.sum(a * xn, axis=0, keepdims=True)                       # (1, D) readout

    # ---- readout MLP on [q | r | graph_attr] via split lin1 weights ----
    ga = ga_ref[0].astype(_BF16)                                         # (1, G)
    hid = jnp.maximum(_dot(q.astype(_BF16), w1q_ref[...]) +
                      _dot(r.astype(_BF16), w1r_ref[...]) +
                      _dot(ga, w1g_ref[...]) + b1_ref[...], 0.0)
    # TODO(synk): Dropout with p > 0 would mask `hid` via pltpu.prng_random_bits; p = 0 is identity.
    pred = _dot(hid.astype(_BF16), w2_ref[...]) + b2_ref[...]            # (1, 128) lane-dense
    o_ref[...] = pred[jnp.newaxis]


def set2set_readout(xn, batch_col, ga3, wq, wr, wh, lb, w1q, w1r, w1g, b1, w2p, b2p,
                    *, n_steps, dim):
    N = xn.shape[0]
    B = ga3.shape[0]
    G = ga3.shape[2]

    def _full(a):
        return pl.BlockSpec(a.shape, lambda b: (0, 0))

    in_specs = [
        pl.BlockSpec((N, dim), lambda b: (0, 0)),        # node features (shared, loaded once)
        pl.BlockSpec((N, 1), lambda b: (0, 0)),          # node -> graph ids
        pl.BlockSpec((1, 1, G), lambda b: (b, 0, 0)),    # this graph's attributes
        _full(wq), _full(wr), _full(wh), _full(lb),
        _full(w1q), _full(w1r), _full(w1g), _full(b1),
        _full(w2p), _full(b2p),
    ]
    out_spec = pl.BlockSpec((1, 1, 128), lambda b: (b, 0, 0))

    flops = int(B * (n_steps * (6 * dim * 4 * _GATE_PAD + 6 * N * dim)
                     + 4 * dim * dim + 2 * G * dim + 2 * dim * 128))
    cost = pl.CostEstimate(
        flops=flops,
        transcendentals=int(B * n_steps * (5 * dim + N)),
        bytes_accessed=_nbytes(xn, batch_col, ga3, wq, wr, wh, lb,
                               w1q, w1r, w1g, b1, w2p, b2p) + B * 128 * 4)

    return pl.pallas_call(
        functools.partial(_s2s_kernel, n_steps=n_steps),
        out_shape=jax.ShapeDtypeStruct((B, 1, 128), jnp.float32),
        grid=(B,),
        in_specs=in_specs,
        out_specs=out_spec,
        compiler_params=pltpu.CompilerParams(
            dimension_semantics=("parallel",),
            vmem_limit_bytes=32 * 1024 * 1024),
        cost_estimate=cost,
    )(xn, batch_col, ga3, wq, wr, wh, lb, w1q, w1r, w1g, b1, w2p, b2p)


# ----------------------------------------------------------------------------
# Parameters (deterministic synthetic init; per-gate layout, split q/r weights)
# ----------------------------------------------------------------------------
def init_params(key, n_node, n_edge, n_graph, dim):
    keys = jax.random.split(key, 22)
    s = 0.1

    def w(k, shape):
        return jax.random.normal(k, shape, dtype=jnp.float32) * s

    p = {}
    p["lin0_w"] = w(keys[0], (n_node, dim));        p["lin0_b"] = w(keys[1], (1, dim))
    p["e1_w"] = w(keys[2], (n_edge, 128));          p["e1_b"] = w(keys[3], (1, 128))
    p["e2_w"] = w(keys[4], (128, dim * dim));       p["e2_b"] = w(keys[5], (1, dim * dim))
    p["conv_root"] = w(keys[6], (dim, dim));        p["conv_b"] = w(keys[7], (1, dim))
    # GRU gates (r, z, n)
    p["gru_wi"] = w(keys[8], (3, dim, dim));        p["gru_wh"] = w(keys[9], (3, dim, dim))
    p["gru_bi"] = w(keys[10], (3, 1, dim));         p["gru_bh"] = w(keys[11], (3, 1, dim))
    # Set2Set LSTM gates (i, f, g, o); input weights split into q-part / r-part
    p["lstm_wq"] = w(keys[12], (4, dim, dim));      p["lstm_wr"] = w(keys[13], (4, dim, dim))
    p["lstm_wh"] = w(keys[14], (4, dim, dim));      p["lstm_b"] = w(keys[15], (4, 1, dim))
    # lin1 on [q | r | graph_attr] split
    p["lin1_wq"] = w(keys[16], (dim, dim));         p["lin1_wr"] = w(keys[17], (dim, dim))
    p["lin1_wg"] = w(keys[18], (n_graph, dim));     p["lin1_b"] = w(keys[19], (1, dim))
    p["lin2_w"] = w(keys[20], (dim, 1));            p["lin2_b"] = w(keys[21], (1, 1))
    return p


# ----------------------------------------------------------------------------
# Forward pass
# ----------------------------------------------------------------------------
def gilmer_forward(params, x, edge_index, edge_attr, batch, graph_attr,
                   dim=64, n_atom_jumps=3, set2set_steps=3):
    N = x.shape[0]
    E = edge_index.shape[1]
    B = graph_attr.shape[0]

    # tiny int32 index inputs (one-hots are built inside the kernel)
    src_col = edge_index[0].reshape(E, 1).astype(jnp.int32)
    dst_row = edge_index[1].reshape(1, E).astype(jnp.int32)
    batch_col = batch.reshape(N, 1).astype(jnp.int32)

    # wrapper-side weight prep: bf16 MXU operands, fused+128-padded gate blocks, f32 biases
    l0w = params["lin0_w"].astype(_BF16)
    e1w = params["e1_w"].astype(_BF16)
    e2w = params["e2_w"].astype(_BF16)
    root = params["conv_root"].astype(_BF16)
    gwi = _fuse_gates(params["gru_wi"]);   gwh = _fuse_gates(params["gru_wh"])
    gbi = _fuse_bias(params["gru_bi"]);    gbh = _fuse_bias(params["gru_bh"])

    # ---- kernel A: fused edge-net + lin0 + message-passing loop ----
    node_out = message_passing(
        x, edge_attr, src_col, dst_row,
        l0w, params["lin0_b"], e1w, params["e1_b"], e2w, params["e2_b"],
        root, params["conv_b"], gwi, gwh, gbi, gbh,
        n_steps=n_atom_jumps, dim=dim)                                   # (N, D)

    # ---- kernel B: fused Set2Set + lin1 + relu + (dropout p=0) + lin2 ----
    wq = _fuse_gates(params["lstm_wq"]);   wr = _fuse_gates(params["lstm_wr"])
    wh = _fuse_gates(params["lstm_wh"]);   lb = _fuse_bias(params["lstm_b"])
    w1q = params["lin1_wq"].astype(_BF16); w1r = params["lin1_wr"].astype(_BF16)
    w1g = params["lin1_wg"].astype(_BF16)
    w2p = jnp.pad(params["lin2_w"], ((0, 0), (0, 127))).astype(_BF16)    # (D, 128) lane-dense
    b2p = jnp.pad(params["lin2_b"], ((0, 0), (0, 127)))                  # (1, 128)
    ga3 = graph_attr.reshape(B, 1, -1)

    pred_slab = set2set_readout(
        node_out, batch_col, ga3, wq, wr, wh, lb,
        w1q, w1r, w1g, params["lin1_b"], w2p, b2p,
        n_steps=set2set_steps, dim=dim)                                  # (B, 1, 128)
    return pred_slab[:, 0, 0]                                            # (B,)


# ----------------------------------------------------------------------------
# Main
# ----------------------------------------------------------------------------
if __name__ == "__main__":
    key = jax.random.PRNGKey(0)
    n_node_features, n_edge_features, n_graph_features = 8, 6, 3
    dim = 64
    N, E, B = 16, 32, 2

    kx, ke, kg, ks1, kd1, ks2, kd2, kp = jax.random.split(key, 8)

    x = jax.random.normal(kx, (N, n_node_features), dtype=jnp.float32)
    edge_attr = jax.random.normal(ke, (E, n_edge_features), dtype=jnp.float32)
    graph_attr = jax.random.normal(kg, (B, n_graph_features), dtype=jnp.float32)

    # edges stay within each graph (nodes 0..7 -> graph 0, 8..15 -> graph 1)
    src = jnp.concatenate([jax.random.randint(ks1, (E // 2,), 0, N // 2),
                           jax.random.randint(ks2, (E // 2,), N // 2, N)])
    dst = jnp.concatenate([jax.random.randint(kd1, (E // 2,), 0, N // 2),
                           jax.random.randint(kd2, (E // 2,), N // 2, N)])
    edge_index = jnp.stack([src, dst], axis=0).astype(jnp.int32)
    batch = jnp.concatenate([jnp.zeros(N // 2, dtype=jnp.int32),
                             jnp.ones(N // 2, dtype=jnp.int32)])

    params = init_params(kp, n_node_features, n_edge_features,
                         n_graph_features, dim)

    preds = gilmer_forward(params, x, edge_index, edge_attr, batch, graph_attr,
                           dim=dim, n_atom_jumps=3, set2set_steps=3)
    preds = jax.block_until_ready(preds)
    assert preds.shape == (B,)
    print("KERNEL_OK")
</pallas_src>

<mosaic_0001>
module attributes {stable_mosaic.version = 11 : i64} {
  func.func @_mp_kernel(%arg0: memref<16x8xf32, #tpu.memory_space<vmem>>, %arg1: memref<32x6xf32, #tpu.memory_space<vmem>>, %arg2: memref<32x1xi32, #tpu.memory_space<vmem>>, %arg3: memref<1x32xi32, #tpu.memory_space<vmem>>, %arg4: memref<8x64xbf16, #tpu.memory_space<vmem>>, %arg5: memref<1x64xf32, #tpu.memory_space<vmem>>, %arg6: memref<6x128xbf16, #tpu.memory_space<vmem>>, %arg7: memref<1x128xf32, #tpu.memory_space<vmem>>, %arg8: memref<128x4096xbf16, #tpu.memory_space<vmem>>, %arg9: memref<1x4096xf32, #tpu.memory_space<vmem>>, %arg10: memref<64x64xbf16, #tpu.memory_space<vmem>>, %arg11: memref<1x64xf32, #tpu.memory_space<vmem>>, %arg12: memref<64x384xbf16, #tpu.memory_space<vmem>>, %arg13: memref<64x384xbf16, #tpu.memory_space<vmem>>, %arg14: memref<1x384xf32, #tpu.memory_space<vmem>>, %arg15: memref<1x384xf32, #tpu.memory_space<vmem>>, %arg16: memref<16x64xf32, #tpu.memory_space<vmem>>, %arg17: memref<32x4096xf32, #tpu.memory_space<vmem>>) attributes {dimension_semantics = [], scalar_prefetch = 0 : i64, scratch_operands = 1 : i64, tpu.core_type = #tpu.core_type<tc>} {
    %c0 = arith.constant 0 : index
    %c0_0 = arith.constant 0 : index
    %0 = vector.load %arg2[%c0, %c0_0] : memref<32x1xi32, #tpu.memory_space<vmem>>, vector<32x1xi32>
    %c0_1 = arith.constant 0 : index
    %c0_2 = arith.constant 0 : index
    %1 = vector.load %arg3[%c0_1, %c0_2] : memref<1x32xi32, #tpu.memory_space<vmem>>, vector<1x32xi32>
    %2 = tpu.iota {dimensions = array<i32: 1>} : vector<32x16xi32>
    %3 = vector.broadcast %0 : vector<32x1xi32> to vector<32x16xi32>
    %4 = arith.cmpi eq, %3, %2 : vector<32x16xi32>
    %5 = arith.extui %4 : vector<32x16xi1> to vector<32x16xi32>
    %6 = arith.sitofp %5 : vector<32x16xi32> to vector<32x16xf32>
    %7 = arith.truncf %6 : vector<32x16xf32> to vector<32x16xbf16>
    %8 = tpu.iota {dimensions = array<i32: 0>} : vector<16x32xi32>
    %9 = vector.broadcast %1 : vector<1x32xi32> to vector<16x32xi32>
    %10 = arith.cmpi eq, %8, %9 : vector<16x32xi32>
    %11 = arith.extui %10 : vector<16x32xi1> to vector<16x32xi32>
    %12 = arith.sitofp %11 : vector<16x32xi32> to vector<16x32xf32>
    %cst = arith.constant dense<0.000000e+00> : vector<16xf32>
    %13 = vector.multi_reduction <add>, %12, %cst [1] : vector<16x32xf32> to vector<16xf32>
    %14 = vector.shape_cast %13 : vector<16xf32> to vector<16x1xf32>
    %cst_3 = arith.constant 0.000000e+00 : f32
    %15 = vector.broadcast %cst_3 : f32 to vector<16x1xf32>
    %16 = arith.cmpf ogt, %14, %15 : vector<16x1xf32>
    %cst_4 = arith.constant 1.000000e+00 : f32
    %17 = vector.broadcast %cst_4 : f32 to vector<16x1xf32>
    %18 = arith.maximumf %14, %17 : vector<16x1xf32>
    %cst_5 = arith.constant 1.000000e+00 : f32
    %19 = vector.broadcast %cst_5 : f32 to vector<16x1xf32>
    %20 = arith.divf %19, %18 : vector<16x1xf32>
    %cst_6 = arith.constant 0.000000e+00 : f32
    %21 = vector.broadcast %cst_6 : f32 to vector<16x1xf32>
    %22 = arith.select %16, %20, %21 : vector<16x1xi1>, vector<16x1xf32>
    %23 = arith.truncf %12 : vector<16x32xf32> to vector<16x32xbf16>
    %c0_7 = arith.constant 0 : index
    %c0_8 = arith.constant 0 : index
    %24 = vector.load %arg1[%c0_7, %c0_8] : memref<32x6xf32, #tpu.memory_space<vmem>>, vector<32x6xf32>
    %25 = arith.truncf %24 : vector<32x6xf32> to vector<32x6xbf16>
    %c0_9 = arith.constant 0 : index
    %c0_10 = arith.constant 0 : index
    %26 = vector.load %arg6[%c0_9, %c0_10] : memref<6x128xbf16, #tpu.memory_space<vmem>>, vector<6x128xbf16>
    %cst_11 = arith.constant dense<0.000000e+00> : vector<32x128xf32>
    %27 = tpu.matmul %25, %26, %cst_11 {dimension_numbers = #tpu.dot_dimension_numbers<[1], [0], [0], [1], [0, 0, 1, 1], [], []>} : vector<32x6xbf16>, vector<6x128xbf16>, vector<32x128xf32> -> vector<32x128xf32>
    %c0_12 = arith.constant 0 : index
    %c0_13 = arith.constant 0 : index
    %28 = vector.load %arg7[%c0_12, %c0_13] : memref<1x128xf32, #tpu.memory_space<vmem>>, vector<1x128xf32>
    %29 = vector.broadcast %28 : vector<1x128xf32> to vector<32x128xf32>
    %30 = arith.addf %27, %29 : vector<32x128xf32>
    %cst_14 = arith.constant 0.000000e+00 : f32
    %31 = vector.broadcast %cst_14 : f32 to vector<32x128xf32>
    %32 = arith.maximumf %30, %31 : vector<32x128xf32>
    %33 = arith.truncf %32 : vector<32x128xf32> to vector<32x128xbf16>
    %c0_15 = arith.constant 0 : index
    %c0_16 = arith.constant 0 : index
    %34 = vector.load %arg8[%c0_15, %c0_16] : memref<128x4096xbf16, #tpu.memory_space<vmem>>, vector<128x4096xbf16>
    %cst_17 = arith.constant dense<0.000000e+00> : vector<32x4096xf32>
    %35 = tpu.matmul %33, %34, %cst_17 {dimension_numbers = #tpu.dot_dimension_numbers<[1], [0], [0], [1], [0, 0, 1, 1], [], []>} : vector<32x128xbf16>, vector<128x4096xbf16>, vector<32x4096xf32> -> vector<32x4096xf32>
    %c0_18 = arith.constant 0 : index
    %c0_19 = arith.constant 0 : index
    %36 = vector.load %arg9[%c0_18, %c0_19] : memref<1x4096xf32, #tpu.memory_space<vmem>>, vector<1x4096xf32>
    %37 = vector.broadcast %36 : vector<1x4096xf32> to vector<32x4096xf32>
    %38 = arith.addf %35, %37 : vector<32x4096xf32>
    %c0_20 = arith.constant 0 : index
    %c0_21 = arith.constant 0 : index
    %39 = vector.load %arg17[%c0_20, %c0_21] : memref<32x4096xf32, #tpu.memory_space<vmem>>, vector<32x4096xf32>
    tpu.vector_store %arg17[%c0_20, %c0_21], %38 {strides = array<i32>} : memref<32x4096xf32, #tpu.memory_space<vmem>>, vector<32x4096xf32>,
    %c0_22 = arith.constant 0 : index
    %c0_23 = arith.constant 0 : index
    %40 = vector.load %arg0[%c0_22, %c0_23] : memref<16x8xf32, #tpu.memory_space<vmem>>, vector<16x8xf32>
    %41 = arith.truncf %40 : vector<16x8xf32> to vector<16x8xbf16>
    %c0_24 = arith.constant 0 : index
    %c0_25 = arith.constant 0 : index
    %42 = vector.load %arg4[%c0_24, %c0_25] : memref<8x64xbf16, #tpu.memory_space<vmem>>, vector<8x64xbf16>
    %cst_26 = arith.constant dense<0.000000e+00> : vector<16x64xf32>
    %43 = tpu.matmul %41, %42, %cst_26 {dimension_numbers = #tpu.dot_dimension_numbers<[1], [0], [0], [1], [0, 0, 1, 1], [], []>} : vector<16x8xbf16>, vector<8x64xbf16>, vector<16x64xf32> -> vector<16x64xf32>
    %c0_27 = arith.constant 0 : index
    %c0_28 = arith.constant 0 : index
    %44 = vector.load %arg5[%c0_27, %c0_28] : memref<1x64xf32, #tpu.memory_space<vmem>>, vector<1x64xf32>
    %45 = vector.broadcast %44 : vector<1x64xf32> to vector<16x64xf32>
    %46 = arith.addf %43, %45 : vector<16x64xf32>
    %cst_29 = arith.constant 0.000000e+00 : f32
    %47 = vector.broadcast %cst_29 : f32 to vector<16x64xf32>
    %48 = arith.maximumf %46, %47 : vector<16x64xf32>
    %c0_30 = arith.constant 0 : index
    %c0_31 = arith.constant 0 : index
    %49 = vector.load %arg10[%c0_30, %c0_31] : memref<64x64xbf16, #tpu.memory_space<vmem>>, vector<64x64xbf16>
    %c0_32 = arith.constant 0 : index
    %c0_33 = arith.constant 0 : index
    %50 = vector.load %arg11[%c0_32, %c0_33] : memref<1x64xf32, #tpu.memory_space<vmem>>, vector<1x64xf32>
    %c0_34 = arith.constant 0 : index
    %c0_35 = arith.constant 0 : index
    %51 = vector.load %arg12[%c0_34, %c0_35] : memref<64x384xbf16, #tpu.memory_space<vmem>>, vector<64x384xbf16>
    %c0_36 = arith.constant 0 : index
    %c0_37 = arith.constant 0 : index
    %52 = vector.load %arg13[%c0_36, %c0_37] : memref<64x384xbf16, #tpu.memory_space<vmem>>, vector<64x384xbf16>
    %c0_38 = arith.constant 0 : index
    %c0_39 = arith.constant 0 : index
    %53 = vector.load %arg14[%c0_38, %c0_39] : memref<1x384xf32, #tpu.memory_space<vmem>>, vector<1x384xf32>
    %c0_40 = arith.constant 0 : index
    %c0_41 = arith.constant 0 : index
    %54 = vector.load %arg15[%c0_40, %c0_41] : memref<1x384xf32, #tpu.memory_space<vmem>>, vector<1x384xf32>
    %55 = arith.truncf %48 : vector<16x64xf32> to vector<16x64xbf16>
    %cst_42 = arith.constant dense<0.000000e+00> : vector<32x64xf32>
    %56 = tpu.matmul %7, %55, %cst_42 {dimension_numbers = #tpu.dot_dimension_numbers<[1], [0], [0], [1], [0, 0, 1, 1], [], []>} : vector<32x16xbf16>, vector<16x64xbf16>, vector<32x64xf32> -> vector<32x64xf32>
    %cst_43 = arith.constant 0.000000e+00 : f32
    %57 = vector.broadcast %cst_43 : f32 to vector<32x64xf32>
    %58 = vector.extract_strided_slice %56 {offsets = [0, 0], sizes = [32, 1], strides = [1, 1]} : vector<32x64xf32> to vector<32x1xf32>
    %c0_44 = arith.constant 0 : index
    %c0_45 = arith.constant 0 : index
    %59 = vector.load %arg17[%c0_44, %c0_45] : memref<32x4096xf32, #tpu.memory_space<vmem>>, vector<32x64xf32>
    %60 = vector.broadcast %58 : vector<32x1xf32> to vector<32x64xf32>
    %61 = arith.mulf %60, %59 : vector<32x64xf32>
    %62 = arith.addf %57, %61 : vector<32x64xf32>
    %63 = vector.extract_strided_slice %56 {offsets = [0, 1], sizes = [32, 1], strides = [1, 1]} : vector<32x64xf32> to vector<32x1xf32>
    %c0_46 = arith.constant 0 : index
    %c64 = arith.constant 64 : index
    %64 = vector.load %arg17[%c0_46, %c64] : memref<32x4096xf32, #tpu.memory_space<vmem>>, vector<32x64xf32>
    %65 = vector.broadcast %63 : vector<32x1xf32> to vector<32x64xf32>
    %66 = arith.mulf %65, %64 : vector<32x64xf32>
    %67 = arith.addf %62, %66 : vector<32x64xf32>
    %68 = vector.extract_strided_slice %56 {offsets = [0, 2], sizes = [32, 1], strides = [1, 1]} : vector<32x64xf32> to vector<32x1xf32>
    %c0_47 = arith.constant 0 : index
    %c128 = arith.constant 128 : index
    %69 = vector.load %arg17[%c0_47, %c128] : memref<32x4096xf32, #tpu.memory_space<vmem>>, vector<32x64xf32>
    %70 = vector.broadcast %68 : vector<32x1xf32> to vector<32x64xf32>
    %71 = arith.mulf %70, %69 : vector<32x64xf32>
    %72 = arith.addf %67, %71 : vector<32x64xf32>
    %73 = vector.extract_strided_slice %56 {offsets = [0, 3], sizes = [32, 1], strides = [1, 1]} : vector<32x64xf32> to vector<32x1xf32>
    %c0_48 = arith.constant 0 : index
    %c192 = arith.constant 192 : index
    %74 = vector.load %arg17[%c0_48, %c192] : memref<32x4096xf32, #tpu.memory_space<vmem>>, vector<32x64xf32>
    %75 = vector.broadcast %73 : vector<32x1xf32> to vector<32x64xf32>
    %76 = arith.mulf %75, %74 : vector<32x64xf32>
    %77 = arith.addf %72, %76 : vector<32x64xf32>
    %78 = vector.extract_strided_slice %56 {offsets = [0, 4], sizes = [32, 1], strides = [1, 1]} : vector<32x64xf32> to vector<32x1xf32>
    %c0_49 = arith.constant 0 : index
    %c256 = arith.constant 256 : index
    %79 = vector.load %arg17[%c0_49, %c256] : memref<32x4096xf32, #tpu.memory_space<vmem>>, vector<32x64xf32>
    %80 = vector.broadcast %78 : vector<32x1xf32> to vector<32x64xf32>
    %81 = arith.mulf %80, %79 : vector<32x64xf32>
    %82 = arith.addf %77, %81 : vector<32x64xf32>
    %83 = vector.extract_strided_slice %56 {offsets = [0, 5], sizes = [32, 1], strides = [1, 1]} : vector<32x64xf32> to vector<32x1xf32>
    %c0_50 = arith.constant 0 : index
    %c320 = arith.constant 320 : index
    %84 = vector.load %arg17[%c0_50, %c320] : memref<32x4096xf32, #tpu.memory_space<vmem>>, vector<32x64xf32>
    %85 = vector.broadcast %83 : vector<32x1xf32> to vector<32x64xf32>
    %86 = arith.mulf %85, %84 : vector<32x64xf32>
    %87 = arith.addf %82, %86 : vector<32x64xf32>
    %88 = vector.extract_strided_slice %56 {offsets = [0, 6], sizes = [32, 1], strides = [1, 1]} : vector<32x64xf32> to vector<32x1xf32>
    %c0_51 = arith.constant 0 : index
    %c384 = arith.constant 384 : index
    %89 = vector.load %arg17[%c0_51, %c384] : memref<32x4096xf32, #tpu.memory_space<vmem>>, vector<32x64xf32>
    %90 = vector.broadcast %88 : vector<32x1xf32> to vector<32x64xf32>
    %91 = arith.mulf %90, %89 : vector<32x64xf32>
    %92 = arith.addf %87, %91 : vector<32x64xf32>
    %93 = vector.extract_strided_slice %56 {offsets = [0, 7], sizes = [32, 1], strides = [1, 1]} : vector<32x64xf32> to vector<32x1xf32>
    %c0_52 = arith.constant 0 : index
    %c448 = arith.constant 448 : index
    %94 = vector.load %arg17[%c0_52, %c448] : memref<32x4096xf32, #tpu.memory_space<vmem>>, vector<32x64xf32>
    %95 = vector.broadcast %93 : vector<32x1xf32> to vector<32x64xf32>
    %96 = arith.mulf %95, %94 : vector<32x64xf32>
    %97 = arith.addf %92, %96 : vector<32x64xf32>
    %98 = vector.extract_strided_slice %56 {offsets = [0, 8], sizes = [32, 1], strides = [1, 1]} : vector<32x64xf32> to vector<32x1xf32>
    %c0_53 = arith.constant 0 : index
    %c512 = arith.constant 512 : index
    %99 = vector.load %arg17[%c0_53, %c512] : memref<32x4096xf32, #tpu.memory_space<vmem>>, vector<32x64xf32>
    %100 = vector.broadcast %98 : vector<32x1xf32> to vector<32x64xf32>
    %101 = arith.mulf %100, %99 : vector<32x64xf32>
    %102 = arith.addf %97, %101 : vector<32x64xf32>
    %103 = vector.extract_strided_slice %56 {offsets = [0, 9], sizes = [32, 1], strides = [1, 1]} : vector<32x64xf32> to vector<32x1xf32>
    %c0_54 = arith.constant 0 : index
    %c576 = arith.constant 576 : index
    %104 = vector.load %arg17[%c0_54, %c576] : memref<32x4096xf32, #tpu.memory_space<vmem>>, vector<32x64xf32>
    %105 = vector.broadcast %103 : vector<32x1xf32> to vector<32x64xf32>
    %106 = arith.mulf %105, %104 : vector<32x64xf32>
    %107 = arith.addf %102, %106 : vector<32x64xf32>
    %108 = vector.extract_strided_slice %56 {offsets = [0, 10], sizes = [32, 1], strides = [1, 1]} : vector<32x64xf32> to vector<32x1xf32>
    %c0_55 = arith.constant 0 : index
    %c640 = arith.constant 640 : index
    %109 = vector.load %arg17[%c0_55, %c640] : memref<32x4096xf32, #tpu.memory_space<vmem>>, vector<32x64xf32>
    %110 = vector.broadcast %108 : vector<32x1xf32> to vector<32x64xf32>
    %111 = arith.mulf %110, %109 : vector<32x64xf32>
    %112 = arith.addf %107, %111 : vector<32x64xf32>
    %113 = vector.extract_strided_slice %56 {offsets = [0, 11], sizes = [32, 1], strides = [1, 1]} : vector<32x64xf32> to vector<32x1xf32>
    %c0_56 = arith.constant 0 : index
    %c704 = arith.constant 704 : index
    %114 = vector.load %arg17[%c0_56, %c704] : memref<32x4096xf32, #tpu.memory_space<vmem>>, vector<32x64xf32>
    %115 = vector.broadcast %113 : vector<32x1xf32> to vector<32x64xf32>
    %116 = arith.mulf %115, %114 : vector<32x64xf32>
    %117 = arith.addf %112, %116 : vector<32x64xf32>
    %118 = vector.extract_strided_slice %56 {offsets = [0, 12], sizes = [32, 1], strides = [1, 1]} : vector<32x64xf32> to vector<32x1xf32>
    %c0_57 = arith.constant 0 : index
    %c768 = arith.constant 768 : index
    %119 = vector.load %arg17[%c0_57, %c768] : memref<32x4096xf32, #tpu.memory_space<vmem>>, vector<32x64xf32>
    %120 = vector.broadcast %118 : vector<32x1xf32> to vector<32x64xf32>
    %121 = arith.mulf %120, %119 : vector<32x64xf32>
    %122 = arith.addf %117, %121 : vector<32x64xf32>
    %123 = vector.extract_strided_slice %56 {offsets = [0, 13], sizes = [32, 1], strides = [1, 1]} : vector<32x64xf32> to vector<32x1xf32>
    %c0_58 = arith.constant 0 : index
    %c832 = arith.constant 832 : index
    %124 = vector.load %arg17[%c0_58, %c832] : memref<32x4096xf32, #tpu.memory_space<vmem>>, vector<32x64xf32>
    %125 = vector.broadcast %123 : vector<32x1xf32> to vector<32x64xf32>
    %126 = arith.mulf %125, %124 : vector<32x64xf32>
    %127 = arith.addf %122, %126 : vector<32x64xf32>
    %128 = vector.extract_strided_slice %56 {offsets = [0, 14], sizes = [32, 1], strides = [1, 1]} : vector<32x64xf32> to vector<32x1xf32>
    %c0_59 = arith.constant 0 : index
    %c896 = arith.constant 896 : index
    %129 = vector.load %arg17[%c0_59, %c896] : memref<32x4096xf32, #tpu.memory_space<vmem>>, vector<32x64xf32>
    %130 = vector.broadcast %128 : vector<32x1xf32> to vector<32x64xf32>
    %131 = arith.mulf %130, %129 : vector<32x64xf32>
    %132 = arith.addf %127, %131 : vector<32x64xf32>
    %133 = vector.extract_strided_slice %56 {offsets = [0, 15], sizes = [32, 1], strides = [1, 1]} : vector<32x64xf32> to vector<32x1xf32>
    %c0_60 = arith.constant 0 : index
    %c960 = arith.constant 960 : index
    %134 = vector.load %arg17[%c0_60, %c960] : memref<32x4096xf32, #tpu.memory_space<vmem>>, vector<32x64xf32>
    %135 = vector.broadcast %133 : vector<32x1xf32> to vector<32x64xf32>
    %136 = arith.mulf %135, %134 : vector<32x64xf32>
    %137 = arith.addf %132, %136 : vector<32x64xf32>
    %138 = vector.extract_strided_slice %56 {offsets = [0, 16], sizes = [32, 1], strides = [1, 1]} : vector<32x64xf32> to vector<32x1xf32>
    %c0_61 = arith.constant 0 : index
    %c1024 = arith.constant 1024 : index
    %139 = vector.load %arg17[%c0_61, %c1024] : memref<32x4096xf32, #tpu.memory_space<vmem>>, vector<32x64xf32>
    %140 = vector.broadcast %138 : vector<32x1xf32> to vector<32x64xf32>
    %141 = arith.mulf %140, %139 : vector<32x64xf32>
    %142 = arith.addf %137, %141 : vector<32x64xf32>
    %143 = vector.extract_strided_slice %56 {offsets = [0, 17], sizes = [32, 1], strides = [1, 1]} : vector<32x64xf32> to vector<32x1xf32>
    %c0_62 = arith.constant 0 : index
    %c1088 = arith.constant 1088 : index
    %144 = vector.load %arg17[%c0_62, %c1088] : memref<32x4096xf32, #tpu.memory_space<vmem>>, vector<32x64xf32>
    %145 = vector.broadcast %143 : vector<32x1xf32> to vector<32x64xf32>
    %146 = arith.mulf %145, %144 : vector<32x64xf32>
    %147 = arith.addf %142, %146 : vector<32x64xf32>
    %148 = vector.extract_strided_slice %56 {offsets = [0, 18], sizes = [32, 1], strides = [1, 1]} : vector<32x64xf32> to vector<32x1xf32>
    %c0_63 = arith.constant 0 : index
    %c1152 = arith.constant 1152 : index
    %149 = vector.load %arg17[%c0_63, %c1152] : memref<32x4096xf32, #tpu.memory_space<vmem>>, vector<32x64xf32>
    %150 = vector.broadcast %148 : vector<32x1xf32> to vector<32x64xf32>
    %151 = arith.mulf %150, %149 : vector<32x64xf32>
    %152 = arith.addf %147, %151 : vector<32x64xf32>
    %153 = vector.extract_strided_slice %56 {offsets = [0, 19], sizes = [32, 1], strides = [1, 1]} : vector<32x64xf32> to vector<32x1xf32>
    %c0_64 = arith.constant 0 : index
    %c1216 = arith.constant 1216 : index
    %154 = vector.load %arg17[%c0_64, %c1216] : memref<32x4096xf32, #tpu.memory_space<vmem>>, vector<32x64xf32>
    %155 = vector.broadcast %153 : vector<32x1xf32> to vector<32x64xf32>
    %156 = arith.mulf %155, %154 : vector<32x64xf32>
    %157 = arith.addf %152, %156 : vector<32x64xf32>
    %158 = vector.extract_strided_slice %56 {offsets = [0, 20], sizes = [32, 1], strides = [1, 1]} : vector<32x64xf32> to vector<32x1xf32>
    %c0_65 = arith.constant 0 : index
    %c1280 = arith.constant 1280 : index
    %159 = vector.load %arg17[%c0_65, %c1280] : memref<32x4096xf32, #tpu.memory_space<vmem>>, vector<32x64xf32>
    %160 = vector.broadcast %158 : vector<32x1xf32> to vector<32x64xf32>
    %161 = arith.mulf %160, %159 : vector<32x64xf32>
    %162 = arith.addf %157, %161 : vector<32x64xf32>
    %163 = vector.extract_strided_slice %56 {offsets = [0, 21], sizes = [32, 1], strides = [1, 1]} : vector<32x64xf32> to vector<32x1xf32>
    %c0_66 = arith.constant 0 : index
    %c1344 = arith.constant 1344 : index
    %164 = vector.load %arg17[%c0_66, %c1344] : memref<32x4096xf32, #tpu.memory_space<vmem>>, vector<32x64xf32>
    %165 = vector.broadcast %163 : vector<32x1xf32> to vector<32x64xf32>
    %166 = arith.mulf %165, %164 : vector<32x64xf32>
    %167 = arith.addf %162, %166 : vector<32x64xf32>
    %168 = vector.extract_strided_slice %56 {offsets = [0, 22], sizes = [32, 1], strides = [1, 1]} : vector<32x64xf32> to vector<32x1xf32>
    %c0_67 = arith.constant 0 : index
    %c1408 = arith.constant 1408 : index
    %169 = vector.load %arg17[%c0_67, %c1408] : memref<32x4096xf32, #tpu.memory_space<vmem>>, vector<32x64xf32>
    %170 = vector.broadcast %168 : vector<32x1xf32> to vector<32x64xf32>
    %171 = arith.mulf %170, %169 : vector<32x64xf32>
    %172 = arith.addf %167, %171 : vector<32x64xf32>
    %173 = vector.extract_strided_slice %56 {offsets = [0, 23], sizes = [32, 1], strides = [1, 1]} : vector<32x64xf32> to vector<32x1xf32>
    %c0_68 = arith.constant 0 : index
    %c1472 = arith.constant 1472 : index
    %174 = vector.load %arg17[%c0_68, %c1472] : memref<32x4096xf32, #tpu.memory_space<vmem>>, vector<32x64xf32>
    %175 = vector.broadcast %173 : vector<32x1xf32> to vector<32x64xf32>
    %176 = arith.mulf %175, %174 : vector<32x64xf32>
    %177 = arith.addf %172, %176 : vector<32x64xf32>
    %178 = vector.extract_strided_slice %56 {offsets = [0, 24], sizes = [32, 1], strides = [1, 1]} : vector<32x64xf32> to vector<32x1xf32>
    %c0_69 = arith.constant 0 : index
    %c1536 = arith.constant 1536 : index
    %179 = vector.load %arg17[%c0_69, %c1536] : memref<32x4096xf32, #tpu.memory_space<vmem>>, vector<32x64xf32>
    %180 = vector.broadcast %178 : vector<32x1xf32> to vector<32x64xf32>
    %181 = arith.mulf %180, %179 : vector<32x64xf32>
    %182 = arith.addf %177, %181 : vector<32x64xf32>
    %183 = vector.extract_strided_slice %56 {offsets = [0, 25], sizes = [32, 1], strides = [1, 1]} : vector<32x64xf32> to vector<32x1xf32>
    %c0_70 = arith.constant 0 : index
    %c1600 = arith.constant 1600 : index
    %184 = vector.load %arg17[%c0_70, %c1600] : memref<32x4096xf32, #tpu.memory_space<vmem>>, vector<32x64xf32>
    %185 = vector.broadcast %183 : vector<32x1xf32> to vector<32x64xf32>
    %186 = arith.mulf %185, %184 : vector<32x64xf32>
    %187 = arith.addf %182, %186 : vector<32x64xf32>
    %188 = vector.extract_strided_slice %56 {offsets = [0, 26], sizes = [32, 1], strides = [1, 1]} : vector<32x64xf32> to vector<32x1xf32>
    %c0_71 = arith.constant 0 : index
    %c1664 = arith.constant 1664 : index
    %189 = vector.load %arg17[%c0_71, %c1664] : memref<32x4096xf32, #tpu.memory_space<vmem>>, vector<32x64xf32>
    %190 = vector.broadcast %188 : vector<32x1xf32> to vector<32x64xf32>
    %191 = arith.mulf %190, %189 : vector<32x64xf32>
    %192 = arith.addf %187, %191 : vector<32x64xf32>
    %193 = vector.extract_strided_slice %56 {offsets = [0, 27], sizes = [32, 1], strides = [1, 1]} : vector<32x64xf32> to vector<32x1xf32>
    %c0_72 = arith.constant 0 : index
    %c1728 = arith.constant 1728 : index
    %194 = vector.load %arg17[%c0_72, %c1728] : memref<32x4096xf32, #tpu.memory_space<vmem>>, vector<32x64xf32>
    %195 = vector.broadcast %193 : vector<32x1xf32> to vector<32x64xf32>
    %196 = arith.mulf %195, %194 : vector<32x64xf32>
    %197 = arith.addf %192, %196 : vector<32x64xf32>
    %198 = vector.extract_strided_slice %56 {offsets = [0, 28], sizes = [32, 1], strides = [1, 1]} : vector<32x64xf32> to vector<32x1xf32>
    %c0_73 = arith.constant 0 : index
    %c1792 = arith.constant 1792 : index
    %199 = vector.load %arg17[%c0_73, %c1792] : memref<32x4096xf32, #tpu.memory_space<vmem>>, vector<32x64xf32>
    %200 = vector.broadcast %198 : vector<32x1xf32> to vector<32x64xf32>
    %201 = arith.mulf %200, %199 : vector<32x64xf32>
    %202 = arith.addf %197, %201 : vector<32x64xf32>
    %203 = vector.extract_strided_slice %56 {offsets = [0, 29], sizes = [32, 1], strides = [1, 1]} : vector<32x64xf32> to vector<32x1xf32>
    %c0_74 = arith.constant 0 : index
    %c1856 = arith.constant 1856 : index
    %204 = vector.load %arg17[%c0_74, %c1856] : memref<32x4096xf32, #tpu.memory_space<vmem>>, vector<32x64xf32>
    %205 = vector.broadcast %203 : vector<32x1xf32> to vector<32x64xf32>
    %206 = arith.mulf %205, %204 : vector<32x64xf32>
    %207 = arith.addf %202, %206 : vector<32x64xf32>
    %208 = vector.extract_strided_slice %56 {offsets = [0, 30], sizes = [32, 1], strides = [1, 1]} : vector<32x64xf32> to vector<32x1xf32>
    %c0_75 = arith.constant 0 : index
    %c1920 = arith.constant 1920 : index
    %209 = vector.load %arg17[%c0_75, %c1920] : memref<32x4096xf32, #tpu.memory_space<vmem>>, vector<32x64xf32>
    %210 = vector.broadcast %208 : vector<32x1xf32> to vector<32x64xf32>
    %211 = arith.mulf %210, %209 : vector<32x64xf32>
    %212 = arith.addf %207, %211 : vector<32x64xf32>
    %213 = vector.extract_strided_slice %56 {offsets = [0, 31], sizes = [32, 1], strides = [1, 1]} : vector<32x64xf32> to vector<32x1xf32>
    %c0_76 = arith.constant 0 : index
    %c1984 = arith.constant 1984 : index
    %214 = vector.load %arg17[%c0_76, %c1984] : memref<32x4096xf32, #tpu.memory_space<vmem>>, vector<32x64xf32>
    %215 = vector.broadcast %213 : vector<32x1xf32> to vector<32x64xf32>
    %216 = arith.mulf %215, %214 : vector<32x64xf32>
    %217 = arith.addf %212, %216 : vector<32x64xf32>
    %218 = vector.extract_strided_slice %56 {offsets = [0, 32], sizes = [32, 1], strides = [1, 1]} : vector<32x64xf32> to vector<32x1xf32>
    %c0_77 = arith.constant 0 : index
    %c2048 = arith.constant 2048 : index
    %219 = vector.load %arg17[%c0_77, %c2048] : memref<32x4096xf32, #tpu.memory_space<vmem>>, vector<32x64xf32>
    %220 = vector.broadcast %218 : vector<32x1xf32> to vector<32x64xf32>
    %221 = arith.mulf %220, %219 : vector<32x64xf32>
    %222 = arith.addf %217, %221 : vector<32x64xf32>
    %223 = vector.extract_strided_slice %56 {offsets = [0, 33], sizes = [32, 1], strides = [1, 1]} : vector<32x64xf32> to vector<32x1xf32>
    %c0_78 = arith.constant 0 : index
    %c2112 = arith.constant 2112 : index
    %224 = vector.load %arg17[%c0_78, %c2112] : memref<32x4096xf32, #tpu.memory_space<vmem>>, vector<32x64xf32>
    %225 = vector.broadcast %223 : vector<32x1xf32> to vector<32x64xf32>
    %226 = arith.mulf %225, %224 : vector<32x64xf32>
    %227 = arith.addf %222, %226 : vector<32x64xf32>
    %228 = vector.extract_strided_slice %56 {offsets = [0, 34], sizes = [32, 1], strides = [1, 1]} : vector<32x64xf32> to vector<32x1xf32>
    %c0_79 = arith.constant 0 : index
    %c2176 = arith.constant 2176 : index
    %229 = vector.load %arg17[%c0_79, %c2176] : memref<32x4096xf32, #tpu.memory_space<vmem>>, vector<32x64xf32>
    %230 = vector.broadcast %228 : vector<32x1xf32> to vector<32x64xf32>
    %231 = arith.mulf %230, %229 : vector<32x64xf32>
    %232 = arith.addf %227, %231 : vector<32x64xf32>
    %233 = vector.extract_strided_slice %56 {offsets = [0, 35], sizes = [32, 1], strides = [1, 1]} : vector<32x64xf32> to vector<32x1xf32>
    %c0_80 = arith.constant 0 : index
    %c2240 = arith.constant 2240 : index
    %234 = vector.load %arg17[%c0_80, %c2240] : memref<32x4096xf32, #tpu.memory_space<vmem>>, vector<32x64xf32>
    %235 = vector.broadcast %233 : vector<32x1xf32> to vector<32x64xf32>
    %236 = arith.mulf %235, %234 : vector<32x64xf32>
    %237 = arith.addf %232, %236 : vector<32x64xf32>
    %238 = vector.extract_strided_slice %56 {offsets = [0, 36], sizes = [32, 1], strides = [1, 1]} : vector<32x64xf32> to vector<32x1xf32>
    %c0_81 = arith.constant 0 : index
    %c2304 = arith.constant 2304 : index
    %239 = vector.load %arg17[%c0_81, %c2304] : memref<32x4096xf32, #tpu.memory_space<vmem>>, vector<32x64xf32>
    %240 = vector.broadcast %238 : vector<32x1xf32> to vector<32x64xf32>
    %241 = arith.mulf %240, %239 : vector<32x64xf32>
    %242 = arith.addf %237, %241 : vector<32x64xf32>
    %243 = vector.extract_strided_slice %56 {offsets = [0, 37], sizes = [32, 1], strides = [1, 1]} : vector<32x64xf32> to vector<32x1xf32>
    %c0_82 = arith.constant 0 : index
    %c2368 = arith.constant 2368 : index
    %244 = vector.load %arg17[%c0_82, %c2368] : memref<32x4096xf32, #tpu.memory_space<vmem>>, vector<32x64xf32>
    %245 = vector.broadcast %243 : vector<32x1xf32> to vector<32x64xf32>
    %246 = arith.mulf %245, %244 : vector<32x64xf32>
    %247 = arith.addf %242, %246 : vector<32x64xf32>
    %248 = vector.extract_strided_slice %56 {offsets = [0, 38], sizes = [32, 1], strides = [1, 1]} : vector<32x64xf32> to vector<32x1xf32>
    %c0_83 = arith.constant 0 : index
    %c2432 = arith.constant 2432 : index
    %249 = vector.load %arg17[%c0_83, %c2432] : memref<32x4096xf32, #tpu.memory_space<vmem>>, vector<32x64xf32>
    %250 = vector.broadcast %248 : vector<32x1xf32> to vector<32x64xf32>
    %251 = arith.mulf %250, %249 : vector<32x64xf32>
    %252 = arith.addf %247, %251 : vector<32x64xf32>
    %253 = vector.extract_strided_slice %56 {offsets = [0, 39], sizes = [32, 1], strides = [1, 1]} : vector<32x64xf32> to vector<32x1xf32>
    %c0_84 = arith.constant 0 : index
    %c2496 = arith.constant 2496 : index
    %254 = vector.load %arg17[%c0_84, %c2496] : memref<32x4096xf32, #tpu.memory_space<vmem>>, vector<32x64xf32>
    %255 = vector.broadcast %253 : vector<32x1xf32> to vector<32x64xf32>
    %256 = arith.mulf %255, %254 : vector<32x64xf32>
    %257 = arith.addf %252, %256 : vector<32x64xf32>
    %258 = vector.extract_strided_slice %56 {offsets = [0, 40], sizes = [32, 1], strides = [1, 1]} : vector<32x64xf32> to vector<32x1xf32>
    %c0_85 = arith.constant 0 : index
    %c2560 = arith.constant 2560 : index
    %259 = vector.load %arg17[%c0_85, %c2560] : memref<32x4096xf32, #tpu.memory_space<vmem>>, vector<32x64xf32>
    %260 = vector.broadcast %258 : vector<32x1xf32> to vector<32x64xf32>
    %261 = arith.mulf %260, %259 : vector<32x64xf32>
    %262 = arith.addf %257, %261 : vector<32x64xf32>
    %263 = vector.extract_strided_slice %56 {offsets = [0, 41], sizes = [32, 1], strides = [1, 1]} : vector<32x64xf32> to vector<32x1xf32>
    %c0_86 = arith.constant 0 : index
    %c2624 = arith.constant 2624 : index
    %264 = vector.load %arg17[%c0_86, %c2624] : memref<32x4096xf32, #tpu.memory_space<vmem>>, vector<32x64xf32>
    %265 = vector.broadcast %263 : vector<32x1xf32> to vector<32x64xf32>
    %266 = arith.mulf %265, %264 : vector<32x64xf32>
    %267 = arith.addf %262, %266 : vector<32x64xf32>
    %268 = vector.extract_strided_slice %56 {offsets = [0, 42], sizes = [32, 1], strides = [1, 1]} : vector<32x64xf32> to vector<32x1xf32>
    %c0_87 = arith.constant 0 : index
    %c2688 = arith.constant 2688 : index
    %269 = vector.load %arg17[%c0_87, %c2688] : memref<32x4096xf32, #tpu.memory_space<vmem>>, vector<32x64xf32>
    %270 = vector.broadcast %268 : vector<32x1xf32> to vector<32x64xf32>
    %271 = arith.mulf %270, %269 : vector<32x64xf32>
    %272 = arith.addf %267, %271 : vector<32x64xf32>
    %273 = vector.extract_strided_slice %56 {offsets = [0, 43], sizes = [32, 1], strides = [1, 1]} : vector<32x64xf32> to vector<32x1xf32>
    %c0_88 = arith.constant 0 : index
    %c2752 = arith.constant 2752 : index
    %274 = vector.load %arg17[%c0_88, %c2752] : memref<32x4096xf32, #tpu.memory_space<vmem>>, vector<32x64xf32>
    %275 = vector.broadcast %273 : vector<32x1xf32> to vector<32x64xf32>
    %276 = arith.mulf %275, %274 : vector<32x64xf32>
    %277 = arith.addf %272, %276 : vector<32x64xf32>
    %278 = vector.extract_strided_slice %56 {offsets = [0, 44], sizes = [32, 1], strides = [1, 1]} : vector<32x64xf32> to vector<32x1xf32>
    %c0_89 = arith.constant 0 : index
    %c2816 = arith.constant 2816 : index
    %279 = vector.load %arg17[%c0_89, %c2816] : memref<32x4096xf32, #tpu.memory_space<vmem>>, vector<32x64xf32>
    %280 = vector.broadcast %278 : vector<32x1xf32> to vector<32x64xf32>
    %281 = arith.mulf %280, %279 : vector<32x64xf32>
    %282 = arith.addf %277, %281 : vector<32x64xf32>
    %283 = vector.extract_strided_slice %56 {offsets = [0, 45], sizes = [32, 1], strides = [1, 1]} : vector<32x64xf32> to vector<32x1xf32>
    %c0_90 = arith.constant 0 : index
    %c2880 = arith.constant 2880 : index
    %284 = vector.load %arg17[%c0_90, %c2880] : memref<32x4096xf32, #tpu.memory_space<vmem>>, vector<32x64xf32>
    %285 = vector.broadcast %283 : vector<32x1xf32> to vector<32x64xf32>
    %286 = arith.mulf %285, %284 : vector<32x64xf32>
    %287 = arith.addf %282, %286 : vector<32x64xf32>
    %288 = vector.extract_strided_slice %56 {offsets = [0, 46], sizes = [32, 1], strides = [1, 1]} : vector<32x64xf32> to vector<32x1xf32>
    %c0_91 = arith.constant 0 : index
    %c2944 = arith.constant 2944 : index
    %289 = vector.load %arg17[%c0_91, %c2944] : memref<32x4096xf32, #tpu.memory_space<vmem>>, vector<32x64xf32>
    %290 = vector.broadcast %288 : vector<32x1xf32> to vector<32x64xf32>
    %291 = arith.mulf %290, %289 : vector<32x64xf32>
    %292 = arith.addf %287, %291 : vector<32x64xf32>
    %293 = vector.extract_strided_slice %56 {offsets = [0, 47], sizes = [32, 1], strides = [1, 1]} : vector<32x64xf32> to vector<32x1xf32>
    %c0_92 = arith.constant 0 : index
    %c3008 = arith.constant 3008 : index
    %294 = vector.load %arg17[%c0_92, %c3008] : memref<32x4096xf32, #tpu.memory_space<vmem>>, vector<32x64xf32>
    %295 = vector.broadcast %293 : vector<32x1xf32> to vector<32x64xf32>
    %296 = arith.mulf %295, %294 : vector<32x64xf32>
    %297 = arith.addf %292, %296 : vector<32x64xf32>
    %298 = vector.extract_strided_slice %56 {offsets = [0, 48], sizes = [32, 1], strides = [1, 1]} : vector<32x64xf32> to vector<32x1xf32>
    %c0_93 = arith.constant 0 : index
    %c3072 = arith.constant 3072 : index
    %299 = vector.load %arg17[%c0_93, %c3072] : memref<32x4096xf32, #tpu.memory_space<vmem>>, vector<32x64xf32>
    %300 = vector.broadcast %298 : vector<32x1xf32> to vector<32x64xf32>
    %301 = arith.mulf %300, %299 : vector<32x64xf32>
    %302 = arith.addf %297, %301 : vector<32x64xf32>
    %303 = vector.extract_strided_slice %56 {offsets = [0, 49], sizes = [32, 1], strides = [1, 1]} : vector<32x64xf32> to vector<32x1xf32>
    %c0_94 = arith.constant 0 : index
    %c3136 = arith.constant 3136 : index
    %304 = vector.load %arg17[%c0_94, %c3136] : memref<32x4096xf32, #tpu.memory_space<vmem>>, vector<32x64xf32>
    %305 = vector.broadcast %303 : vector<32x1xf32> to vector<32x64xf32>
    %306 = arith.mulf %305, %304 : vector<32x64xf32>
    %307 = arith.addf %302, %306 : vector<32x64xf32>
    %308 = vector.extract_strided_slice %56 {offsets = [0, 50], sizes = [32, 1], strides = [1, 1]} : vector<32x64xf32> to vector<32x1xf32>
    %c0_95 = arith.constant 0 : index
    %c3200 = arith.constant 3200 : index
    %309 = vector.load %arg17[%c0_95, %c3200] : memref<32x4096xf32, #tpu.memory_space<vmem>>, vector<32x64xf32>
    %310 = vector.broadcast %308 : vector<32x1xf32> to vector<32x64xf32>
    %311 = arith.mulf %310, %309 : vector<32x64xf32>
    %312 = arith.addf %307, %311 : vector<32x64xf32>
    %313 = vector.extract_strided_slice %56 {offsets = [0, 51], sizes = [32, 1], strides = [1, 1]} : vector<32x64xf32> to vector<32x1xf32>
    %c0_96 = arith.constant 0 : index
    %c3264 = arith.constant 3264 : index
    %314 = vector.load %arg17[%c0_96, %c3264] : memref<32x4096xf32, #tpu.memory_space<vmem>>, vector<32x64xf32>
    %315 = vector.broadcast %313 : vector<32x1xf32> to vector<32x64xf32>
    %316 = arith.mulf %315, %314 : vector<32x64xf32>
    %317 = arith.addf %312, %316 : vector<32x64xf32>
    %318 = vector.extract_strided_slice %56 {offsets = [0, 52], sizes = [32, 1], strides = [1, 1]} : vector<32x64xf32> to vector<32x1xf32>
    %c0_97 = arith.constant 0 : index
    %c3328 = arith.constant 3328 : index
    %319 = vector.load %arg17[%c0_97, %c3328] : memref<32x4096xf32, #tpu.memory_space<vmem>>, vector<32x64xf32>
    %320 = vector.broadcast %318 : vector<32x1xf32> to vector<32x64xf32>
    %321 = arith.mulf %320, %319 : vector<32x64xf32>
    %322 = arith.addf %317, %321 : vector<32x64xf32>
    %323 = vector.extract_strided_slice %56 {offsets = [0, 53], sizes = [32, 1], strides = [1, 1]} : vector<32x64xf32> to vector<32x1xf32>
    %c0_98 = arith.constant 0 : index
    %c3392 = arith.constant 3392 : index
    %324 = vector.load %arg17[%c0_98, %c3392] : memref<32x4096xf32, #tpu.memory_space<vmem>>, vector<32x64xf32>
    %325 = vector.broadcast %323 : vector<32x1xf32> to vector<32x64xf32>
    %326 = arith.mulf %325, %324 : vector<32x64xf32>
    %327 = arith.addf %322, %326 : vector<32x64xf32>
    %328 = vector.extract_strided_slice %56 {offsets = [0, 54], sizes = [32, 1], strides = [1, 1]} : vector<32x64xf32> to vector<32x1xf32>
    %c0_99 = arith.constant 0 : index
    %c3456 = arith.constant 3456 : index
    %329 = vector.load %arg17[%c0_99, %c3456] : memref<32x4096xf32, #tpu.memory_space<vmem>>, vector<32x64xf32>
    %330 = vector.broadcast %328 : vector<32x1xf32> to vector<32x64xf32>
    %331 = arith.mulf %330, %329 : vector<32x64xf32>
    %332 = arith.addf %327, %331 : vector<32x64xf32>
    %333 = vector.extract_strided_slice %56 {offsets = [0, 55], sizes = [32, 1], strides = [1, 1]} : vector<32x64xf32> to vector<32x1xf32>
    %c0_100 = arith.constant 0 : index
    %c3520 = arith.constant 3520 : index
    %334 = vector.load %arg17[%c0_100, %c3520] : memref<32x4096xf32, #tpu.memory_space<vmem>>, vector<32x64xf32>
    %335 = vector.broadcast %333 : vector<32x1xf32> to vector<32x64xf32>
    %336 = arith.mulf %335, %334 : vector<32x64xf32>
    %337 = arith.addf %332, %336 : vector<32x64xf32>
    %338 = vector.extract_strided_slice %56 {offsets = [0, 56], sizes = [32, 1], strides = [1, 1]} : vector<32x64xf32> to vector<32x1xf32>
    %c0_101 = arith.constant 0 : index
    %c3584 = arith.constant 3584 : index
    %339 = vector.load %arg17[%c0_101, %c3584] : memref<32x4096xf32, #tpu.memory_space<vmem>>, vector<32x64xf32>
    %340 = vector.broadcast %338 : vector<32x1xf32> to vector<32x64xf32>
    %341 = arith.mulf %340, %339 : vector<32x64xf32>
    %342 = arith.addf %337, %341 : vector<32x64xf32>
    %343 = vector.extract_strided_slice %56 {offsets = [0, 57], sizes = [32, 1], strides = [1, 1]} : vector<32x64xf32> to vector<32x1xf32>
    %c0_102 = arith.constant 0 : index
    %c3648 = arith.constant 3648 : index
    %344 = vector.load %arg17[%c0_102, %c3648] : memref<32x4096xf32, #tpu.memory_space<vmem>>, vector<32x64xf32>
    %345 = vector.broadcast %343 : vector<32x1xf32> to vector<32x64xf32>
    %346 = arith.mulf %345, %344 : vector<32x64xf32>
    %347 = arith.addf %342, %346 : vector<32x64xf32>
    %348 = vector.extract_strided_slice %56 {offsets = [0, 58], sizes = [32, 1], strides = [1, 1]} : vector<32x64xf32> to vector<32x1xf32>
    %c0_103 = arith.constant 0 : index
    %c3712 = arith.constant 3712 : index
    %349 = vector.load %arg17[%c0_103, %c3712] : memref<32x4096xf32, #tpu.memory_space<vmem>>, vector<32x64xf32>
    %350 = vector.broadcast %348 : vector<32x1xf32> to vector<32x64xf32>
    %351 = arith.mulf %350, %349 : vector<32x64xf32>
    %352 = arith.addf %347, %351 : vector<32x64xf32>
    %353 = vector.extract_strided_slice %56 {offsets = [0, 59], sizes = [32, 1], strides = [1, 1]} : vector<32x64xf32> to vector<32x1xf32>
    %c0_104 = arith.constant 0 : index
    %c3776 = arith.constant 3776 : index
    %354 = vector.load %arg17[%c0_104, %c3776] : memref<32x4096xf32, #tpu.memory_space<vmem>>, vector<32x64xf32>
    %355 = vector.broadcast %353 : vector<32x1xf32> to vector<32x64xf32>
    %356 = arith.mulf %355, %354 : vector<32x64xf32>
    %357 = arith.addf %352, %356 : vector<32x64xf32>
    %358 = vector.extract_strided_slice %56 {offsets = [0, 60], sizes = [32, 1], strides = [1, 1]} : vector<32x64xf32> to vector<32x1xf32>
    %c0_105 = arith.constant 0 : index
    %c3840 = arith.constant 3840 : index
    %359 = vector.load %arg17[%c0_105, %c3840] : memref<32x4096xf32, #tpu.memory_space<vmem>>, vector<32x64xf32>
    %360 = vector.broadcast %358 : vector<32x1xf32> to vector<32x64xf32>
    %361 = arith.mulf %360, %359 : vector<32x64xf32>
    %362 = arith.addf %357, %361 : vector<32x64xf32>
    %363 = vector.extract_strided_slice %56 {offsets = [0, 61], sizes = [32, 1], strides = [1, 1]} : vector<32x64xf32> to vector<32x1xf32>
    %c0_106 = arith.constant 0 : index
    %c3904 = arith.constant 3904 : index
    %364 = vector.load %arg17[%c0_106, %c3904] : memref<32x4096xf32, #tpu.memory_space<vmem>>, vector<32x64xf32>
    %365 = vector.broadcast %363 : vector<32x1xf32> to vector<32x64xf32>
    %366 = arith.mulf %365, %364 : vector<32x64xf32>
    %367 = arith.addf %362, %366 : vector<32x64xf32>
    %368 = vector.extract_strided_slice %56 {offsets = [0, 62], sizes = [32, 1], strides = [1, 1]} : vector<32x64xf32> to vector<32x1xf32>
    %c0_107 = arith.constant 0 : index
    %c3968 = arith.constant 3968 : index
    %369 = vector.load %arg17[%c0_107, %c3968] : memref<32x4096xf32, #tpu.memory_space<vmem>>, vector<32x64xf32>
    %370 = vector.broadcast %368 : vector<32x1xf32> to vector<32x64xf32>
    %371 = arith.mulf %370, %369 : vector<32x64xf32>
    %372 = arith.addf %367, %371 : vector<32x64xf32>
    %373 = vector.extract_strided_slice %56 {offsets = [0, 63], sizes = [32, 1], strides = [1, 1]} : vector<32x64xf32> to vector<32x1xf32>
    %c0_108 = arith.constant 0 : index
    %c4032 = arith.constant 4032 : index
    %374 = vector.load %arg17[%c0_108, %c4032] : memref<32x4096xf32, #tpu.memory_space<vmem>>, vector<32x64xf32>
    %375 = vector.broadcast %373 : vector<32x1xf32> to vector<32x64xf32>
    %376 = arith.mulf %375, %374 : vector<32x64xf32>
    %377 = arith.addf %372, %376 : vector<32x64xf32>
    %378 = arith.truncf %377 : vector<32x64xf32> to vector<32x64xbf16>
    %cst_109 = arith.constant dense<0.000000e+00> : vector<16x64xf32>
    %379 = tpu.matmul %23, %378, %cst_109 {dimension_numbers = #tpu.dot_dimension_numbers<[1], [0], [0], [1], [0, 0, 1, 1], [], []>} : vector<16x32xbf16>, vector<32x64xbf16>, vector<16x64xf32> -> vector<16x64xf32>
    %380 = vector.broadcast %22 : vector<16x1xf32> to vector<16x64xf32>
    %381 = arith.mulf %380, %379 : vector<16x64xf32>
    %cst_110 = arith.constant dense<0.000000e+00> : vector<16x64xf32>
    %382 = tpu.matmul %55, %49, %cst_110 {dimension_numbers = #tpu.dot_dimension_numbers<[1], [0], [0], [1], [0, 0, 1, 1], [], []>} : vector<16x64xbf16>, vector<64x64xbf16>, vector<16x64xf32> -> vector<16x64xf32>
    %383 = arith.addf %381, %382 : vector<16x64xf32>
    %384 = vector.broadcast %50 : vector<1x64xf32> to vector<16x64xf32>
    %385 = arith.addf %383, %384 : vector<16x64xf32>
    %cst_111 = arith.constant 0.000000e+00 : f32
    %386 = vector.broadcast %cst_111 : f32 to vector<16x64xf32>
    %387 = arith.maximumf %385, %386 : vector<16x64xf32>
    %388 = arith.truncf %387 : vector<16x64xf32> to vector<16x64xbf16>
    %cst_112 = arith.constant dense<0.000000e+00> : vector<16x384xf32>
    %389 = tpu.matmul %388, %51, %cst_112 {dimension_numbers = #tpu.dot_dimension_numbers<[1], [0], [0], [1], [0, 0, 1, 1], [], []>} : vector<16x64xbf16>, vector<64x384xbf16>, vector<16x384xf32> -> vector<16x384xf32>
    %390 = vector.broadcast %53 : vector<1x384xf32> to vector<16x384xf32>
    %391 = arith.addf %389, %390 : vector<16x384xf32>
    %392 = arith.truncf %48 : vector<16x64xf32> to vector<16x64xbf16>
    %cst_113 = arith.constant dense<0.000000e+00> : vector<16x384xf32>
    %393 = tpu.matmul %392, %52, %cst_113 {dimension_numbers = #tpu.dot_dimension_numbers<[1], [0], [0], [1], [0, 0, 1, 1], [], []>} : vector<16x64xbf16>, vector<64x384xbf16>, vector<16x384xf32> -> vector<16x384xf32>
    %394 = vector.broadcast %54 : vector<1x384xf32> to vector<16x384xf32>
    %395 = arith.addf %393, %394 : vector<16x384xf32>
    %396 = vector.extract_strided_slice %391 {offsets = [0, 0], sizes = [16, 64], strides = [1, 1]} : vector<16x384xf32> to vector<16x64xf32>
    %397 = vector.extract_strided_slice %395 {offsets = [0, 0], sizes = [16, 64], strides = [1, 1]} : vector<16x384xf32> to vector<16x64xf32>
    %398 = arith.addf %396, %397 : vector<16x64xf32>
    %399 = arith.negf %398 : vector<16x64xf32>
    %400 = math.exp %399 : vector<16x64xf32>
    %cst_114 = arith.constant 1.000000e+00 : f32
    %401 = vector.broadcast %cst_114 : f32 to vector<16x64xf32>
    %402 = arith.addf %401, %400 : vector<16x64xf32>
    %403 = arith.divf %401, %402 : vector<16x64xf32>
    %404 = vector.extract_strided_slice %391 {offsets = [0, 128], sizes = [16, 64], strides = [1, 1]} : vector<16x384xf32> to vector<16x64xf32>
    %405 = vector.extract_strided_slice %395 {offsets = [0, 128], sizes = [16, 64], strides = [1, 1]} : vector<16x384xf32> to vector<16x64xf32>
    %406 = arith.addf %404, %405 : vector<16x64xf32>
    %407 = arith.negf %406 : vector<16x64xf32>
    %408 = math.exp %407 : vector<16x64xf32>
    %cst_115 = arith.constant 1.000000e+00 : f32
    %409 = vector.broadcast %cst_115 : f32 to vector<16x64xf32>
    %410 = arith.addf %409, %408 : vector<16x64xf32>
    %411 = arith.divf %409, %410 : vector<16x64xf32>
    %412 = vector.extract_strided_slice %391 {offsets = [0, 256], sizes = [16, 64], strides = [1, 1]} : vector<16x384xf32> to vector<16x64xf32>
    %413 = vector.extract_strided_slice %395 {offsets = [0, 256], sizes = [16, 64], strides = [1, 1]} : vector<16x384xf32> to vector<16x64xf32>
    %414 = arith.mulf %403, %413 : vector<16x64xf32>
    %415 = arith.addf %412, %414 : vector<16x64xf32>
    %416 = math.tanh %415 : vector<16x64xf32>
    %cst_116 = arith.constant 1.000000e+00 : f32
    %417 = vector.broadcast %cst_116 : f32 to vector<16x64xf32>
    %418 = arith.subf %417, %411 : vector<16x64xf32>
    %419 = arith.mulf %418, %416 : vector<16x64xf32>
    %420 = arith.mulf %411, %48 : vector<16x64xf32>
    %421 = arith.addf %419, %420 : vector<16x64xf32>
    %422 = arith.truncf %421 : vector<16x64xf32> to vector<16x64xbf16>
    %cst_117 = arith.constant dense<0.000000e+00> : vector<32x64xf32>
    %423 = tpu.matmul %7, %422, %cst_117 {dimension_numbers = #tpu.dot_dimension_numbers<[1], [0], [0], [1], [0, 0, 1, 1], [], []>} : vector<32x16xbf16>, vector<16x64xbf16>, vector<32x64xf32> -> vector<32x64xf32>
    %cst_118 = arith.constant 0.000000e+00 : f32
    %424 = vector.broadcast %cst_118 : f32 to vector<32x64xf32>
    %425 = vector.extract_strided_slice %423 {offsets = [0, 0], sizes = [32, 1], strides = [1, 1]} : vector<32x64xf32> to vector<32x1xf32>
    %c0_119 = arith.constant 0 : index
    %c0_120 = arith.constant 0 : index
    %426 = vector.load %arg17[%c0_119, %c0_120] : memref<32x4096xf32, #tpu.memory_space<vmem>>, vector<32x64xf32>
    %427 = vector.broadcast %425 : vector<32x1xf32> to vector<32x64xf32>
    %428 = arith.mulf %427, %426 : vector<32x64xf32>
    %429 = arith.addf %424, %428 : vector<32x64xf32>
    %430 = vector.extract_strided_slice %423 {offsets = [0, 1], sizes = [32, 1], strides = [1, 1]} : vector<32x64xf32> to vector<32x1xf32>
    %c0_121 = arith.constant 0 : index
    %c64_122 = arith.constant 64 : index
    %431 = vector.load %arg17[%c0_121, %c64_122] : memref<32x4096xf32, #tpu.memory_space<vmem>>, vector<32x64xf32>
    %432 = vector.broadcast %430 : vector<32x1xf32> to vector<32x64xf32>
    %433 = arith.mulf %432, %431 : vector<32x64xf32>
    %434 = arith.addf %429, %433 : vector<32x64xf32>
    %435 = vector.extract_strided_slice %423 {offsets = [0, 2], sizes = [32, 1], strides = [1, 1]} : vector<32x64xf32> to vector<32x1xf32>
    %c0_123 = arith.constant 0 : index
    %c128_124 = arith.constant 128 : index
    %436 = vector.load %arg17[%c0_123, %c128_124] : memref<32x4096xf32, #tpu.memory_space<vmem>>, vector<32x64xf32>
    %437 = vector.broadcast %435 : vector<32x1xf32> to vector<32x64xf32>
    %438 = arith.mulf %437, %436 : vector<32x64xf32>
    %439 = arith.addf %434, %438 : vector<32x64xf32>
    %440 = vector.extract_strided_slice %423 {offsets = [0, 3], sizes = [32, 1], strides = [1, 1]} : vector<32x64xf32> to vector<32x1xf32>
    %c0_125 = arith.constant 0 : index
    %c192_126 = arith.constant 192 : index
    %441 = vector.load %arg17[%c0_125, %c192_126] : memref<32x4096xf32, #tpu.memory_space<vmem>>, vector<32x64xf32>
    %442 = vector.broadcast %440 : vector<32x1xf32> to vector<32x64xf32>
    %443 = arith.mulf %442, %441 : vector<32x64xf32>
    %444 = arith.addf %439, %443 : vector<32x64xf32>
    %445 = vector.extract_strided_slice %423 {offsets = [0, 4], sizes = [32, 1], strides = [1, 1]} : vector<32x64xf32> to vector<32x1xf32>
    %c0_127 = arith.constant 0 : index
    %c256_128 = arith.constant 256 : index
    %446 = vector.load %arg17[%c0_127, %c256_128] : memref<32x4096xf32, #tpu.memory_space<vmem>>, vector<32x64xf32>
    %447 = vector.broadcast %445 : vector<32x1xf32> to vector<32x64xf32>
    %448 = arith.mulf %447, %446 : vector<32x64xf32>
    %449 = arith.addf %444, %448 : vector<32x64xf32>
    %450 = vector.extract_strided_slice %423 {offsets = [0, 5], sizes = [32, 1], strides = [1, 1]} : vector<32x64xf32> to vector<32x1xf32>
    %c0_129 = arith.constant 0 : index
    %c320_130 = arith.constant 320 : index
    %451 = vector.load %arg17[%c0_129, %c320_130] : memref<32x4096xf32, #tpu.memory_space<vmem>>, vector<32x64xf32>
    %452 = vector.broadcast %450 : vector<32x1xf32> to vector<32x64xf32>
    %453 = arith.mulf %452, %451 : vector<32x64xf32>
    %454 = arith.addf %449, %453 : vector<32x64xf32>
    %455 = vector.extract_strided_slice %423 {offsets = [0, 6], sizes = [32, 1], strides = [1, 1]} : vector<32x64xf32> to vector<32x1xf32>
    %c0_131 = arith.constant 0 : index
    %c384_132 = arith.constant 384 : index
    %456 = vector.load %arg17[%c0_131, %c384_132] : memref<32x4096xf32, #tpu.memory_space<vmem>>, vector<32x64xf32>
    %457 = vector.broadcast %455 : vector<32x1xf32> to vector<32x64xf32>
    %458 = arith.mulf %457, %456 : vector<32x64xf32>
    %459 = arith.addf %454, %458 : vector<32x64xf32>
    %460 = vector.extract_strided_slice %423 {offsets = [0, 7], sizes = [32, 1], strides = [1, 1]} : vector<32x64xf32> to vector<32x1xf32>
    %c0_133 = arith.constant 0 : index
    %c448_134 = arith.constant 448 : index
    %461 = vector.load %arg17[%c0_133, %c448_134] : memref<32x4096xf32, #tpu.memory_space<vmem>>, vector<32x64xf32>
    %462 = vector.broadcast %460 : vector<32x1xf32> to vector<32x64xf32>
    %463 = arith.mulf %462, %461 : vector<32x64xf32>
    %464 = arith.addf %459, %463 : vector<32x64xf32>
    %465 = vector.extract_strided_slice %423 {offsets = [0, 8], sizes = [32, 1], strides = [1, 1]} : vector<32x64xf32> to vector<32x1xf32>
    %c0_135 = arith.constant 0 : index
    %c512_136 = arith.constant 512 : index
    %466 = vector.load %arg17[%c0_135, %c512_136] : memref<32x4096xf32, #tpu.memory_space<vmem>>, vector<32x64xf32>
    %467 = vector.broadcast %465 : vector<32x1xf32> to vector<32x64xf32>
    %468 = arith.mulf %467, %466 : vector<32x64xf32>
    %469 = arith.addf %464, %468 : vector<32x64xf32>
    %470 = vector.extract_strided_slice %423 {offsets = [0, 9], sizes = [32, 1], strides = [1, 1]} : vector<32x64xf32> to vector<32x1xf32>
    %c0_137 = arith.constant 0 : index
    %c576_138 = arith.constant 576 : index
    %471 = vector.load %arg17[%c0_137, %c576_138] : memref<32x4096xf32, #tpu.memory_space<vmem>>, vector<32x64xf32>
    %472 = vector.broadcast %470 : vector<32x1xf32> to vector<32x64xf32>
    %473 = arith.mulf %472, %471 : vector<32x64xf32>
    %474 = arith.addf %469, %473 : vector<32x64xf32>
    %475 = vector.extract_strided_slice %423 {offsets = [0, 10], sizes = [32, 1], strides = [1, 1]} : vector<32x64xf32> to vector<32x1xf32>
    %c0_139 = arith.constant 0 : index
    %c640_140 = arith.constant 640 : index
    %476 = vector.load %arg17[%c0_139, %c640_140] : memref<32x4096xf32, #tpu.memory_space<vmem>>, vector<32x64xf32>
    %477 = vector.broadcast %475 : vector<32x1xf32> to vector<32x64xf32>
    %478 = arith.mulf %477, %476 : vector<32x64xf32>
    %479 = arith.addf %474, %478 : vector<32x64xf32>
    %480 = vector.extract_strided_slice %423 {offsets = [0, 11], sizes = [32, 1], strides = [1, 1]} : vector<32x64xf32> to vector<32x1xf32>
    %c0_141 = arith.constant 0 : index
    %c704_142 = arith.constant 704 : index
    %481 = vector.load %arg17[%c0_141, %c704_142] : memref<32x4096xf32, #tpu.memory_space<vmem>>, vector<32x64xf32>
    %482 = vector.broadcast %480 : vector<32x1xf32> to vector<32x64xf32>
    %483 = arith.mulf %482, %481 : vector<32x64xf32>
    %484 = arith.addf %479, %483 : vector<32x64xf32>
    %485 = vector.extract_strided_slice %423 {offsets = [0, 12], sizes = [32, 1], strides = [1, 1]} : vector<32x64xf32> to vector<32x1xf32>
    %c0_143 = arith.constant 0 : index
    %c768_144 = arith.constant 768 : index
    %486 = vector.load %arg17[%c0_143, %c768_144] : memref<32x4096xf32, #tpu.memory_space<vmem>>, vector<32x64xf32>
    %487 = vector.broadcast %485 : vector<32x1xf32> to vector<32x64xf32>
    %488 = arith.mulf %487, %486 : vector<32x64xf32>
    %489 = arith.addf %484, %488 : vector<32x64xf32>
    %490 = vector.extract_strided_slice %423 {offsets = [0, 13], sizes = [32, 1], strides = [1, 1]} : vector<32x64xf32> to vector<32x1xf32>
    %c0_145 = arith.constant 0 : index
    %c832_146 = arith.constant 832 : index
    %491 = vector.load %arg17[%c0_145, %c832_146] : memref<32x4096xf32, #tpu.memory_space<vmem>>, vector<32x64xf32>
    %492 = vector.broadcast %490 : vector<32x1xf32> to vector<32x64xf32>
    %493 = arith.mulf %492, %491 : vector<32x64xf32>
    %494 = arith.addf %489, %493 : vector<32x64xf32>
    %495 = vector.extract_strided_slice %423 {offsets = [0, 14], sizes = [32, 1], strides = [1, 1]} : vector<32x64xf32> to vector<32x1xf32>
    %c0_147 = arith.constant 0 : index
    %c896_148 = arith.constant 896 : index
    %496 = vector.load %arg17[%c0_147, %c896_148] : memref<32x4096xf32, #tpu.memory_space<vmem>>, vector<32x64xf32>
    %497 = vector.broadcast %495 : vector<32x1xf32> to vector<32x64xf32>
    %498 = arith.mulf %497, %496 : vector<32x64xf32>
    %499 = arith.addf %494, %498 : vector<32x64xf32>
    %500 = vector.extract_strided_slice %423 {offsets = [0, 15], sizes = [32, 1], strides = [1, 1]} : vector<32x64xf32> to vector<32x1xf32>
    %c0_149 = arith.constant 0 : index
    %c960_150 = arith.constant 960 : index
    %501 = vector.load %arg17[%c0_149, %c960_150] : memref<32x4096xf32, #tpu.memory_space<vmem>>, vector<32x64xf32>
    %502 = vector.broadcast %500 : vector<32x1xf32> to vector<32x64xf32>
    %503 = arith.mulf %502, %501 : vector<32x64xf32>
    %504 = arith.addf %499, %503 : vector<32x64xf32>
    %505 = vector.extract_strided_slice %423 {offsets = [0, 16], sizes = [32, 1], strides = [1, 1]} : vector<32x64xf32> to vector<32x1xf32>
    %c0_151 = arith.constant 0 : index
    %c1024_152 = arith.constant 1024 : index
    %506 = vector.load %arg17[%c0_151, %c1024_152] : memref<32x4096xf32, #tpu.memory_space<vmem>>, vector<32x64xf32>
    %507 = vector.broadcast %505 : vector<32x1xf32> to vector<32x64xf32>
    %508 = arith.mulf %507, %506 : vector<32x64xf32>
    %509 = arith.addf %504, %508 : vector<32x64xf32>
    %510 = vector.extract_strided_slice %423 {offsets = [0, 17], sizes = [32, 1], strides = [1, 1]} : vector<32x64xf32> to vector<32x1xf32>
    %c0_153 = arith.constant 0 : index
    %c1088_154 = arith.constant 1088 : index
    %511 = vector.load %arg17[%c0_153, %c1088_154] : memref<32x4096xf32, #tpu.memory_space<vmem>>, vector<32x64xf32>
    %512 = vector.broadcast %510 : vector<32x1xf32> to vector<32x64xf32>
    %513 = arith.mulf %512, %511 : vector<32x64xf32>
    %514 = arith.addf %509, %513 : vector<32x64xf32>
    %515 = vector.extract_strided_slice %423 {offsets = [0, 18], sizes = [32, 1], strides = [1, 1]} : vector<32x64xf32> to vector<32x1xf32>
    %c0_155 = arith.constant 0 : index
    %c1152_156 = arith.constant 1152 : index
    %516 = vector.load %arg17[%c0_155, %c1152_156] : memref<32x4096xf32, #tpu.memory_space<vmem>>, vector<32x64xf32>
    %517 = vector.broadcast %515 : vector<32x1xf32> to vector<32x64xf32>
    %518 = arith.mulf %517, %516 : vector<32x64xf32>
    %519 = arith.addf %514, %518 : vector<32x64xf32>
    %520 = vector.extract_strided_slice %423 {offsets = [0, 19], sizes = [32, 1], strides = [1, 1]} : vector<32x64xf32> to vector<32x1xf32>
    %c0_157 = arith.constant 0 : index
    %c1216_158 = arith.constant 1216 : index
    %521 = vector.load %arg17[%c0_157, %c1216_158] : memref<32x4096xf32, #tpu.memory_space<vmem>>, vector<32x64xf32>
    %522 = vector.broadcast %520 : vector<32x1xf32> to vector<32x64xf32>
    %523 = arith.mulf %522, %521 : vector<32x64xf32>
    %524 = arith.addf %519, %523 : vector<32x64xf32>
    %525 = vector.extract_strided_slice %423 {offsets = [0, 20], sizes = [32, 1], strides = [1, 1]} : vector<32x64xf32> to vector<32x1xf32>
    %c0_159 = arith.constant 0 : index
    %c1280_160 = arith.constant 1280 : index
    %526 = vector.load %arg17[%c0_159, %c1280_160] : memref<32x4096xf32, #tpu.memory_space<vmem>>, vector<32x64xf32>
    %527 = vector.broadcast %525 : vector<32x1xf32> to vector<32x64xf32>
    %528 = arith.mulf %527, %526 : vector<32x64xf32>
    %529 = arith.addf %524, %528 : vector<32x64xf32>
    %530 = vector.extract_strided_slice %423 {offsets = [0, 21], sizes = [32, 1], strides = [1, 1]} : vector<32x64xf32> to vector<32x1xf32>
    %c0_161 = arith.constant 0 : index
    %c1344_162 = arith.constant 1344 : index
    %531 = vector.load %arg17[%c0_161, %c1344_162] : memref<32x4096xf32, #tpu.memory_space<vmem>>, vector<32x64xf32>
    %532 = vector.broadcast %530 : vector<32x1xf32> to vector<32x64xf32>
    %533 = arith.mulf %532, %531 : vector<32x64xf32>
    %534 = arith.addf %529, %533 : vector<32x64xf32>
    %535 = vector.extract_strided_slice %423 {offsets = [0, 22], sizes = [32, 1], strides = [1, 1]} : vector<32x64xf32> to vector<32x1xf32>
    %c0_163 = arith.constant 0 : index
    %c1408_164 = arith.constant 1408 : index
    %536 = vector.load %arg17[%c0_163, %c1408_164] : memref<32x4096xf32, #tpu.memory_space<vmem>>, vector<32x64xf32>
    %537 = vector.broadcast %535 : vector<32x1xf32> to vector<32x64xf32>
    %538 = arith.mulf %537, %536 : vector<32x64xf32>
    %539 = arith.addf %534, %538 : vector<32x64xf32>
    %540 = vector.extract_strided_slice %423 {offsets = [0, 23], sizes = [32, 1], strides = [1, 1]} : vector<32x64xf32> to vector<32x1xf32>
    %c0_165 = arith.constant 0 : index
    %c1472_166 = arith.constant 1472 : index
    %541 = vector.load %arg17[%c0_165, %c1472_166] : memref<32x4096xf32, #tpu.memory_space<vmem>>, vector<32x64xf32>
    %542 = vector.broadcast %540 : vector<32x1xf32> to vector<32x64xf32>
    %543 = arith.mulf %542, %541 : vector<32x64xf32>
    %544 = arith.addf %539, %543 : vector<32x64xf32>
    %545 = vector.extract_strided_slice %423 {offsets = [0, 24], sizes = [32, 1], strides = [1, 1]} : vector<32x64xf32> to vector<32x1xf32>
    %c0_167 = arith.constant 0 : index
    %c1536_168 = arith.constant 1536 : index
    %546 = vector.load %arg17[%c0_167, %c1536_168] : memref<32x4096xf32, #tpu.memory_space<vmem>>, vector<32x64xf32>
    %547 = vector.broadcast %545 : vector<32x1xf32> to vector<32x64xf32>
    %548 = arith.mulf %547, %546 : vector<32x64xf32>
    %549 = arith.addf %544, %548 : vector<32x64xf32>
    %550 = vector.extract_strided_slice %423 {offsets = [0, 25], sizes = [32, 1], strides = [1, 1]} : vector<32x64xf32> to vector<32x1xf32>
    %c0_169 = arith.constant 0 : index
    %c1600_170 = arith.constant 1600 : index
    %551 = vector.load %arg17[%c0_169, %c1600_170] : memref<32x4096xf32, #tpu.memory_space<vmem>>, vector<32x64xf32>
    %552 = vector.broadcast %550 : vector<32x1xf32> to vector<32x64xf32>
    %553 = arith.mulf %552, %551 : vector<32x64xf32>
    %554 = arith.addf %549, %553 : vector<32x64xf32>
    %555 = vector.extract_strided_slice %423 {offsets = [0, 26], sizes = [32, 1], strides = [1, 1]} : vector<32x64xf32> to vector<32x1xf32>
    %c0_171 = arith.constant 0 : index
    %c1664_172 = arith.constant 1664 : index
    %556 = vector.load %arg17[%c0_171, %c1664_172] : memref<32x4096xf32, #tpu.memory_space<vmem>>, vector<32x64xf32>
    %557 = vector.broadcast %555 : vector<32x1xf32> to vector<32x64xf32>
    %558 = arith.mulf %557, %556 : vector<32x64xf32>
    %559 = arith.addf %554, %558 : vector<32x64xf32>
    %560 = vector.extract_strided_slice %423 {offsets = [0, 27], sizes = [32, 1], strides = [1, 1]} : vector<32x64xf32> to vector<32x1xf32>
    %c0_173 = arith.constant 0 : index
    %c1728_174 = arith.constant 1728 : index
    %561 = vector.load %arg17[%c0_173, %c1728_174] : memref<32x4096xf32, #tpu.memory_space<vmem>>, vector<32x64xf32>
    %562 = vector.broadcast %560 : vector<32x1xf32> to vector<32x64xf32>
    %563 = arith.mulf %562, %561 : vector<32x64xf32>
    %564 = arith.addf %559, %563 : vector<32x64xf32>
    %565 = vector.extract_strided_slice %423 {offsets = [0, 28], sizes = [32, 1], strides = [1, 1]} : vector<32x64xf32> to vector<32x1xf32>
    %c0_175 = arith.constant 0 : index
    %c1792_176 = arith.constant 1792 : index
    %566 = vector.load %arg17[%c0_175, %c1792_176] : memref<32x4096xf32, #tpu.memory_space<vmem>>, vector<32x64xf32>
    %567 = vector.broadcast %565 : vector<32x1xf32> to vector<32x64xf32>
    %568 = arith.mulf %567, %566 : vector<32x64xf32>
    %569 = arith.addf %564, %568 : vector<32x64xf32>
    %570 = vector.extract_strided_slice %423 {offsets = [0, 29], sizes = [32, 1], strides = [1, 1]} : vector<32x64xf32> to vector<32x1xf32>
    %c0_177 = arith.constant 0 : index
    %c1856_178 = arith.constant 1856 : index
    %571 = vector.load %arg17[%c0_177, %c1856_178] : memref<32x4096xf32, #tpu.memory_space<vmem>>, vector<32x64xf32>
    %572 = vector.broadcast %570 : vector<32x1xf32> to vector<32x64xf32>
    %573 = arith.mulf %572, %571 : vector<32x64xf32>
    %574 = arith.addf %569, %573 : vector<32x64xf32>
    %575 = vector.extract_strided_slice %423 {offsets = [0, 30], sizes = [32, 1], strides = [1, 1]} : vector<32x64xf32> to vector<32x1xf32>
    %c0_179 = arith.constant 0 : index
    %c1920_180 = arith.constant 1920 : index
    %576 = vector.load %arg17[%c0_179, %c1920_180] : memref<32x4096xf32, #tpu.memory_space<vmem>>, vector<32x64xf32>
    %577 = vector.broadcast %575 : vector<32x1xf32> to vector<32x64xf32>
    %578 = arith.mulf %577, %576 : vector<32x64xf32>
    %579 = arith.addf %574, %578 : vector<32x64xf32>
    %580 = vector.extract_strided_slice %423 {offsets = [0, 31], sizes = [32, 1], strides = [1, 1]} : vector<32x64xf32> to vector<32x1xf32>
    %c0_181 = arith.constant 0 : index
    %c1984_182 = arith.constant 1984 : index
    %581 = vector.load %arg17[%c0_181, %c1984_182] : memref<32x4096xf32, #tpu.memory_space<vmem>>, vector<32x64xf32>
    %582 = vector.broadcast %580 : vector<32x1xf32> to vector<32x64xf32>
    %583 = arith.mulf %582, %581 : vector<32x64xf32>
    %584 = arith.addf %579, %583 : vector<32x64xf32>
    %585 = vector.extract_strided_slice %423 {offsets = [0, 32], sizes = [32, 1], strides = [1, 1]} : vector<32x64xf32> to vector<32x1xf32>
    %c0_183 = arith.constant 0 : index
    %c2048_184 = arith.constant 2048 : index
    %586 = vector.load %arg17[%c0_183, %c2048_184] : memref<32x4096xf32, #tpu.memory_space<vmem>>, vector<32x64xf32>
    %587 = vector.broadcast %585 : vector<32x1xf32> to vector<32x64xf32>
    %588 = arith.mulf %587, %586 : vector<32x64xf32>
    %589 = arith.addf %584, %588 : vector<32x64xf32>
    %590 = vector.extract_strided_slice %423 {offsets = [0, 33], sizes = [32, 1], strides = [1, 1]} : vector<32x64xf32> to vector<32x1xf32>
    %c0_185 = arith.constant 0 : index
    %c2112_186 = arith.constant 2112 : index
    %591 = vector.load %arg17[%c0_185, %c2112_186] : memref<32x4096xf32, #tpu.memory_space<vmem>>, vector<32x64xf32>
    %592 = vector.broadcast %590 : vector<32x1xf32> to vector<32x64xf32>
    %593 = arith.mulf %592, %591 : vector<32x64xf32>
    %594 = arith.addf %589, %593 : vector<32x64xf32>
    %595 = vector.extract_strided_slice %423 {offsets = [0, 34], sizes = [32, 1], strides = [1, 1]} : vector<32x64xf32> to vector<32x1xf32>
    %c0_187 = arith.constant 0 : index
    %c2176_188 = arith.constant 2176 : index
    %596 = vector.load %arg17[%c0_187, %c2176_188] : memref<32x4096xf32, #tpu.memory_space<vmem>>, vector<32x64xf32>
    %597 = vector.broadcast %595 : vector<32x1xf32> to vector<32x64xf32>
    %598 = arith.mulf %597, %596 : vector<32x64xf32>
    %599 = arith.addf %594, %598 : vector<32x64xf32>
    %600 = vector.extract_strided_slice %423 {offsets = [0, 35], sizes = [32, 1], strides = [1, 1]} : vector<32x64xf32> to vector<32x1xf32>
    %c0_189 = arith.constant 0 : index
    %c2240_190 = arith.constant 2240 : index
    %601 = vector.load %arg17[%c0_189, %c2240_190] : memref<32x4096xf32, #tpu.memory_space<vmem>>, vector<32x64xf32>
    %602 = vector.broadcast %600 : vector<32x1xf32> to vector<32x64xf32>
    %603 = arith.mulf %602, %601 : vector<32x64xf32>
    %604 = arith.addf %599, %603 : vector<32x64xf32>
    %605 = vector.extract_strided_slice %423 {offsets = [0, 36], sizes = [32, 1], strides = [1, 1]} : vector<32x64xf32> to vector<32x1xf32>
    %c0_191 = arith.constant 0 : index
    %c2304_192 = arith.constant 2304 : index
    %606 = vector.load %arg17[%c0_191, %c2304_192] : memref<32x4096xf32, #tpu.memory_space<vmem>>, vector<32x64xf32>
    %607 = vector.broadcast %605 : vector<32x1xf32> to vector<32x64xf32>
    %608 = arith.mulf %607, %606 : vector<32x64xf32>
    %609 = arith.addf %604, %608 : vector<32x64xf32>
    %610 = vector.extract_strided_slice %423 {offsets = [0, 37], sizes = [32, 1], strides = [1, 1]} : vector<32x64xf32> to vector<32x1xf32>
    %c0_193 = arith.constant 0 : index
    %c2368_194 = arith.constant 2368 : index
    %611 = vector.load %arg17[%c0_193, %c2368_194] : memref<32x4096xf32, #tpu.memory_space<vmem>>, vector<32x64xf32>
    %612 = vector.broadcast %610 : vector<32x1xf32> to vector<32x64xf32>
    %613 = arith.mulf %612, %611 : vector<32x64xf32>
    %614 = arith.addf %609, %613 : vector<32x64xf32>
    %615 = vector.extract_strided_slice %423 {offsets = [0, 38], sizes = [32, 1], strides = [1, 1]} : vector<32x64xf32> to vector<32x1xf32>
    %c0_195 = arith.constant 0 : index
    %c2432_196 = arith.constant 2432 : index
    %616 = vector.load %arg17[%c0_195, %c2432_196] : memref<32x4096xf32, #tpu.memory_space<vmem>>, vector<32x64xf32>
    %617 = vector.broadcast %615 : vector<32x1xf32> to vector<32x64xf32>
    %618 = arith.mulf %617, %616 : vector<32x64xf32>
    %619 = arith.addf %614, %618 : vector<32x64xf32>
    %620 = vector.extract_strided_slice %423 {offsets = [0, 39], sizes = [32, 1], strides = [1, 1]} : vector<32x64xf32> to vector<32x1xf32>
    %c0_197 = arith.constant 0 : index
    %c2496_198 = arith.constant 2496 : index
    %621 = vector.load %arg17[%c0_197, %c2496_198] : memref<32x4096xf32, #tpu.memory_space<vmem>>, vector<32x64xf32>
    %622 = vector.broadcast %620 : vector<32x1xf32> to vector<32x64xf32>
    %623 = arith.mulf %622, %621 : vector<32x64xf32>
    %624 = arith.addf %619, %623 : vector<32x64xf32>
    %625 = vector.extract_strided_slice %423 {offsets = [0, 40], sizes = [32, 1], strides = [1, 1]} : vector<32x64xf32> to vector<32x1xf32>
    %c0_199 = arith.constant 0 : index
    %c2560_200 = arith.constant 2560 : index
    %626 = vector.load %arg17[%c0_199, %c2560_200] : memref<32x4096xf32, #tpu.memory_space<vmem>>, vector<32x64xf32>
    %627 = vector.broadcast %625 : vector<32x1xf32> to vector<32x64xf32>
    %628 = arith.mulf %627, %626 : vector<32x64xf32>
    %629 = arith.addf %624, %628 : vector<32x64xf32>
    %630 = vector.extract_strided_slice %423 {offsets = [0, 41], sizes = [32, 1], strides = [1, 1]} : vector<32x64xf32> to vector<32x1xf32>
    %c0_201 = arith.constant 0 : index
    %c2624_202 = arith.constant 2624 : index
    %631 = vector.load %arg17[%c0_201, %c2624_202] : memref<32x4096xf32, #tpu.memory_space<vmem>>, vector<32x64xf32>
    %632 = vector.broadcast %630 : vector<32x1xf32> to vector<32x64xf32>
    %633 = arith.mulf %632, %631 : vector<32x64xf32>
    %634 = arith.addf %629, %633 : vector<32x64xf32>
    %635 = vector.extract_strided_slice %423 {offsets = [0, 42], sizes = [32, 1], strides = [1, 1]} : vector<32x64xf32> to vector<32x1xf32>
    %c0_203 = arith.constant 0 : index
    %c2688_204 = arith.constant 2688 : index
    %636 = vector.load %arg17[%c0_203, %c2688_204] : memref<32x4096xf32, #tpu.memory_space<vmem>>, vector<32x64xf32>
    %637 = vector.broadcast %635 : vector<32x1xf32> to vector<32x64xf32>
    %638 = arith.mulf %637, %636 : vector<32x64xf32>
    %639 = arith.addf %634, %638 : vector<32x64xf32>
    %640 = vector.extract_strided_slice %423 {offsets = [0, 43], sizes = [32, 1], strides = [1, 1]} : vector<32x64xf32> to vector<32x1xf32>
    %c0_205 = arith.constant 0 : index
    %c2752_206 = arith.constant 2752 : index
    %641 = vector.load %arg17[%c0_205, %c2752_206] : memref<32x4096xf32, #tpu.memory_space<vmem>>, vector<32x64xf32>
    %642 = vector.broadcast %640 : vector<32x1xf32> to vector<32x64xf32>
    %643 = arith.mulf %642, %641 : vector<32x64xf32>
    %644 = arith.addf %639, %643 : vector<32x64xf32>
    %645 = vector.extract_strided_slice %423 {offsets = [0, 44], sizes = [32, 1], strides = [1, 1]} : vector<32x64xf32> to vector<32x1xf32>
    %c0_207 = arith.constant 0 : index
    %c2816_208 = arith.constant 2816 : index
    %646 = vector.load %arg17[%c0_207, %c2816_208] : memref<32x4096xf32, #tpu.memory_space<vmem>>, vector<32x64xf32>
    %647 = vector.broadcast %645 : vector<32x1xf32> to vector<32x64xf32>
    %648 = arith.mulf %647, %646 : vector<32x64xf32>
    %649 = arith.addf %644, %648 : vector<32x64xf32>
    %650 = vector.extract_strided_slice %423 {offsets = [0, 45], sizes = [32, 1], strides = [1, 1]} : vector<32x64xf32> to vector<32x1xf32>
    %c0_209 = arith.constant 0 : index
    %c2880_210 = arith.constant 2880 : index
    %651 = vector.load %arg17[%c0_209, %c2880_210] : memref<32x4096xf32, #tpu.memory_space<vmem>>, vector<32x64xf32>
    %652 = vector.broadcast %650 : vector<32x1xf32> to vector<32x64xf32>
    %653 = arith.mulf %652, %651 : vector<32x64xf32>
    %654 = arith.addf %649, %653 : vector<32x64xf32>
    %655 = vector.extract_strided_slice %423 {offsets = [0, 46], sizes = [32, 1], strides = [1, 1]} : vector<32x64xf32> to vector<32x1xf32>
    %c0_211 = arith.constant 0 : index
    %c2944_212 = arith.constant 2944 : index
    %656 = vector.load %arg17[%c0_211, %c2944_212] : memref<32x4096xf32, #tpu.memory_space<vmem>>, vector<32x64xf32>
    %657 = vector.broadcast %655 : vector<32x1xf32> to vector<32x64xf32>
    %658 = arith.mulf %657, %656 : vector<32x64xf32>
    %659 = arith.addf %654, %658 : vector<32x64xf32>
    %660 = vector.extract_strided_slice %423 {offsets = [0, 47], sizes = [32, 1], strides = [1, 1]} : vector<32x64xf32> to vector<32x1xf32>
    %c0_213 = arith.constant 0 : index
    %c3008_214 = arith.constant 3008 : index
    %661 = vector.load %arg17[%c0_213, %c3008_214] : memref<32x4096xf32, #tpu.memory_space<vmem>>, vector<32x64xf32>
    %662 = vector.broadcast %660 : vector<32x1xf32> to vector<32x64xf32>
    %663 = arith.mulf %662, %661 : vector<32x64xf32>
    %664 = arith.addf %659, %663 : vector<32x64xf32>
    %665 = vector.extract_strided_slice %423 {offsets = [0, 48], sizes = [32, 1], strides = [1, 1]} : vector<32x64xf32> to vector<32x1xf32>
    %c0_215 = arith.constant 0 : index
    %c3072_216 = arith.constant 3072 : index
    %666 = vector.load %arg17[%c0_215, %c3072_216] : memref<32x4096xf32, #tpu.memory_space<vmem>>, vector<32x64xf32>
    %667 = vector.broadcast %665 : vector<32x1xf32> to vector<32x64xf32>
    %668 = arith.mulf %667, %666 : vector<32x64xf32>
    %669 = arith.addf %664, %668 : vector<32x64xf32>
    %670 = vector.extract_strided_slice %423 {offsets = [0, 49], sizes = [32, 1], strides = [1, 1]} : vector<32x64xf32> to vector<32x1xf32>
    %c0_217 = arith.constant 0 : index
    %c3136_218 = arith.constant 3136 : index
    %671 = vector.load %arg17[%c0_217, %c3136_218] : memref<32x4096xf32, #tpu.memory_space<vmem>>, vector<32x64xf32>
    %672 = vector.broadcast %670 : vector<32x1xf32> to vector<32x64xf32>
    %673 = arith.mulf %672, %671 : vector<32x64xf32>
    %674 = arith.addf %669, %673 : vector<32x64xf32>
    %675 = vector.extract_strided_slice %423 {offsets = [0, 50], sizes = [32, 1], strides = [1, 1]} : vector<32x64xf32> to vector<32x1xf32>
    %c0_219 = arith.constant 0 : index
    %c3200_220 = arith.constant 3200 : index
    %676 = vector.load %arg17[%c0_219, %c3200_220] : memref<32x4096xf32, #tpu.memory_space<vmem>>, vector<32x64xf32>
    %677 = vector.broadcast %675 : vector<32x1xf32> to vector<32x64xf32>
    %678 = arith.mulf %677, %676 : vector<32x64xf32>
    %679 = arith.addf %674, %678 : vector<32x64xf32>
    %680 = vector.extract_strided_slice %423 {offsets = [0, 51], sizes = [32, 1], strides = [1, 1]} : vector<32x64xf32> to vector<32x1xf32>
    %c0_221 = arith.constant 0 : index
    %c3264_222 = arith.constant 3264 : index
    %681 = vector.load %arg17[%c0_221, %c3264_222] : memref<32x4096xf32, #tpu.memory_space<vmem>>, vector<32x64xf32>
    %682 = vector.broadcast %680 : vector<32x1xf32> to vector<32x64xf32>
    %683 = arith.mulf %682, %681 : vector<32x64xf32>
    %684 = arith.addf %679, %683 : vector<32x64xf32>
    %685 = vector.extract_strided_slice %423 {offsets = [0, 52], sizes = [32, 1], strides = [1, 1]} : vector<32x64xf32> to vector<32x1xf32>
    %c0_223 = arith.constant 0 : index
    %c3328_224 = arith.constant 3328 : index
    %686 = vector.load %arg17[%c0_223, %c3328_224] : memref<32x4096xf32, #tpu.memory_space<vmem>>, vector<32x64xf32>
    %687 = vector.broadcast %685 : vector<32x1xf32> to vector<32x64xf32>
    %688 = arith.mulf %687, %686 : vector<32x64xf32>
    %689 = arith.addf %684, %688 : vector<32x64xf32>
    %690 = vector.extract_strided_slice %423 {offsets = [0, 53], sizes = [32, 1], strides = [1, 1]} : vector<32x64xf32> to vector<32x1xf32>
    %c0_225 = arith.constant 0 : index
    %c3392_226 = arith.constant 3392 : index
    %691 = vector.load %arg17[%c0_225, %c3392_226] : memref<32x4096xf32, #tpu.memory_space<vmem>>, vector<32x64xf32>
    %692 = vector.broadcast %690 : vector<32x1xf32> to vector<32x64xf32>
    %693 = arith.mulf %692, %691 : vector<32x64xf32>
    %694 = arith.addf %689, %693 : vector<32x64xf32>
    %695 = vector.extract_strided_slice %423 {offsets = [0, 54], sizes = [32, 1], strides = [1, 1]} : vector<32x64xf32> to vector<32x1xf32>
    %c0_227 = arith.constant 0 : index
    %c3456_228 = arith.constant 3456 : index
    %696 = vector.load %arg17[%c0_227, %c3456_228] : memref<32x4096xf32, #tpu.memory_space<vmem>>, vector<32x64xf32>
    %697 = vector.broadcast %695 : vector<32x1xf32> to vector<32x64xf32>
    %698 = arith.mulf %697, %696 : vector<32x64xf32>
    %699 = arith.addf %694, %698 : vector<32x64xf32>
    %700 = vector.extract_strided_slice %423 {offsets = [0, 55], sizes = [32, 1], strides = [1, 1]} : vector<32x64xf32> to vector<32x1xf32>
    %c0_229 = arith.constant 0 : index
    %c3520_230 = arith.constant 3520 : index
    %701 = vector.load %arg17[%c0_229, %c3520_230] : memref<32x4096xf32, #tpu.memory_space<vmem>>, vector<32x64xf32>
    %702 = vector.broadcast %700 : vector<32x1xf32> to vector<32x64xf32>
    %703 = arith.mulf %702, %701 : vector<32x64xf32>
    %704 = arith.addf %699, %703 : vector<32x64xf32>
    %705 = vector.extract_strided_slice %423 {offsets = [0, 56], sizes = [32, 1], strides = [1, 1]} : vector<32x64xf32> to vector<32x1xf32>
    %c0_231 = arith.constant 0 : index
    %c3584_232 = arith.constant 3584 : index
    %706 = vector.load %arg17[%c0_231, %c3584_232] : memref<32x4096xf32, #tpu.memory_space<vmem>>, vector<32x64xf32>
    %707 = vector.broadcast %705 : vector<32x1xf32> to vector<32x64xf32>
    %708 = arith.mulf %707, %706 : vector<32x64xf32>
    %709 = arith.addf %704, %708 : vector<32x64xf32>
    %710 = vector.extract_strided_slice %423 {offsets = [0, 57], sizes = [32, 1], strides = [1, 1]} : vector<32x64xf32> to vector<32x1xf32>
    %c0_233 = arith.constant 0 : index
    %c3648_234 = arith.constant 3648 : index
    %711 = vector.load %arg17[%c0_233, %c3648_234] : memref<32x4096xf32, #tpu.memory_space<vmem>>, vector<32x64xf32>
    %712 = vector.broadcast %710 : vector<32x1xf32> to vector<32x64xf32>
    %713 = arith.mulf %712, %711 : vector<32x64xf32>
    %714 = arith.addf %709, %713 : vector<32x64xf32>
    %715 = vector.extract_strided_slice %423 {offsets = [0, 58], sizes = [32, 1], strides = [1, 1]} : vector<32x64xf32> to vector<32x1xf32>
    %c0_235 = arith.constant 0 : index
    %c3712_236 = arith.constant 3712 : index
    %716 = vector.load %arg17[%c0_235, %c3712_236] : memref<32x4096xf32, #tpu.memory_space<vmem>>, vector<32x64xf32>
    %717 = vector.broadcast %715 : vector<32x1xf32> to vector<32x64xf32>
    %718 = arith.mulf %717, %716 : vector<32x64xf32>
    %719 = arith.addf %714, %718 : vector<32x64xf32>
    %720 = vector.extract_strided_slice %423 {offsets = [0, 59], sizes = [32, 1], strides = [1, 1]} : vector<32x64xf32> to vector<32x1xf32>
    %c0_237 = arith.constant 0 : index
    %c3776_238 = arith.constant 3776 : index
    %721 = vector.load %arg17[%c0_237, %c3776_238] : memref<32x4096xf32, #tpu.memory_space<vmem>>, vector<32x64xf32>
    %722 = vector.broadcast %720 : vector<32x1xf32> to vector<32x64xf32>
    %723 = arith.mulf %722, %721 : vector<32x64xf32>
    %724 = arith.addf %719, %723 : vector<32x64xf32>
    %725 = vector.extract_strided_slice %423 {offsets = [0, 60], sizes = [32, 1], strides = [1, 1]} : vector<32x64xf32> to vector<32x1xf32>
    %c0_239 = arith.constant 0 : index
    %c3840_240 = arith.constant 3840 : index
    %726 = vector.load %arg17[%c0_239, %c3840_240] : memref<32x4096xf32, #tpu.memory_space<vmem>>, vector<32x64xf32>
    %727 = vector.broadcast %725 : vector<32x1xf32> to vector<32x64xf32>
    %728 = arith.mulf %727, %726 : vector<32x64xf32>
    %729 = arith.addf %724, %728 : vector<32x64xf32>
    %730 = vector.extract_strided_slice %423 {offsets = [0, 61], sizes = [32, 1], strides = [1, 1]} : vector<32x64xf32> to vector<32x1xf32>
    %c0_241 = arith.constant 0 : index
    %c3904_242 = arith.constant 3904 : index
    %731 = vector.load %arg17[%c0_241, %c3904_242] : memref<32x4096xf32, #tpu.memory_space<vmem>>, vector<32x64xf32>
    %732 = vector.broadcast %730 : vector<32x1xf32> to vector<32x64xf32>
    %733 = arith.mulf %732, %731 : vector<32x64xf32>
    %734 = arith.addf %729, %733 : vector<32x64xf32>
    %735 = vector.extract_strided_slice %423 {offsets = [0, 62], sizes = [32, 1], strides = [1, 1]} : vector<32x64xf32> to vector<32x1xf32>
    %c0_243 = arith.constant 0 : index
    %c3968_244 = arith.constant 3968 : index
    %736 = vector.load %arg17[%c0_243, %c3968_244] : memref<32x4096xf32, #tpu.memory_space<vmem>>, vector<32x64xf32>
    %737 = vector.broadcast %735 : vector<32x1xf32> to vector<32x64xf32>
    %738 = arith.mulf %737, %736 : vector<32x64xf32>
    %739 = arith.addf %734, %738 : vector<32x64xf32>
    %740 = vector.extract_strided_slice %423 {offsets = [0, 63], sizes = [32, 1], strides = [1, 1]} : vector<32x64xf32> to vector<32x1xf32>
    %c0_245 = arith.constant 0 : index
    %c4032_246 = arith.constant 4032 : index
    %741 = vector.load %arg17[%c0_245, %c4032_246] : memref<32x4096xf32, #tpu.memory_space<vmem>>, vector<32x64xf32>
    %742 = vector.broadcast %740 : vector<32x1xf32> to vector<32x64xf32>
    %743 = arith.mulf %742, %741 : vector<32x64xf32>
    %744 = arith.addf %739, %743 : vector<32x64xf32>
    %745 = arith.truncf %744 : vector<32x64xf32> to vector<32x64xbf16>
    %cst_247 = arith.constant dense<0.000000e+00> : vector<16x64xf32>
    %746 = tpu.matmul %23, %745, %cst_247 {dimension_numbers = #tpu.dot_dimension_numbers<[1], [0], [0], [1], [0, 0, 1, 1], [], []>} : vector<16x32xbf16>, vector<32x64xbf16>, vector<16x64xf32> -> vector<16x64xf32>
    %747 = vector.broadcast %22 : vector<16x1xf32> to vector<16x64xf32>
    %748 = arith.mulf %747, %746 : vector<16x64xf32>
    %cst_248 = arith.constant dense<0.000000e+00> : vector<16x64xf32>
    %749 = tpu.matmul %422, %49, %cst_248 {dimension_numbers = #tpu.dot_dimension_numbers<[1], [0], [0], [1], [0, 0, 1, 1], [], []>} : vector<16x64xbf16>, vector<64x64xbf16>, vector<16x64xf32> -> vector<16x64xf32>
    %750 = arith.addf %748, %749 : vector<16x64xf32>
    %751 = vector.broadcast %50 : vector<1x64xf32> to vector<16x64xf32>
    %752 = arith.addf %750, %751 : vector<16x64xf32>
    %cst_249 = arith.constant 0.000000e+00 : f32
    %753 = vector.broadcast %cst_249 : f32 to vector<16x64xf32>
    %754 = arith.maximumf %752, %753 : vector<16x64xf32>
    %755 = arith.truncf %754 : vector<16x64xf32> to vector<16x64xbf16>
    %cst_250 = arith.constant dense<0.000000e+00> : vector<16x384xf32>
    %756 = tpu.matmul %755, %51, %cst_250 {dimension_numbers = #tpu.dot_dimension_numbers<[1], [0], [0], [1], [0, 0, 1, 1], [], []>} : vector<16x64xbf16>, vector<64x384xbf16>, vector<16x384xf32> -> vector<16x384xf32>
    %757 = vector.broadcast %53 : vector<1x384xf32> to vector<16x384xf32>
    %758 = arith.addf %756, %757 : vector<16x384xf32>
    %759 = arith.truncf %421 : vector<16x64xf32> to vector<16x64xbf16>
    %cst_251 = arith.constant dense<0.000000e+00> : vector<16x384xf32>
    %760 = tpu.matmul %759, %52, %cst_251 {dimension_numbers = #tpu.dot_dimension_numbers<[1], [0], [0], [1], [0, 0, 1, 1], [], []>} : vector<16x64xbf16>, vector<64x384xbf16>, vector<16x384xf32> -> vector<16x384xf32>
    %761 = vector.broadcast %54 : vector<1x384xf32> to vector<16x384xf32>
    %762 = arith.addf %760, %761 : vector<16x384xf32>
    %763 = vector.extract_strided_slice %758 {offsets = [0, 0], sizes = [16, 64], strides = [1, 1]} : vector<16x384xf32> to vector<16x64xf32>
    %764 = vector.extract_strided_slice %762 {offsets = [0, 0], sizes = [16, 64], strides = [1, 1]} : vector<16x384xf32> to vector<16x64xf32>
    %765 = arith.addf %763, %764 : vector<16x64xf32>
    %766 = arith.negf %765 : vector<16x64xf32>
    %767 = math.exp %766 : vector<16x64xf32>
    %cst_252 = arith.constant 1.000000e+00 : f32
    %768 = vector.broadcast %cst_252 : f32 to vector<16x64xf32>
    %769 = arith.addf %768, %767 : vector<16x64xf32>
    %770 = arith.divf %768, %769 : vector<16x64xf32>
    %771 = vector.extract_strided_slice %758 {offsets = [0, 128], sizes = [16, 64], strides = [1, 1]} : vector<16x384xf32> to vector<16x64xf32>
    %772 = vector.extract_strided_slice %762 {offsets = [0, 128], sizes = [16, 64], strides = [1, 1]} : vector<16x384xf32> to vector<16x64xf32>
    %773 = arith.addf %771, %772 : vector<16x64xf32>
    %774 = arith.negf %773 : vector<16x64xf32>
    %775 = math.exp %774 : vector<16x64xf32>
    %cst_253 = arith.constant 1.000000e+00 : f32
    %776 = vector.broadcast %cst_253 : f32 to vector<16x64xf32>
    %777 = arith.addf %776, %775 : vector<16x64xf32>
    %778 = arith.divf %776, %777 : vector<16x64xf32>
    %779 = vector.extract_strided_slice %758 {offsets = [0, 256], sizes = [16, 64], strides = [1, 1]} : vector<16x384xf32> to vector<16x64xf32>
    %780 = vector.extract_strided_slice %762 {offsets = [0, 256], sizes = [16, 64], strides = [1, 1]} : vector<16x384xf32> to vector<16x64xf32>
    %781 = arith.mulf %770, %780 : vector<16x64xf32>
    %782 = arith.addf %779, %781 : vector<16x64xf32>
    %783 = math.tanh %782 : vector<16x64xf32>
    %cst_254 = arith.constant 1.000000e+00 : f32
    %784 = vector.broadcast %cst_254 : f32 to vector<16x64xf32>
    %785 = arith.subf %784, %778 : vector<16x64xf32>
    %786 = arith.mulf %785, %783 : vector<16x64xf32>
    %787 = arith.mulf %778, %421 : vector<16x64xf32>
    %788 = arith.addf %786, %787 : vector<16x64xf32>
    %789 = arith.truncf %788 : vector<16x64xf32> to vector<16x64xbf16>
    %cst_255 = arith.constant dense<0.000000e+00> : vector<32x64xf32>
    %790 = tpu.matmul %7, %789, %cst_255 {dimension_numbers = #tpu.dot_dimension_numbers<[1], [0], [0], [1], [0, 0, 1, 1], [], []>} : vector<32x16xbf16>, vector<16x64xbf16>, vector<32x64xf32> -> vector<32x64xf32>
    %cst_256 = arith.constant 0.000000e+00 : f32
    %791 = vector.broadcast %cst_256 : f32 to vector<32x64xf32>
    %792 = vector.extract_strided_slice %790 {offsets = [0, 0], sizes = [32, 1], strides = [1, 1]} : vector<32x64xf32> to vector<32x1xf32>
    %c0_257 = arith.constant 0 : index
    %c0_258 = arith.constant 0 : index
    %793 = vector.load %arg17[%c0_257, %c0_258] : memref<32x4096xf32, #tpu.memory_space<vmem>>, vector<32x64xf32>
    %794 = vector.broadcast %792 : vector<32x1xf32> to vector<32x64xf32>
    %795 = arith.mulf %794, %793 : vector<32x64xf32>
    %796 = arith.addf %791, %795 : vector<32x64xf32>
    %797 = vector.extract_strided_slice %790 {offsets = [0, 1], sizes = [32, 1], strides = [1, 1]} : vector<32x64xf32> to vector<32x1xf32>
    %c0_259 = arith.constant 0 : index
    %c64_260 = arith.constant 64 : index
    %798 = vector.load %arg17[%c0_259, %c64_260] : memref<32x4096xf32, #tpu.memory_space<vmem>>, vector<32x64xf32>
    %799 = vector.broadcast %797 : vector<32x1xf32> to vector<32x64xf32>
    %800 = arith.mulf %799, %798 : vector<32x64xf32>
    %801 = arith.addf %796, %800 : vector<32x64xf32>
    %802 = vector.extract_strided_slice %790 {offsets = [0, 2], sizes = [32, 1], strides = [1, 1]} : vector<32x64xf32> to vector<32x1xf32>
    %c0_261 = arith.constant 0 : index
    %c128_262 = arith.constant 128 : index
    %803 = vector.load %arg17[%c0_261, %c128_262] : memref<32x4096xf32, #tpu.memory_space<vmem>>, vector<32x64xf32>
    %804 = vector.broadcast %802 : vector<32x1xf32> to vector<32x64xf32>
    %805 = arith.mulf %804, %803 : vector<32x64xf32>
    %806 = arith.addf %801, %805 : vector<32x64xf32>
    %807 = vector.extract_strided_slice %790 {offsets = [0, 3], sizes = [32, 1], strides = [1, 1]} : vector<32x64xf32> to vector<32x1xf32>
    %c0_263 = arith.constant 0 : index
    %c192_264 = arith.constant 192 : index
    %808 = vector.load %arg17[%c0_263, %c192_264] : memref<32x4096xf32, #tpu.memory_space<vmem>>, vector<32x64xf32>
    %809 = vector.broadcast %807 : vector<32x1xf32> to vector<32x64xf32>
    %810 = arith.mulf %809, %808 : vector<32x64xf32>
    %811 = arith.addf %806, %810 : vector<32x64xf32>
    %812 = vector.extract_strided_slice %790 {offsets = [0, 4], sizes = [32, 1], strides = [1, 1]} : vector<32x64xf32> to vector<32x1xf32>
    %c0_265 = arith.constant 0 : index
    %c256_266 = arith.constant 256 : index
    %813 = vector.load %arg17[%c0_265, %c256_266] : memref<32x4096xf32, #tpu.memory_space<vmem>>, vector<32x64xf32>
    %814 = vector.broadcast %812 : vector<32x1xf32> to vector<32x64xf32>
    %815 = arith.mulf %814, %813 : vector<32x64xf32>
    %816 = arith.addf %811, %815 : vector<32x64xf32>
    %817 = vector.extract_strided_slice %790 {offsets = [0, 5], sizes = [32, 1], strides = [1, 1]} : vector<32x64xf32> to vector<32x1xf32>
    %c0_267 = arith.constant 0 : index
    %c320_268 = arith.constant 320 : index
    %818 = vector.load %arg17[%c0_267, %c320_268] : memref<32x4096xf32, #tpu.memory_space<vmem>>, vector<32x64xf32>
    %819 = vector.broadcast %817 : vector<32x1xf32> to vector<32x64xf32>
    %820 = arith.mulf %819, %818 : vector<32x64xf32>
    %821 = arith.addf %816, %820 : vector<32x64xf32>
    %822 = vector.extract_strided_slice %790 {offsets = [0, 6], sizes = [32, 1], strides = [1, 1]} : vector<32x64xf32> to vector<32x1xf32>
    %c0_269 = arith.constant 0 : index
    %c384_270 = arith.constant 384 : index
    %823 = vector.load %arg17[%c0_269, %c384_270] : memref<32x4096xf32, #tpu.memory_space<vmem>>, vector<32x64xf32>
    %824 = vector.broadcast %822 : vector<32x1xf32> to vector<32x64xf32>
    %825 = arith.mulf %824, %823 : vector<32x64xf32>
    %826 = arith.addf %821, %825 : vector<32x64xf32>
    %827 = vector.extract_strided_slice %790 {offsets = [0, 7], sizes = [32, 1], strides = [1, 1]} : vector<32x64xf32> to vector<32x1xf32>
    %c0_271 = arith.constant 0 : index
    %c448_272 = arith.constant 448 : index
    %828 = vector.load %arg17[%c0_271, %c448_272] : memref<32x4096xf32, #tpu.memory_space<vmem>>, vector<32x64xf32>
    %829 = vector.broadcast %827 : vector<32x1xf32> to vector<32x64xf32>
    %830 = arith.mulf %829, %828 : vector<32x64xf32>
    %831 = arith.addf %826, %830 : vector<32x64xf32>
    %832 = vector.extract_strided_slice %790 {offsets = [0, 8], sizes = [32, 1], strides = [1, 1]} : vector<32x64xf32> to vector<32x1xf32>
    %c0_273 = arith.constant 0 : index
    %c512_274 = arith.constant 512 : index
    %833 = vector.load %arg17[%c0_273, %c512_274] : memref<32x4096xf32, #tpu.memory_space<vmem>>, vector<32x64xf32>
    %834 = vector.broadcast %832 : vector<32x1xf32> to vector<32x64xf32>
    %835 = arith.mulf %834, %833 : vector<32x64xf32>
    %836 = arith.addf %831, %835 : vector<32x64xf32>
    %837 = vector.extract_strided_slice %790 {offsets = [0, 9], sizes = [32, 1], strides = [1, 1]} : vector<32x64xf32> to vector<32x1xf32>
    %c0_275 = arith.constant 0 : index
    %c576_276 = arith.constant 576 : index
    %838 = vector.load %arg17[%c0_275, %c576_276] : memref<32x4096xf32, #tpu.memory_space<vmem>>, vector<32x64xf32>
    %839 = vector.broadcast %837 : vector<32x1xf32> to vector<32x64xf32>
    %840 = arith.mulf %839, %838 : vector<32x64xf32>
    %841 = arith.addf %836, %840 : vector<32x64xf32>
    %842 = vector.extract_strided_slice %790 {offsets = [0, 10], sizes = [32, 1], strides = [1, 1]} : vector<32x64xf32> to vector<32x1xf32>
    %c0_277 = arith.constant 0 : index
    %c640_278 = arith.constant 640 : index
    %843 = vector.load %arg17[%c0_277, %c640_278] : memref<32x4096xf32, #tpu.memory_space<vmem>>, vector<32x64xf32>
    %844 = vector.broadcast %842 : vector<32x1xf32> to vector<32x64xf32>
    %845 = arith.mulf %844, %843 : vector<32x64xf32>
    %846 = arith.addf %841, %845 : vector<32x64xf32>
    %847 = vector.extract_strided_slice %790 {offsets = [0, 11], sizes = [32, 1], strides = [1, 1]} : vector<32x64xf32> to vector<32x1xf32>
    %c0_279 = arith.constant 0 : index
    %c704_280 = arith.constant 704 : index
    %848 = vector.load %arg17[%c0_279, %c704_280] : memref<32x4096xf32, #tpu.memory_space<vmem>>, vector<32x64xf32>
    %849 = vector.broadcast %847 : vector<32x1xf32> to vector<32x64xf32>
    %850 = arith.mulf %849, %848 : vector<32x64xf32>
    %851 = arith.addf %846, %850 : vector<32x64xf32>
    %852 = vector.extract_strided_slice %790 {offsets = [0, 12], sizes = [32, 1], strides = [1, 1]} : vector<32x64xf32> to vector<32x1xf32>
    %c0_281 = arith.constant 0 : index
    %c768_282 = arith.constant 768 : index
    %853 = vector.load %arg17[%c0_281, %c768_282] : memref<32x4096xf32, #tpu.memory_space<vmem>>, vector<32x64xf32>
    %854 = vector.broadcast %852 : vector<32x1xf32> to vector<32x64xf32>
    %855 = arith.mulf %854, %853 : vector<32x64xf32>
    %856 = arith.addf %851, %855 : vector<32x64xf32>
    %857 = vector.extract_strided_slice %790 {offsets = [0, 13], sizes = [32, 1], strides = [1, 1]} : vector<32x64xf32> to vector<32x1xf32>
    %c0_283 = arith.constant 0 : index
    %c832_284 = arith.constant 832 : index
    %858 = vector.load %arg17[%c0_283, %c832_284] : memref<32x4096xf32, #tpu.memory_space<vmem>>, vector<32x64xf32>
    %859 = vector.broadcast %857 : vector<32x1xf32> to vector<32x64xf32>
    %860 = arith.mulf %859, %858 : vector<32x64xf32>
    %861 = arith.addf %856, %860 : vector<32x64xf32>
    %862 = vector.extract_strided_slice %790 {offsets = [0, 14], sizes = [32, 1], strides = [1, 1]} : vector<32x64xf32> to vector<32x1xf32>
    %c0_285 = arith.constant 0 : index
    %c896_286 = arith.constant 896 : index
    %863 = vector.load %arg17[%c0_285, %c896_286] : memref<32x4096xf32, #tpu.memory_space<vmem>>, vector<32x64xf32>
    %864 = vector.broadcast %862 : vector<32x1xf32> to vector<32x64xf32>
    %865 = arith.mulf %864, %863 : vector<32x64xf32>
    %866 = arith.addf %861, %865 : vector<32x64xf32>
    %867 = vector.extract_strided_slice %790 {offsets = [0, 15], sizes = [32, 1], strides = [1, 1]} : vector<32x64xf32> to vector<32x1xf32>
    %c0_287 = arith.constant 0 : index
    %c960_288 = arith.constant 960 : index
    %868 = vector.load %arg17[%c0_287, %c960_288] : memref<32x4096xf32, #tpu.memory_space<vmem>>, vector<32x64xf32>
    %869 = vector.broadcast %867 : vector<32x1xf32> to vector<32x64xf32>
    %870 = arith.mulf %869, %868 : vector<32x64xf32>
    %871 = arith.addf %866, %870 : vector<32x64xf32>
    %872 = vector.extract_strided_slice %790 {offsets = [0, 16], sizes = [32, 1], strides = [1, 1]} : vector<32x64xf32> to vector<32x1xf32>
    %c0_289 = arith.constant 0 : index
    %c1024_290 = arith.constant 1024 : index
    %873 = vector.load %arg17[%c0_289, %c1024_290] : memref<32x4096xf32, #tpu.memory_space<vmem>>, vector<32x64xf32>
    %874 = vector.broadcast %872 : vector<32x1xf32> to vector<32x64xf32>
    %875 = arith.mulf %874, %873 : vector<32x64xf32>
    %876 = arith.addf %871, %875 : vector<32x64xf32>
    %877 = vector.extract_strided_slice %790 {offsets = [0, 17], sizes = [32, 1], strides = [1, 1]} : vector<32x64xf32> to vector<32x1xf32>
    %c0_291 = arith.constant 0 : index
    %c1088_292 = arith.constant 1088 : index
    %878 = vector.load %arg17[%c0_291, %c1088_292] : memref<32x4096xf32, #tpu.memory_space<vmem>>, vector<32x64xf32>
    %879 = vector.broadcast %877 : vector<32x1xf32> to vector<32x64xf32>
    %880 = arith.mulf %879, %878 : vector<32x64xf32>
    %881 = arith.addf %876, %880 : vector<32x64xf32>
    %882 = vector.extract_strided_slice %790 {offsets = [0, 18], sizes = [32, 1], strides = [1, 1]} : vector<32x64xf32> to vector<32x1xf32>
    %c0_293 = arith.constant 0 : index
    %c1152_294 = arith.constant 1152 : index
    %883 = vector.load %arg17[%c0_293, %c1152_294] : memref<32x4096xf32, #tpu.memory_space<vmem>>, vector<32x64xf32>
    %884 = vector.broadcast %882 : vector<32x1xf32> to vector<32x64xf32>
    %885 = arith.mulf %884, %883 : vector<32x64xf32>
    %886 = arith.addf %881, %885 : vector<32x64xf32>
    %887 = vector.extract_strided_slice %790 {offsets = [0, 19], sizes = [32, 1], strides = [1, 1]} : vector<32x64xf32> to vector<32x1xf32>
    %c0_295 = arith.constant 0 : index
    %c1216_296 = arith.constant 1216 : index
    %888 = vector.load %arg17[%c0_295, %c1216_296] : memref<32x4096xf32, #tpu.memory_space<vmem>>, vector<32x64xf32>
    %889 = vector.broadcast %887 : vector<32x1xf32> to vector<32x64xf32>
    %890 = arith.mulf %889, %888 : vector<32x64xf32>
    %891 = arith.addf %886, %890 : vector<32x64xf32>
    %892 = vector.extract_strided_slice %790 {offsets = [0, 20], sizes = [32, 1], strides = [1, 1]} : vector<32x64xf32> to vector<32x1xf32>
    %c0_297 = arith.constant 0 : index
    %c1280_298 = arith.constant 1280 : index
    %893 = vector.load %arg17[%c0_297, %c1280_298] : memref<32x4096xf32, #tpu.memory_space<vmem>>, vector<32x64xf32>
    %894 = vector.broadcast %892 : vector<32x1xf32> to vector<32x64xf32>
    %895 = arith.mulf %894, %893 : vector<32x64xf32>
    %896 = arith.addf %891, %895 : vector<32x64xf32>
    %897 = vector.extract_strided_slice %790 {offsets = [0, 21], sizes = [32, 1], strides = [1, 1]} : vector<32x64xf32> to vector<32x1xf32>
    %c0_299 = arith.constant 0 : index
    %c1344_300 = arith.constant 1344 : index
    %898 = vector.load %arg17[%c0_299, %c1344_300] : memref<32x4096xf32, #tpu.memory_space<vmem>>, vector<32x64xf32>
    %899 = vector.broadcast %897 : vector<32x1xf32> to vector<32x64xf32>
    %900 = arith.mulf %899, %898 : vector<32x64xf32>
    %901 = arith.addf %896, %900 : vector<32x64xf32>
    %902 = vector.extract_strided_slice %790 {offsets = [0, 22], sizes = [32, 1], strides = [1, 1]} : vector<32x64xf32> to vector<32x1xf32>
    %c0_301 = arith.constant 0 : index
    %c1408_302 = arith.constant 1408 : index
    %903 = vector.load %arg17[%c0_301, %c1408_302] : memref<32x4096xf32, #tpu.memory_space<vmem>>, vector<32x64xf32>
    %904 = vector.broadcast %902 : vector<32x1xf32> to vector<32x64xf32>
    %905 = arith.mulf %904, %903 : vector<32x64xf32>
    %906 = arith.addf %901, %905 : vector<32x64xf32>
    %907 = vector.extract_strided_slice %790 {offsets = [0, 23], sizes = [32, 1], strides = [1, 1]} : vector<32x64xf32> to vector<32x1xf32>
    %c0_303 = arith.constant 0 : index
    %c1472_304 = arith.constant 1472 : index
    %908 = vector.load %arg17[%c0_303, %c1472_304] : memref<32x4096xf32, #tpu.memory_space<vmem>>, vector<32x64xf32>
    %909 = vector.broadcast %907 : vector<32x1xf32> to vector<32x64xf32>
    %910 = arith.mulf %909, %908 : vector<32x64xf32>
    %911 = arith.addf %906, %910 : vector<32x64xf32>
    %912 = vector.extract_strided_slice %790 {offsets = [0, 24], sizes = [32, 1], strides = [1, 1]} : vector<32x64xf32> to vector<32x1xf32>
    %c0_305 = arith.constant 0 : index
    %c1536_306 = arith.constant 1536 : index
    %913 = vector.load %arg17[%c0_305, %c1536_306] : memref<32x4096xf32, #tpu.memory_space<vmem>>, vector<32x64xf32>
    %914 = vector.broadcast %912 : vector<32x1xf32> to vector<32x64xf32>
    %915 = arith.mulf %914, %913 : vector<32x64xf32>
    %916 = arith.addf %911, %915 : vector<32x64xf32>
    %917 = vector.extract_strided_slice %790 {offsets = [0, 25], sizes = [32, 1], strides = [1, 1]} : vector<32x64xf32> to vector<32x1xf32>
    %c0_307 = arith.constant 0 : index
    %c1600_308 = arith.constant 1600 : index
    %918 = vector.load %arg17[%c0_307, %c1600_308] : memref<32x4096xf32, #tpu.memory_space<vmem>>, vector<32x64xf32>
    %919 = vector.broadcast %917 : vector<32x1xf32> to vector<32x64xf32>
    %920 = arith.mulf %919, %918 : vector<32x64xf32>
    %921 = arith.addf %916, %920 : vector<32x64xf32>
    %922 = vector.extract_strided_slice %790 {offsets = [0, 26], sizes = [32, 1], strides = [1, 1]} : vector<32x64xf32> to vector<32x1xf32>
    %c0_309 = arith.constant 0 : index
    %c1664_310 = arith.constant 1664 : index
    %923 = vector.load %arg17[%c0_309, %c1664_310] : memref<32x4096xf32, #tpu.memory_space<vmem>>, vector<32x64xf32>
    %924 = vector.broadcast %922 : vector<32x1xf32> to vector<32x64xf32>
    %925 = arith.mulf %924, %923 : vector<32x64xf32>
    %926 = arith.addf %921, %925 : vector<32x64xf32>
    %927 = vector.extract_strided_slice %790 {offsets = [0, 27], sizes = [32, 1], strides = [1, 1]} : vector<32x64xf32> to vector<32x1xf32>
    %c0_311 = arith.constant 0 : index
    %c1728_312 = arith.constant 1728 : index
    %928 = vector.load %arg17[%c0_311, %c1728_312] : memref<32x4096xf32, #tpu.memory_space<vmem>>, vector<32x64xf32>
    %929 = vector.broadcast %927 : vector<32x1xf32> to vector<32x64xf32>
    %930 = arith.mulf %929, %928 : vector<32x64xf32>
    %931 = arith.addf %926, %930 : vector<32x64xf32>
    %932 = vector.extract_strided_slice %790 {offsets = [0, 28], sizes = [32, 1], strides = [1, 1]} : vector<32x64xf32> to vector<32x1xf32>
    %c0_313 = arith.constant 0 : index
    %c1792_314 = arith.constant 1792 : index
    %933 = vector.load %arg17[%c0_313, %c1792_314] : memref<32x4096xf32, #tpu.memory_space<vmem>>, vector<32x64xf32>
    %934 = vector.broadcast %932 : vector<32x1xf32> to vector<32x64xf32>
    %935 = arith.mulf %934, %933 : vector<32x64xf32>
    %936 = arith.addf %931, %935 : vector<32x64xf32>
    %937 = vector.extract_strided_slice %790 {offsets = [0, 29], sizes = [32, 1], strides = [1, 1]} : vector<32x64xf32> to vector<32x1xf32>
    %c0_315 = arith.constant 0 : index
    %c1856_316 = arith.constant 1856 : index
    %938 = vector.load %arg17[%c0_315, %c1856_316] : memref<32x4096xf32, #tpu.memory_space<vmem>>, vector<32x64xf32>
    %939 = vector.broadcast %937 : vector<32x1xf32> to vector<32x64xf32>
    %940 = arith.mulf %939, %938 : vector<32x64xf32>
    %941 = arith.addf %936, %940 : vector<32x64xf32>
    %942 = vector.extract_strided_slice %790 {offsets = [0, 30], sizes = [32, 1], strides = [1, 1]} : vector<32x64xf32> to vector<32x1xf32>
    %c0_317 = arith.constant 0 : index
    %c1920_318 = arith.constant 1920 : index
    %943 = vector.load %arg17[%c0_317, %c1920_318] : memref<32x4096xf32, #tpu.memory_space<vmem>>, vector<32x64xf32>
    %944 = vector.broadcast %942 : vector<32x1xf32> to vector<32x64xf32>
    %945 = arith.mulf %944, %943 : vector<32x64xf32>
    %946 = arith.addf %941, %945 : vector<32x64xf32>
    %947 = vector.extract_strided_slice %790 {offsets = [0, 31], sizes = [32, 1], strides = [1, 1]} : vector<32x64xf32> to vector<32x1xf32>
    %c0_319 = arith.constant 0 : index
    %c1984_320 = arith.constant 1984 : index
    %948 = vector.load %arg17[%c0_319, %c1984_320] : memref<32x4096xf32, #tpu.memory_space<vmem>>, vector<32x64xf32>
    %949 = vector.broadcast %947 : vector<32x1xf32> to vector<32x64xf32>
    %950 = arith.mulf %949, %948 : vector<32x64xf32>
    %951 = arith.addf %946, %950 : vector<32x64xf32>
    %952 = vector.extract_strided_slice %790 {offsets = [0, 32], sizes = [32, 1], strides = [1, 1]} : vector<32x64xf32> to vector<32x1xf32>
    %c0_321 = arith.constant 0 : index
    %c2048_322 = arith.constant 2048 : index
    %953 = vector.load %arg17[%c0_321, %c2048_322] : memref<32x4096xf32, #tpu.memory_space<vmem>>, vector<32x64xf32>
    %954 = vector.broadcast %952 : vector<32x1xf32> to vector<32x64xf32>
    %955 = arith.mulf %954, %953 : vector<32x64xf32>
    %956 = arith.addf %951, %955 : vector<32x64xf32>
    %957 = vector.extract_strided_slice %790 {offsets = [0, 33], sizes = [32, 1], strides = [1, 1]} : vector<32x64xf32> to vector<32x1xf32>
    %c0_323 = arith.constant 0 : index
    %c2112_324 = arith.constant 2112 : index
    %958 = vector.load %arg17[%c0_323, %c2112_324] : memref<32x4096xf32, #tpu.memory_space<vmem>>, vector<32x64xf32>
    %959 = vector.broadcast %957 : vector<32x1xf32> to vector<32x64xf32>
    %960 = arith.mulf %959, %958 : vector<32x64xf32>
    %961 = arith.addf %956, %960 : vector<32x64xf32>
    %962 = vector.extract_strided_slice %790 {offsets = [0, 34], sizes = [32, 1], strides = [1, 1]} : vector<32x64xf32> to vector<32x1xf32>
    %c0_325 = arith.constant 0 : index
    %c2176_326 = arith.constant 2176 : index
    %963 = vector.load %arg17[%c0_325, %c2176_326] : memref<32x4096xf32, #tpu.memory_space<vmem>>, vector<32x64xf32>
    %964 = vector.broadcast %962 : vector<32x1xf32> to vector<32x64xf32>
    %965 = arith.mulf %964, %963 : vector<32x64xf32>
    %966 = arith.addf %961, %965 : vector<32x64xf32>
    %967 = vector.extract_strided_slice %790 {offsets = [0, 35], sizes = [32, 1], strides = [1, 1]} : vector<32x64xf32> to vector<32x1xf32>
    %c0_327 = arith.constant 0 : index
    %c2240_328 = arith.constant 2240 : index
    %968 = vector.load %arg17[%c0_327, %c2240_328] : memref<32x4096xf32, #tpu.memory_space<vmem>>, vector<32x64xf32>
    %969 = vector.broadcast %967 : vector<32x1xf32> to vector<32x64xf32>
    %970 = arith.mulf %969, %968 : vector<32x64xf32>
    %971 = arith.addf %966, %970 : vector<32x64xf32>
    %972 = vector.extract_strided_slice %790 {offsets = [0, 36], sizes = [32, 1], strides = [1, 1]} : vector<32x64xf32> to vector<32x1xf32>
    %c0_329 = arith.constant 0 : index
    %c2304_330 = arith.constant 2304 : index
    %973 = vector.load %arg17[%c0_329, %c2304_330] : memref<32x4096xf32, #tpu.memory_space<vmem>>, vector<32x64xf32>
    %974 = vector.broadcast %972 : vector<32x1xf32> to vector<32x64xf32>
    %975 = arith.mulf %974, %973 : vector<32x64xf32>
    %976 = arith.addf %971, %975 : vector<32x64xf32>
    %977 = vector.extract_strided_slice %790 {offsets = [0, 37], sizes = [32, 1], strides = [1, 1]} : vector<32x64xf32> to vector<32x1xf32>
    %c0_331 = arith.constant 0 : index
    %c2368_332 = arith.constant 2368 : index
    %978 = vector.load %arg17[%c0_331, %c2368_332] : memref<32x4096xf32, #tpu.memory_space<vmem>>, vector<32x64xf32>
    %979 = vector.broadcast %977 : vector<32x1xf32> to vector<32x64xf32>
    %980 = arith.mulf %979, %978 : vector<32x64xf32>
    %981 = arith.addf %976, %980 : vector<32x64xf32>
    %982 = vector.extract_strided_slice %790 {offsets = [0, 38], sizes = [32, 1], strides = [1, 1]} : vector<32x64xf32> to vector<32x1xf32>
    %c0_333 = arith.constant 0 : index
    %c2432_334 = arith.constant 2432 : index
    %983 = vector.load %arg17[%c0_333, %c2432_334] : memref<32x4096xf32, #tpu.memory_space<vmem>>, vector<32x64xf32>
    %984 = vector.broadcast %982 : vector<32x1xf32> to vector<32x64xf32>
    %985 = arith.mulf %984, %983 : vector<32x64xf32>
    %986 = arith.addf %981, %985 : vector<32x64xf32>
    %987 = vector.extract_strided_slice %790 {offsets = [0, 39], sizes = [32, 1], strides = [1, 1]} : vector<32x64xf32> to vector<32x1xf32>
    %c0_335 = arith.constant 0 : index
    %c2496_336 = arith.constant 2496 : index
    %988 = vector.load %arg17[%c0_335, %c2496_336] : memref<32x4096xf32, #tpu.memory_space<vmem>>, vector<32x64xf32>
    %989 = vector.broadcast %987 : vector<32x1xf32> to vector<32x64xf32>
    %990 = arith.mulf %989, %988 : vector<32x64xf32>
    %991 = arith.addf %986, %990 : vector<32x64xf32>
    %992 = vector.extract_strided_slice %790 {offsets = [0, 40], sizes = [32, 1], strides = [1, 1]} : vector<32x64xf32> to vector<32x1xf32>
    %c0_337 = arith.constant 0 : index
    %c2560_338 = arith.constant 2560 : index
    %993 = vector.load %arg17[%c0_337, %c2560_338] : memref<32x4096xf32, #tpu.memory_space<vmem>>, vector<32x64xf32>
    %994 = vector.broadcast %992 : vector<32x1xf32> to vector<32x64xf32>
    %995 = arith.mulf %994, %993 : vector<32x64xf32>
    %996 = arith.addf %991, %995 : vector<32x64xf32>
    %997 = vector.extract_strided_slice %790 {offsets = [0, 41], sizes = [32, 1], strides = [1, 1]} : vector<32x64xf32> to vector<32x1xf32>
    %c0_339 = arith.constant 0 : index
    %c2624_340 = arith.constant 2624 : index
    %998 = vector.load %arg17[%c0_339, %c2624_340] : memref<32x4096xf32, #tpu.memory_space<vmem>>, vector<32x64xf32>
    %999 = vector.broadcast %997 : vector<32x1xf32> to vector<32x64xf32>
    %1000 = arith.mulf %999, %998 : vector<32x64xf32>
    %1001 = arith.addf %996, %1000 : vector<32x64xf32>
    %1002 = vector.extract_strided_slice %790 {offsets = [0, 42], sizes = [32, 1], strides = [1, 1]} : vector<32x64xf32> to vector<32x1xf32>
    %c0_341 = arith.constant 0 : index
    %c2688_342 = arith.constant 2688 : index
    %1003 = vector.load %arg17[%c0_341, %c2688_342] : memref<32x4096xf32, #tpu.memory_space<vmem>>, vector<32x64xf32>
    %1004 = vector.broadcast %1002 : vector<32x1xf32> to vector<32x64xf32>
    %1005 = arith.mulf %1004, %1003 : vector<32x64xf32>
    %1006 = arith.addf %1001, %1005 : vector<32x64xf32>
    %1007 = vector.extract_strided_slice %790 {offsets = [0, 43], sizes = [32, 1], strides = [1, 1]} : vector<32x64xf32> to vector<32x1xf32>
    %c0_343 = arith.constant 0 : index
    %c2752_344 = arith.constant 2752 : index
    %1008 = vector.load %arg17[%c0_343, %c2752_344] : memref<32x4096xf32, #tpu.memory_space<vmem>>, vector<32x64xf32>
    %1009 = vector.broadcast %1007 : vector<32x1xf32> to vector<32x64xf32>
    %1010 = arith.mulf %1009, %1008 : vector<32x64xf32>
    %1011 = arith.addf %1006, %1010 : vector<32x64xf32>
    %1012 = vector.extract_strided_slice %790 {offsets = [0, 44], sizes = [32, 1], strides = [1, 1]} : vector<32x64xf32> to vector<32x1xf32>
    %c0_345 = arith.constant 0 : index
    %c2816_346 = arith.constant 2816 : index
    %1013 = vector.load %arg17[%c0_345, %c2816_346] : memref<32x4096xf32, #tpu.memory_space<vmem>>, vector<32x64xf32>
    %1014 = vector.broadcast %1012 : vector<32x1xf32> to vector<32x64xf32>
    %1015 = arith.mulf %1014, %1013 : vector<32x64xf32>
    %1016 = arith.addf %1011, %1015 : vector<32x64xf32>
    %1017 = vector.extract_strided_slice %790 {offsets = [0, 45], sizes = [32, 1], strides = [1, 1]} : vector<32x64xf32> to vector<32x1xf32>
    %c0_347 = arith.constant 0 : index
    %c2880_348 = arith.constant 2880 : index
    %1018 = vector.load %arg17[%c0_347, %c2880_348] : memref<32x4096xf32, #tpu.memory_space<vmem>>, vector<32x64xf32>
    %1019 = vector.broadcast %1017 : vector<32x1xf32> to vector<32x64xf32>
    %1020 = arith.mulf %1019, %1018 : vector<32x64xf32>
    %1021 = arith.addf %1016, %1020 : vector<32x64xf32>
    %1022 = vector.extract_strided_slice %790 {offsets = [0, 46], sizes = [32, 1], strides = [1, 1]} : vector<32x64xf32> to vector<32x1xf32>
    %c0_349 = arith.constant 0 : index
    %c2944_350 = arith.constant 2944 : index
    %1023 = vector.load %arg17[%c0_349, %c2944_350] : memref<32x4096xf32, #tpu.memory_space<vmem>>, vector<32x64xf32>
    %1024 = vector.broadcast %1022 : vector<32x1xf32> to vector<32x64xf32>
    %1025 = arith.mulf %1024, %1023 : vector<32x64xf32>
    %1026 = arith.addf %1021, %1025 : vector<32x64xf32>
    %1027 = vector.extract_strided_slice %790 {offsets = [0, 47], sizes = [32, 1], strides = [1, 1]} : vector<32x64xf32> to vector<32x1xf32>
    %c0_351 = arith.constant 0 : index
    %c3008_352 = arith.constant 3008 : index
    %1028 = vector.load %arg17[%c0_351, %c3008_352] : memref<32x4096xf32, #tpu.memory_space<vmem>>, vector<32x64xf32>
    %1029 = vector.broadcast %1027 : vector<32x1xf32> to vector<32x64xf32>
    %1030 = arith.mulf %1029, %1028 : vector<32x64xf32>
    %1031 = arith.addf %1026, %1030 : vector<32x64xf32>
    %1032 = vector.extract_strided_slice %790 {offsets = [0, 48], sizes = [32, 1], strides = [1, 1]} : vector<32x64xf32> to vector<32x1xf32>
    %c0_353 = arith.constant 0 : index
    %c3072_354 = arith.constant 3072 : index
    %1033 = vector.load %arg17[%c0_353, %c3072_354] : memref<32x4096xf32, #tpu.memory_space<vmem>>, vector<32x64xf32>
    %1034 = vector.broadcast %1032 : vector<32x1xf32> to vector<32x64xf32>
    %1035 = arith.mulf %1034, %1033 : vector<32x64xf32>
    %1036 = arith.addf %1031, %1035 : vector<32x64xf32>
    %1037 = vector.extract_strided_slice %790 {offsets = [0, 49], sizes = [32, 1], strides = [1, 1]} : vector<32x64xf32> to vector<32x1xf32>
    %c0_355 = arith.constant 0 : index
    %c3136_356 = arith.constant 3136 : index
    %1038 = vector.load %arg17[%c0_355, %c3136_356] : memref<32x4096xf32, #tpu.memory_space<vmem>>, vector<32x64xf32>
    %1039 = vector.broadcast %1037 : vector<32x1xf32> to vector<32x64xf32>
    %1040 = arith.mulf %1039, %1038 : vector<32x64xf32>
    %1041 = arith.addf %1036, %1040 : vector<32x64xf32>
    %1042 = vector.extract_strided_slice %790 {offsets = [0, 50], sizes = [32, 1], strides = [1, 1]} : vector<32x64xf32> to vector<32x1xf32>
    %c0_357 = arith.constant 0 : index
    %c3200_358 = arith.constant 3200 : index
    %1043 = vector.load %arg17[%c0_357, %c3200_358] : memref<32x4096xf32, #tpu.memory_space<vmem>>, vector<32x64xf32>
    %1044 = vector.broadcast %1042 : vector<32x1xf32> to vector<32x64xf32>
    %1045 = arith.mulf %1044, %1043 : vector<32x64xf32>
    %1046 = arith.addf %1041, %1045 : vector<32x64xf32>
    %1047 = vector.extract_strided_slice %790 {offsets = [0, 51], sizes = [32, 1], strides = [1, 1]} : vector<32x64xf32> to vector<32x1xf32>
    %c0_359 = arith.constant 0 : index
    %c3264_360 = arith.constant 3264 : index
    %1048 = vector.load %arg17[%c0_359, %c3264_360] : memref<32x4096xf32, #tpu.memory_space<vmem>>, vector<32x64xf32>
    %1049 = vector.broadcast %1047 : vector<32x1xf32> to vector<32x64xf32>
    %1050 = arith.mulf %1049, %1048 : vector<32x64xf32>
    %1051 = arith.addf %1046, %1050 : vector<32x64xf32>
    %1052 = vector.extract_strided_slice %790 {offsets = [0, 52], sizes = [32, 1], strides = [1, 1]} : vector<32x64xf32> to vector<32x1xf32>
    %c0_361 = arith.constant 0 : index
    %c3328_362 = arith.constant 3328 : index
    %1053 = vector.load %arg17[%c0_361, %c3328_362] : memref<32x4096xf32, #tpu.memory_space<vmem>>, vector<32x64xf32>
    %1054 = vector.broadcast %1052 : vector<32x1xf32> to vector<32x64xf32>
    %1055 = arith.mulf %1054, %1053 : vector<32x64xf32>
    %1056 = arith.addf %1051, %1055 : vector<32x64xf32>
    %1057 = vector.extract_strided_slice %790 {offsets = [0, 53], sizes = [32, 1], strides = [1, 1]} : vector<32x64xf32> to vector<32x1xf32>
    %c0_363 = arith.constant 0 : index
    %c3392_364 = arith.constant 3392 : index
    %1058 = vector.load %arg17[%c0_363, %c3392_364] : memref<32x4096xf32, #tpu.memory_space<vmem>>, vector<32x64xf32>
    %1059 = vector.broadcast %1057 : vector<32x1xf32> to vector<32x64xf32>
    %1060 = arith.mulf %1059, %1058 : vector<32x64xf32>
    %1061 = arith.addf %1056, %1060 : vector<32x64xf32>
    %1062 = vector.extract_strided_slice %790 {offsets = [0, 54], sizes = [32, 1], strides = [1, 1]} : vector<32x64xf32> to vector<32x1xf32>
    %c0_365 = arith.constant 0 : index
    %c3456_366 = arith.constant 3456 : index
    %1063 = vector.load %arg17[%c0_365, %c3456_366] : memref<32x4096xf32, #tpu.memory_space<vmem>>, vector<32x64xf32>
    %1064 = vector.broadcast %1062 : vector<32x1xf32> to vector<32x64xf32>
    %1065 = arith.mulf %1064, %1063 : vector<32x64xf32>
    %1066 = arith.addf %1061, %1065 : vector<32x64xf32>
    %1067 = vector.extract_strided_slice %790 {offsets = [0, 55], sizes = [32, 1], strides = [1, 1]} : vector<32x64xf32> to vector<32x1xf32>
    %c0_367 = arith.constant 0 : index
    %c3520_368 = arith.constant 3520 : index
    %1068 = vector.load %arg17[%c0_367, %c3520_368] : memref<32x4096xf32, #tpu.memory_space<vmem>>, vector<32x64xf32>
    %1069 = vector.broadcast %1067 : vector<32x1xf32> to vector<32x64xf32>
    %1070 = arith.mulf %1069, %1068 : vector<32x64xf32>
    %1071 = arith.addf %1066, %1070 : vector<32x64xf32>
    %1072 = vector.extract_strided_slice %790 {offsets = [0, 56], sizes = [32, 1], strides = [1, 1]} : vector<32x64xf32> to vector<32x1xf32>
    %c0_369 = arith.constant 0 : index
    %c3584_370 = arith.constant 3584 : index
    %1073 = vector.load %arg17[%c0_369, %c3584_370] : memref<32x4096xf32, #tpu.memory_space<vmem>>, vector<32x64xf32>
    %1074 = vector.broadcast %1072 : vector<32x1xf32> to vector<32x64xf32>
    %1075 = arith.mulf %1074, %1073 : vector<32x64xf32>
    %1076 = arith.addf %1071, %1075 : vector<32x64xf32>
    %1077 = vector.extract_strided_slice %790 {offsets = [0, 57], sizes = [32, 1], strides = [1, 1]} : vector<32x64xf32> to vector<32x1xf32>
    %c0_371 = arith.constant 0 : index
    %c3648_372 = arith.constant 3648 : index
    %1078 = vector.load %arg17[%c0_371, %c3648_372] : memref<32x4096xf32, #tpu.memory_space<vmem>>, vector<32x64xf32>
    %1079 = vector.broadcast %1077 : vector<32x1xf32> to vector<32x64xf32>
    %1080 = arith.mulf %1079, %1078 : vector<32x64xf32>
    %1081 = arith.addf %1076, %1080 : vector<32x64xf32>
    %1082 = vector.extract_strided_slice %790 {offsets = [0, 58], sizes = [32, 1], strides = [1, 1]} : vector<32x64xf32> to vector<32x1xf32>
    %c0_373 = arith.constant 0 : index
    %c3712_374 = arith.constant 3712 : index
    %1083 = vector.load %arg17[%c0_373, %c3712_374] : memref<32x4096xf32, #tpu.memory_space<vmem>>, vector<32x64xf32>
    %1084 = vector.broadcast %1082 : vector<32x1xf32> to vector<32x64xf32>
    %1085 = arith.mulf %1084, %1083 : vector<32x64xf32>
    %1086 = arith.addf %1081, %1085 : vector<32x64xf32>
    %1087 = vector.extract_strided_slice %790 {offsets = [0, 59], sizes = [32, 1], strides = [1, 1]} : vector<32x64xf32> to vector<32x1xf32>
    %c0_375 = arith.constant 0 : index
    %c3776_376 = arith.constant 3776 : index
    %1088 = vector.load %arg17[%c0_375, %c3776_376] : memref<32x4096xf32, #tpu.memory_space<vmem>>, vector<32x64xf32>
    %1089 = vector.broadcast %1087 : vector<32x1xf32> to vector<32x64xf32>
    %1090 = arith.mulf %1089, %1088 : vector<32x64xf32>
    %1091 = arith.addf %1086, %1090 : vector<32x64xf32>
    %1092 = vector.extract_strided_slice %790 {offsets = [0, 60], sizes = [32, 1], strides = [1, 1]} : vector<32x64xf32> to vector<32x1xf32>
    %c0_377 = arith.constant 0 : index
    %c3840_378 = arith.constant 3840 : index
    %1093 = vector.load %arg17[%c0_377, %c3840_378] : memref<32x4096xf32, #tpu.memory_space<vmem>>, vector<32x64xf32>
    %1094 = vector.broadcast %1092 : vector<32x1xf32> to vector<32x64xf32>
    %1095 = arith.mulf %1094, %1093 : vector<32x64xf32>
    %1096 = arith.addf %1091, %1095 : vector<32x64xf32>
    %1097 = vector.extract_strided_slice %790 {offsets = [0, 61], sizes = [32, 1], strides = [1, 1]} : vector<32x64xf32> to vector<32x1xf32>
    %c0_379 = arith.constant 0 : index
    %c3904_380 = arith.constant 3904 : index
    %1098 = vector.load %arg17[%c0_379, %c3904_380] : memref<32x4096xf32, #tpu.memory_space<vmem>>, vector<32x64xf32>
    %1099 = vector.broadcast %1097 : vector<32x1xf32> to vector<32x64xf32>
    %1100 = arith.mulf %1099, %1098 : vector<32x64xf32>
    %1101 = arith.addf %1096, %1100 : vector<32x64xf32>
    %1102 = vector.extract_strided_slice %790 {offsets = [0, 62], sizes = [32, 1], strides = [1, 1]} : vector<32x64xf32> to vector<32x1xf32>
    %c0_381 = arith.constant 0 : index
    %c3968_382 = arith.constant 3968 : index
    %1103 = vector.load %arg17[%c0_381, %c3968_382] : memref<32x4096xf32, #tpu.memory_space<vmem>>, vector<32x64xf32>
    %1104 = vector.broadcast %1102 : vector<32x1xf32> to vector<32x64xf32>
    %1105 = arith.mulf %1104, %1103 : vector<32x64xf32>
    %1106 = arith.addf %1101, %1105 : vector<32x64xf32>
    %1107 = vector.extract_strided_slice %790 {offsets = [0, 63], sizes = [32, 1], strides = [1, 1]} : vector<32x64xf32> to vector<32x1xf32>
    %c0_383 = arith.constant 0 : index
    %c4032_384 = arith.constant 4032 : index
    %1108 = vector.load %arg17[%c0_383, %c4032_384] : memref<32x4096xf32, #tpu.memory_space<vmem>>, vector<32x64xf32>
    %1109 = vector.broadcast %1107 : vector<32x1xf32> to vector<32x64xf32>
    %1110 = arith.mulf %1109, %1108 : vector<32x64xf32>
    %1111 = arith.addf %1106, %1110 : vector<32x64xf32>
    %1112 = arith.truncf %1111 : vector<32x64xf32> to vector<32x64xbf16>
    %cst_385 = arith.constant dense<0.000000e+00> : vector<16x64xf32>
    %1113 = tpu.matmul %23, %1112, %cst_385 {dimension_numbers = #tpu.dot_dimension_numbers<[1], [0], [0], [1], [0, 0, 1, 1], [], []>} : vector<16x32xbf16>, vector<32x64xbf16>, vector<16x64xf32> -> vector<16x64xf32>
    %1114 = vector.broadcast %22 : vector<16x1xf32> to vector<16x64xf32>
    %1115 = arith.mulf %1114, %1113 : vector<16x64xf32>
    %cst_386 = arith.constant dense<0.000000e+00> : vector<16x64xf32>
    %1116 = tpu.matmul %789, %49, %cst_386 {dimension_numbers = #tpu.dot_dimension_numbers<[1], [0], [0], [1], [0, 0, 1, 1], [], []>} : vector<16x64xbf16>, vector<64x64xbf16>, vector<16x64xf32> -> vector<16x64xf32>
    %1117 = arith.addf %1115, %1116 : vector<16x64xf32>
    %1118 = vector.broadcast %50 : vector<1x64xf32> to vector<16x64xf32>
    %1119 = arith.addf %1117, %1118 : vector<16x64xf32>
    %cst_387 = arith.constant 0.000000e+00 : f32
    %1120 = vector.broadcast %cst_387 : f32 to vector<16x64xf32>
    %1121 = arith.maximumf %1119, %1120 : vector<16x64xf32>
    %1122 = arith.truncf %1121 : vector<16x64xf32> to vector<16x64xbf16>
    %cst_388 = arith.constant dense<0.000000e+00> : vector<16x384xf32>
    %1123 = tpu.matmul %1122, %51, %cst_388 {dimension_numbers = #tpu.dot_dimension_numbers<[1], [0], [0], [1], [0, 0, 1, 1], [], []>} : vector<16x64xbf16>, vector<64x384xbf16>, vector<16x384xf32> -> vector<16x384xf32>
    %1124 = vector.broadcast %53 : vector<1x384xf32> to vector<16x384xf32>
    %1125 = arith.addf %1123, %1124 : vector<16x384xf32>
    %1126 = arith.truncf %788 : vector<16x64xf32> to vector<16x64xbf16>
    %cst_389 = arith.constant dense<0.000000e+00> : vector<16x384xf32>
    %1127 = tpu.matmul %1126, %52, %cst_389 {dimension_numbers = #tpu.dot_dimension_numbers<[1], [0], [0], [1], [0, 0, 1, 1], [], []>} : vector<16x64xbf16>, vector<64x384xbf16>, vector<16x384xf32> -> vector<16x384xf32>
    %1128 = vector.broadcast %54 : vector<1x384xf32> to vector<16x384xf32>
    %1129 = arith.addf %1127, %1128 : vector<16x384xf32>
    %1130 = vector.extract_strided_slice %1125 {offsets = [0, 0], sizes = [16, 64], strides = [1, 1]} : vector<16x384xf32> to vector<16x64xf32>
    %1131 = vector.extract_strided_slice %1129 {offsets = [0, 0], sizes = [16, 64], strides = [1, 1]} : vector<16x384xf32> to vector<16x64xf32>
    %1132 = arith.addf %1130, %1131 : vector<16x64xf32>
    %1133 = arith.negf %1132 : vector<16x64xf32>
    %1134 = math.exp %1133 : vector<16x64xf32>
    %cst_390 = arith.constant 1.000000e+00 : f32
    %1135 = vector.broadcast %cst_390 : f32 to vector<16x64xf32>
    %1136 = arith.addf %1135, %1134 : vector<16x64xf32>
    %1137 = arith.divf %1135, %1136 : vector<16x64xf32>
    %1138 = vector.extract_strided_slice %1125 {offsets = [0, 128], sizes = [16, 64], strides = [1, 1]} : vector<16x384xf32> to vector<16x64xf32>
    %1139 = vector.extract_strided_slice %1129 {offsets = [0, 128], sizes = [16, 64], strides = [1, 1]} : vector<16x384xf32> to vector<16x64xf32>
    %1140 = arith.addf %1138, %1139 : vector<16x64xf32>
    %1141 = arith.negf %1140 : vector<16x64xf32>
    %1142 = math.exp %1141 : vector<16x64xf32>
    %cst_391 = arith.constant 1.000000e+00 : f32
    %1143 = vector.broadcast %cst_391 : f32 to vector<16x64xf32>
    %1144 = arith.addf %1143, %1142 : vector<16x64xf32>
    %1145 = arith.divf %1143, %1144 : vector<16x64xf32>
    %1146 = vector.extract_strided_slice %1125 {offsets = [0, 256], sizes = [16, 64], strides = [1, 1]} : vector<16x384xf32> to vector<16x64xf32>
    %1147 = vector.extract_strided_slice %1129 {offsets = [0, 256], sizes = [16, 64], strides = [1, 1]} : vector<16x384xf32> to vector<16x64xf32>
    %1148 = arith.mulf %1137, %1147 : vector<16x64xf32>
    %1149 = arith.addf %1146, %1148 : vector<16x64xf32>
    %1150 = math.tanh %1149 : vector<16x64xf32>
    %cst_392 = arith.constant 1.000000e+00 : f32
    %1151 = vector.broadcast %cst_392 : f32 to vector<16x64xf32>
    %1152 = arith.subf %1151, %1145 : vector<16x64xf32>
    %1153 = arith.mulf %1152, %1150 : vector<16x64xf32>
    %1154 = arith.mulf %1145, %788 : vector<16x64xf32>
    %1155 = arith.addf %1153, %1154 : vector<16x64xf32>
    %c0_393 = arith.constant 0 : index
    %c0_394 = arith.constant 0 : index
    %1156 = vector.load %arg16[%c0_393, %c0_394] : memref<16x64xf32, #tpu.memory_space<vmem>>, vector<16x64xf32>
    tpu.vector_store %arg16[%c0_393, %c0_394], %1155 {strides = array<i32>} : memref<16x64xf32, #tpu.memory_space<vmem>>, vector<16x64xf32>,
    return
  }
}

</mosaic_0001>

<llo_original>
// kernel: tpu_custom_call.1
$region0: #{tpu_custom_call.1}
  #allocation0 [shape = 'u32[]', space=smem, size = 0x4, offset = 0x4, fixed_abs, tag = 'smem constant byte address 0x4 - core index']
  #allocation1 [shape = 'u32[72,128]{1,0:T(1,128)}', space=vmem, size = 0x9000, scoped, tag = 'internal scratch']
  #allocation2 [shape = 'f32[32,4096]{1,0:T(8,128)}', space=vmem, size = 0x80000, scoped, tag = 'scratch operand']
  %s0 = inlined_call_operand.vmem [shape: f32[16,8], index: 0, kind: input, shape index: {}]
  %s1 = inlined_call_operand.vmem [shape: f32[32,6], index: 1, kind: input, shape index: {}]
  %s2 = inlined_call_operand.vmem [shape: s32[32,1], index: 2, kind: input, shape index: {}]
  %s3 = inlined_call_operand.hbm [shape: s32[1,32], index: 3, kind: input, shape index: {}]
  %s4 = inlined_call_operand.vmem [shape: bf16[8,64], index: 4, kind: input, shape index: {}]
  %s5 = inlined_call_operand.hbm [shape: f32[1,64], index: 5, kind: input, shape index: {}]
  %s6 = inlined_call_operand.vmem [shape: bf16[6,128], index: 6, kind: input, shape index: {}]
  %s7 = inlined_call_operand.hbm [shape: f32[1,128], index: 7, kind: input, shape index: {}]
  %s8 = inlined_call_operand.hbm [shape: bf16[128,4096], index: 8, kind: input, shape index: {}]
  %s9 = inlined_call_operand.hbm [shape: f32[1,4096], index: 9, kind: input, shape index: {}]
  %s10 = inlined_call_operand.hbm [shape: bf16[64,64], index: 10, kind: input, shape index: {}]
  %s11 = inlined_call_operand.hbm [shape: f32[1,64], index: 11, kind: input, shape index: {}]
  %s12 = inlined_call_operand.vmem [shape: bf16[64,384], index: 12, kind: input, shape index: {}]
  %s13 = inlined_call_operand.hbm [shape: bf16[64,384], index: 13, kind: input, shape index: {}]
  %s14 = inlined_call_operand.vmem [shape: f32[1,384], index: 14, kind: input, shape index: {}]
  %s15 = inlined_call_operand.vmem [shape: f32[1,384], index: 15, kind: input, shape index: {}]
  %s16 = inlined_call_operand.hbm [shape: f32[16,64], index: 16, kind: output, shape index: {}]
  %s17 = sld [smem:[#allocation0]]
  $region106: #{tpu_custom_call.1} parent=0
    _
  %s19 = ssub.s32 1, %s17
  %s20 = scalar_select 0, %s19, %s17
  $region1: #{tpu_custom_call.1} parent=0
    #allocation3 [shape = 'u8[512]{0}', space=vmem, size = 0x400, scoped, tag = 'input window, operand 3, single buffered']
    #allocation4 [shape = 's32[1]{0}', space=sflag, size = 0x4, scoped, tag = 'scoped memory for tpu_custom_call.1']
    #allocation5 [shape = 's32[1]{0}', space=sflag, size = 0x4, scoped, tag = 'scoped memory for tpu_custom_call.1']
    #allocation6 [shape = 'u8[512]{0}', space=vmem, size = 0x400, scoped, tag = 'input window, operand 5, single buffered']
    #allocation7 [shape = 's32[1]{0}', space=sflag, size = 0x4, scoped, tag = 'scoped memory for tpu_custom_call.1']
    #allocation8 [shape = 'u8[512]{0}', space=vmem, size = 0x400, scoped, tag = 'input window, operand 7, single buffered']
    #allocation9 [shape = 'u8[1048576]{0}', space=vmem, size = 0x100000, scoped, tag = 'input window, operand 8, single buffered']
    #allocation10 [shape = 's32[1]{0}', space=sflag, size = 0x4, scoped, tag = 'scoped memory for tpu_custom_call.1']
    #allocation11 [shape = 'u8[16384]{0}', space=vmem, size = 0x4000, scoped, tag = 'input window, operand 9, single buffered']
    #allocation12 [shape = 'u8[16384]{0}', space=vmem, size = 0x4000, scoped, tag = 'input window, operand 10, single buffered']
    #allocation13 [shape = 's32[1]{0}', space=sflag, size = 0x4, scoped, tag = 'scoped memory for tpu_custom_call.1']
    #allocation14 [shape = 'u8[512]{0}', space=vmem, size = 0x400, scoped, tag = 'input window, operand 11, single buffered']
    #allocation15 [shape = 'u8[49152]{0}', space=vmem, size = 0xc000, scoped, tag = 'input window, operand 13, single buffered']
    #allocation16 [shape = 's32[1]{0}', space=sflag, size = 0x4, scoped, tag = 'scoped memory for tpu_custom_call.1']
    #allocation17 [shape = 'u8[8192]{0}', space=vmem, size = 0x2000, scoped, tag = 'output window, operand 0, single buffered']
    %21 = vsyncpa [#allocation4], 0
    %22 = vsyncpa [#allocation7], 0
    %23 = vsyncpa [#allocation10], 0
    %24 = vsyncpa [#allocation13], 0
    %25 = vsyncpa [#allocation16], 0
    %26 = vsyncpa [#allocation5], 0
    // Predicated region
    $region2: #{tpu_custom_call.1} parent=1 // pred_check
      _
    $region3: #{tpu_custom_call.1} parent=1 // pred_check_branch
      %28 = sbr.rel (0) target = $region5
    $region4: #{tpu_custom_call.1} parent=1 // pred_region
      _
    $region5: #{tpu_custom_call.1} parent=1 // pred_fallthru
      _
    // Predicated region
    $region6: #{tpu_custom_call.1} parent=1 // pred_check
      _
    $region7: #{tpu_custom_call.1} parent=1 // pred_check_branch
      %30 = sbr.rel (0) target = $region9
    $region8: #{tpu_custom_call.1} parent=1 // pred_region
      _
    $region9: #{tpu_custom_call.1} parent=1 // pred_fallthru
      _
    // Predicated region
    $region10: #{tpu_custom_call.1} parent=1 // pred_check
      _
    $region11: #{tpu_custom_call.1} parent=1 // pred_check_branch
      %32 = sbr.rel (0) target = $region13
    $region12: #{tpu_custom_call.1} parent=1 // pred_region
      _
    $region13: #{tpu_custom_call.1} parent=1 // pred_fallthru
      _
    // Predicated region
    $region14: #{tpu_custom_call.1} parent=1 // pred_check
      _
    $region15: #{tpu_custom_call.1} parent=1 // pred_check_branch
      %34 = sbr.rel (0) target = $region17
    $region16: #{tpu_custom_call.1} parent=1 // pred_region
      %36 = vsyncadd [#allocation4], 0
      %s38 = sshll.u32 %s3, 4
      %s39 = int_to_ptr.hbm [resolvable:$true] %s38
      %s40 = sshll.u32 [#allocation3], 4
      %s41 = int_to_ptr.vmem [resolvable:$true] %s40
      %43 = dma.hbm_to_vmem [thread:$0]  %s39, 16, %s41, [#allocation4]
    $region17: #{tpu_custom_call.1} parent=1 // pred_fallthru
      _
    // Predicated region
    $region18: #{tpu_custom_call.1} parent=1 // pred_check
      _
    $region19: #{tpu_custom_call.1} parent=1 // pred_check_branch
      %45 = sbr.rel (0) target = $region21
    $region20: #{tpu_custom_call.1} parent=1 // pred_region
      _
    $region21: #{tpu_custom_call.1} parent=1 // pred_fallthru
      _
    // Predicated region
    $region22: #{tpu_custom_call.1} parent=1 // pred_check
      _
    $region23: #{tpu_custom_call.1} parent=1 // pred_check_branch
      %47 = sbr.rel (0) target = $region25
    $region24: #{tpu_custom_call.1} parent=1 // pred_region
      %49 = vsyncadd [#allocation7], 0
      %s51 = sshll.u32 %s5, 4
      %s52 = int_to_ptr.hbm [resolvable:$true] %s51
      %s53 = sshll.u32 [#allocation6], 4
      %s54 = int_to_ptr.vmem [resolvable:$true] %s53
      %56 = dma.hbm_to_vmem [thread:$0]  %s52, 16, %s54, [#allocation7]
    $region25: #{tpu_custom_call.1} parent=1 // pred_fallthru
      _
    // Predicated region
    $region26: #{tpu_custom_call.1} parent=1 // pred_check
      _
    $region27: #{tpu_custom_call.1} parent=1 // pred_check_branch
      %58 = sbr.rel (0) target = $region29
    $region28: #{tpu_custom_call.1} parent=1 // pred_region
      _
    $region29: #{tpu_custom_call.1} parent=1 // pred_fallthru
      _
    // Predicated region
    $region30: #{tpu_custom_call.1} parent=1 // pred_check
      _
    $region31: #{tpu_custom_call.1} parent=1 // pred_check_branch
      %60 = sbr.rel (0) target = $region33
    $region32: #{tpu_custom_call.1} parent=1 // pred_region
      %62 = vsyncadd [#allocation7], 0
      %s64 = sshll.u32 %s7, 4
      %s65 = int_to_ptr.hbm [resolvable:$true] %s64
      %s66 = sshll.u32 [#allocation8], 4
      %s67 = int_to_ptr.vmem [resolvable:$true] %s66
      %69 = dma.hbm_to_vmem [thread:$0]  %s65, 16, %s67, [#allocation7]
    $region33: #{tpu_custom_call.1} parent=1 // pred_fallthru
      _
    // Predicated region
    $region34: #{tpu_custom_call.1} parent=1 // pred_check
      _
    $region35: #{tpu_custom_call.1} parent=1 // pred_check_branch
      %71 = sbr.rel (0) target = $region37
    $region36: #{tpu_custom_call.1} parent=1 // pred_region
      %73 = vsyncadd [#allocation10], 0
      %s74 = sshll.u32 %s8, 4
      %s75 = int_to_ptr.hbm [resolvable:$true] %s74
      %s76 = sshll.u32 [#allocation9], 4
      %s77 = int_to_ptr.vmem [resolvable:$true] %s76
      %82 = dma.hbm_to_vmem [thread:$0]  %s75, 32768, %s77, [#allocation10], 2048, 2048, 128
    $region37: #{tpu_custom_call.1} parent=1 // pred_fallthru
      _
    // Predicated region
    $region38: #{tpu_custom_call.1} parent=1 // pred_check
      _
    $region39: #{tpu_custom_call.1} parent=1 // pred_check_branch
      %84 = sbr.rel (0) target = $region41
    $region40: #{tpu_custom_call.1} parent=1 // pred_region
      %86 = vsyncadd [#allocation10], 0
      %s88 = sshll.u32 %s9, 4
      %s89 = int_to_ptr.hbm [resolvable:$true] %s88
      %s90 = sshll.u32 [#allocation11], 4
      %s91 = int_to_ptr.vmem [resolvable:$true] %s90
      %93 = dma.hbm_to_vmem [thread:$0]  %s89, 512, %s91, [#allocation10]
    $region41: #{tpu_custom_call.1} parent=1 // pred_fallthru
      _
    // Predicated region
    $region42: #{tpu_custom_call.1} parent=1 // pred_check
      _
    $region43: #{tpu_custom_call.1} parent=1 // pred_check_branch
      %95 = sbr.rel (0) target = $region45
    $region44: #{tpu_custom_call.1} parent=1 // pred_region
      %97 = vsyncadd [#allocation13], 0
      %s98 = sshll.u32 %s10, 4
      %s99 = int_to_ptr.hbm [resolvable:$true] %s98
      %s100 = sshll.u32 [#allocation12], 4
      %s101 = int_to_ptr.vmem [resolvable:$true] %s100
      %106 = dma.hbm_to_vmem [thread:$0]  %s99, 512, %s101, [#allocation13], 64, 64, 4
    $region45: #{tpu_custom_call.1} parent=1 // pred_fallthru
      _
    // Predicated region
    $region46: #{tpu_custom_call.1} parent=1 // pred_check
      _
    $region47: #{tpu_custom_call.1} parent=1 // pred_check_branch
      %108 = sbr.rel (0) target = $region49
    $region48: #{tpu_custom_call.1} parent=1 // pred_region
      %110 = vsyncadd [#allocation13], 0
      %s112 = sshll.u32 %s11, 4
      %s113 = int_to_ptr.hbm [resolvable:$true] %s112
      %s114 = sshll.u32 [#allocation14], 4
      %s115 = int_to_ptr.vmem [resolvable:$true] %s114
      %117 = dma.hbm_to_vmem [thread:$0]  %s113, 16, %s115, [#allocation13]
    $region49: #{tpu_custom_call.1} parent=1 // pred_fallthru
      _
    // Predicated region
    $region50: #{tpu_custom_call.1} parent=1 // pred_check
      _
    $region51: #{tpu_custom_call.1} parent=1 // pred_check_branch
      %119 = sbr.rel (0) target = $region53
    $region52: #{tpu_custom_call.1} parent=1 // pred_region
      _
    $region53: #{tpu_custom_call.1} parent=1 // pred_fallthru
      _
    // Predicated region
    $region54: #{tpu_custom_call.1} parent=1 // pred_check
      _
    $region55: #{tpu_custom_call.1} parent=1 // pred_check_branch
      %121 = sbr.rel (0) target = $region57
    $region56: #{tpu_custom_call.1} parent=1 // pred_region
      %123 = vsyncadd [#allocation16], 0
      %s124 = sshll.u32 %s13, 4
      %s125 = int_to_ptr.hbm [resolvable:$true] %s124
      %s126 = sshll.u32 [#allocation15], 4
      %s127 = int_to_ptr.vmem [resolvable:$true] %s126
      %132 = dma.hbm_to_vmem [thread:$0]  %s125, 1536, %s127, [#allocation16], 192, 192, 12
    $region57: #{tpu_custom_call.1} parent=1 // pred_fallthru
      _
    // Predicated region
    $region58: #{tpu_custom_call.1} parent=1 // pred_check
      _
    $region59: #{tpu_custom_call.1} parent=1 // pred_check_branch
      %134 = sbr.rel (0) target = $region61
    $region60: #{tpu_custom_call.1} parent=1 // pred_region
      _
    $region61: #{tpu_custom_call.1} parent=1 // pred_fallthru
      _
    // Predicated region
    $region62: #{tpu_custom_call.1} parent=1 // pred_check
      _
    $region63: #{tpu_custom_call.1} parent=1 // pred_check_branch
      %136 = sbr.rel (0) target = $region65
    $region64: #{tpu_custom_call.1} parent=1 // pred_region
      _
    $region65: #{tpu_custom_call.1} parent=1 // pred_fallthru
      _
    // Predicated region
    $region66: #{tpu_custom_call.1} parent=1 // pred_check
      _
    $region67: #{tpu_custom_call.1} parent=1 // pred_check_branch
      %138 = sbr.rel (0) target = $region69
    $region68: #{tpu_custom_call.1} parent=1 // pred_region
      %140 = dma.done [#allocation4], 16
    $region69: #{tpu_custom_call.1} parent=1 // pred_fallthru
      _
    // Predicated region
    $region70: #{tpu_custom_call.1} parent=1 // pred_check
      _
    $region71: #{tpu_custom_call.1} parent=1 // pred_check_branch
      %142 = sbr.rel (0) target = $region73
    $region72: #{tpu_custom_call.1} parent=1 // pred_region
      %144 = dma.done [#allocation7], 16
    $region73: #{tpu_custom_call.1} parent=1 // pred_fallthru
      _
    // Predicated region
    $region74: #{tpu_custom_call.1} parent=1 // pred_check
      _
    $region75: #{tpu_custom_call.1} parent=1 // pred_check_branch
      %146 = sbr.rel (0) target = $region77
    $region76: #{tpu_custom_call.1} parent=1 // pred_region
      %148 = dma.done [#allocation7], 16
    $region77: #{tpu_custom_call.1} parent=1 // pred_fallthru
      _
    // Predicated region
    $region78: #{tpu_custom_call.1} parent=1 // pred_check
      _
    $region79: #{tpu_custom_call.1} parent=1 // pred_check_branch
      %150 = sbr.rel (0) target = $region81
    $region80: #{tpu_custom_call.1} parent=1 // pred_region
      %152 = dma.done [#allocation10], 32768
    $region81: #{tpu_custom_call.1} parent=1 // pred_fallthru
      _
    // Predicated region
    $region82: #{tpu_custom_call.1} parent=1 // pred_check
      _
    $region83: #{tpu_custom_call.1} parent=1 // pred_check_branch
      %154 = sbr.rel (0) target = $region85
    $region84: #{tpu_custom_call.1} parent=1 // pred_region
      %156 = dma.done [#allocation10], 512
    $region85: #{tpu_custom_call.1} parent=1 // pred_fallthru
      _
    // Predicated region
    $region86: #{tpu_custom_call.1} parent=1 // pred_check
      _
    $region87: #{tpu_custom_call.1} parent=1 // pred_check_branch
      %158 = sbr.rel (0) target = $region89
    $region88: #{tpu_custom_call.1} parent=1 // pred_region
      %160 = dma.done [#allocation13], 512
    $region89: #{tpu_custom_call.1} parent=1 // pred_fallthru
      _
    // Predicated region
    $region90: #{tpu_custom_call.1} parent=1 // pred_check
      _
    $region91: #{tpu_custom_call.1} parent=1 // pred_check_branch
      %162 = sbr.rel (0) target = $region93
    $region92: #{tpu_custom_call.1} parent=1 // pred_region
      %164 = dma.done [#allocation13], 16
    $region93: #{tpu_custom_call.1} parent=1 // pred_fallthru
      _
    // Predicated region
    $region94: #{tpu_custom_call.1} parent=1 // pred_check
      _
    $region95: #{tpu_custom_call.1} parent=1 // pred_check_branch
      %166 = sbr.rel (0) target = $region97
    $region96: #{tpu_custom_call.1} parent=1 // pred_region
      %168 = dma.done [#allocation16], 1536
    $region97: #{tpu_custom_call.1} parent=1 // pred_fallthru
      _
    %v170 = vld [vmem:[%s2] sm:$0xff]
    %v171 = vld [vmem:[%s2 + $0x8] sm:$0xff]
    %v172 = vld [vmem:[%s2 + $0x10] sm:$0xff]
    %v173 = vld [vmem:[%s2 + $0x18] sm:$0xff]
    %v174 = vld [vmem:[#allocation3] sm:$0x1]
    %v175 = vlaneseq
    %v176 = vand.u32 %v175, 127
    %177 = vset.pattern.permute.xlu0 0
    %178 = vperm.xlu0 %177, %v170
    %v179 = vpop.permute.xlu0 %178
    %180 = vset.pattern.permute.xlu0 0
    %181 = vperm.xlu0 %180, %v171
    %v182 = vpop.permute.xlu0 %181
    %183 = vset.pattern.permute.xlu0 0
    %184 = vperm.xlu0 %183, %v172
    %v185 = vpop.permute.xlu0 %184
    %186 = vset.pattern.permute.xlu0 0
    %187 = vperm.xlu0 %186, %v173
    %v188 = vpop.permute.xlu0 %187
    %vm189 = vcmp.eq.s32.totalorder %v179, %v176
    %vm190 = vcmp.eq.s32.totalorder %v182, %v176
    %vm191 = vcmp.eq.s32.totalorder %v185, %v176
    %vm192 = vcmp.eq.s32.totalorder %v188, %v176
    %v193 = vsel %vm189, 1, 0
    %v194 = vsel %vm190, 1, 0
    %v195 = vsel %vm191, 1, 0
    %v196 = vsel %vm192, 1, 0
    %v197 = vcvt.s32.f32 %v193
    %v198 = vcvt.s32.f32 %v194
    %v199 = vcvt.s32.f32 %v195
    %v200 = vcvt.s32.f32 %v196
    %v201 = vpack.c.bf16 %v198, %v197
    %v202 = vpack.c.bf16 %v200, %v199
    %v203 = vlaneseq
    %v204 = vshrl.u32 %v203, 7
    %v205 = vadd.s32 %v204, 8
    %v206 = vperm.slane %v174, 0
    %vm207 = vcmp.eq.s32.totalorder %v204, %v206
    %vm208 = vcmp.eq.s32.totalorder %v205, %v206
    %v209 = vsel %vm207, 1, 0
    %v210 = vsel %vm208, 1, 0
    %v211 = vcvt.s32.f32 %v209
    %v212 = vcvt.s32.f32 %v210
    %vm213 = vcmask 261120
    %v214 = vsel %vm213, %v211, 0.0
    %215 = vadd.xlane.f32.xlu0 %v214
    %v216 = vpop.xlane.xlu0 %215
    %v217 = vsel %vm213, %v212, 0.0
    %218 = vadd.xlane.f32.xlu0 %v217
    %v219 = vpop.xlane.xlu0 %218
    %vm220 = vcmp.gt.f32.partialorder %v216, 0.0
    %vm221 = vcmp.gt.f32.partialorder %v219, 0.0
    %v222 = vmax.f32 %v216, 1.0
    %v223 = vmax.f32 %v219, 1.0
    %v224 = vrcp.pop %v222
    %v225 = vmul.f32 %v222, %v224
    %v226 = vsub.f32 1.0, %v225
    %v227 = vmul.f32 %v224, %v226
    %v228 = vadd.f32 %v224, %v227
    %vm229 = vweird.f32 %v222
    %vm230 = vweird.f32 %v224
    %vm231 = vmor %vm229, %vm230
    %v232 = vsel %vm231, %v224, %v228
    %v233 = vand.u32 2147483647, %v222
    %vm234 = vcmp.eq.f32.partialorder %v233, 8.507059e+37
    %v235 = vand.u32 %v222, 2147483648
    %v236 = vor.u32 1.1754944e-38, %v235
    %v237 = vsel %vm234, %v236, %v232
    %v238 = vmul.f32 1.0, %v237
    %v239 = vrcp.pop %v223
    %v240 = vmul.f32 %v223, %v239
    %v241 = vsub.f32 1.0, %v240
    %v242 = vmul.f32 %v239, %v241
    %v243 = vadd.f32 %v239, %v242
    %vm244 = vweird.f32 %v223
    %vm245 = vweird.f32 %v239
    %vm246 = vmor %vm244, %vm245
    %v247 = vsel %vm246, %v239, %v243
    %v248 = vand.u32 2147483647, %v223
    %vm249 = vcmp.eq.f32.partialorder %v248, 8.507059e+37
    %v250 = vand.u32 %v223, 2147483648
    %v251 = vor.u32 1.1754944e-38, %v250
    %v252 = vsel %vm249, %v251, %v247
    %v253 = vmul.f32 1.0, %v252
    %v254 = vsel %vm220, %v238, 0.0
    %v255 = vsel %vm221, %v253, 0.0
    %v256 = vpack.c.bf16 %v212, %v211
    %v257 = vld [vmem:[%s1] sm:$0xff]
    %v258 = vld [vmem:[%s1 + $0x8] sm:$0xff]
    %v259 = vld [vmem:[%s1 + $0x10] sm:$0xff]
    %v260 = vld [vmem:[%s1 + $0x18] sm:$0xff]
    %v261 = vpack.c.bf16 %v258, %v257
    %v262 = vpack.c.bf16 %v260, %v259
    %v263 = vld [vmem:[%s6] sm:$0x7]
    %v264 = vld [vmem:[#allocation8] sm:$0x1]
    %v266 = vperm.slane %v264, 0
    %vm268 = vcmask 48128
    %v270 = vsel %vm268, %v261, 0
    %v273 = vsel %vm268, %v262, 0
    %vm275 = vcmask 1042432
    %v277 = vsel %vm275, %v263, 0
    %279 = vmatpush.bf16.msra.mxu0 0
    %280 = vmatpush.bf16.msra.mxu0 0
    %281 = vmatpush.bf16.msra.mxu0 0
    %282 = vmatpush.bf16.msra.mxu0 0
    %283 = vmatpush.bf16.msra.mxu0 0
    %284 = vmatpush.bf16.msra.mxu0 0
    %285 = vmatpush.bf16.msra.mxu0 0
    %286 = vmatpush.bf16.msra.mxu0 %v277
    %287 = vmatmul.bf16.gmra.mxu0 %v270
    %v288 = vpop.f32.mrf.mxu0
    %v289 = vadd.f32 %v266, %v288
    %v290 = vpop.f32.mrf.mxu0
    %v291 = vadd.f32 %v266, %v290
    %292 = vmatmul.bf16.gmra.mxu0 %v273
    %v293 = vpop.f32.mrf.mxu0
    %v294 = vadd.f32 %v266, %v293
    %v295 = vpop.f32.mrf.mxu0
    %v296 = vadd.f32 %v266, %v295
    %297 = vdwg.mxu0
    %v298 = vmax.f32 %v289, 0.0
    %v299 = vmax.f32 %v291, 0.0
    %v300 = vmax.f32 %v294, 0.0
    %v301 = vmax.f32 %v296, 0.0
    %v302 = vpack.c.bf16 %v299, %v298
    %v303 = vpack.c.bf16 %v301, %v300
    %v304 = vld [vmem:[#allocation9] sm:$0xff]
    %v305 = vld [vmem:[#allocation9 + $0x8] sm:$0xff]
    %v306 = vld [vmem:[#allocation9 + $0x10] sm:$0xff]
    %v307 = vld [vmem:[#allocation9 + $0x18] sm:$0xff]
    %v308 = vld [vmem:[#allocation9 + $0x20] sm:$0xff]
    %v309 = vld [vmem:[#allocation9 + $0x28] sm:$0xff]
    %v310 = vld [vmem:[#allocation9 + $0x30] sm:$0xff]
    %v311 = vld [vmem:[#allocation9 + $0x38] sm:$0xff]
    %v312 = vld [vmem:[#allocation9 + $0x40] sm:$0xff]
    %v313 = vld [vmem:[#allocation9 + $0x48] sm:$0xff]
    %v314 = vld [vmem:[#allocation9 + $0x50] sm:$0xff]
    %v315 = vld [vmem:[#allocation9 + $0x58] sm:$0xff]
    %v316 = vld [vmem:[#allocation9 + $0x60] sm:$0xff]
    %v317 = vld [vmem:[#allocation9 + $0x68] sm:$0xff]
    %v318 = vld [vmem:[#allocation9 + $0x70] sm:$0xff]
    %v319 = vld [vmem:[#allocation9 + $0x78] sm:$0xff]
    %v320 = vld [vmem:[#allocation9 + $0x80] sm:$0xff]
    %v321 = vld [vmem:[#allocation9 + $0x88] sm:$0xff]
    %v322 = vld [vmem:[#allocation9 + $0x90] sm:$0xff]
    %v323 = vld [vmem:[#allocation9 + $0x98] sm:$0xff]
    %v324 = vld [vmem:[#allocation9 + $0xa0] sm:$0xff]
    %v325 = vld [vmem:[#allocation9 + $0xa8] sm:$0xff]
    %v326 = vld [vmem:[#allocation9 + $0xb0] sm:$0xff]
    %v327 = vld [vmem:[#allocation9 + $0xb8] sm:$0xff]
    %v328 = vld [vmem:[#allocation9 + $0xc0] sm:$0xff]
    %v329 = vld [vmem:[#allocation9 + $0xc8] sm:$0xff]
    %v330 = vld [vmem:[#allocation9 + $0xd0] sm:$0xff]
    %v331 = vld [vmem:[#allocation9 + $0xd8] sm:$0xff]
    %v332 = vld [vmem:[#allocation9 + $0xe0] sm:$0xff]
    %v333 = vld [vmem:[#allocation9 + $0xe8] sm:$0xff]
    %v334 = vld [vmem:[#allocation9 + $0xf0] sm:$0xff]
    %v335 = vld [vmem:[#allocation9 + $0xf8] sm:$0xff]
    %v336 = vld [vmem:[#allocation9 + $0x100] sm:$0xff]
    %v337 = vld [vmem:[#allocation9 + $0x108] sm:$0xff]
    %v338 = vld [vmem:[#allocation9 + $0x110] sm:$0xff]
    %v339 = vld [vmem:[#allocation9 + $0x118] sm:$0xff]
    %v340 = vld [vmem:[#allocation9 + $0x120] sm:$0xff]
    %v341 = vld [vmem:[#allocation9 + $0x128] sm:$0xff]
    %v342 = vld [vmem:[#allocation9 + $0x130] sm:$0xff]
    %v343 = vld [vmem:[#allocation9 + $0x138] sm:$0xff]
    %v344 = vld [vmem:[#allocation9 + $0x140] sm:$0xff]
    %v345 = vld [vmem:[#allocation9 + $0x148] sm:$0xff]
    %v346 = vld [vmem:[#allocation9 + $0x150] sm:$0xff]
    %v347 = vld [vmem:[#allocation9 + $0x158] sm:$0xff]
    %v348 = vld [vmem:[#allocation9 + $0x160] sm:$0xff]
    %v349 = vld [vmem:[#allocation9 + $0x168] sm:$0xff]
    %v350 = vld [vmem:[#allocation9 + $0x170] sm:$0xff]
    %v351 = vld [vmem:[#allocation9 + $0x178] sm:$0xff]
    %v352 = vld [vmem:[#allocation9 + $0x180] sm:$0xff]
    %v353 = vld [vmem:[#allocation9 + $0x188] sm:$0xff]
    %v354 = vld [vmem:[#allocation9 + $0x190] sm:$0xff]
    %v355 = vld [vmem:[#allocation9 + $0x198] sm:$0xff]
    %v356 = vld [vmem:[#allocation9 + $0x1a0] sm:$0xff]
    %v357 = vld [vmem:[#allocation9 + $0x1a8] sm:$0xff]
    %v358 = vld [vmem:[#allocation9 + $0x1b0] sm:$0xff]
    %v359 = vld [vmem:[#allocation9 + $0x1b8] sm:$0xff]
    %v360 = vld [vmem:[#allocation9 + $0x1c0] sm:$0xff]
    %v361 = vld [vmem:[#allocation9 + $0x1c8] sm:$0xff]
    %v362 = vld [vmem:[#allocation9 + $0x1d0] sm:$0xff]
    %v363 = vld [vmem:[#allocation9 + $0x1d8] sm:$0xff]
    %v364 = vld [vmem:[#allocation9 + $0x1e0] sm:$0xff]
    %v365 = vld [vmem:[#allocation9 + $0x1e8] sm:$0xff]
    %v366 = vld [vmem:[#allocation9 + $0x1f0] sm:$0xff]
    %v367 = vld [vmem:[#allocation9 + $0x1f8] sm:$0xff]
    %v368 = vld [vmem:[#allocation9 + $0x200] sm:$0xff]
    %v369 = vld [vmem:[#allocation9 + $0x208] sm:$0xff]
    %v370 = vld [vmem:[#allocation9 + $0x210] sm:$0xff]
    %v371 = vld [vmem:[#allocation9 + $0x218] sm:$0xff]
    %v372 = vld [vmem:[#allocation9 + $0x220] sm:$0xff]
    %v373 = vld [vmem:[#allocation9 + $0x228] sm:$0xff]
    %v374 = vld [vmem:[#allocation9 + $0x230] sm:$0xff]
    %v375 = vld [vmem:[#allocation9 + $0x238] sm:$0xff]
    %v376 = vld [vmem:[#allocation9 + $0x240] sm:$0xff]
    %v377 = vld [vmem:[#allocation9 + $0x248] sm:$0xff]
    %v378 = vld [vmem:[#allocation9 + $0x250] sm:$0xff]
    %v379 = vld [vmem:[#allocation9 + $0x258] sm:$0xff]
    %v380 = vld [vmem:[#allocation9 + $0x260] sm:$0xff]
    %v381 = vld [vmem:[#allocation9 + $0x268] sm:$0xff]
    %v382 = vld [vmem:[#allocation9 + $0x270] sm:$0xff]
    %v383 = vld [vmem:[#allocation9 + $0x278] sm:$0xff]
    %v384 = vld [vmem:[#allocation9 + $0x280] sm:$0xff]
    %v385 = vld [vmem:[#allocation9 + $0x288] sm:$0xff]
    %v386 = vld [vmem:[#allocation9 + $0x290] sm:$0xff]
    %v387 = vld [vmem:[#allocation9 + $0x298] sm:$0xff]
    %v388 = vld [vmem:[#allocation9 + $0x2a0] sm:$0xff]
    %v389 = vld [vmem:[#allocation9 + $0x2a8] sm:$0xff]
    %v390 = vld [vmem:[#allocation9 + $0x2b0] sm:$0xff]
    %v391 = vld [vmem:[#allocation9 + $0x2b8] sm:$0xff]
    %v392 = vld [vmem:[#allocation9 + $0x2c0] sm:$0xff]
    %v393 = vld [vmem:[#allocation9 + $0x2c8] sm:$0xff]
    %v394 = vld [vmem:[#allocation9 + $0x2d0] sm:$0xff]
    %v395 = vld [vmem:[#allocation9 + $0x2d8] sm:$0xff]
    %v396 = vld [vmem:[#allocation9 + $0x2e0] sm:$0xff]
    %v397 = vld [vmem:[#allocation9 + $0x2e8] sm:$0xff]
    %v398 = vld [vmem:[#allocation9 + $0x2f0] sm:$0xff]
    %v399 = vld [vmem:[#allocation9 + $0x2f8] sm:$0xff]
    %v400 = vld [vmem:[#allocation9 + $0x300] sm:$0xff]
    %v401 = vld [vmem:[#allocation9 + $0x308] sm:$0xff]
    %v402 = vld [vmem:[#allocation9 + $0x310] sm:$0xff]
    %v403 = vld [vmem:[#allocation9 + $0x318] sm:$0xff]
    %v404 = vld [vmem:[#allocation9 + $0x320] sm:$0xff]
    %v405 = vld [vmem:[#allocation9 + $0x328] sm:$0xff]
    %v406 = vld [vmem:[#allocation9 + $0x330] sm:$0xff]
    %v407 = vld [vmem:[#allocation9 + $0x338] sm:$0xff]
    %v408 = vld [vmem:[#allocation9 + $0x340] sm:$0xff]
    %v409 = vld [vmem:[#allocation9 + $0x348] sm:$0xff]
    %v410 = vld [vmem:[#allocation9 + $0x350] sm:$0xff]
    %v411 = vld [vmem:[#allocation9 + $0x358] sm:$0xff]
    %v412 = vld [vmem:[#allocation9 + $0x360] sm:$0xff]
    %v413 = vld [vmem:[#allocation9 + $0x368] sm:$0xff]
    %v414 = vld [vmem:[#allocation9 + $0x370] sm:$0xff]
    %v415 = vld [vmem:[#allocation9 + $0x378] sm:$0xff]
    %v416 = vld [vmem:[#allocation9 + $0x380] sm:$0xff]
    %v417 = vld [vmem:[#allocation9 + $0x388] sm:$0xff]
    %v418 = vld [vmem:[#allocation9 + $0x390] sm:$0xff]
    %v419 = vld [vmem:[#allocation9 + $0x398] sm:$0xff]
    %v420 = vld [vmem:[#allocation9 + $0x3a0] sm:$0xff]
    %v421 = vld [vmem:[#allocation9 + $0x3a8] sm:$0xff]
    %v422 = vld [vmem:[#allocation9 + $0x3b0] sm:$0xff]
    %v423 = vld [vmem:[#allocation9 + $0x3b8] sm:$0xff]
    %v424 = vld [vmem:[#allocation9 + $0x3c0] sm:$0xff]
    %v425 = vld [vmem:[#allocation9 + $0x3c8] sm:$0xff]
    %v426 = vld [vmem:[#allocation9 + $0x3d0] sm:$0xff]
    %v427 = vld [vmem:[#allocation9 + $0x3d8] sm:$0xff]
    %v428 = vld [vmem:[#allocation9 + $0x3e0] sm:$0xff]
    %v429 = vld [vmem:[#allocation9 + $0x3e8] sm:$0xff]
    %v430 = vld [vmem:[#allocation9 + $0x3f0] sm:$0xff]
    %v431 = vld [vmem:[#allocation9 + $0x3f8] sm:$0xff]
    %v432 = vld [vmem:[#allocation9 + $0x400] sm:$0xff]
    %v433 = vld [vmem:[#allocation9 + $0x408] sm:$0xff]
    %v434 = vld [vmem:[#allocation9 + $0x410] sm:$0xff]
    %v435 = vld [vmem:[#allocation9 + $0x418] sm:$0xff]
    %v436 = vld [vmem:[#allocation9 + $0x420] sm:$0xff]
    %v437 = vld [vmem:[#allocation9 + $0x428] sm:$0xff]
    %v438 = vld [vmem:[#allocation9 + $0x430] sm:$0xff]
    %v439 = vld [vmem:[#allocation9 + $0x438] sm:$0xff]
    %v440 = vld [vmem:[#allocation9 + $0x440] sm:$0xff]
    %v441 = vld [vmem:[#allocation9 + $0x448] sm:$0xff]
    %v442 = vld [vmem:[#allocation9 + $0x450] sm:$0xff]
    %v443 = vld [vmem:[#allocation9 + $0x458] sm:$0xff]
    %v444 = vld [vmem:[#allocation9 + $0x460] sm:$0xff]
    %v445 = vld [vmem:[#allocation9 + $0x468] sm:$0xff]
    %v446 = vld [vmem:[#allocation9 + $0x470] sm:$0xff]
    %v447 = vld [vmem:[#allocation9 + $0x478] sm:$0xff]
    %v448 = vld [vmem:[#allocation9 + $0x480] sm:$0xff]
    %v449 = vld [vmem:[#allocation9 + $0x488] sm:$0xff]
    %v450 = vld [vmem:[#allocation9 + $0x490] sm:$0xff]
    %v451 = vld [vmem:[#allocation9 + $0x498] sm:$0xff]
    %v452 = vld [vmem:[#allocation9 + $0x4a0] sm:$0xff]
    %v453 = vld [vmem:[#allocation9 + $0x4a8] sm:$0xff]
    %v454 = vld [vmem:[#allocation9 + $0x4b0] sm:$0xff]
    %v455 = vld [vmem:[#allocation9 + $0x4b8] sm:$0xff]
    %v456 = vld [vmem:[#allocation9 + $0x4c0] sm:$0xff]
    %v457 = vld [vmem:[#allocation9 + $0x4c8] sm:$0xff]
    %v458 = vld [vmem:[#allocation9 + $0x4d0] sm:$0xff]
    %v459 = vld [vmem:[#allocation9 + $0x4d8] sm:$0xff]
    %v460 = vld [vmem:[#allocation9 + $0x4e0] sm:$0xff]
    %v461 = vld [vmem:[#allocation9 + $0x4e8] sm:$0xff]
    %v462 = vld [vmem:[#allocation9 + $0x4f0] sm:$0xff]
    %v463 = vld [vmem:[#allocation9 + $0x4f8] sm:$0xff]
    %v464 = vld [vmem:[#allocation9 + $0x500] sm:$0xff]
    %v465 = vld [vmem:[#allocation9 + $0x508] sm:$0xff]
    %v466 = vld [vmem:[#allocation9 + $0x510] sm:$0xff]
    %v467 = vld [vmem:[#allocation9 + $0x518] sm:$0xff]
    %v468 = vld [vmem:[#allocation9 + $0x520] sm:$0xff]
    %v469 = vld [vmem:[#allocation9 + $0x528] sm:$0xff]
    %v470 = vld [vmem:[#allocation9 + $0x530] sm:$0xff]
    %v471 = vld [vmem:[#allocation9 + $0x538] sm:$0xff]
    %v472 = vld [vmem:[#allocation9 + $0x540] sm:$0xff]
    %v473 = vld [vmem:[#allocation9 + $0x548] sm:$0xff]
    %v474 = vld [vmem:[#allocation9 + $0x550] sm:$0xff]
    %v475 = vld [vmem:[#allocation9 + $0x558] sm:$0xff]
    %v476 = vld [vmem:[#allocation9 + $0x560] sm:$0xff]
    %v477 = vld [vmem:[#allocation9 + $0x568] sm:$0xff]
    %v478 = vld [vmem:[#allocation9 + $0x570] sm:$0xff]
    %v479 = vld [vmem:[#allocation9 + $0x578] sm:$0xff]
    %v480 = vld [vmem:[#allocation9 + $0x580] sm:$0xff]
    %v481 = vld [vmem:[#allocation9 + $0x588] sm:$0xff]
    %v482 = vld [vmem:[#allocation9 + $0x590] sm:$0xff]
    %v483 = vld [vmem:[#allocation9 + $0x598] sm:$0xff]
    %v484 = vld [vmem:[#allocation9 + $0x5a0] sm:$0xff]
    %v485 = vld [vmem:[#allocation9 + $0x5a8] sm:$0xff]
    %v486 = vld [vmem:[#allocation9 + $0x5b0] sm:$0xff]
    %v487 = vld [vmem:[#allocation9 + $0x5b8] sm:$0xff]
    %v488 = vld [vmem:[#allocation9 + $0x5c0] sm:$0xff]
    %v489 = vld [vmem:[#allocation9 + $0x5c8] sm:$0xff]
    %v490 = vld [vmem:[#allocation9 + $0x5d0] sm:$0xff]
    %v491 = vld [vmem:[#allocation9 + $0x5d8] sm:$0xff]
    %v492 = vld [vmem:[#allocation9 + $0x5e0] sm:$0xff]
    %v493 = vld [vmem:[#allocation9 + $0x5e8] sm:$0xff]
    %v494 = vld [vmem:[#allocation9 + $0x5f0] sm:$0xff]
    %v495 = vld [vmem:[#allocation9 + $0x5f8] sm:$0xff]
    %v496 = vld [vmem:[#allocation9 + $0x600] sm:$0xff]
    %v497 = vld [vmem:[#allocation9 + $0x608] sm:$0xff]
    %v498 = vld [vmem:[#allocation9 + $0x610] sm:$0xff]
    %v499 = vld [vmem:[#allocation9 + $0x618] sm:$0xff]
    %v500 = vld [vmem:[#allocation9 + $0x620] sm:$0xff]
    %v501 = vld [vmem:[#allocation9 + $0x628] sm:$0xff]
    %v502 = vld [vmem:[#allocation9 + $0x630] sm:$0xff]
    %v503 = vld [vmem:[#allocation9 + $0x638] sm:$0xff]
    %v504 = vld [vmem:[#allocation9 + $0x640] sm:$0xff]
    %v505 = vld [vmem:[#allocation9 + $0x648] sm:$0xff]
    %v506 = vld [vmem:[#allocation9 + $0x650] sm:$0xff]
    %v507 = vld [vmem:[#allocation9 + $0x658] sm:$0xff]
    %v508 = vld [vmem:[#allocation9 + $0x660] sm:$0xff]
    %v509 = vld [vmem:[#allocation9 + $0x668] sm:$0xff]
    %v510 = vld [vmem:[#allocation9 + $0x670] sm:$0xff]
    %v511 = vld [vmem:[#allocation9 + $0x678] sm:$0xff]
    %v512 = vld [vmem:[#allocation9 + $0x680] sm:$0xff]
    %v513 = vld [vmem:[#allocation9 + $0x688] sm:$0xff]
    %v514 = vld [vmem:[#allocation9 + $0x690] sm:$0xff]
    %v515 = vld [vmem:[#allocation9 + $0x698] sm:$0xff]
    %v516 = vld [vmem:[#allocation9 + $0x6a0] sm:$0xff]
    %v517 = vld [vmem:[#allocation9 + $0x6a8] sm:$0xff]
    %v518 = vld [vmem:[#allocation9 + $0x6b0] sm:$0xff]
    %v519 = vld [vmem:[#allocation9 + $0x6b8] sm:$0xff]
    %v520 = vld [vmem:[#allocation9 + $0x6c0] sm:$0xff]
    %v521 = vld [vmem:[#allocation9 + $0x6c8] sm:$0xff]
    %v522 = vld [vmem:[#allocation9 + $0x6d0] sm:$0xff]
    %v523 = vld [vmem:[#allocation9 + $0x6d8] sm:$0xff]
    %v524 = vld [vmem:[#allocation9 + $0x6e0] sm:$0xff]
    %v525 = vld [vmem:[#allocation9 + $0x6e8] sm:$0xff]
    %v526 = vld [vmem:[#allocation9 + $0x6f0] sm:$0xff]
    %v527 = vld [vmem:[#allocation9 + $0x6f8] sm:$0xff]
    %v528 = vld [vmem:[#allocation9 + $0x700] sm:$0xff]
    %v529 = vld [vmem:[#allocation9 + $0x708] sm:$0xff]
    %v530 = vld [vmem:[#allocation9 + $0x710] sm:$0xff]
    %v531 = vld [vmem:[#allocation9 + $0x718] sm:$0xff]
    %v532 = vld [vmem:[#allocation9 + $0x720] sm:$0xff]
    %v533 = vld [vmem:[#allocation9 + $0x728] sm:$0xff]
    %v534 = vld [vmem:[#allocation9 + $0x730] sm:$0xff]
    %v535 = vld [vmem:[#allocation9 + $0x738] sm:$0xff]
    %v536 = vld [vmem:[#allocation9 + $0x740] sm:$0xff]
    %v537 = vld [vmem:[#allocation9 + $0x748] sm:$0xff]
    %v538 = vld [vmem:[#allocation9 + $0x750] sm:$0xff]
    %v539 = vld [vmem:[#allocation9 + $0x758] sm:$0xff]
    %v540 = vld [vmem:[#allocation9 + $0x760] sm:$0xff]
    %v541 = vld [vmem:[#allocation9 + $0x768] sm:$0xff]
    %v542 = vld [vmem:[#allocation9 + $0x770] sm:$0xff]
    %v543 = vld [vmem:[#allocation9 + $0x778] sm:$0xff]
    %v544 = vld [vmem:[#allocation9 + $0x780] sm:$0xff]
    %v545 = vld [vmem:[#allocation9 + $0x788] sm:$0xff]
    %v546 = vld [vmem:[#allocation9 + $0x790] sm:$0xff]
    %v547 = vld [vmem:[#allocation9 + $0x798] sm:$0xff]
    %v548 = vld [vmem:[#allocation9 + $0x7a0] sm:$0xff]
    %v549 = vld [vmem:[#allocation9 + $0x7a8] sm:$0xff]
    %v550 = vld [vmem:[#allocation9 + $0x7b0] sm:$0xff]
    %v551 = vld [vmem:[#allocation9 + $0x7b8] sm:$0xff]
    %v552 = vld [vmem:[#allocation9 + $0x7c0] sm:$0xff]
    %v553 = vld [vmem:[#allocation9 + $0x7c8] sm:$0xff]
    %v554 = vld [vmem:[#allocation9 + $0x7d0] sm:$0xff]
    %v555 = vld [vmem:[#allocation9 + $0x7d8] sm:$0xff]
    %v556 = vld [vmem:[#allocation9 + $0x7e0] sm:$0xff]
    %v557 = vld [vmem:[#allocation9 + $0x7e8] sm:$0xff]
    %v558 = vld [vmem:[#allocation9 + $0x7f0] sm:$0xff]
    %v559 = vld [vmem:[#allocation9 + $0x7f8] sm:$0xff]
    %v560 = vld [vmem:[#allocation11] sm:$0xff]
    %v561 = vld [vmem:[#allocation11 + $0x8] sm:$0xff]
    %v562 = vld [vmem:[#allocation11 + $0x10] sm:$0xff]
    %v563 = vld [vmem:[#allocation11 + $0x18] sm:$0xff]
    %v568 = vperm.slane %v560, 0
    %v569 = vperm.slane %v560, 1
    %v570 = vperm.slane %v560, 2
    %v571 = vperm.slane %v560, 3
    %v572 = vperm.slane %v560, 4
    %v573 = vperm.slane %v560, 5
    %v574 = vperm.slane %v560, 6
    %v575 = vperm.slane %v560, 7
    %v576 = vperm.slane %v561, 0
    %v577 = vperm.slane %v561, 1
    %v578 = vperm.slane %v561, 2
    %v579 = vperm.slane %v561, 3
    %v580 = vperm.slane %v561, 4
    %v581 = vperm.slane %v561, 5
    %v582 = vperm.slane %v561, 6
    %v583 = vperm.slane %v561, 7
    %v584 = vperm.slane %v562, 0
    %v585 = vperm.slane %v562, 1
    %v586 = vperm.slane %v562, 2
    %v587 = vperm.slane %v562, 3
    %v588 = vperm.slane %v562, 4
    %v589 = vperm.slane %v562, 5
    %v590 = vperm.slane %v562, 6
    %v591 = vperm.slane %v562, 7
    %v592 = vperm.slane %v563, 0
    %v593 = vperm.slane %v563, 1
    %v594 = vperm.slane %v563, 2
    %v595 = vperm.slane %v563, 3
    %v596 = vperm.slane %v563, 4
    %v597 = vperm.slane %v563, 5
    %v598 = vperm.slane %v563, 6
    %v599 = vperm.slane %v563, 7
    %v888 = vunpack.c.l.b16 %v304
    %v889 = vunpack.c.h.b16 %v304
    %v890 = vunpack.c.l.b16 %v305
    %v891 = vunpack.c.h.b16 %v305
    %v892 = vunpack.c.l.b16 %v306
    %v893 = vunpack.c.h.b16 %v306
    %v894 = vunpack.c.l.b16 %v307
    %v895 = vunpack.c.h.b16 %v307
    %v896 = vunpack.c.l.b16 %v308
    %v897 = vunpack.c.h.b16 %v308
    %v898 = vunpack.c.l.b16 %v309
    %v899 = vunpack.c.h.b16 %v309
    %v900 = vunpack.c.l.b16 %v310
    %v901 = vunpack.c.h.b16 %v310
    %v902 = vunpack.c.l.b16 %v311
    %v903 = vunpack.c.h.b16 %v311
    %v904 = vunpack.c.l.b16 %v312
    %v905 = vunpack.c.h.b16 %v312
    %v906 = vunpack.c.l.b16 %v313
    %v907 = vunpack.c.h.b16 %v313
    %v908 = vunpack.c.l.b16 %v314
    %v909 = vunpack.c.h.b16 %v314
    %v910 = vunpack.c.l.b16 %v315
    %v911 = vunpack.c.h.b16 %v315
    %v912 = vunpack.c.l.b16 %v316
    %v913 = vunpack.c.h.b16 %v316
    %v914 = vunpack.c.l.b16 %v317
    %v915 = vunpack.c.h.b16 %v317
    %v916 = vunpack.c.l.b16 %v318
    %v917 = vunpack.c.h.b16 %v318
    %v918 = vunpack.c.l.b16 %v319
    %v919 = vunpack.c.h.b16 %v319
    %v920 = vunpack.c.l.b16 %v320
    %v921 = vunpack.c.h.b16 %v320
    %v922 = vunpack.c.l.b16 %v321
    %v923 = vunpack.c.h.b16 %v321
    %v924 = vunpack.c.l.b16 %v322
    %v925 = vunpack.c.h.b16 %v322
    %v926 = vunpack.c.l.b16 %v323
    %v927 = vunpack.c.h.b16 %v323
    %v928 = vunpack.c.l.b16 %v324
    %v929 = vunpack.c.h.b16 %v324
    %v930 = vunpack.c.l.b16 %v325
    %v931 = vunpack.c.h.b16 %v325
    %v932 = vunpack.c.l.b16 %v326
    %v933 = vunpack.c.h.b16 %v326
    %v934 = vunpack.c.l.b16 %v327
    %v935 = vunpack.c.h.b16 %v327
    %v936 = vunpack.c.l.b16 %v328
    %v937 = vunpack.c.h.b16 %v328
    %v938 = vunpack.c.l.b16 %v329
    %v939 = vunpack.c.h.b16 %v329
    %v940 = vunpack.c.l.b16 %v330
    %v941 = vunpack.c.h.b16 %v330
    %v942 = vunpack.c.l.b16 %v331
    %v943 = vunpack.c.h.b16 %v331
    %v944 = vunpack.c.l.b16 %v332
    %v945 = vunpack.c.h.b16 %v332
    %v946 = vunpack.c.l.b16 %v333
    %v947 = vunpack.c.h.b16 %v333
    %v948 = vunpack.c.l.b16 %v334
    %v949 = vunpack.c.h.b16 %v334
    %v950 = vunpack.c.l.b16 %v335
    %v951 = vunpack.c.h.b16 %v335
    %v952 = vunpack.c.l.b16 %v336
    %v953 = vunpack.c.h.b16 %v336
    %v954 = vunpack.c.l.b16 %v337
    %v955 = vunpack.c.h.b16 %v337
    %v956 = vunpack.c.l.b16 %v338
    %v957 = vunpack.c.h.b16 %v338
    %v958 = vunpack.c.l.b16 %v339
    %v959 = vunpack.c.h.b16 %v339
    %v960 = vunpack.c.l.b16 %v340
    %v961 = vunpack.c.h.b16 %v340
    %v962 = vunpack.c.l.b16 %v341
    %v963 = vunpack.c.h.b16 %v341
    %v964 = vunpack.c.l.b16 %v342
    %v965 = vunpack.c.h.b16 %v342
    %v966 = vunpack.c.l.b16 %v343
    %v967 = vunpack.c.h.b16 %v343
    %v968 = vunpack.c.l.b16 %v344
    %v969 = vunpack.c.h.b16 %v344
    %v970 = vunpack.c.l.b16 %v345
    %v971 = vunpack.c.h.b16 %v345
    %v972 = vunpack.c.l.b16 %v346
    %v973 = vunpack.c.h.b16 %v346
    %v974 = vunpack.c.l.b16 %v347
    %v975 = vunpack.c.h.b16 %v347
    %v976 = vunpack.c.l.b16 %v348
    %v977 = vunpack.c.h.b16 %v348
    %v978 = vunpack.c.l.b16 %v349
    %v979 = vunpack.c.h.b16 %v349
    %v980 = vunpack.c.l.b16 %v350
    %v981 = vunpack.c.h.b16 %v350
    %v982 = vunpack.c.l.b16 %v351
    %v983 = vunpack.c.h.b16 %v351
    %v984 = vunpack.c.l.b16 %v352
    %v985 = vunpack.c.h.b16 %v352
    %v986 = vunpack.c.l.b16 %v353
    %v987 = vunpack.c.h.b16 %v353
    %v988 = vunpack.c.l.b16 %v354
    %v989 = vunpack.c.h.b16 %v354
    %v990 = vunpack.c.l.b16 %v355
    %v991 = vunpack.c.h.b16 %v355
    %v992 = vunpack.c.l.b16 %v356
    %v993 = vunpack.c.h.b16 %v356
    %v994 = vunpack.c.l.b16 %v357
    %v995 = vunpack.c.h.b16 %v357
    %v996 = vunpack.c.l.b16 %v358
    %v997 = vunpack.c.h.b16 %v358
    %v998 = vunpack.c.l.b16 %v359
    %v999 = vunpack.c.h.b16 %v359
    %v1000 = vunpack.c.l.b16 %v360
    %v1001 = vunpack.c.h.b16 %v360
    %v1002 = vunpack.c.l.b16 %v361
    %v1003 = vunpack.c.h.b16 %v361
    %v1004 = vunpack.c.l.b16 %v362
    %v1005 = vunpack.c.h.b16 %v362
    %v1006 = vunpack.c.l.b16 %v363
    %v1007 = vunpack.c.h.b16 %v363
    %v1008 = vunpack.c.l.b16 %v364
    %v1009 = vunpack.c.h.b16 %v364
    %v1010 = vunpack.c.l.b16 %v365
    %v1011 = vunpack.c.h.b16 %v365
    %v1012 = vunpack.c.l.b16 %v366
    %v1013 = vunpack.c.h.b16 %v366
    %v1014 = vunpack.c.l.b16 %v367
    %v1015 = vunpack.c.h.b16 %v367
    %v1016 = vunpack.c.l.b16 %v368
    %v1017 = vunpack.c.h.b16 %v368
    %v1018 = vunpack.c.l.b16 %v369
    %v1019 = vunpack.c.h.b16 %v369
    %v1020 = vunpack.c.l.b16 %v370
    %v1021 = vunpack.c.h.b16 %v370
    %v1022 = vunpack.c.l.b16 %v371
    %v1023 = vunpack.c.h.b16 %v371
    %v1024 = vunpack.c.l.b16 %v372
    %v1025 = vunpack.c.h.b16 %v372
    %v1026 = vunpack.c.l.b16 %v373
    %v1027 = vunpack.c.h.b16 %v373
    %v1028 = vunpack.c.l.b16 %v374
    %v1029 = vunpack.c.h.b16 %v374
    %v1030 = vunpack.c.l.b16 %v375
    %v1031 = vunpack.c.h.b16 %v375
    %v1032 = vunpack.c.l.b16 %v376
    %v1033 = vunpack.c.h.b16 %v376
    %v1034 = vunpack.c.l.b16 %v377
    %v1035 = vunpack.c.h.b16 %v377
    %v1036 = vunpack.c.l.b16 %v378
    %v1037 = vunpack.c.h.b16 %v378
    %v1038 = vunpack.c.l.b16 %v379
    %v1039 = vunpack.c.h.b16 %v379
    %v1040 = vunpack.c.l.b16 %v380
    %v1041 = vunpack.c.h.b16 %v380
    %v1042 = vunpack.c.l.b16 %v381
    %v1043 = vunpack.c.h.b16 %v381
    %v1044 = vunpack.c.l.b16 %v382
    %v1045 = vunpack.c.h.b16 %v382
    %v1046 = vunpack.c.l.b16 %v383
    %v1047 = vunpack.c.h.b16 %v383
    %v1048 = vunpack.c.l.b16 %v384
    %v1049 = vunpack.c.h.b16 %v384
    %v1050 = vunpack.c.l.b16 %v385
    %v1051 = vunpack.c.h.b16 %v385
    %v1052 = vunpack.c.l.b16 %v386
    %v1053 = vunpack.c.h.b16 %v386
    %v1054 = vunpack.c.l.b16 %v387
    %v1055 = vunpack.c.h.b16 %v387
    %v1056 = vunpack.c.l.b16 %v388
    %v1057 = vunpack.c.h.b16 %v388
    %v1058 = vunpack.c.l.b16 %v389
    %v1059 = vunpack.c.h.b16 %v389
    %v1060 = vunpack.c.l.b16 %v390
    %v1061 = vunpack.c.h.b16 %v390
    %v1062 = vunpack.c.l.b16 %v391
    %v1063 = vunpack.c.h.b16 %v391
    %v1064 = vunpack.c.l.b16 %v392
    %v1065 = vunpack.c.h.b16 %v392
    %v1066 = vunpack.c.l.b16 %v393
    %v1067 = vunpack.c.h.b16 %v393
    %v1068 = vunpack.c.l.b16 %v394
    %v1069 = vunpack.c.h.b16 %v394
    %v1070 = vunpack.c.l.b16 %v395
    %v1071 = vunpack.c.h.b16 %v395
    %v1072 = vunpack.c.l.b16 %v396
    %v1073 = vunpack.c.h.b16 %v396
    %v1074 = vunpack.c.l.b16 %v397
    %v1075 = vunpack.c.h.b16 %v397
    %v1076 = vunpack.c.l.b16 %v398
    %v1077 = vunpack.c.h.b16 %v398
    %v1078 = vunpack.c.l.b16 %v399
    %v1079 = vunpack.c.h.b16 %v399
    %v1080 = vunpack.c.l.b16 %v400
    %v1081 = vunpack.c.h.b16 %v400
    %v1082 = vunpack.c.l.b16 %v401
    %v1083 = vunpack.c.h.b16 %v401
    %v1084 = vunpack.c.l.b16 %v402
    %v1085 = vunpack.c.h.b16 %v402
    %v1086 = vunpack.c.l.b16 %v403
    %v1087 = vunpack.c.h.b16 %v403
    %v1088 = vunpack.c.l.b16 %v404
    %v1089 = vunpack.c.h.b16 %v404
    %v1090 = vunpack.c.l.b16 %v405
    %v1091 = vunpack.c.h.b16 %v405
    %v1092 = vunpack.c.l.b16 %v406
    %v1093 = vunpack.c.h.b16 %v406
    %v1094 = vunpack.c.l.b16 %v407
    %v1095 = vunpack.c.h.b16 %v407
    %v1096 = vunpack.c.l.b16 %v408
    %v1097 = vunpack.c.h.b16 %v408
    %v1098 = vunpack.c.l.b16 %v409
    %v1099 = vunpack.c.h.b16 %v409
    %v1100 = vunpack.c.l.b16 %v410
    %v1101 = vunpack.c.h.b16 %v410
    %v1102 = vunpack.c.l.b16 %v411
    %v1103 = vunpack.c.h.b16 %v411
    %v1104 = vunpack.c.l.b16 %v412
    %v1105 = vunpack.c.h.b16 %v412
    %v1106 = vunpack.c.l.b16 %v413
    %v1107 = vunpack.c.h.b16 %v413
    %v1108 = vunpack.c.l.b16 %v414
    %v1109 = vunpack.c.h.b16 %v414
    %v1110 = vunpack.c.l.b16 %v415
    %v1111 = vunpack.c.h.b16 %v415
    %v1112 = vunpack.c.l.b16 %v416
    %v1113 = vunpack.c.h.b16 %v416
    %v1114 = vunpack.c.l.b16 %v417
    %v1115 = vunpack.c.h.b16 %v417
    %v1116 = vunpack.c.l.b16 %v418
    %v1117 = vunpack.c.h.b16 %v418
    %v1118 = vunpack.c.l.b16 %v419
    %v1119 = vunpack.c.h.b16 %v419
    %v1120 = vunpack.c.l.b16 %v420
    %v1121 = vunpack.c.h.b16 %v420
    %v1122 = vunpack.c.l.b16 %v421
    %v1123 = vunpack.c.h.b16 %v421
    %v1124 = vunpack.c.l.b16 %v422
    %v1125 = vunpack.c.h.b16 %v422
    %v1126 = vunpack.c.l.b16 %v423
    %v1127 = vunpack.c.h.b16 %v423
    %v1128 = vunpack.c.l.b16 %v424
    %v1129 = vunpack.c.h.b16 %v424
    %v1130 = vunpack.c.l.b16 %v425
    %v1131 = vunpack.c.h.b16 %v425
    %v1132 = vunpack.c.l.b16 %v426
    %v1133 = vunpack.c.h.b16 %v426
    %v1134 = vunpack.c.l.b16 %v427
    %v1135 = vunpack.c.h.b16 %v427
    %v1136 = vunpack.c.l.b16 %v428
    %v1137 = vunpack.c.h.b16 %v428
    %v1138 = vunpack.c.l.b16 %v429
    %v1139 = vunpack.c.h.b16 %v429
    %v1140 = vunpack.c.l.b16 %v430
    %v1141 = vunpack.c.h.b16 %v430
    %v1142 = vunpack.c.l.b16 %v431
    %v1143 = vunpack.c.h.b16 %v431
    %v1144 = vunpack.c.l.b16 %v432
    %v1145 = vunpack.c.h.b16 %v432
    %v1146 = vunpack.c.l.b16 %v433
    %v1147 = vunpack.c.h.b16 %v433
    %v1148 = vunpack.c.l.b16 %v434
    %v1149 = vunpack.c.h.b16 %v434
    %v1150 = vunpack.c.l.b16 %v435
    %v1151 = vunpack.c.h.b16 %v435
    %v1152 = vunpack.c.l.b16 %v436
    %v1153 = vunpack.c.h.b16 %v436
    %v1154 = vunpack.c.l.b16 %v437
    %v1155 = vunpack.c.h.b16 %v437
    %v1156 = vunpack.c.l.b16 %v438
    %v1157 = vunpack.c.h.b16 %v438
    %v1158 = vunpack.c.l.b16 %v439
    %v1159 = vunpack.c.h.b16 %v439
    %v1160 = vunpack.c.l.b16 %v440
    %v1161 = vunpack.c.h.b16 %v440
    %v1162 = vunpack.c.l.b16 %v441
    %v1163 = vunpack.c.h.b16 %v441
    %v1164 = vunpack.c.l.b16 %v442
    %v1165 = vunpack.c.h.b16 %v442
    %v1166 = vunpack.c.l.b16 %v443
    %v1167 = vunpack.c.h.b16 %v443
    %v1168 = vunpack.c.l.b16 %v444
    %v1169 = vunpack.c.h.b16 %v444
    %v1170 = vunpack.c.l.b16 %v445
    %v1171 = vunpack.c.h.b16 %v445
    %v1172 = vunpack.c.l.b16 %v446
    %v1173 = vunpack.c.h.b16 %v446
    %v1174 = vunpack.c.l.b16 %v447
    %v1175 = vunpack.c.h.b16 %v447
    %v1176 = vunpack.c.l.b16 %v448
    %v1177 = vunpack.c.h.b16 %v448
    %v1178 = vunpack.c.l.b16 %v449
    %v1179 = vunpack.c.h.b16 %v449
    %v1180 = vunpack.c.l.b16 %v450
    %v1181 = vunpack.c.h.b16 %v450
    %v1182 = vunpack.c.l.b16 %v451
    %v1183 = vunpack.c.h.b16 %v451
    %v1184 = vunpack.c.l.b16 %v452
    %v1185 = vunpack.c.h.b16 %v452
    %v1186 = vunpack.c.l.b16 %v453
    %v1187 = vunpack.c.h.b16 %v453
    %v1188 = vunpack.c.l.b16 %v454
    %v1189 = vunpack.c.h.b16 %v454
    %v1190 = vunpack.c.l.b16 %v455
    %v1191 = vunpack.c.h.b16 %v455
    %v1192 = vunpack.c.l.b16 %v456
    %v1193 = vunpack.c.h.b16 %v456
    %v1194 = vunpack.c.l.b16 %v457
    %v1195 = vunpack.c.h.b16 %v457
    %v1196 = vunpack.c.l.b16 %v458
    %v1197 = vunpack.c.h.b16 %v458
    %v1198 = vunpack.c.l.b16 %v459
    %v1199 = vunpack.c.h.b16 %v459
    %v1200 = vunpack.c.l.b16 %v460
    %v1201 = vunpack.c.h.b16 %v460
    %v1202 = vunpack.c.l.b16 %v461
    %v1203 = vunpack.c.h.b16 %v461
    %v1204 = vunpack.c.l.b16 %v462
    %v1205 = vunpack.c.h.b16 %v462
    %v1206 = vunpack.c.l.b16 %v463
    %v1207 = vunpack.c.h.b16 %v463
    %v1208 = vunpack.c.l.b16 %v464
    %v1209 = vunpack.c.h.b16 %v464
    %v1210 = vunpack.c.l.b16 %v465
    %v1211 = vunpack.c.h.b16 %v465
    %v1212 = vunpack.c.l.b16 %v466
    %v1213 = vunpack.c.h.b16 %v466
    %v1214 = vunpack.c.l.b16 %v467
    %v1215 = vunpack.c.h.b16 %v467
    %v1216 = vunpack.c.l.b16 %v468
    %v1217 = vunpack.c.h.b16 %v468
    %v1218 = vunpack.c.l.b16 %v469
    %v1219 = vunpack.c.h.b16 %v469
    %v1220 = vunpack.c.l.b16 %v470
    %v1221 = vunpack.c.h.b16 %v470
    %v1222 = vunpack.c.l.b16 %v471
    %v1223 = vunpack.c.h.b16 %v471
    %v1224 = vunpack.c.l.b16 %v472
    %v1225 = vunpack.c.h.b16 %v472
    %v1226 = vunpack.c.l.b16 %v473
    %v1227 = vunpack.c.h.b16 %v473
    %v1228 = vunpack.c.l.b16 %v474
    %v1229 = vunpack.c.h.b16 %v474
    %v1230 = vunpack.c.l.b16 %v475
    %v1231 = vunpack.c.h.b16 %v475
    %v1232 = vunpack.c.l.b16 %v476
    %v1233 = vunpack.c.h.b16 %v476
    %v1234 = vunpack.c.l.b16 %v477
    %v1235 = vunpack.c.h.b16 %v477
    %v1236 = vunpack.c.l.b16 %v478
    %v1237 = vunpack.c.h.b16 %v478
    %v1238 = vunpack.c.l.b16 %v479
    %v1239 = vunpack.c.h.b16 %v479
    %v1240 = vunpack.c.l.b16 %v480
    %v1241 = vunpack.c.h.b16 %v480
    %v1242 = vunpack.c.l.b16 %v481
    %v1243 = vunpack.c.h.b16 %v481
    %v1244 = vunpack.c.l.b16 %v482
    %v1245 = vunpack.c.h.b16 %v482
    %v1246 = vunpack.c.l.b16 %v483
    %v1247 = vunpack.c.h.b16 %v483
    %v1248 = vunpack.c.l.b16 %v484
    %v1249 = vunpack.c.h.b16 %v484
    %v1250 = vunpack.c.l.b16 %v485
    %v1251 = vunpack.c.h.b16 %v485
    %v1252 = vunpack.c.l.b16 %v486
    %v1253 = vunpack.c.h.b16 %v486
    %v1254 = vunpack.c.l.b16 %v487
    %v1255 = vunpack.c.h.b16 %v487
    %v1256 = vunpack.c.l.b16 %v488
    %v1257 = vunpack.c.h.b16 %v488
    %v1258 = vunpack.c.l.b16 %v489
    %v1259 = vunpack.c.h.b16 %v489
    %v1260 = vunpack.c.l.b16 %v490
    %v1261 = vunpack.c.h.b16 %v490
    %v1262 = vunpack.c.l.b16 %v491
    %v1263 = vunpack.c.h.b16 %v491
    %v1264 = vunpack.c.l.b16 %v492
    %v1265 = vunpack.c.h.b16 %v492
    %v1266 = vunpack.c.l.b16 %v493
    %v1267 = vunpack.c.h.b16 %v493
    %v1268 = vunpack.c.l.b16 %v494
    %v1269 = vunpack.c.h.b16 %v494
    %v1270 = vunpack.c.l.b16 %v495
    %v1271 = vunpack.c.h.b16 %v495
    %v1272 = vunpack.c.l.b16 %v496
    %v1273 = vunpack.c.h.b16 %v496
    %v1274 = vunpack.c.l.b16 %v497
    %v1275 = vunpack.c.h.b16 %v497
    %v1276 = vunpack.c.l.b16 %v498
    %v1277 = vunpack.c.h.b16 %v498
    %v1278 = vunpack.c.l.b16 %v499
    %v1279 = vunpack.c.h.b16 %v499
    %v1280 = vunpack.c.l.b16 %v500
    %v1281 = vunpack.c.h.b16 %v500
    %v1282 = vunpack.c.l.b16 %v501
    %v1283 = vunpack.c.h.b16 %v501
    %v1284 = vunpack.c.l.b16 %v502
    %v1285 = vunpack.c.h.b16 %v502
    %v1286 = vunpack.c.l.b16 %v503
    %v1287 = vunpack.c.h.b16 %v503
    %v1288 = vunpack.c.l.b16 %v504
    %v1289 = vunpack.c.h.b16 %v504
    %v1290 = vunpack.c.l.b16 %v505
    %v1291 = vunpack.c.h.b16 %v505
    %v1292 = vunpack.c.l.b16 %v506
    %v1293 = vunpack.c.h.b16 %v506
    %v1294 = vunpack.c.l.b16 %v507
    %v1295 = vunpack.c.h.b16 %v507
    %v1296 = vunpack.c.l.b16 %v508
    %v1297 = vunpack.c.h.b16 %v508
    %v1298 = vunpack.c.l.b16 %v509
    %v1299 = vunpack.c.h.b16 %v509
    %v1300 = vunpack.c.l.b16 %v510
    %v1301 = vunpack.c.h.b16 %v510
    %v1302 = vunpack.c.l.b16 %v511
    %v1303 = vunpack.c.h.b16 %v511
    %v1304 = vunpack.c.l.b16 %v512
    %v1305 = vunpack.c.h.b16 %v512
    %v1306 = vunpack.c.l.b16 %v513
    %v1307 = vunpack.c.h.b16 %v513
    %v1308 = vunpack.c.l.b16 %v514
    %v1309 = vunpack.c.h.b16 %v514
    %v1310 = vunpack.c.l.b16 %v515
    %v1311 = vunpack.c.h.b16 %v515
    %v1312 = vunpack.c.l.b16 %v516
    %v1313 = vunpack.c.h.b16 %v516
    %v1314 = vunpack.c.l.b16 %v517
    %v1315 = vunpack.c.h.b16 %v517
    %v1316 = vunpack.c.l.b16 %v518
    %v1317 = vunpack.c.h.b16 %v518
    %v1318 = vunpack.c.l.b16 %v519
    %v1319 = vunpack.c.h.b16 %v519
    %v1320 = vunpack.c.l.b16 %v520
    %v1321 = vunpack.c.h.b16 %v520
    %v1322 = vunpack.c.l.b16 %v521
    %v1323 = vunpack.c.h.b16 %v521
    %v1324 = vunpack.c.l.b16 %v522
    %v1325 = vunpack.c.h.b16 %v522
    %v1326 = vunpack.c.l.b16 %v523
    %v1327 = vunpack.c.h.b16 %v523
    %v1328 = vunpack.c.l.b16 %v524
    %v1329 = vunpack.c.h.b16 %v524
    %v1330 = vunpack.c.l.b16 %v525
    %v1331 = vunpack.c.h.b16 %v525
    %v1332 = vunpack.c.l.b16 %v526
    %v1333 = vunpack.c.h.b16 %v526
    %v1334 = vunpack.c.l.b16 %v527
    %v1335 = vunpack.c.h.b16 %v527
    %v1336 = vunpack.c.l.b16 %v528
    %v1337 = vunpack.c.h.b16 %v528
    %v1338 = vunpack.c.l.b16 %v529
    %v1339 = vunpack.c.h.b16 %v529
    %v1340 = vunpack.c.l.b16 %v530
    %v1341 = vunpack.c.h.b16 %v530
    %v1342 = vunpack.c.l.b16 %v531
    %v1343 = vunpack.c.h.b16 %v531
    %v1344 = vunpack.c.l.b16 %v532
    %v1345 = vunpack.c.h.b16 %v532
    %v1346 = vunpack.c.l.b16 %v533
    %v1347 = vunpack.c.h.b16 %v533
    %v1348 = vunpack.c.l.b16 %v534
    %v1349 = vunpack.c.h.b16 %v534
    %v1350 = vunpack.c.l.b16 %v535
    %v1351 = vunpack.c.h.b16 %v535
    %v1352 = vunpack.c.l.b16 %v536
    %v1353 = vunpack.c.h.b16 %v536
    %v1354 = vunpack.c.l.b16 %v537
    %v1355 = vunpack.c.h.b16 %v537
    %v1356 = vunpack.c.l.b16 %v538
    %v1357 = vunpack.c.h.b16 %v538
    %v1358 = vunpack.c.l.b16 %v539
    %v1359 = vunpack.c.h.b16 %v539
    %v1360 = vunpack.c.l.b16 %v540
    %v1361 = vunpack.c.h.b16 %v540
    %v1362 = vunpack.c.l.b16 %v541
    %v1363 = vunpack.c.h.b16 %v541
    %v1364 = vunpack.c.l.b16 %v542
    %v1365 = vunpack.c.h.b16 %v542
    %v1366 = vunpack.c.l.b16 %v543
    %v1367 = vunpack.c.h.b16 %v543
    %v1368 = vunpack.c.l.b16 %v544
    %v1369 = vunpack.c.h.b16 %v544
    %v1370 = vunpack.c.l.b16 %v545
    %v1371 = vunpack.c.h.b16 %v545
    %v1372 = vunpack.c.l.b16 %v546
    %v1373 = vunpack.c.h.b16 %v546
    %v1374 = vunpack.c.l.b16 %v547
    %v1375 = vunpack.c.h.b16 %v547
    %v1376 = vunpack.c.l.b16 %v548
    %v1377 = vunpack.c.h.b16 %v548
    %v1378 = vunpack.c.l.b16 %v549
    %v1379 = vunpack.c.h.b16 %v549
    %v1380 = vunpack.c.l.b16 %v550
    %v1381 = vunpack.c.h.b16 %v550
    %v1382 = vunpack.c.l.b16 %v551
    %v1383 = vunpack.c.h.b16 %v551
    %v1384 = vunpack.c.l.b16 %v552
    %v1385 = vunpack.c.h.b16 %v552
    %v1386 = vunpack.c.l.b16 %v553
    %v1387 = vunpack.c.h.b16 %v553
    %v1388 = vunpack.c.l.b16 %v554
    %v1389 = vunpack.c.h.b16 %v554
    %v1390 = vunpack.c.l.b16 %v555
    %v1391 = vunpack.c.h.b16 %v555
    %v1392 = vunpack.c.l.b16 %v556
    %v1393 = vunpack.c.h.b16 %v556
    %v1394 = vunpack.c.l.b16 %v557
    %v1395 = vunpack.c.h.b16 %v557
    %v1396 = vunpack.c.l.b16 %v558
    %v1397 = vunpack.c.h.b16 %v558
    %v1398 = vunpack.c.l.b16 %v559
    %v1399 = vunpack.c.h.b16 %v559
    %v1400 = vpack.c.b16 %v920, %v888
    %v1401 = vpack.c.b16 %v921, %v889
    %v1402 = vpack.c.b16 %v922, %v890
    %v1403 = vpack.c.b16 %v923, %v891
    %v1404 = vpack.c.b16 %v924, %v892
    %v1405 = vpack.c.b16 %v925, %v893
    %v1406 = vpack.c.b16 %v926, %v894
    %v1407 = vpack.c.b16 %v927, %v895
    %v1408 = vpack.c.b16 %v928, %v896
    %v1409 = vpack.c.b16 %v929, %v897
    %v1410 = vpack.c.b16 %v930, %v898
    %v1411 = vpack.c.b16 %v931, %v899
    %v1412 = vpack.c.b16 %v932, %v900
    %v1413 = vpack.c.b16 %v933, %v901
    %v1414 = vpack.c.b16 %v934, %v902
    %v1415 = vpack.c.b16 %v935, %v903
    %v1416 = vpack.c.b16 %v936, %v904
    %v1417 = vpack.c.b16 %v937, %v905
    %v1418 = vpack.c.b16 %v938, %v906
    %v1419 = vpack.c.b16 %v939, %v907
    %v1420 = vpack.c.b16 %v940, %v908
    %v1421 = vpack.c.b16 %v941, %v909
    %v1422 = vpack.c.b16 %v942, %v910
    %v1423 = vpack.c.b16 %v943, %v911
    %v1424 = vpack.c.b16 %v944, %v912
    %v1425 = vpack.c.b16 %v945, %v913
    %v1426 = vpack.c.b16 %v946, %v914
    %v1427 = vpack.c.b16 %v947, %v915
    %v1428 = vpack.c.b16 %v948, %v916
    %v1429 = vpack.c.b16 %v949, %v917
    %v1430 = vpack.c.b16 %v950, %v918
    %v1431 = vpack.c.b16 %v951, %v919
    %v1432 = vpack.c.b16 %v984, %v952
    %v1433 = vpack.c.b16 %v985, %v953
    %v1434 = vpack.c.b16 %v986, %v954
    %v1435 = vpack.c.b16 %v987, %v955
    %v1436 = vpack.c.b16 %v988, %v956
    %v1437 = vpack.c.b16 %v989, %v957
    %v1438 = vpack.c.b16 %v990, %v958
    %v1439 = vpack.c.b16 %v991, %v959
    %v1440 = vpack.c.b16 %v992, %v960
    %v1441 = vpack.c.b16 %v993, %v961
    %v1442 = vpack.c.b16 %v994, %v962
    %v1443 = vpack.c.b16 %v995, %v963
    %v1444 = vpack.c.b16 %v996, %v964
    %v1445 = vpack.c.b16 %v997, %v965
    %v1446 = vpack.c.b16 %v998, %v966
    %v1447 = vpack.c.b16 %v999, %v967
    %v1448 = vpack.c.b16 %v1000, %v968
    %v1449 = vpack.c.b16 %v1001, %v969
    %v1450 = vpack.c.b16 %v1002, %v970
    %v1451 = vpack.c.b16 %v1003, %v971
    %v1452 = vpack.c.b16 %v1004, %v972
    %v1453 = vpack.c.b16 %v1005, %v973
    %v1454 = vpack.c.b16 %v1006, %v974
    %v1455 = vpack.c.b16 %v1007, %v975
    %v1456 = vpack.c.b16 %v1008, %v976
    %v1457 = vpack.c.b16 %v1009, %v977
    %v1458 = vpack.c.b16 %v1010, %v978
    %v1459 = vpack.c.b16 %v1011, %v979
    %v1460 = vpack.c.b16 %v1012, %v980
    %v1461 = vpack.c.b16 %v1013, %v981
    %v1462 = vpack.c.b16 %v1014, %v982
    %v1463 = vpack.c.b16 %v1015, %v983
    %v1464 = vpack.c.b16 %v1048, %v1016
    %v1465 = vpack.c.b16 %v1049, %v1017
    %v1466 = vpack.c.b16 %v1050, %v1018
    %v1467 = vpack.c.b16 %v1051, %v1019
    %v1468 = vpack.c.b16 %v1052, %v1020
    %v1469 = vpack.c.b16 %v1053, %v1021
    %v1470 = vpack.c.b16 %v1054, %v1022
    %v1471 = vpack.c.b16 %v1055, %v1023
    %v1472 = vpack.c.b16 %v1056, %v1024
    %v1473 = vpack.c.b16 %v1057, %v1025
    %v1474 = vpack.c.b16 %v1058, %v1026
    %v1475 = vpack.c.b16 %v1059, %v1027
    %v1476 = vpack.c.b16 %v1060, %v1028
    %v1477 = vpack.c.b16 %v1061, %v1029
    %v1478 = vpack.c.b16 %v1062, %v1030
    %v1479 = vpack.c.b16 %v1063, %v1031
    %v1480 = vpack.c.b16 %v1064, %v1032
    %v1481 = vpack.c.b16 %v1065, %v1033
    %v1482 = vpack.c.b16 %v1066, %v1034
    %v1483 = vpack.c.b16 %v1067, %v1035
    %v1484 = vpack.c.b16 %v1068, %v1036
    %v1485 = vpack.c.b16 %v1069, %v1037
    %v1486 = vpack.c.b16 %v1070, %v1038
    %v1487 = vpack.c.b16 %v1071, %v1039
    %v1488 = vpack.c.b16 %v1072, %v1040
    %v1489 = vpack.c.b16 %v1073, %v1041
    %v1490 = vpack.c.b16 %v1074, %v1042
    %v1491 = vpack.c.b16 %v1075, %v1043
    %v1492 = vpack.c.b16 %v1076, %v1044
    %v1493 = vpack.c.b16 %v1077, %v1045
    %v1494 = vpack.c.b16 %v1078, %v1046
    %v1495 = vpack.c.b16 %v1079, %v1047
    %v1496 = vpack.c.b16 %v1112, %v1080
    %v1497 = vpack.c.b16 %v1113, %v1081
    %v1498 = vpack.c.b16 %v1114, %v1082
    %v1499 = vpack.c.b16 %v1115, %v1083
    %v1500 = vpack.c.b16 %v1116, %v1084
    %v1501 = vpack.c.b16 %v1117, %v1085
    %v1502 = vpack.c.b16 %v1118, %v1086
    %v1503 = vpack.c.b16 %v1119, %v1087
    %v1504 = vpack.c.b16 %v1120, %v1088
    %v1505 = vpack.c.b16 %v1121, %v1089
    %v1506 = vpack.c.b16 %v1122, %v1090
    %v1507 = vpack.c.b16 %v1123, %v1091
    %v1508 = vpack.c.b16 %v1124, %v1092
    %v1509 = vpack.c.b16 %v1125, %v1093
    %v1510 = vpack.c.b16 %v1126, %v1094
    %v1511 = vpack.c.b16 %v1127, %v1095
    %v1512 = vpack.c.b16 %v1128, %v1096
    %v1513 = vpack.c.b16 %v1129, %v1097
    %v1514 = vpack.c.b16 %v1130, %v1098
    %v1515 = vpack.c.b16 %v1131, %v1099
    %v1516 = vpack.c.b16 %v1132, %v1100
    %v1517 = vpack.c.b16 %v1133, %v1101
    %v1518 = vpack.c.b16 %v1134, %v1102
    %v1519 = vpack.c.b16 %v1135, %v1103
    %v1520 = vpack.c.b16 %v1136, %v1104
    %v1521 = vpack.c.b16 %v1137, %v1105
    %v1522 = vpack.c.b16 %v1138, %v1106
    %v1523 = vpack.c.b16 %v1139, %v1107
    %v1524 = vpack.c.b16 %v1140, %v1108
    %v1525 = vpack.c.b16 %v1141, %v1109
    %v1526 = vpack.c.b16 %v1142, %v1110
    %v1527 = vpack.c.b16 %v1143, %v1111
    %v1528 = vpack.c.b16 %v1176, %v1144
    %v1529 = vpack.c.b16 %v1177, %v1145
    %v1530 = vpack.c.b16 %v1178, %v1146
    %v1531 = vpack.c.b16 %v1179, %v1147
    %v1532 = vpack.c.b16 %v1180, %v1148
    %v1533 = vpack.c.b16 %v1181, %v1149
    %v1534 = vpack.c.b16 %v1182, %v1150
    %v1535 = vpack.c.b16 %v1183, %v1151
    %v1536 = vpack.c.b16 %v1184, %v1152
    %v1537 = vpack.c.b16 %v1185, %v1153
    %v1538 = vpack.c.b16 %v1186, %v1154
    %v1539 = vpack.c.b16 %v1187, %v1155
    %v1540 = vpack.c.b16 %v1188, %v1156
    %v1541 = vpack.c.b16 %v1189, %v1157
    %v1542 = vpack.c.b16 %v1190, %v1158
    %v1543 = vpack.c.b16 %v1191, %v1159
    %v1544 = vpack.c.b16 %v1192, %v1160
    %v1545 = vpack.c.b16 %v1193, %v1161
    %v1546 = vpack.c.b16 %v1194, %v1162
    %v1547 = vpack.c.b16 %v1195, %v1163
    %v1548 = vpack.c.b16 %v1196, %v1164
    %v1549 = vpack.c.b16 %v1197, %v1165
    %v1550 = vpack.c.b16 %v1198, %v1166
    %v1551 = vpack.c.b16 %v1199, %v1167
    %v1552 = vpack.c.b16 %v1200, %v1168
    %v1553 = vpack.c.b16 %v1201, %v1169
    %v1554 = vpack.c.b16 %v1202, %v1170
    %v1555 = vpack.c.b16 %v1203, %v1171
    %v1556 = vpack.c.b16 %v1204, %v1172
    %v1557 = vpack.c.b16 %v1205, %v1173
    %v1558 = vpack.c.b16 %v1206, %v1174
    %v1559 = vpack.c.b16 %v1207, %v1175
    %v1560 = vpack.c.b16 %v1240, %v1208
    %v1561 = vpack.c.b16 %v1241, %v1209
    %v1562 = vpack.c.b16 %v1242, %v1210
    %v1563 = vpack.c.b16 %v1243, %v1211
    %v1564 = vpack.c.b16 %v1244, %v1212
    %v1565 = vpack.c.b16 %v1245, %v1213
    %v1566 = vpack.c.b16 %v1246, %v1214
    %v1567 = vpack.c.b16 %v1247, %v1215
    %v1568 = vpack.c.b16 %v1248, %v1216
    %v1569 = vpack.c.b16 %v1249, %v1217
    %v1570 = vpack.c.b16 %v1250, %v1218
    %v1571 = vpack.c.b16 %v1251, %v1219
    %v1572 = vpack.c.b16 %v1252, %v1220
    %v1573 = vpack.c.b16 %v1253, %v1221
    %v1574 = vpack.c.b16 %v1254, %v1222
    %v1575 = vpack.c.b16 %v1255, %v1223
    %v1576 = vpack.c.b16 %v1256, %v1224
    %v1577 = vpack.c.b16 %v1257, %v1225
    %v1578 = vpack.c.b16 %v1258, %v1226
    %v1579 = vpack.c.b16 %v1259, %v1227
    %v1580 = vpack.c.b16 %v1260, %v1228
    %v1581 = vpack.c.b16 %v1261, %v1229
    %v1582 = vpack.c.b16 %v1262, %v1230
    %v1583 = vpack.c.b16 %v1263, %v1231
    %v1584 = vpack.c.b16 %v1264, %v1232
    %v1585 = vpack.c.b16 %v1265, %v1233
    %v1586 = vpack.c.b16 %v1266, %v1234
    %v1587 = vpack.c.b16 %v1267, %v1235
    %v1588 = vpack.c.b16 %v1268, %v1236
    %v1589 = vpack.c.b16 %v1269, %v1237
    %v1590 = vpack.c.b16 %v1270, %v1238
    %v1591 = vpack.c.b16 %v1271, %v1239
    %v1592 = vpack.c.b16 %v1304, %v1272
    %v1593 = vpack.c.b16 %v1305, %v1273
    %v1594 = vpack.c.b16 %v1306, %v1274
    %v1595 = vpack.c.b16 %v1307, %v1275
    %v1596 = vpack.c.b16 %v1308, %v1276
    %v1597 = vpack.c.b16 %v1309, %v1277
    %v1598 = vpack.c.b16 %v1310, %v1278
    %v1599 = vpack.c.b16 %v1311, %v1279
    %v1600 = vpack.c.b16 %v1312, %v1280
    %v1601 = vpack.c.b16 %v1313, %v1281
    %v1602 = vpack.c.b16 %v1314, %v1282
    %v1603 = vpack.c.b16 %v1315, %v1283
    %v1604 = vpack.c.b16 %v1316, %v1284
    %v1605 = vpack.c.b16 %v1317, %v1285
    %v1606 = vpack.c.b16 %v1318, %v1286
    %v1607 = vpack.c.b16 %v1319, %v1287
    %v1608 = vpack.c.b16 %v1320, %v1288
    %v1609 = vpack.c.b16 %v1321, %v1289
    %v1610 = vpack.c.b16 %v1322, %v1290
    %v1611 = vpack.c.b16 %v1323, %v1291
    %v1612 = vpack.c.b16 %v1324, %v1292
    %v1613 = vpack.c.b16 %v1325, %v1293
    %v1614 = vpack.c.b16 %v1326, %v1294
    %v1615 = vpack.c.b16 %v1327, %v1295
    %v1616 = vpack.c.b16 %v1328, %v1296
    %v1617 = vpack.c.b16 %v1329, %v1297
    %v1618 = vpack.c.b16 %v1330, %v1298
    %v1619 = vpack.c.b16 %v1331, %v1299
    %v1620 = vpack.c.b16 %v1332, %v1300
    %v1621 = vpack.c.b16 %v1333, %v1301
    %v1622 = vpack.c.b16 %v1334, %v1302
    %v1623 = vpack.c.b16 %v1335, %v1303
    %v1624 = vpack.c.b16 %v1368, %v1336
    %v1625 = vpack.c.b16 %v1369, %v1337
    %v1626 = vpack.c.b16 %v1370, %v1338
    %v1627 = vpack.c.b16 %v1371, %v1339
    %v1628 = vpack.c.b16 %v1372, %v1340
    %v1629 = vpack.c.b16 %v1373, %v1341
    %v1630 = vpack.c.b16 %v1374, %v1342
    %v1631 = vpack.c.b16 %v1375, %v1343
    %v1632 = vpack.c.b16 %v1376, %v1344
    %v1633 = vpack.c.b16 %v1377, %v1345
    %v1634 = vpack.c.b16 %v1378, %v1346
    %v1635 = vpack.c.b16 %v1379, %v1347
    %v1636 = vpack.c.b16 %v1380, %v1348
    %v1637 = vpack.c.b16 %v1381, %v1349
    %v1638 = vpack.c.b16 %v1382, %v1350
    %v1639 = vpack.c.b16 %v1383, %v1351
    %v1640 = vpack.c.b16 %v1384, %v1352
    %v1641 = vpack.c.b16 %v1385, %v1353
    %v1642 = vpack.c.b16 %v1386, %v1354
    %v1643 = vpack.c.b16 %v1387, %v1355
    %v1644 = vpack.c.b16 %v1388, %v1356
    %v1645 = vpack.c.b16 %v1389, %v1357
    %v1646 = vpack.c.b16 %v1390, %v1358
    %v1647 = vpack.c.b16 %v1391, %v1359
    %v1648 = vpack.c.b16 %v1392, %v1360
    %v1649 = vpack.c.b16 %v1393, %v1361
    %v1650 = vpack.c.b16 %v1394, %v1362
    %v1651 = vpack.c.b16 %v1395, %v1363
    %v1652 = vpack.c.b16 %v1396, %v1364
    %v1653 = vpack.c.b16 %v1397, %v1365
    %v1654 = vpack.c.b16 %v1398, %v1366
    %v1655 = vpack.c.b16 %v1399, %v1367
    %1912 = vmatpush.bf16.msra.mxu0 %v1624
    %1913 = vmatpush.bf16.msra.mxu0 %v1592
    %1914 = vmatpush.bf16.msra.mxu0 %v1560
    %1915 = vmatpush.bf16.msra.mxu0 %v1528
    %1916 = vmatpush.bf16.msra.mxu0 %v1496
    %1917 = vmatpush.bf16.msra.mxu0 %v1464
    %1918 = vmatpush.bf16.msra.mxu0 %v1432
    %1919 = vmatpush.bf16.msra.mxu0 %v1400
    %1920 = vmatmul.bf16.gmra.mxu0 %v302
    %v1921 = vpop.f32.mrf.mxu0
    %v1922 = vadd.f32 %v568, %v1921
    %v1923 = vpop.f32.mrf.mxu0
    %v1924 = vadd.f32 %v568, %v1923
    %1925 = vmatmul.bf16.gmra.mxu0 %v303
    %v1926 = vpop.f32.mrf.mxu0
    %v1927 = vadd.f32 %v568, %v1926
    %v1928 = vpop.f32.mrf.mxu0
    %v1929 = vadd.f32 %v568, %v1928
    %1930 = vdwg.mxu0
    %1931 = vmatpush.bf16.msra.mxu0 %v1625
    %1932 = vmatpush.bf16.msra.mxu0 %v1593
    %1933 = vmatpush.bf16.msra.mxu0 %v1561
    %1934 = vmatpush.bf16.msra.mxu0 %v1529
    %1935 = vmatpush.bf16.msra.mxu0 %v1497
    %1936 = vmatpush.bf16.msra.mxu0 %v1465
    %1937 = vmatpush.bf16.msra.mxu0 %v1433
    %1938 = vmatpush.bf16.msra.mxu0 %v1401
    %1939 = vmatmul.bf16.gmra.mxu0 %v302
    %v1940 = vpop.f32.mrf.mxu0
    %v1941 = vadd.f32 %v569, %v1940
    %v1942 = vpop.f32.mrf.mxu0
    %v1943 = vadd.f32 %v569, %v1942
    %1944 = vmatmul.bf16.gmra.mxu0 %v303
    %v1945 = vpop.f32.mrf.mxu0
    %v1946 = vadd.f32 %v569, %v1945
    %v1947 = vpop.f32.mrf.mxu0
    %v1948 = vadd.f32 %v569, %v1947
    %1949 = vdwg.mxu0
    %1950 = vmatpush.bf16.msra.mxu0 %v1626
    %1951 = vmatpush.bf16.msra.mxu0 %v1594
    %1952 = vmatpush.bf16.msra.mxu0 %v1562
    %1953 = vmatpush.bf16.msra.mxu0 %v1530
    %1954 = vmatpush.bf16.msra.mxu0 %v1498
    %1955 = vmatpush.bf16.msra.mxu0 %v1466
    %1956 = vmatpush.bf16.msra.mxu0 %v1434
    %1957 = vmatpush.bf16.msra.mxu0 %v1402
    %1958 = vmatmul.bf16.gmra.mxu0 %v302
    %v1959 = vpop.f32.mrf.mxu0
    %v1960 = vadd.f32 %v570, %v1959
    %v1961 = vpop.f32.mrf.mxu0
    %v1962 = vadd.f32 %v570, %v1961
    %1963 = vmatmul.bf16.gmra.mxu0 %v303
    %v1964 = vpop.f32.mrf.mxu0
    %v1965 = vadd.f32 %v570, %v1964
    %v1966 = vpop.f32.mrf.mxu0
    %v1967 = vadd.f32 %v570, %v1966
    %1968 = vdwg.mxu0
    %1969 = vmatpush.bf16.msra.mxu0 %v1627
    %1970 = vmatpush.bf16.msra.mxu0 %v1595
    %1971 = vmatpush.bf16.msra.mxu0 %v1563
    %1972 = vmatpush.bf16.msra.mxu0 %v1531
    %1973 = vmatpush.bf16.msra.mxu0 %v1499
    %1974 = vmatpush.bf16.msra.mxu0 %v1467
    %1975 = vmatpush.bf16.msra.mxu0 %v1435
    %1976 = vmatpush.bf16.msra.mxu0 %v1403
    %1977 = vmatmul.bf16.gmra.mxu0 %v302
    %v1978 = vpop.f32.mrf.mxu0
    %v1979 = vadd.f32 %v571, %v1978
    %v1980 = vpop.f32.mrf.mxu0
    %v1981 = vadd.f32 %v571, %v1980
    %1982 = vmatmul.bf16.gmra.mxu0 %v303
    %v1983 = vpop.f32.mrf.mxu0
    %v1984 = vadd.f32 %v571, %v1983
    %v1985 = vpop.f32.mrf.mxu0
    %v1986 = vadd.f32 %v571, %v1985
    %1987 = vdwg.mxu0
    %1988 = vmatpush.bf16.msra.mxu0 %v1628
    %1989 = vmatpush.bf16.msra.mxu0 %v1596
    %1990 = vmatpush.bf16.msra.mxu0 %v1564
    %1991 = vmatpush.bf16.msra.mxu0 %v1532
    %1992 = vmatpush.bf16.msra.mxu0 %v1500
    %1993 = vmatpush.bf16.msra.mxu0 %v1468
    %1994 = vmatpush.bf16.msra.mxu0 %v1436
    %1995 = vmatpush.bf16.msra.mxu0 %v1404
    %1996 = vmatmul.bf16.gmra.mxu0 %v302
    %v1997 = vpop.f32.mrf.mxu0
    %v1998 = vadd.f32 %v572, %v1997
    %v1999 = vpop.f32.mrf.mxu0
    %v2000 = vadd.f32 %v572, %v1999
    %2001 = vmatmul.bf16.gmra.mxu0 %v303
    %v2002 = vpop.f32.mrf.mxu0
    %v2003 = vadd.f32 %v572, %v2002
    %v2004 = vpop.f32.mrf.mxu0
    %v2005 = vadd.f32 %v572, %v2004
    %2006 = vdwg.mxu0
    %2007 = vmatpush.bf16.msra.mxu0 %v1629
    %2008 = vmatpush.bf16.msra.mxu0 %v1597
    %2009 = vmatpush.bf16.msra.mxu0 %v1565
    %2010 = vmatpush.bf16.msra.mxu0 %v1533
    %2011 = vmatpush.bf16.msra.mxu0 %v1501
    %2012 = vmatpush.bf16.msra.mxu0 %v1469
    %2013 = vmatpush.bf16.msra.mxu0 %v1437
    %2014 = vmatpush.bf16.msra.mxu0 %v1405
    %2015 = vmatmul.bf16.gmra.mxu0 %v302
    %v2016 = vpop.f32.mrf.mxu0
    %v2017 = vadd.f32 %v573, %v2016
    %v2018 = vpop.f32.mrf.mxu0
    %v2019 = vadd.f32 %v573, %v2018
    %2020 = vmatmul.bf16.gmra.mxu0 %v303
    %v2021 = vpop.f32.mrf.mxu0
    %v2022 = vadd.f32 %v573, %v2021
    %v2023 = vpop.f32.mrf.mxu0
    %v2024 = vadd.f32 %v573, %v2023
    %2025 = vdwg.mxu0
    %2026 = vmatpush.bf16.msra.mxu0 %v1630
    %2027 = vmatpush.bf16.msra.mxu0 %v1598
    %2028 = vmatpush.bf16.msra.mxu0 %v1566
    %2029 = vmatpush.bf16.msra.mxu0 %v1534
    %2030 = vmatpush.bf16.msra.mxu0 %v1502
    %2031 = vmatpush.bf16.msra.mxu0 %v1470
    %2032 = vmatpush.bf16.msra.mxu0 %v1438
    %2033 = vmatpush.bf16.msra.mxu0 %v1406
    %2034 = vmatmul.bf16.gmra.mxu0 %v302
    %v2035 = vpop.f32.mrf.mxu0
    %v2036 = vadd.f32 %v574, %v2035
    %v2037 = vpop.f32.mrf.mxu0
    %v2038 = vadd.f32 %v574, %v2037
    %2039 = vmatmul.bf16.gmra.mxu0 %v303
    %v2040 = vpop.f32.mrf.mxu0
    %v2041 = vadd.f32 %v574, %v2040
    %v2042 = vpop.f32.mrf.mxu0
    %v2043 = vadd.f32 %v574, %v2042
    %2044 = vdwg.mxu0
    %2045 = vmatpush.bf16.msra.mxu0 %v1631
    %2046 = vmatpush.bf16.msra.mxu0 %v1599
    %2047 = vmatpush.bf16.msra.mxu0 %v1567
    %2048 = vmatpush.bf16.msra.mxu0 %v1535
    %2049 = vmatpush.bf16.msra.mxu0 %v1503
    %2050 = vmatpush.bf16.msra.mxu0 %v1471
    %2051 = vmatpush.bf16.msra.mxu0 %v1439
    %2052 = vmatpush.bf16.msra.mxu0 %v1407
    %2053 = vmatmul.bf16.gmra.mxu0 %v302
    %v2054 = vpop.f32.mrf.mxu0
    %v2055 = vadd.f32 %v575, %v2054
    %v2056 = vpop.f32.mrf.mxu0
    %v2057 = vadd.f32 %v575, %v2056
    %2058 = vmatmul.bf16.gmra.mxu0 %v303
    %v2059 = vpop.f32.mrf.mxu0
    %v2060 = vadd.f32 %v575, %v2059
    %v2061 = vpop.f32.mrf.mxu0
    %v2062 = vadd.f32 %v575, %v2061
    %2063 = vdwg.mxu0
    %2064 = vmatpush.bf16.msra.mxu0 %v1632
    %2065 = vmatpush.bf16.msra.mxu0 %v1600
    %2066 = vmatpush.bf16.msra.mxu0 %v1568
    %2067 = vmatpush.bf16.msra.mxu0 %v1536
    %2068 = vmatpush.bf16.msra.mxu0 %v1504
    %2069 = vmatpush.bf16.msra.mxu0 %v1472
    %2070 = vmatpush.bf16.msra.mxu0 %v1440
    %2071 = vmatpush.bf16.msra.mxu0 %v1408
    %2072 = vmatmul.bf16.gmra.mxu0 %v302
    %v2073 = vpop.f32.mrf.mxu0
    %v2074 = vadd.f32 %v576, %v2073
    %v2075 = vpop.f32.mrf.mxu0
    %v2076 = vadd.f32 %v576, %v2075
    %2077 = vmatmul.bf16.gmra.mxu0 %v303
    %v2078 = vpop.f32.mrf.mxu0
    %v2079 = vadd.f32 %v576, %v2078
    %v2080 = vpop.f32.mrf.mxu0
    %v2081 = vadd.f32 %v576, %v2080
    %2082 = vdwg.mxu0
    %2083 = vmatpush.bf16.msra.mxu0 %v1633
    %2084 = vmatpush.bf16.msra.mxu0 %v1601
    %2085 = vmatpush.bf16.msra.mxu0 %v1569
    %2086 = vmatpush.bf16.msra.mxu0 %v1537
    %2087 = vmatpush.bf16.msra.mxu0 %v1505
    %2088 = vmatpush.bf16.msra.mxu0 %v1473
    %2089 = vmatpush.bf16.msra.mxu0 %v1441
    %2090 = vmatpush.bf16.msra.mxu0 %v1409
    %2091 = vmatmul.bf16.gmra.mxu0 %v302
    %v2092 = vpop.f32.mrf.mxu0
    %v2093 = vadd.f32 %v577, %v2092
    %v2094 = vpop.f32.mrf.mxu0
    %v2095 = vadd.f32 %v577, %v2094
    %2096 = vmatmul.bf16.gmra.mxu0 %v303
    %v2097 = vpop.f32.mrf.mxu0
    %v2098 = vadd.f32 %v577, %v2097
    %v2099 = vpop.f32.mrf.mxu0
    %v2100 = vadd.f32 %v577, %v2099
    %2101 = vdwg.mxu0
    %2102 = vmatpush.bf16.msra.mxu0 %v1634
    %2103 = vmatpush.bf16.msra.mxu0 %v1602
    %2104 = vmatpush.bf16.msra.mxu0 %v1570
    %2105 = vmatpush.bf16.msra.mxu0 %v1538
    %2106 = vmatpush.bf16.msra.mxu0 %v1506
    %2107 = vmatpush.bf16.msra.mxu0 %v1474
    %2108 = vmatpush.bf16.msra.mxu0 %v1442
    %2109 = vmatpush.bf16.msra.mxu0 %v1410
    %2110 = vmatmul.bf16.gmra.mxu0 %v302
    %v2111 = vpop.f32.mrf.mxu0
    %v2112 = vadd.f32 %v578, %v2111
    %v2113 = vpop.f32.mrf.mxu0
    %v2114 = vadd.f32 %v578, %v2113
    %2115 = vmatmul.bf16.gmra.mxu0 %v303
    %v2116 = vpop.f32.mrf.mxu0
    %v2117 = vadd.f32 %v578, %v2116
    %v2118 = vpop.f32.mrf.mxu0
    %v2119 = vadd.f32 %v578, %v2118
    %2120 = vdwg.mxu0
    %2121 = vmatpush.bf16.msra.mxu0 %v1635
    %2122 = vmatpush.bf16.msra.mxu0 %v1603
    %2123 = vmatpush.bf16.msra.mxu0 %v1571
    %2124 = vmatpush.bf16.msra.mxu0 %v1539
    %2125 = vmatpush.bf16.msra.mxu0 %v1507
    %2126 = vmatpush.bf16.msra.mxu0 %v1475
    %2127 = vmatpush.bf16.msra.mxu0 %v1443
    %2128 = vmatpush.bf16.msra.mxu0 %v1411
    %2129 = vmatmul.bf16.gmra.mxu0 %v302
    %v2130 = vpop.f32.mrf.mxu0
    %v2131 = vadd.f32 %v579, %v2130
    %v2132 = vpop.f32.mrf.mxu0
    %v2133 = vadd.f32 %v579, %v2132
    %2134 = vmatmul.bf16.gmra.mxu0 %v303
    %v2135 = vpop.f32.mrf.mxu0
    %v2136 = vadd.f32 %v579, %v2135
    %v2137 = vpop.f32.mrf.mxu0
    %v2138 = vadd.f32 %v579, %v2137
    %2139 = vdwg.mxu0
    %2140 = vmatpush.bf16.msra.mxu0 %v1636
    %2141 = vmatpush.bf16.msra.mxu0 %v1604
    %2142 = vmatpush.bf16.msra.mxu0 %v1572
    %2143 = vmatpush.bf16.msra.mxu0 %v1540
    %2144 = vmatpush.bf16.msra.mxu0 %v1508
    %2145 = vmatpush.bf16.msra.mxu0 %v1476
    %2146 = vmatpush.bf16.msra.mxu0 %v1444
    %2147 = vmatpush.bf16.msra.mxu0 %v1412
    %2148 = vmatmul.bf16.gmra.mxu0 %v302
    %v2149 = vpop.f32.mrf.mxu0
    %v2150 = vadd.f32 %v580, %v2149
    %v2151 = vpop.f32.mrf.mxu0
    %v2152 = vadd.f32 %v580, %v2151
    %2153 = vmatmul.bf16.gmra.mxu0 %v303
    %v2154 = vpop.f32.mrf.mxu0
    %v2155 = vadd.f32 %v580, %v2154
    %v2156 = vpop.f32.mrf.mxu0
    %v2157 = vadd.f32 %v580, %v2156
    %2158 = vdwg.mxu0
    %2159 = vmatpush.bf16.msra.mxu0 %v1637
    %2160 = vmatpush.bf16.msra.mxu0 %v1605
    %2161 = vmatpush.bf16.msra.mxu0 %v1573
    %2162 = vmatpush.bf16.msra.mxu0 %v1541
    %2163 = vmatpush.bf16.msra.mxu0 %v1509
    %2164 = vmatpush.bf16.msra.mxu0 %v1477
    %2165 = vmatpush.bf16.msra.mxu0 %v1445
    %2166 = vmatpush.bf16.msra.mxu0 %v1413
    %2167 = vmatmul.bf16.gmra.mxu0 %v302
    %v2168 = vpop.f32.mrf.mxu0
    %v2169 = vadd.f32 %v581, %v2168
    %v2170 = vpop.f32.mrf.mxu0
    %v2171 = vadd.f32 %v581, %v2170
    %2172 = vmatmul.bf16.gmra.mxu0 %v303
    %v2173 = vpop.f32.mrf.mxu0
    %v2174 = vadd.f32 %v581, %v2173
    %v2175 = vpop.f32.mrf.mxu0
    %v2176 = vadd.f32 %v581, %v2175
    %2177 = vdwg.mxu0
    %2178 = vmatpush.bf16.msra.mxu0 %v1638
    %2179 = vmatpush.bf16.msra.mxu0 %v1606
    %2180 = vmatpush.bf16.msra.mxu0 %v1574
    %2181 = vmatpush.bf16.msra.mxu0 %v1542
    %2182 = vmatpush.bf16.msra.mxu0 %v1510
    %2183 = vmatpush.bf16.msra.mxu0 %v1478
    %2184 = vmatpush.bf16.msra.mxu0 %v1446
    %2185 = vmatpush.bf16.msra.mxu0 %v1414
    %2186 = vmatmul.bf16.gmra.mxu0 %v302
    %v2187 = vpop.f32.mrf.mxu0
    %v2188 = vadd.f32 %v582, %v2187
    %v2189 = vpop.f32.mrf.mxu0
    %v2190 = vadd.f32 %v582, %v2189
    %2191 = vmatmul.bf16.gmra.mxu0 %v303
    %v2192 = vpop.f32.mrf.mxu0
    %v2193 = vadd.f32 %v582, %v2192
    %v2194 = vpop.f32.mrf.mxu0
    %v2195 = vadd.f32 %v582, %v2194
    %2196 = vdwg.mxu0
    %2197 = vmatpush.bf16.msra.mxu0 %v1639
    %2198 = vmatpush.bf16.msra.mxu0 %v1607
    %2199 = vmatpush.bf16.msra.mxu0 %v1575
    %2200 = vmatpush.bf16.msra.mxu0 %v1543
    %2201 = vmatpush.bf16.msra.mxu0 %v1511
    %2202 = vmatpush.bf16.msra.mxu0 %v1479
    %2203 = vmatpush.bf16.msra.mxu0 %v1447
    %2204 = vmatpush.bf16.msra.mxu0 %v1415
    %2205 = vmatmul.bf16.gmra.mxu0 %v302
    %v2206 = vpop.f32.mrf.mxu0
    %v2207 = vadd.f32 %v583, %v2206
    %v2208 = vpop.f32.mrf.mxu0
    %v2209 = vadd.f32 %v583, %v2208
    %2210 = vmatmul.bf16.gmra.mxu0 %v303
    %v2211 = vpop.f32.mrf.mxu0
    %v2212 = vadd.f32 %v583, %v2211
    %v2213 = vpop.f32.mrf.mxu0
    %v2214 = vadd.f32 %v583, %v2213
    %2215 = vdwg.mxu0
    %2216 = vmatpush.bf16.msra.mxu0 %v1640
    %2217 = vmatpush.bf16.msra.mxu0 %v1608
    %2218 = vmatpush.bf16.msra.mxu0 %v1576
    %2219 = vmatpush.bf16.msra.mxu0 %v1544
    %2220 = vmatpush.bf16.msra.mxu0 %v1512
    %2221 = vmatpush.bf16.msra.mxu0 %v1480
    %2222 = vmatpush.bf16.msra.mxu0 %v1448
    %2223 = vmatpush.bf16.msra.mxu0 %v1416
    %2224 = vmatmul.bf16.gmra.mxu0 %v302
    %v2225 = vpop.f32.mrf.mxu0
    %v2226 = vadd.f32 %v584, %v2225
    %v2227 = vpop.f32.mrf.mxu0
    %v2228 = vadd.f32 %v584, %v2227
    %2229 = vmatmul.bf16.gmra.mxu0 %v303
    %v2230 = vpop.f32.mrf.mxu0
    %v2231 = vadd.f32 %v584, %v2230
    %v2232 = vpop.f32.mrf.mxu0
    %v2233 = vadd.f32 %v584, %v2232
    %2234 = vdwg.mxu0
    %2235 = vmatpush.bf16.msra.mxu0 %v1641
    %2236 = vmatpush.bf16.msra.mxu0 %v1609
    %2237 = vmatpush.bf16.msra.mxu0 %v1577
    %2238 = vmatpush.bf16.msra.mxu0 %v1545
    %2239 = vmatpush.bf16.msra.mxu0 %v1513
    %2240 = vmatpush.bf16.msra.mxu0 %v1481
    %2241 = vmatpush.bf16.msra.mxu0 %v1449
    %2242 = vmatpush.bf16.msra.mxu0 %v1417
    %2243 = vmatmul.bf16.gmra.mxu0 %v302
    %v2244 = vpop.f32.mrf.mxu0
    %v2245 = vadd.f32 %v585, %v2244
    %v2246 = vpop.f32.mrf.mxu0
    %v2247 = vadd.f32 %v585, %v2246
    %2248 = vmatmul.bf16.gmra.mxu0 %v303
    %v2249 = vpop.f32.mrf.mxu0
    %v2250 = vadd.f32 %v585, %v2249
    %v2251 = vpop.f32.mrf.mxu0
    %v2252 = vadd.f32 %v585, %v2251
    %2253 = vdwg.mxu0
    %2254 = vmatpush.bf16.msra.mxu0 %v1642
    %2255 = vmatpush.bf16.msra.mxu0 %v1610
    %2256 = vmatpush.bf16.msra.mxu0 %v1578
    %2257 = vmatpush.bf16.msra.mxu0 %v1546
    %2258 = vmatpush.bf16.msra.mxu0 %v1514
    %2259 = vmatpush.bf16.msra.mxu0 %v1482
    %2260 = vmatpush.bf16.msra.mxu0 %v1450
    %2261 = vmatpush.bf16.msra.mxu0 %v1418
    %2262 = vmatmul.bf16.gmra.mxu0 %v302
    %v2263 = vpop.f32.mrf.mxu0
    %v2264 = vadd.f32 %v586, %v2263
    %v2265 = vpop.f32.mrf.mxu0
    %v2266 = vadd.f32 %v586, %v2265
    %2267 = vmatmul.bf16.gmra.mxu0 %v303
    %v2268 = vpop.f32.mrf.mxu0
    %v2269 = vadd.f32 %v586, %v2268
    %v2270 = vpop.f32.mrf.mxu0
    %v2271 = vadd.f32 %v586, %v2270
    %2272 = vdwg.mxu0
    %2273 = vmatpush.bf16.msra.mxu0 %v1643
    %2274 = vmatpush.bf16.msra.mxu0 %v1611
    %2275 = vmatpush.bf16.msra.mxu0 %v1579
    %2276 = vmatpush.bf16.msra.mxu0 %v1547
    %2277 = vmatpush.bf16.msra.mxu0 %v1515
    %2278 = vmatpush.bf16.msra.mxu0 %v1483
    %2279 = vmatpush.bf16.msra.mxu0 %v1451
    %2280 = vmatpush.bf16.msra.mxu0 %v1419
    %2281 = vmatmul.bf16.gmra.mxu0 %v302
    %v2282 = vpop.f32.mrf.mxu0
    %v2283 = vadd.f32 %v587, %v2282
    %v2284 = vpop.f32.mrf.mxu0
    %v2285 = vadd.f32 %v587, %v2284
    %2286 = vmatmul.bf16.gmra.mxu0 %v303
    %v2287 = vpop.f32.mrf.mxu0
    %v2288 = vadd.f32 %v587, %v2287
    %v2289 = vpop.f32.mrf.mxu0
    %v2290 = vadd.f32 %v587, %v2289
    %2291 = vdwg.mxu0
    %2292 = vmatpush.bf16.msra.mxu0 %v1644
    %2293 = vmatpush.bf16.msra.mxu0 %v1612
    %2294 = vmatpush.bf16.msra.mxu0 %v1580
    %2295 = vmatpush.bf16.msra.mxu0 %v1548
    %2296 = vmatpush.bf16.msra.mxu0 %v1516
    %2297 = vmatpush.bf16.msra.mxu0 %v1484
    %2298 = vmatpush.bf16.msra.mxu0 %v1452
    %2299 = vmatpush.bf16.msra.mxu0 %v1420
    %2300 = vmatmul.bf16.gmra.mxu0 %v302
    %v2301 = vpop.f32.mrf.mxu0
    %v2302 = vadd.f32 %v588, %v2301
    %v2303 = vpop.f32.mrf.mxu0
    %v2304 = vadd.f32 %v588, %v2303
    %2305 = vmatmul.bf16.gmra.mxu0 %v303
    %v2306 = vpop.f32.mrf.mxu0
    %v2307 = vadd.f32 %v588, %v2306
    %v2308 = vpop.f32.mrf.mxu0
    %v2309 = vadd.f32 %v588, %v2308
    %2310 = vdwg.mxu0
    %2311 = vmatpush.bf16.msra.mxu0 %v1645
    %2312 = vmatpush.bf16.msra.mxu0 %v1613
    %2313 = vmatpush.bf16.msra.mxu0 %v1581
    %2314 = vmatpush.bf16.msra.mxu0 %v1549
    %2315 = vmatpush.bf16.msra.mxu0 %v1517
    %2316 = vmatpush.bf16.msra.mxu0 %v1485
    %2317 = vmatpush.bf16.msra.mxu0 %v1453
    %2318 = vmatpush.bf16.msra.mxu0 %v1421
    %2319 = vmatmul.bf16.gmra.mxu0 %v302
    %v2320 = vpop.f32.mrf.mxu0
    %v2321 = vadd.f32 %v589, %v2320
    %v2322 = vpop.f32.mrf.mxu0
    %v2323 = vadd.f32 %v589, %v2322
    %2324 = vmatmul.bf16.gmra.mxu0 %v303
    %v2325 = vpop.f32.mrf.mxu0
    %v2326 = vadd.f32 %v589, %v2325
    %v2327 = vpop.f32.mrf.mxu0
    %v2328 = vadd.f32 %v589, %v2327
    %2329 = vdwg.mxu0
    %2330 = vmatpush.bf16.msra.mxu0 %v1646
    %2331 = vmatpush.bf16.msra.mxu0 %v1614
    %2332 = vmatpush.bf16.msra.mxu0 %v1582
    %2333 = vmatpush.bf16.msra.mxu0 %v1550
    %2334 = vmatpush.bf16.msra.mxu0 %v1518
    %2335 = vmatpush.bf16.msra.mxu0 %v1486
    %2336 = vmatpush.bf16.msra.mxu0 %v1454
    %2337 = vmatpush.bf16.msra.mxu0 %v1422
    %2338 = vmatmul.bf16.gmra.mxu0 %v302
    %v2339 = vpop.f32.mrf.mxu0
    %v2340 = vadd.f32 %v590, %v2339
    %v2341 = vpop.f32.mrf.mxu0
    %v2342 = vadd.f32 %v590, %v2341
    %2343 = vmatmul.bf16.gmra.mxu0 %v303
    %v2344 = vpop.f32.mrf.mxu0
    %v2345 = vadd.f32 %v590, %v2344
    %v2346 = vpop.f32.mrf.mxu0
    %v2347 = vadd.f32 %v590, %v2346
    %2348 = vdwg.mxu0
    %2349 = vmatpush.bf16.msra.mxu0 %v1647
    %2350 = vmatpush.bf16.msra.mxu0 %v1615
    %2351 = vmatpush.bf16.msra.mxu0 %v1583
    %2352 = vmatpush.bf16.msra.mxu0 %v1551
    %2353 = vmatpush.bf16.msra.mxu0 %v1519
    %2354 = vmatpush.bf16.msra.mxu0 %v1487
    %2355 = vmatpush.bf16.msra.mxu0 %v1455
    %2356 = vmatpush.bf16.msra.mxu0 %v1423
    %2357 = vmatmul.bf16.gmra.mxu0 %v302
    %v2358 = vpop.f32.mrf.mxu0
    %v2359 = vadd.f32 %v591, %v2358
    %v2360 = vpop.f32.mrf.mxu0
    %v2361 = vadd.f32 %v591, %v2360
    %2362 = vmatmul.bf16.gmra.mxu0 %v303
    %v2363 = vpop.f32.mrf.mxu0
    %v2364 = vadd.f32 %v591, %v2363
    %v2365 = vpop.f32.mrf.mxu0
    %v2366 = vadd.f32 %v591, %v2365
    %2367 = vdwg.mxu0
    %2368 = vmatpush.bf16.msra.mxu0 %v1648
    %2369 = vmatpush.bf16.msra.mxu0 %v1616
    %2370 = vmatpush.bf16.msra.mxu0 %v1584
    %2371 = vmatpush.bf16.msra.mxu0 %v1552
    %2372 = vmatpush.bf16.msra.mxu0 %v1520
    %2373 = vmatpush.bf16.msra.mxu0 %v1488
    %2374 = vmatpush.bf16.msra.mxu0 %v1456
    %2375 = vmatpush.bf16.msra.mxu0 %v1424
    %2376 = vmatmul.bf16.gmra.mxu0 %v302
    %v2377 = vpop.f32.mrf.mxu0
    %v2378 = vadd.f32 %v592, %v2377
    %v2379 = vpop.f32.mrf.mxu0
    %v2380 = vadd.f32 %v592, %v2379
    %2381 = vmatmul.bf16.gmra.mxu0 %v303
    %v2382 = vpop.f32.mrf.mxu0
    %v2383 = vadd.f32 %v592, %v2382
    %v2384 = vpop.f32.mrf.mxu0
    %v2385 = vadd.f32 %v592, %v2384
    %2386 = vdwg.mxu0
    %2387 = vmatpush.bf16.msra.mxu0 %v1649
    %2388 = vmatpush.bf16.msra.mxu0 %v1617
    %2389 = vmatpush.bf16.msra.mxu0 %v1585
    %2390 = vmatpush.bf16.msra.mxu0 %v1553
    %2391 = vmatpush.bf16.msra.mxu0 %v1521
    %2392 = vmatpush.bf16.msra.mxu0 %v1489
    %2393 = vmatpush.bf16.msra.mxu0 %v1457
    %2394 = vmatpush.bf16.msra.mxu0 %v1425
    %2395 = vmatmul.bf16.gmra.mxu0 %v302
    %v2396 = vpop.f32.mrf.mxu0
    %v2397 = vadd.f32 %v593, %v2396
    %v2398 = vpop.f32.mrf.mxu0
    %v2399 = vadd.f32 %v593, %v2398
    %2400 = vmatmul.bf16.gmra.mxu0 %v303
    %v2401 = vpop.f32.mrf.mxu0
    %v2402 = vadd.f32 %v593, %v2401
    %v2403 = vpop.f32.mrf.mxu0
    %v2404 = vadd.f32 %v593, %v2403
    %2405 = vdwg.mxu0
    %2406 = vmatpush.bf16.msra.mxu0 %v1650
    %2407 = vmatpush.bf16.msra.mxu0 %v1618
    %2408 = vmatpush.bf16.msra.mxu0 %v1586
    %2409 = vmatpush.bf16.msra.mxu0 %v1554
    %2410 = vmatpush.bf16.msra.mxu0 %v1522
    %2411 = vmatpush.bf16.msra.mxu0 %v1490
    %2412 = vmatpush.bf16.msra.mxu0 %v1458
    %2413 = vmatpush.bf16.msra.mxu0 %v1426
    %2414 = vmatmul.bf16.gmra.mxu0 %v302
    %v2415 = vpop.f32.mrf.mxu0
    %v2416 = vadd.f32 %v594, %v2415
    %v2417 = vpop.f32.mrf.mxu0
    %v2418 = vadd.f32 %v594, %v2417
    %2419 = vmatmul.bf16.gmra.mxu0 %v303
    %v2420 = vpop.f32.mrf.mxu0
    %v2421 = vadd.f32 %v594, %v2420
    %v2422 = vpop.f32.mrf.mxu0
    %v2423 = vadd.f32 %v594, %v2422
    %2424 = vdwg.mxu0
    %2425 = vmatpush.bf16.msra.mxu0 %v1651
    %2426 = vmatpush.bf16.msra.mxu0 %v1619
    %2427 = vmatpush.bf16.msra.mxu0 %v1587
    %2428 = vmatpush.bf16.msra.mxu0 %v1555
    %2429 = vmatpush.bf16.msra.mxu0 %v1523
    %2430 = vmatpush.bf16.msra.mxu0 %v1491
    %2431 = vmatpush.bf16.msra.mxu0 %v1459
    %2432 = vmatpush.bf16.msra.mxu0 %v1427
    %2433 = vmatmul.bf16.gmra.mxu0 %v302
    %v2434 = vpop.f32.mrf.mxu0
    %v2435 = vadd.f32 %v595, %v2434
    %v2436 = vpop.f32.mrf.mxu0
    %v2437 = vadd.f32 %v595, %v2436
    %2438 = vmatmul.bf16.gmra.mxu0 %v303
    %v2439 = vpop.f32.mrf.mxu0
    %v2440 = vadd.f32 %v595, %v2439
    %v2441 = vpop.f32.mrf.mxu0
    %v2442 = vadd.f32 %v595, %v2441
    %2443 = vdwg.mxu0
    %2444 = vmatpush.bf16.msra.mxu0 %v1652
    %2445 = vmatpush.bf16.msra.mxu0 %v1620
    %2446 = vmatpush.bf16.msra.mxu0 %v1588
    %2447 = vmatpush.bf16.msra.mxu0 %v1556
    %2448 = vmatpush.bf16.msra.mxu0 %v1524
    %2449 = vmatpush.bf16.msra.mxu0 %v1492
    %2450 = vmatpush.bf16.msra.mxu0 %v1460
    %2451 = vmatpush.bf16.msra.mxu0 %v1428
    %2452 = vmatmul.bf16.gmra.mxu0 %v302
    %v2453 = vpop.f32.mrf.mxu0
    %v2454 = vadd.f32 %v596, %v2453
    %v2455 = vpop.f32.mrf.mxu0
    %v2456 = vadd.f32 %v596, %v2455
    %2457 = vmatmul.bf16.gmra.mxu0 %v303
    %v2458 = vpop.f32.mrf.mxu0
    %v2459 = vadd.f32 %v596, %v2458
    %v2460 = vpop.f32.mrf.mxu0
    %v2461 = vadd.f32 %v596, %v2460
    %2462 = vdwg.mxu0
    %2463 = vmatpush.bf16.msra.mxu0 %v1653
    %2464 = vmatpush.bf16.msra.mxu0 %v1621
    %2465 = vmatpush.bf16.msra.mxu0 %v1589
    %2466 = vmatpush.bf16.msra.mxu0 %v1557
    %2467 = vmatpush.bf16.msra.mxu0 %v1525
    %2468 = vmatpush.bf16.msra.mxu0 %v1493
    %2469 = vmatpush.bf16.msra.mxu0 %v1461
    %2470 = vmatpush.bf16.msra.mxu0 %v1429
    %2471 = vmatmul.bf16.gmra.mxu0 %v302
    %v2472 = vpop.f32.mrf.mxu0
    %v2473 = vadd.f32 %v597, %v2472
    %v2474 = vpop.f32.mrf.mxu0
    %v2475 = vadd.f32 %v597, %v2474
    %2476 = vmatmul.bf16.gmra.mxu0 %v303
    %v2477 = vpop.f32.mrf.mxu0
    %v2478 = vadd.f32 %v597, %v2477
    %v2479 = vpop.f32.mrf.mxu0
    %v2480 = vadd.f32 %v597, %v2479
    %2481 = vdwg.mxu0
    %2482 = vmatpush.bf16.msra.mxu0 %v1654
    %2483 = vmatpush.bf16.msra.mxu0 %v1622
    %2484 = vmatpush.bf16.msra.mxu0 %v1590
    %2485 = vmatpush.bf16.msra.mxu0 %v1558
    %2486 = vmatpush.bf16.msra.mxu0 %v1526
    %2487 = vmatpush.bf16.msra.mxu0 %v1494
    %2488 = vmatpush.bf16.msra.mxu0 %v1462
    %2489 = vmatpush.bf16.msra.mxu0 %v1430
    %2490 = vmatmul.bf16.gmra.mxu0 %v302
    %v2491 = vpop.f32.mrf.mxu0
    %v2492 = vadd.f32 %v598, %v2491
    %v2493 = vpop.f32.mrf.mxu0
    %v2494 = vadd.f32 %v598, %v2493
    %2495 = vmatmul.bf16.gmra.mxu0 %v303
    %v2496 = vpop.f32.mrf.mxu0
    %v2497 = vadd.f32 %v598, %v2496
    %v2498 = vpop.f32.mrf.mxu0
    %v2499 = vadd.f32 %v598, %v2498
    %2500 = vdwg.mxu0
    %2501 = vmatpush.bf16.msra.mxu0 %v1655
    %2502 = vmatpush.bf16.msra.mxu0 %v1623
    %2503 = vmatpush.bf16.msra.mxu0 %v1591
    %2504 = vmatpush.bf16.msra.mxu0 %v1559
    %2505 = vmatpush.bf16.msra.mxu0 %v1527
    %2506 = vmatpush.bf16.msra.mxu0 %v1495
    %2507 = vmatpush.bf16.msra.mxu0 %v1463
    %2508 = vmatpush.bf16.msra.mxu0 %v1431
    %2509 = vmatmul.bf16.gmra.mxu0 %v302
    %v2510 = vpop.f32.mrf.mxu0
    %v2511 = vadd.f32 %v599, %v2510
    %v2512 = vpop.f32.mrf.mxu0
    %v2513 = vadd.f32 %v599, %v2512
    %2514 = vmatmul.bf16.gmra.mxu0 %v303
    %v2515 = vpop.f32.mrf.mxu0
    %v2516 = vadd.f32 %v599, %v2515
    %v2517 = vpop.f32.mrf.mxu0
    %v2518 = vadd.f32 %v599, %v2517
    %2519 = vdwg.mxu0
    %2520 = vst [vmem:[#allocation2] sm:$0xff] %v1922
    %2521 = vst [vmem:[#allocation2 + $0x8] sm:$0xff] %v1941
    %2522 = vst [vmem:[#allocation2 + $0x10] sm:$0xff] %v1960
    %2523 = vst [vmem:[#allocation2 + $0x18] sm:$0xff] %v1979
    %2524 = vst [vmem:[#allocation2 + $0x20] sm:$0xff] %v1998
    %2525 = vst [vmem:[#allocation2 + $0x28] sm:$0xff] %v2017
    %2526 = vst [vmem:[#allocation2 + $0x30] sm:$0xff] %v2036
    %2527 = vst [vmem:[#allocation2 + $0x38] sm:$0xff] %v2055
    %2528 = vst [vmem:[#allocation2 + $0x40] sm:$0xff] %v2074
    %2529 = vst [vmem:[#allocation2 + $0x48] sm:$0xff] %v2093
    %2530 = vst [vmem:[#allocation2 + $0x50] sm:$0xff] %v2112
    %2531 = vst [vmem:[#allocation2 + $0x58] sm:$0xff] %v2131
    %2532 = vst [vmem:[#allocation2 + $0x60] sm:$0xff] %v2150
    %2533 = vst [vmem:[#allocation2 + $0x68] sm:$0xff] %v2169
    %2534 = vst [vmem:[#allocation2 + $0x70] sm:$0xff] %v2188
    %2535 = vst [vmem:[#allocation2 + $0x78] sm:$0xff] %v2207
    %2536 = vst [vmem:[#allocation2 + $0x80] sm:$0xff] %v2226
    %2537 = vst [vmem:[#allocation2 + $0x88] sm:$0xff] %v2245
    %2538 = vst [vmem:[#allocation2 + $0x90] sm:$0xff] %v2264
    %2539 = vst [vmem:[#allocation2 + $0x98] sm:$0xff] %v2283
    %2540 = vst [vmem:[#allocation2 + $0xa0] sm:$0xff] %v2302
    %2541 = vst [vmem:[#allocation2 + $0xa8] sm:$0xff] %v2321
    %2542 = vst [vmem:[#allocation2 + $0xb0] sm:$0xff] %v2340
    %2543 = vst [vmem:[#allocation2 + $0xb8] sm:$0xff] %v2359
    %2544 = vst [vmem:[#allocation2 + $0xc0] sm:$0xff] %v2378
    %2545 = vst [vmem:[#allocation2 + $0xc8] sm:$0xff] %v2397
    %2546 = vst [vmem:[#allocation2 + $0xd0] sm:$0xff] %v2416
    %2547 = vst [vmem:[#allocation2 + $0xd8] sm:$0xff] %v2435
    %2548 = vst [vmem:[#allocation2 + $0xe0] sm:$0xff] %v2454
    %2549 = vst [vmem:[#allocation2 + $0xe8] sm:$0xff] %v2473
    %2550 = vst [vmem:[#allocation2 + $0xf0] sm:$0xff] %v2492
    %2551 = vst [vmem:[#allocation2 + $0xf8] sm:$0xff] %v2511
    %2552 = vst [vmem:[#allocation2 + $0x100] sm:$0xff] %v1924
    %2553 = vst [vmem:[#allocation2 + $0x108] sm:$0xff] %v1943
    %2554 = vst [vmem:[#allocation2 + $0x110] sm:$0xff] %v1962
    %2555 = vst [vmem:[#allocation2 + $0x118] sm:$0xff] %v1981
    %2556 = vst [vmem:[#allocation2 + $0x120] sm:$0xff] %v2000
    %2557 = vst [vmem:[#allocation2 + $0x128] sm:$0xff] %v2019
    %2558 = vst [vmem:[#allocation2 + $0x130] sm:$0xff] %v2038
    %2559 = vst [vmem:[#allocation2 + $0x138] sm:$0xff] %v2057
    %2560 = vst [vmem:[#allocation2 + $0x140] sm:$0xff] %v2076
    %2561 = vst [vmem:[#allocation2 + $0x148] sm:$0xff] %v2095
    %2562 = vst [vmem:[#allocation2 + $0x150] sm:$0xff] %v2114
    %2563 = vst [vmem:[#allocation2 + $0x158] sm:$0xff] %v2133
    %2564 = vst [vmem:[#allocation2 + $0x160] sm:$0xff] %v2152
    %2565 = vst [vmem:[#allocation2 + $0x168] sm:$0xff] %v2171
    %2566 = vst [vmem:[#allocation2 + $0x170] sm:$0xff] %v2190
    %2567 = vst [vmem:[#allocation2 + $0x178] sm:$0xff] %v2209
    %2568 = vst [vmem:[#allocation2 + $0x180] sm:$0xff] %v2228
    %2569 = vst [vmem:[#allocation2 + $0x188] sm:$0xff] %v2247
    %2570 = vst [vmem:[#allocation2 + $0x190] sm:$0xff] %v2266
    %2571 = vst [vmem:[#allocation2 + $0x198] sm:$0xff] %v2285
    %2572 = vst [vmem:[#allocation2 + $0x1a0] sm:$0xff] %v2304
    %2573 = vst [vmem:[#allocation2 + $0x1a8] sm:$0xff] %v2323
    %2574 = vst [vmem:[#allocation2 + $0x1b0] sm:$0xff] %v2342
    %2575 = vst [vmem:[#allocation2 + $0x1b8] sm:$0xff] %v2361
    %2576 = vst [vmem:[#allocation2 + $0x1c0] sm:$0xff] %v2380
    %2577 = vst [vmem:[#allocation2 + $0x1c8] sm:$0xff] %v2399
    %2578 = vst [vmem:[#allocation2 + $0x1d0] sm:$0xff] %v2418
    %2579 = vst [vmem:[#allocation2 + $0x1d8] sm:$0xff] %v2437
    %2580 = vst [vmem:[#allocation2 + $0x1e0] sm:$0xff] %v2456
    %2581 = vst [vmem:[#allocation2 + $0x1e8] sm:$0xff] %v2475
    %2582 = vst [vmem:[#allocation2 + $0x1f0] sm:$0xff] %v2494
    %2583 = vst [vmem:[#allocation2 + $0x1f8] sm:$0xff] %v2513
    %2584 = vst [vmem:[#allocation2 + $0x200] sm:$0xff] %v1927
    %2585 = vst [vmem:[#allocation2 + $0x208] sm:$0xff] %v1946
    %2586 = vst [vmem:[#allocation2 + $0x210] sm:$0xff] %v1965
    %2587 = vst [vmem:[#allocation2 + $0x218] sm:$0xff] %v1984
    %2588 = vst [vmem:[#allocation2 + $0x220] sm:$0xff] %v2003
    %2589 = vst [vmem:[#allocation2 + $0x228] sm:$0xff] %v2022
    %2590 = vst [vmem:[#allocation2 + $0x230] sm:$0xff] %v2041
    %2591 = vst [vmem:[#allocation2 + $0x238] sm:$0xff] %v2060
    %2592 = vst [vmem:[#allocation2 + $0x240] sm:$0xff] %v2079
    %2593 = vst [vmem:[#allocation2 + $0x248] sm:$0xff] %v2098
    %2594 = vst [vmem:[#allocation2 + $0x250] sm:$0xff] %v2117
    %2595 = vst [vmem:[#allocation2 + $0x258] sm:$0xff] %v2136
    %2596 = vst [vmem:[#allocation2 + $0x260] sm:$0xff] %v2155
    %2597 = vst [vmem:[#allocation2 + $0x268] sm:$0xff] %v2174
    %2598 = vst [vmem:[#allocation2 + $0x270] sm:$0xff] %v2193
    %2599 = vst [vmem:[#allocation2 + $0x278] sm:$0xff] %v2212
    %2600 = vst [vmem:[#allocation2 + $0x280] sm:$0xff] %v2231
    %2601 = vst [vmem:[#allocation2 + $0x288] sm:$0xff] %v2250
    %2602 = vst [vmem:[#allocation2 + $0x290] sm:$0xff] %v2269
    %2603 = vst [vmem:[#allocation2 + $0x298] sm:$0xff] %v2288
    %2604 = vst [vmem:[#allocation2 + $0x2a0] sm:$0xff] %v2307
    %2605 = vst [vmem:[#allocation2 + $0x2a8] sm:$0xff] %v2326
    %2606 = vst [vmem:[#allocation2 + $0x2b0] sm:$0xff] %v2345
    %2607 = vst [vmem:[#allocation2 + $0x2b8] sm:$0xff] %v2364
    %2608 = vst [vmem:[#allocation2 + $0x2c0] sm:$0xff] %v2383
    %2609 = vst [vmem:[#allocation2 + $0x2c8] sm:$0xff] %v2402
    %2610 = vst [vmem:[#allocation2 + $0x2d0] sm:$0xff] %v2421
    %2611 = vst [vmem:[#allocation2 + $0x2d8] sm:$0xff] %v2440
    %2612 = vst [vmem:[#allocation2 + $0x2e0] sm:$0xff] %v2459
    %2613 = vst [vmem:[#allocation2 + $0x2e8] sm:$0xff] %v2478
    %2614 = vst [vmem:[#allocation2 + $0x2f0] sm:$0xff] %v2497
    %2615 = vst [vmem:[#allocation2 + $0x2f8] sm:$0xff] %v2516
    %2616 = vst [vmem:[#allocation2 + $0x300] sm:$0xff] %v1929
    %2617 = vst [vmem:[#allocation2 + $0x308] sm:$0xff] %v1948
    %2618 = vst [vmem:[#allocation2 + $0x310] sm:$0xff] %v1967
    %2619 = vst [vmem:[#allocation2 + $0x318] sm:$0xff] %v1986
    %2620 = vst [vmem:[#allocation2 + $0x320] sm:$0xff] %v2005
    %2621 = vst [vmem:[#allocation2 + $0x328] sm:$0xff] %v2024
    %2622 = vst [vmem:[#allocation2 + $0x330] sm:$0xff] %v2043
    %2623 = vst [vmem:[#allocation2 + $0x338] sm:$0xff] %v2062
    %2624 = vst [vmem:[#allocation2 + $0x340] sm:$0xff] %v2081
    %2625 = vst [vmem:[#allocation2 + $0x348] sm:$0xff] %v2100
    %2626 = vst [vmem:[#allocation2 + $0x350] sm:$0xff] %v2119
    %2627 = vst [vmem:[#allocation2 + $0x358] sm:$0xff] %v2138
    %2628 = vst [vmem:[#allocation2 + $0x360] sm:$0xff] %v2157
    %2629 = vst [vmem:[#allocation2 + $0x368] sm:$0xff] %v2176
    %2630 = vst [vmem:[#allocation2 + $0x370] sm:$0xff] %v2195
    %2631 = vst [vmem:[#allocation2 + $0x378] sm:$0xff] %v2214
    %2632 = vst [vmem:[#allocation2 + $0x380] sm:$0xff] %v2233
    %2633 = vst [vmem:[#allocation2 + $0x388] sm:$0xff] %v2252
    %2634 = vst [vmem:[#allocation2 + $0x390] sm:$0xff] %v2271
    %2635 = vst [vmem:[#allocation2 + $0x398] sm:$0xff] %v2290
    %2636 = vst [vmem:[#allocation2 + $0x3a0] sm:$0xff] %v2309
    %2637 = vst [vmem:[#allocation2 + $0x3a8] sm:$0xff] %v2328
    %2638 = vst [vmem:[#allocation2 + $0x3b0] sm:$0xff] %v2347
    %2639 = vst [vmem:[#allocation2 + $0x3b8] sm:$0xff] %v2366
    %2640 = vst [vmem:[#allocation2 + $0x3c0] sm:$0xff] %v2385
    %2641 = vst [vmem:[#allocation2 + $0x3c8] sm:$0xff] %v2404
    %2642 = vst [vmem:[#allocation2 + $0x3d0] sm:$0xff] %v2423
    %2643 = vst [vmem:[#allocation2 + $0x3d8] sm:$0xff] %v2442
    %2644 = vst [vmem:[#allocation2 + $0x3e0] sm:$0xff] %v2461
    %2645 = vst [vmem:[#allocation2 + $0x3e8] sm:$0xff] %v2480
    %2646 = vst [vmem:[#allocation2 + $0x3f0] sm:$0xff] %v2499
    %2647 = vst [vmem:[#allocation2 + $0x3f8] sm:$0xff] %v2518
    %v2648 = vld [vmem:[%s0] sm:$0xff]
    %v2649 = vld [vmem:[%s0 + $0x8] sm:$0xff]
    %v2650 = vpack.c.bf16 %v2649, %v2648
    %v2651 = vld [vmem:[%s4] sm:$0xf]
    %v2652 = vld [vmem:[#allocation6] sm:$0x1]
    %v2654 = vperm.slane %v2652, 0
    %vm2656 = vcmask 64512
    %v2658 = vsel %vm2656, %v2650, 0
    %vm2660 = vcmask 1043456
    %v2662 = vsel %vm2660, %v2651, 0
    %2664 = vmatpush.bf16.msra.mxu0 0
    %2665 = vmatpush.bf16.msra.mxu0 0
    %2666 = vmatpush.bf16.msra.mxu0 0
    %2667 = vmatpush.bf16.msra.mxu0 0
    %2668 = vmatpush.bf16.msra.mxu0 0
    %2669 = vmatpush.bf16.msra.mxu0 0
    %2670 = vmatpush.bf16.msra.mxu0 0
    %2671 = vmatpush.bf16.msra.mxu0 %v2662
    %2672 = vmatmul.bf16.gmra.mxu0 %v2658
    %v2673 = vpop.f32.mrf.mxu0
    %v2674 = vadd.f32 %v2654, %v2673
    %v2675 = vpop.f32.mrf.mxu0
    %v2676 = vadd.f32 %v2654, %v2675
    %2677 = vdwg.mxu0
    %v2678 = vmax.f32 %v2674, 0.0
    %v2679 = vmax.f32 %v2676, 0.0
    %v2680 = vld [vmem:[#allocation12] sm:$0xf]
    %v2681 = vld [vmem:[#allocation12 + $0x4] sm:$0xf]
    %v2682 = vld [vmem:[#allocation12 + $0x8] sm:$0xf]
    %v2683 = vld [vmem:[#allocation12 + $0xc] sm:$0xf]
    %v2684 = vld [vmem:[#allocation12 + $0x10] sm:$0xf]
    %v2685 = vld [vmem:[#allocation12 + $0x14] sm:$0xf]
    %v2686 = vld [vmem:[#allocation12 + $0x18] sm:$0xf]
    %v2687 = vld [vmem:[#allocation12 + $0x1c] sm:$0xf]
    %v2688 = vld [vmem:[#allocation14] sm:$0x1]
    %v2689 = vld [vmem:[%s12] sm:$0xff]
    %v2690 = vld [vmem:[%s12 + $0x8] sm:$0xf]
    %v2691 = vld [vmem:[%s12 + $0xc] sm:$0xff]
    %v2692 = vld [vmem:[%s12 + $0x14] sm:$0xf]
    %v2693 = vld [vmem:[%s12 + $0x18] sm:$0xff]
    %v2694 = vld [vmem:[%s12 + $0x20] sm:$0xf]
    %v2695 = vld [vmem:[%s12 + $0x24] sm:$0xff]
    %v2696 = vld [vmem:[%s12 + $0x2c] sm:$0xf]
    %v2697 = vld [vmem:[%s12 + $0x30] sm:$0xff]
    %v2698 = vld [vmem:[%s12 + $0x38] sm:$0xf]
    %v2699 = vld [vmem:[%s12 + $0x3c] sm:$0xff]
    %v2700 = vld [vmem:[%s12 + $0x44] sm:$0xf]
    %v2701 = vld [vmem:[%s12 + $0x48] sm:$0xff]
    %v2702 = vld [vmem:[%s12 + $0x50] sm:$0xf]
    %v2703 = vld [vmem:[%s12 + $0x54] sm:$0xff]
    %v2704 = vld [vmem:[%s12 + $0x5c] sm:$0xf]
    %v2705 = vld [vmem:[#allocation15] sm:$0xff]
    %v2706 = vld [vmem:[#allocation15 + $0x8] sm:$0xf]
    %v2707 = vld [vmem:[#allocation15 + $0xc] sm:$0xff]
    %v2708 = vld [vmem:[#allocation15 + $0x14] sm:$0xf]
    %v2709 = vld [vmem:[#allocation15 + $0x18] sm:$0xff]
    %v2710 = vld [vmem:[#allocation15 + $0x20] sm:$0xf]
    %v2711 = vld [vmem:[#allocation15 + $0x24] sm:$0xff]
    %v2712 = vld [vmem:[#allocation15 + $0x2c] sm:$0xf]
    %v2713 = vld [vmem:[#allocation15 + $0x30] sm:$0xff]
    %v2714 = vld [vmem:[#allocation15 + $0x38] sm:$0xf]
    %v2715 = vld [vmem:[#allocation15 + $0x3c] sm:$0xff]
    %v2716 = vld [vmem:[#allocation15 + $0x44] sm:$0xf]
    %v2717 = vld [vmem:[#allocation15 + $0x48] sm:$0xff]
    %v2718 = vld [vmem:[#allocation15 + $0x50] sm:$0xf]
    %v2719 = vld [vmem:[#allocation15 + $0x54] sm:$0xff]
    %v2720 = vld [vmem:[#allocation15 + $0x5c] sm:$0xf]
    %v2721 = vld [vmem:[%s14] sm:$0x7]
    %v2722 = vld [vmem:[%s15] sm:$0x7]
    %v2723 = vpack.c.bf16 %v2679, %v2678
    %vm2724 = vcmask 130048
    %v2726 = vsel %vm2724, %v201, 0
    %v2729 = vsel %vm2724, %v202, 0
    %2731 = vmatpush.bf16.msra.mxu0 0
    %2732 = vmatpush.bf16.msra.mxu0 0
    %2733 = vmatpush.bf16.msra.mxu0 0
    %2734 = vmatpush.bf16.msra.mxu0 0
    %2735 = vmatpush.bf16.msra.mxu0 0
    %2736 = vmatpush.bf16.msra.mxu0 0
    %2737 = vmatpush.bf16.msra.mxu0 0
    %2738 = vmatpush.bf16.msra.mxu0 %v2723
    %2739 = vmatmul.bf16.gmra.mxu0 %v2726
    %v2740 = vpop.f32.mrf.mxu0
    %v2741 = vadd.f32 0.0, %v2740
    %v2742 = vpop.f32.mrf.mxu0
    %v2743 = vadd.f32 0.0, %v2742
    %2744 = vmatmul.bf16.gmra.mxu0 %v2729
    %v2745 = vpop.f32.mrf.mxu0
    %v2746 = vadd.f32 0.0, %v2745
    %v2747 = vpop.f32.mrf.mxu0
    %v2748 = vadd.f32 0.0, %v2747
    %2749 = vdwg.mxu0
    %v2750 = vld [vmem:[#allocation2] sm:$0xff]
    %v2751 = vld [vmem:[#allocation2 + $0x100] sm:$0xff]
    %v2752 = vld [vmem:[#allocation2 + $0x200] sm:$0xff]
    %v2753 = vld [vmem:[#allocation2 + $0x300] sm:$0xff]
    %2755 = vset.pattern.permute.xlu0 0
    %2756 = vperm.xlu0 %2755, %v2741
    %v2757 = vpop.permute.xlu0 %2756
    %2760 = vset.pattern.permute.xlu0 0
    %2761 = vperm.xlu0 %2760, %v2743
    %v2762 = vpop.permute.xlu0 %2761
    %2765 = vset.pattern.permute.xlu0 0
    %2766 = vperm.xlu0 %2765, %v2746
    %v2767 = vpop.permute.xlu0 %2766
    %2770 = vset.pattern.permute.xlu0 0
    %2771 = vperm.xlu0 %2770, %v2748
    %v2772 = vpop.permute.xlu0 %2771
    %v2774 = vmul.f32 %v2757, %v2750
    %v2775 = vmul.f32 %v2762, %v2751
    %v2776 = vmul.f32 %v2767, %v2752
    %v2777 = vmul.f32 %v2772, %v2753
    %v2778 = vadd.f32 %v2774, 0.0
    %v2779 = vadd.f32 %v2775, 0.0
    %v2780 = vadd.f32 %v2776, 0.0
    %v2781 = vadd.f32 %v2777, 0.0
    %2782 = vset.pattern.permute.xlu0 1
    %2783 = vperm.xlu0 %2782, %v2741
    %v2784 = vpop.permute.xlu0 %2783
    %2786 = vset.pattern.permute.xlu0 1
    %2787 = vperm.xlu0 %2786, %v2743
    %v2788 = vpop.permute.xlu0 %2787
    %2790 = vset.pattern.permute.xlu0 1
    %2791 = vperm.xlu0 %2790, %v2746
    %v2792 = vpop.permute.xlu0 %2791
    %2794 = vset.pattern.permute.xlu0 1
    %2795 = vperm.xlu0 %2794, %v2748
    %v2796 = vpop.permute.xlu0 %2795
    %v2798 = vmul.f32 %v2784, %v2750
    %v2799 = vmul.f32 %v2788, %v2751
    %v2800 = vmul.f32 %v2792, %v2752
    %v2801 = vmul.f32 %v2796, %v2753
    %2806 = vrot.lane.b32.xlu0 %v2798, 64
    %v2807 = vpop.permute.xlu0 %2806
    %2808 = vrot.lane.b32.xlu0 %v2799, 64
    %v2809 = vpop.permute.xlu0 %2808
    %2810 = vrot.lane.b32.xlu0 %v2800, 64
    %v2811 = vpop.permute.xlu0 %2810
    %2812 = vrot.lane.b32.xlu0 %v2801, 64
    %v2813 = vpop.permute.xlu0 %2812
    %v2818 = vadd.f32 %v2778, %v2807
    %v2819 = vadd.f32 %v2779, %v2809
    %v2820 = vadd.f32 %v2780, %v2811
    %v2821 = vadd.f32 %v2781, %v2813
    %v2822 = vld [vmem:[#allocation2 + $0x8] sm:$0xff]
    %v2823 = vld [vmem:[#allocation2 + $0x108] sm:$0xff]
    %v2824 = vld [vmem:[#allocation2 + $0x208] sm:$0xff]
    %v2825 = vld [vmem:[#allocation2 + $0x308] sm:$0xff]
    %2826 = vset.pattern.permute.xlu0 2
    %2827 = vperm.xlu0 %2826, %v2741
    %v2828 = vpop.permute.xlu0 %2827
    %2830 = vset.pattern.permute.xlu0 2
    %2831 = vperm.xlu0 %2830, %v2743
    %v2832 = vpop.permute.xlu0 %2831
    %2834 = vset.pattern.permute.xlu0 2
    %2835 = vperm.xlu0 %2834, %v2746
    %v2836 = vpop.permute.xlu0 %2835
    %2838 = vset.pattern.permute.xlu0 2
    %2839 = vperm.xlu0 %2838, %v2748
    %v2840 = vpop.permute.xlu0 %2839
    %v2842 = vmul.f32 %v2828, %v2822
    %v2843 = vmul.f32 %v2832, %v2823
    %v2844 = vmul.f32 %v2836, %v2824
    %v2845 = vmul.f32 %v2840, %v2825
    %v2846 = vadd.f32 %v2818, %v2842
    %v2847 = vadd.f32 %v2819, %v2843
    %v2848 = vadd.f32 %v2820, %v2844
    %v2849 = vadd.f32 %v2821, %v2845
    %2850 = vset.pattern.permute.xlu0 3
    %2851 = vperm.xlu0 %2850, %v2741
    %v2852 = vpop.permute.xlu0 %2851
    %2854 = vset.pattern.permute.xlu0 3
    %2855 = vperm.xlu0 %2854, %v2743
    %v2856 = vpop.permute.xlu0 %2855
    %2858 = vset.pattern.permute.xlu0 3
    %2859 = vperm.xlu0 %2858, %v2746
    %v2860 = vpop.permute.xlu0 %2859
    %2862 = vset.pattern.permute.xlu0 3
    %2863 = vperm.xlu0 %2862, %v2748
    %v2864 = vpop.permute.xlu0 %2863
    %v2866 = vmul.f32 %v2852, %v2822
    %v2867 = vmul.f32 %v2856, %v2823
    %v2868 = vmul.f32 %v2860, %v2824
    %v2869 = vmul.f32 %v2864, %v2825
    %2874 = vrot.lane.b32.xlu0 %v2866, 64
    %v2875 = vpop.permute.xlu0 %2874
    %2876 = vrot.lane.b32.xlu0 %v2867, 64
    %v2877 = vpop.permute.xlu0 %2876
    %2878 = vrot.lane.b32.xlu0 %v2868, 64
    %v2879 = vpop.permute.xlu0 %2878
    %2880 = vrot.lane.b32.xlu0 %v2869, 64
    %v2881 = vpop.permute.xlu0 %2880
    %v2886 = vadd.f32 %v2846, %v2875
    %v2887 = vadd.f32 %v2847, %v2877
    %v2888 = vadd.f32 %v2848, %v2879
    %v2889 = vadd.f32 %v2849, %v2881
    %v2890 = vld [vmem:[#allocation2 + $0x10] sm:$0xff]
    %v2891 = vld [vmem:[#allocation2 + $0x110] sm:$0xff]
    %v2892 = vld [vmem:[#allocation2 + $0x210] sm:$0xff]
    %v2893 = vld [vmem:[#allocation2 + $0x310] sm:$0xff]
    %2894 = vset.pattern.permute.xlu0 4
    %2895 = vperm.xlu0 %2894, %v2741
    %v2896 = vpop.permute.xlu0 %2895
    %2898 = vset.pattern.permute.xlu0 4
    %2899 = vperm.xlu0 %2898, %v2743
    %v2900 = vpop.permute.xlu0 %2899
    %2902 = vset.pattern.permute.xlu0 4
    %2903 = vperm.xlu0 %2902, %v2746
    %v2904 = vpop.permute.xlu0 %2903
    %2906 = vset.pattern.permute.xlu0 4
    %2907 = vperm.xlu0 %2906, %v2748
    %v2908 = vpop.permute.xlu0 %2907
    %v2910 = vmul.f32 %v2896, %v2890
    %v2911 = vmul.f32 %v2900, %v2891
    %v2912 = vmul.f32 %v2904, %v2892
    %v2913 = vmul.f32 %v2908, %v2893
    %v2914 = vadd.f32 %v2886, %v2910
    %v2915 = vadd.f32 %v2887, %v2911
    %v2916 = vadd.f32 %v2888, %v2912
    %v2917 = vadd.f32 %v2889, %v2913
    %2918 = vset.pattern.permute.xlu0 5
    %2919 = vperm.xlu0 %2918, %v2741
    %v2920 = vpop.permute.xlu0 %2919
    %2922 = vset.pattern.permute.xlu0 5
    %2923 = vperm.xlu0 %2922, %v2743
    %v2924 = vpop.permute.xlu0 %2923
    %2926 = vset.pattern.permute.xlu0 5
    %2927 = vperm.xlu0 %2926, %v2746
    %v2928 = vpop.permute.xlu0 %2927
    %2930 = vset.pattern.permute.xlu0 5
    %2931 = vperm.xlu0 %2930, %v2748
    %v2932 = vpop.permute.xlu0 %2931
    %v2934 = vmul.f32 %v2920, %v2890
    %v2935 = vmul.f32 %v2924, %v2891
    %v2936 = vmul.f32 %v2928, %v2892
    %v2937 = vmul.f32 %v2932, %v2893
    %2942 = vrot.lane.b32.xlu0 %v2934, 64
    %v2943 = vpop.permute.xlu0 %2942
    %2944 = vrot.lane.b32.xlu0 %v2935, 64
    %v2945 = vpop.permute.xlu0 %2944
    %2946 = vrot.lane.b32.xlu0 %v2936, 64
    %v2947 = vpop.permute.xlu0 %2946
    %2948 = vrot.lane.b32.xlu0 %v2937, 64
    %v2949 = vpop.permute.xlu0 %2948
    %v2954 = vadd.f32 %v2914, %v2943
    %v2955 = vadd.f32 %v2915, %v2945
    %v2956 = vadd.f32 %v2916, %v2947
    %v2957 = vadd.f32 %v2917, %v2949
    %v2958 = vld [vmem:[#allocation2 + $0x18] sm:$0xff]
    %v2959 = vld [vmem:[#allocation2 + $0x118] sm:$0xff]
    %v2960 = vld [vmem:[#allocation2 + $0x218] sm:$0xff]
    %v2961 = vld [vmem:[#allocation2 + $0x318] sm:$0xff]
    %2962 = vset.pattern.permute.xlu0 6
    %2963 = vperm.xlu0 %2962, %v2741
    %v2964 = vpop.permute.xlu0 %2963
    %2966 = vset.pattern.permute.xlu0 6
    %2967 = vperm.xlu0 %2966, %v2743
    %v2968 = vpop.permute.xlu0 %2967
    %2970 = vset.pattern.permute.xlu0 6
    %2971 = vperm.xlu0 %2970, %v2746
    %v2972 = vpop.permute.xlu0 %2971
    %2974 = vset.pattern.permute.xlu0 6
    %2975 = vperm.xlu0 %2974, %v2748
    %v2976 = vpop.permute.xlu0 %2975
    %v2978 = vmul.f32 %v2964, %v2958
    %v2979 = vmul.f32 %v2968, %v2959
    %v2980 = vmul.f32 %v2972, %v2960
    %v2981 = vmul.f32 %v2976, %v2961
    %v2982 = vadd.f32 %v2954, %v2978
    %v2983 = vadd.f32 %v2955, %v2979
    %v2984 = vadd.f32 %v2956, %v2980
    %v2985 = vadd.f32 %v2957, %v2981
    %2986 = vset.pattern.permute.xlu0 7
    %2987 = vperm.xlu0 %2986, %v2741
    %v2988 = vpop.permute.xlu0 %2987
    %2990 = vset.pattern.permute.xlu0 7
    %2991 = vperm.xlu0 %2990, %v2743
    %v2992 = vpop.permute.xlu0 %2991
    %2994 = vset.pattern.permute.xlu0 7
    %2995 = vperm.xlu0 %2994, %v2746
    %v2996 = vpop.permute.xlu0 %2995
    %2998 = vset.pattern.permute.xlu0 7
    %2999 = vperm.xlu0 %2998, %v2748
    %v3000 = vpop.permute.xlu0 %2999
    %v3002 = vmul.f32 %v2988, %v2958
    %v3003 = vmul.f32 %v2992, %v2959
    %v3004 = vmul.f32 %v2996, %v2960
    %v3005 = vmul.f32 %v3000, %v2961
    %3010 = vrot.lane.b32.xlu0 %v3002, 64
    %v3011 = vpop.permute.xlu0 %3010
    %3012 = vrot.lane.b32.xlu0 %v3003, 64
    %v3013 = vpop.permute.xlu0 %3012
    %3014 = vrot.lane.b32.xlu0 %v3004, 64
    %v3015 = vpop.permute.xlu0 %3014
    %3016 = vrot.lane.b32.xlu0 %v3005, 64
    %v3017 = vpop.permute.xlu0 %3016
    %v3022 = vadd.f32 %v2982, %v3011
    %v3023 = vadd.f32 %v2983, %v3013
    %v3024 = vadd.f32 %v2984, %v3015
    %v3025 = vadd.f32 %v2985, %v3017
    %v3026 = vld [vmem:[#allocation2 + $0x20] sm:$0xff]
    %v3027 = vld [vmem:[#allocation2 + $0x120] sm:$0xff]
    %v3028 = vld [vmem:[#allocation2 + $0x220] sm:$0xff]
    %v3029 = vld [vmem:[#allocation2 + $0x320] sm:$0xff]
    %3030 = vset.pattern.permute.xlu0 8
    %3031 = vperm.xlu0 %3030, %v2741
    %v3032 = vpop.permute.xlu0 %3031
    %3034 = vset.pattern.permute.xlu0 8
    %3035 = vperm.xlu0 %3034, %v2743
    %v3036 = vpop.permute.xlu0 %3035
    %3038 = vset.pattern.permute.xlu0 8
    %3039 = vperm.xlu0 %3038, %v2746
    %v3040 = vpop.permute.xlu0 %3039
    %3042 = vset.pattern.permute.xlu0 8
    %3043 = vperm.xlu0 %3042, %v2748
    %v3044 = vpop.permute.xlu0 %3043
    %v3046 = vmul.f32 %v3032, %v3026
    %v3047 = vmul.f32 %v3036, %v3027
    %v3048 = vmul.f32 %v3040, %v3028
    %v3049 = vmul.f32 %v3044, %v3029
    %v3050 = vadd.f32 %v3022, %v3046
    %v3051 = vadd.f32 %v3023, %v3047
    %v3052 = vadd.f32 %v3024, %v3048
    %v3053 = vadd.f32 %v3025, %v3049
    %3054 = vset.pattern.permute.xlu0 9
    %3055 = vperm.xlu0 %3054, %v2741
    %v3056 = vpop.permute.xlu0 %3055
    %3058 = vset.pattern.permute.xlu0 9
    %3059 = vperm.xlu0 %3058, %v2743
    %v3060 = vpop.permute.xlu0 %3059
    %3062 = vset.pattern.permute.xlu0 9
    %3063 = vperm.xlu0 %3062, %v2746
    %v3064 = vpop.permute.xlu0 %3063
    %3066 = vset.pattern.permute.xlu0 9
    %3067 = vperm.xlu0 %3066, %v2748
    %v3068 = vpop.permute.xlu0 %3067
    %v3070 = vmul.f32 %v3056, %v3026
    %v3071 = vmul.f32 %v3060, %v3027
    %v3072 = vmul.f32 %v3064, %v3028
    %v3073 = vmul.f32 %v3068, %v3029
    %3078 = vrot.lane.b32.xlu0 %v3070, 64
    %v3079 = vpop.permute.xlu0 %3078
    %3080 = vrot.lane.b32.xlu0 %v3071, 64
    %v3081 = vpop.permute.xlu0 %3080
    %3082 = vrot.lane.b32.xlu0 %v3072, 64
    %v3083 = vpop.permute.xlu0 %3082
    %3084 = vrot.lane.b32.xlu0 %v3073, 64
    %v3085 = vpop.permute.xlu0 %3084
    %v3090 = vadd.f32 %v3050, %v3079
    %v3091 = vadd.f32 %v3051, %v3081
    %v3092 = vadd.f32 %v3052, %v3083
    %v3093 = vadd.f32 %v3053, %v3085
    %v3094 = vld [vmem:[#allocation2 + $0x28] sm:$0xff]
    %v3095 = vld [vmem:[#allocation2 + $0x128] sm:$0xff]
    %v3096 = vld [vmem:[#allocation2 + $0x228] sm:$0xff]
    %v3097 = vld [vmem:[#allocation2 + $0x328] sm:$0xff]
    %3098 = vset.pattern.permute.xlu0 10
    %3099 = vperm.xlu0 %3098, %v2741
    %v3100 = vpop.permute.xlu0 %3099
    %3102 = vset.pattern.permute.xlu0 10
    %3103 = vperm.xlu0 %3102, %v2743
    %v3104 = vpop.permute.xlu0 %3103
    %3106 = vset.pattern.permute.xlu0 10
    %3107 = vperm.xlu0 %3106, %v2746
    %v3108 = vpop.permute.xlu0 %3107
    %3110 = vset.pattern.permute.xlu0 10
    %3111 = vperm.xlu0 %3110, %v2748
    %v3112 = vpop.permute.xlu0 %3111
    %v3114 = vmul.f32 %v3100, %v3094
    %v3115 = vmul.f32 %v3104, %v3095
    %v3116 = vmul.f32 %v3108, %v3096
    %v3117 = vmul.f32 %v3112, %v3097
    %v3118 = vadd.f32 %v3090, %v3114
    %v3119 = vadd.f32 %v3091, %v3115
    %v3120 = vadd.f32 %v3092, %v3116
    %v3121 = vadd.f32 %v3093, %v3117
    %3122 = vset.pattern.permute.xlu0 11
    %3123 = vperm.xlu0 %3122, %v2741
    %v3124 = vpop.permute.xlu0 %3123
    %3126 = vset.pattern.permute.xlu0 11
    %3127 = vperm.xlu0 %3126, %v2743
    %v3128 = vpop.permute.xlu0 %3127
    %3130 = vset.pattern.permute.xlu0 11
    %3131 = vperm.xlu0 %3130, %v2746
    %v3132 = vpop.permute.xlu0 %3131
    %3134 = vset.pattern.permute.xlu0 11
    %3135 = vperm.xlu0 %3134, %v2748
    %v3136 = vpop.permute.xlu0 %3135
    %v3138 = vmul.f32 %v3124, %v3094
    %v3139 = vmul.f32 %v3128, %v3095
    %v3140 = vmul.f32 %v3132, %v3096
    %v3141 = vmul.f32 %v3136, %v3097
    %3146 = vrot.lane.b32.xlu0 %v3138, 64
    %v3147 = vpop.permute.xlu0 %3146
    %3148 = vrot.lane.b32.xlu0 %v3139, 64
    %v3149 = vpop.permute.xlu0 %3148
    %3150 = vrot.lane.b32.xlu0 %v3140, 64
    %v3151 = vpop.permute.xlu0 %3150
    %3152 = vrot.lane.b32.xlu0 %v3141, 64
    %v3153 = vpop.permute.xlu0 %3152
    %v3158 = vadd.f32 %v3118, %v3147
    %v3159 = vadd.f32 %v3119, %v3149
    %v3160 = vadd.f32 %v3120, %v3151
    %v3161 = vadd.f32 %v3121, %v3153
    %v3162 = vld [vmem:[#allocation2 + $0x30] sm:$0xff]
    %v3163 = vld [vmem:[#allocation2 + $0x130] sm:$0xff]
    %v3164 = vld [vmem:[#allocation2 + $0x230] sm:$0xff]
    %v3165 = vld [vmem:[#allocation2 + $0x330] sm:$0xff]
    %3166 = vset.pattern.permute.xlu0 12
    %3167 = vperm.xlu0 %3166, %v2741
    %v3168 = vpop.permute.xlu0 %3167
    %3170 = vset.pattern.permute.xlu0 12
    %3171 = vperm.xlu0 %3170, %v2743
    %v3172 = vpop.permute.xlu0 %3171
    %3174 = vset.pattern.permute.xlu0 12
    %3175 = vperm.xlu0 %3174, %v2746
    %v3176 = vpop.permute.xlu0 %3175
    %3178 = vset.pattern.permute.xlu0 12
    %3179 = vperm.xlu0 %3178, %v2748
    %v3180 = vpop.permute.xlu0 %3179
    %v3182 = vmul.f32 %v3168, %v3162
    %v3183 = vmul.f32 %v3172, %v3163
    %v3184 = vmul.f32 %v3176, %v3164
    %v3185 = vmul.f32 %v3180, %v3165
    %v3186 = vadd.f32 %v3158, %v3182
    %v3187 = vadd.f32 %v3159, %v3183
    %v3188 = vadd.f32 %v3160, %v3184
    %v3189 = vadd.f32 %v3161, %v3185
    %3190 = vset.pattern.permute.xlu0 13
    %3191 = vperm.xlu0 %3190, %v2741
    %v3192 = vpop.permute.xlu0 %3191
    %3194 = vset.pattern.permute.xlu0 13
    %3195 = vperm.xlu0 %3194, %v2743
    %v3196 = vpop.permute.xlu0 %3195
    %3198 = vset.pattern.permute.xlu0 13
    %3199 = vperm.xlu0 %3198, %v2746
    %v3200 = vpop.permute.xlu0 %3199
    %3202 = vset.pattern.permute.xlu0 13
    %3203 = vperm.xlu0 %3202, %v2748
    %v3204 = vpop.permute.xlu0 %3203
    %v3206 = vmul.f32 %v3192, %v3162
    %v3207 = vmul.f32 %v3196, %v3163
    %v3208 = vmul.f32 %v3200, %v3164
    %v3209 = vmul.f32 %v3204, %v3165
    %3214 = vrot.lane.b32.xlu0 %v3206, 64
    %v3215 = vpop.permute.xlu0 %3214
    %3216 = vrot.lane.b32.xlu0 %v3207, 64
    %v3217 = vpop.permute.xlu0 %3216
    %3218 = vrot.lane.b32.xlu0 %v3208, 64
    %v3219 = vpop.permute.xlu0 %3218
    %3220 = vrot.lane.b32.xlu0 %v3209, 64
    %v3221 = vpop.permute.xlu0 %3220
    %v3226 = vadd.f32 %v3186, %v3215
    %v3227 = vadd.f32 %v3187, %v3217
    %v3228 = vadd.f32 %v3188, %v3219
    %v3229 = vadd.f32 %v3189, %v3221
    %v3230 = vld [vmem:[#allocation2 + $0x38] sm:$0xff]
    %v3231 = vld [vmem:[#allocation2 + $0x138] sm:$0xff]
    %v3232 = vld [vmem:[#allocation2 + $0x238] sm:$0xff]
    %v3233 = vld [vmem:[#allocation2 + $0x338] sm:$0xff]
    %3234 = vset.pattern.permute.xlu0 14
    %3235 = vperm.xlu0 %3234, %v2741
    %v3236 = vpop.permute.xlu0 %3235
    %3238 = vset.pattern.permute.xlu0 14
    %3239 = vperm.xlu0 %3238, %v2743
    %v3240 = vpop.permute.xlu0 %3239
    %3242 = vset.pattern.permute.xlu0 14
    %3243 = vperm.xlu0 %3242, %v2746
    %v3244 = vpop.permute.xlu0 %3243
    %3246 = vset.pattern.permute.xlu0 14
    %3247 = vperm.xlu0 %3246, %v2748
    %v3248 = vpop.permute.xlu0 %3247
    %v3250 = vmul.f32 %v3236, %v3230
    %v3251 = vmul.f32 %v3240, %v3231
    %v3252 = vmul.f32 %v3244, %v3232
    %v3253 = vmul.f32 %v3248, %v3233
    %v3254 = vadd.f32 %v3226, %v3250
    %v3255 = vadd.f32 %v3227, %v3251
    %v3256 = vadd.f32 %v3228, %v3252
    %v3257 = vadd.f32 %v3229, %v3253
    %3258 = vset.pattern.permute.xlu0 15
    %3259 = vperm.xlu0 %3258, %v2741
    %v3260 = vpop.permute.xlu0 %3259
    %3262 = vset.pattern.permute.xlu0 15
    %3263 = vperm.xlu0 %3262, %v2743
    %v3264 = vpop.permute.xlu0 %3263
    %3266 = vset.pattern.permute.xlu0 15
    %3267 = vperm.xlu0 %3266, %v2746
    %v3268 = vpop.permute.xlu0 %3267
    %3270 = vset.pattern.permute.xlu0 15
    %3271 = vperm.xlu0 %3270, %v2748
    %v3272 = vpop.permute.xlu0 %3271
    %v3274 = vmul.f32 %v3260, %v3230
    %v3275 = vmul.f32 %v3264, %v3231
    %v3276 = vmul.f32 %v3268, %v3232
    %v3277 = vmul.f32 %v3272, %v3233
    %3282 = vrot.lane.b32.xlu0 %v3274, 64
    %v3283 = vpop.permute.xlu0 %3282
    %3284 = vrot.lane.b32.xlu0 %v3275, 64
    %v3285 = vpop.permute.xlu0 %3284
    %3286 = vrot.lane.b32.xlu0 %v3276, 64
    %v3287 = vpop.permute.xlu0 %3286
    %3288 = vrot.lane.b32.xlu0 %v3277, 64
    %v3289 = vpop.permute.xlu0 %3288
    %v3294 = vadd.f32 %v3254, %v3283
    %v3295 = vadd.f32 %v3255, %v3285
    %v3296 = vadd.f32 %v3256, %v3287
    %v3297 = vadd.f32 %v3257, %v3289
    %v3298 = vld [vmem:[#allocation2 + $0x40] sm:$0xff]
    %v3299 = vld [vmem:[#allocation2 + $0x140] sm:$0xff]
    %v3300 = vld [vmem:[#allocation2 + $0x240] sm:$0xff]
    %v3301 = vld [vmem:[#allocation2 + $0x340] sm:$0xff]
    %3302 = vset.pattern.permute.xlu0 16
    %3303 = vperm.xlu0 %3302, %v2741
    %v3304 = vpop.permute.xlu0 %3303
    %3306 = vset.pattern.permute.xlu0 16
    %3307 = vperm.xlu0 %3306, %v2743
    %v3308 = vpop.permute.xlu0 %3307
    %3310 = vset.pattern.permute.xlu0 16
    %3311 = vperm.xlu0 %3310, %v2746
    %v3312 = vpop.permute.xlu0 %3311
    %3314 = vset.pattern.permute.xlu0 16
    %3315 = vperm.xlu0 %3314, %v2748
    %v3316 = vpop.permute.xlu0 %3315
    %v3318 = vmul.f32 %v3304, %v3298
    %v3319 = vmul.f32 %v3308, %v3299
    %v3320 = vmul.f32 %v3312, %v3300
    %v3321 = vmul.f32 %v3316, %v3301
    %v3322 = vadd.f32 %v3294, %v3318
    %v3323 = vadd.f32 %v3295, %v3319
    %v3324 = vadd.f32 %v3296, %v3320
    %v3325 = vadd.f32 %v3297, %v3321
    %3326 = vset.pattern.permute.xlu0 17
    %3327 = vperm.xlu0 %3326, %v2741
    %v3328 = vpop.permute.xlu0 %3327
    %3330 = vset.pattern.permute.xlu0 17
    %3331 = vperm.xlu0 %3330, %v2743
    %v3332 = vpop.permute.xlu0 %3331
    %3334 = vset.pattern.permute.xlu0 17
    %3335 = vperm.xlu0 %3334, %v2746
    %v3336 = vpop.permute.xlu0 %3335
    %3338 = vset.pattern.permute.xlu0 17
    %3339 = vperm.xlu0 %3338, %v2748
    %v3340 = vpop.permute.xlu0 %3339
    %v3342 = vmul.f32 %v3328, %v3298
    %v3343 = vmul.f32 %v3332, %v3299
    %v3344 = vmul.f32 %v3336, %v3300
    %v3345 = vmul.f32 %v3340, %v3301
    %3350 = vrot.lane.b32.xlu0 %v3342, 64
    %v3351 = vpop.permute.xlu0 %3350
    %3352 = vrot.lane.b32.xlu0 %v3343, 64
    %v3353 = vpop.permute.xlu0 %3352
    %3354 = vrot.lane.b32.xlu0 %v3344, 64
    %v3355 = vpop.permute.xlu0 %3354
    %3356 = vrot.lane.b32.xlu0 %v3345, 64
    %v3357 = vpop.permute.xlu0 %3356
    %v3362 = vadd.f32 %v3322, %v3351
    %v3363 = vadd.f32 %v3323, %v3353
    %v3364 = vadd.f32 %v3324, %v3355
    %v3365 = vadd.f32 %v3325, %v3357
    %v3366 = vld [vmem:[#allocation2 + $0x48] sm:$0xff]
    %v3367 = vld [vmem:[#allocation2 + $0x148] sm:$0xff]
    %v3368 = vld [vmem:[#allocation2 + $0x248] sm:$0xff]
    %v3369 = vld [vmem:[#allocation2 + $0x348] sm:$0xff]
    %3370 = vset.pattern.permute.xlu0 18
    %3371 = vperm.xlu0 %3370, %v2741
    %v3372 = vpop.permute.xlu0 %3371
    %3374 = vset.pattern.permute.xlu0 18
    %3375 = vperm.xlu0 %3374, %v2743
    %v3376 = vpop.permute.xlu0 %3375
    %3378 = vset.pattern.permute.xlu0 18
    %3379 = vperm.xlu0 %3378, %v2746
    %v3380 = vpop.permute.xlu0 %3379
    %3382 = vset.pattern.permute.xlu0 18
    %3383 = vperm.xlu0 %3382, %v2748
    %v3384 = vpop.permute.xlu0 %3383
    %v3386 = vmul.f32 %v3372, %v3366
    %v3387 = vmul.f32 %v3376, %v3367
    %v3388 = vmul.f32 %v3380, %v3368
    %v3389 = vmul.f32 %v3384, %v3369
    %v3390 = vadd.f32 %v3362, %v3386
    %v3391 = vadd.f32 %v3363, %v3387
    %v3392 = vadd.f32 %v3364, %v3388
    %v3393 = vadd.f32 %v3365, %v3389
    %3394 = vset.pattern.permute.xlu0 19
    %3395 = vperm.xlu0 %3394, %v2741
    %v3396 = vpop.permute.xlu0 %3395
    %3398 = vset.pattern.permute.xlu0 19
    %3399 = vperm.xlu0 %3398, %v2743
    %v3400 = vpop.permute.xlu0 %3399
    %3402 = vset.pattern.permute.xlu0 19
    %3403 = vperm.xlu0 %3402, %v2746
    %v3404 = vpop.permute.xlu0 %3403
    %3406 = vset.pattern.permute.xlu0 19
    %3407 = vperm.xlu0 %3406, %v2748
    %v3408 = vpop.permute.xlu0 %3407
    %v3410 = vmul.f32 %v3396, %v3366
    %v3411 = vmul.f32 %v3400, %v3367
    %v3412 = vmul.f32 %v3404, %v3368
    %v3413 = vmul.f32 %v3408, %v3369
    %3418 = vrot.lane.b32.xlu0 %v3410, 64
    %v3419 = vpop.permute.xlu0 %3418
    %3420 = vrot.lane.b32.xlu0 %v3411, 64
    %v3421 = vpop.permute.xlu0 %3420
    %3422 = vrot.lane.b32.xlu0 %v3412, 64
    %v3423 = vpop.permute.xlu0 %3422
    %3424 = vrot.lane.b32.xlu0 %v3413, 64
    %v3425 = vpop.permute.xlu0 %3424
    %v3430 = vadd.f32 %v3390, %v3419
    %v3431 = vadd.f32 %v3391, %v3421
    %v3432 = vadd.f32 %v3392, %v3423
    %v3433 = vadd.f32 %v3393, %v3425
    %v3434 = vld [vmem:[#allocation2 + $0x50] sm:$0xff]
    %v3435 = vld [vmem:[#allocation2 + $0x150] sm:$0xff]
    %v3436 = vld [vmem:[#allocation2 + $0x250] sm:$0xff]
    %v3437 = vld [vmem:[#allocation2 + $0x350] sm:$0xff]
    %3438 = vset.pattern.permute.xlu0 20
    %3439 = vperm.xlu0 %3438, %v2741
    %v3440 = vpop.permute.xlu0 %3439
    %3442 = vset.pattern.permute.xlu0 20
    %3443 = vperm.xlu0 %3442, %v2743
    %v3444 = vpop.permute.xlu0 %3443
    %3446 = vset.pattern.permute.xlu0 20
    %3447 = vperm.xlu0 %3446, %v2746
    %v3448 = vpop.permute.xlu0 %3447
    %3450 = vset.pattern.permute.xlu0 20
    %3451 = vperm.xlu0 %3450, %v2748
    %v3452 = vpop.permute.xlu0 %3451
    %v3454 = vmul.f32 %v3440, %v3434
    %v3455 = vmul.f32 %v3444, %v3435
    %v3456 = vmul.f32 %v3448, %v3436
    %v3457 = vmul.f32 %v3452, %v3437
    %v3458 = vadd.f32 %v3430, %v3454
    %v3459 = vadd.f32 %v3431, %v3455
    %v3460 = vadd.f32 %v3432, %v3456
    %v3461 = vadd.f32 %v3433, %v3457
    %3462 = vset.pattern.permute.xlu0 21
    %3463 = vperm.xlu0 %3462, %v2741
    %v3464 = vpop.permute.xlu0 %3463
    %3466 = vset.pattern.permute.xlu0 21
    %3467 = vperm.xlu0 %3466, %v2743
    %v3468 = vpop.permute.xlu0 %3467
    %3470 = vset.pattern.permute.xlu0 21
    %3471 = vperm.xlu0 %3470, %v2746
    %v3472 = vpop.permute.xlu0 %3471
    %3474 = vset.pattern.permute.xlu0 21
    %3475 = vperm.xlu0 %3474, %v2748
    %v3476 = vpop.permute.xlu0 %3475
    %v3478 = vmul.f32 %v3464, %v3434
    %v3479 = vmul.f32 %v3468, %v3435
    %v3480 = vmul.f32 %v3472, %v3436
    %v3481 = vmul.f32 %v3476, %v3437
    %3486 = vrot.lane.b32.xlu0 %v3478, 64
    %v3487 = vpop.permute.xlu0 %3486
    %3488 = vrot.lane.b32.xlu0 %v3479, 64
    %v3489 = vpop.permute.xlu0 %3488
    %3490 = vrot.lane.b32.xlu0 %v3480, 64
    %v3491 = vpop.permute.xlu0 %3490
    %3492 = vrot.lane.b32.xlu0 %v3481, 64
    %v3493 = vpop.permute.xlu0 %3492
    %v3498 = vadd.f32 %v3458, %v3487
    %v3499 = vadd.f32 %v3459, %v3489
    %v3500 = vadd.f32 %v3460, %v3491
    %v3501 = vadd.f32 %v3461, %v3493
    %v3502 = vld [vmem:[#allocation2 + $0x58] sm:$0xff]
    %v3503 = vld [vmem:[#allocation2 + $0x158] sm:$0xff]
    %v3504 = vld [vmem:[#allocation2 + $0x258] sm:$0xff]
    %v3505 = vld [vmem:[#allocation2 + $0x358] sm:$0xff]
    %3506 = vset.pattern.permute.xlu0 22
    %3507 = vperm.xlu0 %3506, %v2741
    %v3508 = vpop.permute.xlu0 %3507
    %3510 = vset.pattern.permute.xlu0 22
    %3511 = vperm.xlu0 %3510, %v2743
    %v3512 = vpop.permute.xlu0 %3511
    %3514 = vset.pattern.permute.xlu0 22
    %3515 = vperm.xlu0 %3514, %v2746
    %v3516 = vpop.permute.xlu0 %3515
    %3518 = vset.pattern.permute.xlu0 22
    %3519 = vperm.xlu0 %3518, %v2748
    %v3520 = vpop.permute.xlu0 %3519
    %v3522 = vmul.f32 %v3508, %v3502
    %v3523 = vmul.f32 %v3512, %v3503
    %v3524 = vmul.f32 %v3516, %v3504
    %v3525 = vmul.f32 %v3520, %v3505
    %v3526 = vadd.f32 %v3498, %v3522
    %v3527 = vadd.f32 %v3499, %v3523
    %v3528 = vadd.f32 %v3500, %v3524
    %v3529 = vadd.f32 %v3501, %v3525
    %3530 = vset.pattern.permute.xlu0 23
    %3531 = vperm.xlu0 %3530, %v2741
    %v3532 = vpop.permute.xlu0 %3531
    %3534 = vset.pattern.permute.xlu0 23
    %3535 = vperm.xlu0 %3534, %v2743
    %v3536 = vpop.permute.xlu0 %3535
    %3538 = vset.pattern.permute.xlu0 23
    %3539 = vperm.xlu0 %3538, %v2746
    %v3540 = vpop.permute.xlu0 %3539
    %3542 = vset.pattern.permute.xlu0 23
    %3543 = vperm.xlu0 %3542, %v2748
    %v3544 = vpop.permute.xlu0 %3543
    %v3546 = vmul.f32 %v3532, %v3502
    %v3547 = vmul.f32 %v3536, %v3503
    %v3548 = vmul.f32 %v3540, %v3504
    %v3549 = vmul.f32 %v3544, %v3505
    %3554 = vrot.lane.b32.xlu0 %v3546, 64
    %v3555 = vpop.permute.xlu0 %3554
    %3556 = vrot.lane.b32.xlu0 %v3547, 64
    %v3557 = vpop.permute.xlu0 %3556
    %3558 = vrot.lane.b32.xlu0 %v3548, 64
    %v3559 = vpop.permute.xlu0 %3558
    %3560 = vrot.lane.b32.xlu0 %v3549, 64
    %v3561 = vpop.permute.xlu0 %3560
    %v3566 = vadd.f32 %v3526, %v3555
    %v3567 = vadd.f32 %v3527, %v3557
    %v3568 = vadd.f32 %v3528, %v3559
    %v3569 = vadd.f32 %v3529, %v3561
    %v3570 = vld [vmem:[#allocation2 + $0x60] sm:$0xff]
    %v3571 = vld [vmem:[#allocation2 + $0x160] sm:$0xff]
    %v3572 = vld [vmem:[#allocation2 + $0x260] sm:$0xff]
    %v3573 = vld [vmem:[#allocation2 + $0x360] sm:$0xff]
    %3574 = vset.pattern.permute.xlu0 24
    %3575 = vperm.xlu0 %3574, %v2741
    %v3576 = vpop.permute.xlu0 %3575
    %3578 = vset.pattern.permute.xlu0 24
    %3579 = vperm.xlu0 %3578, %v2743
    %v3580 = vpop.permute.xlu0 %3579
    %3582 = vset.pattern.permute.xlu0 24
    %3583 = vperm.xlu0 %3582, %v2746
    %v3584 = vpop.permute.xlu0 %3583
    %3586 = vset.pattern.permute.xlu0 24
    %3587 = vperm.xlu0 %3586, %v2748
    %v3588 = vpop.permute.xlu0 %3587
    %v3590 = vmul.f32 %v3576, %v3570
    %v3591 = vmul.f32 %v3580, %v3571
    %v3592 = vmul.f32 %v3584, %v3572
    %v3593 = vmul.f32 %v3588, %v3573
    %v3594 = vadd.f32 %v3566, %v3590
    %v3595 = vadd.f32 %v3567, %v3591
    %v3596 = vadd.f32 %v3568, %v3592
    %v3597 = vadd.f32 %v3569, %v3593
    %3598 = vset.pattern.permute.xlu0 25
    %3599 = vperm.xlu0 %3598, %v2741
    %v3600 = vpop.permute.xlu0 %3599
    %3602 = vset.pattern.permute.xlu0 25
    %3603 = vperm.xlu0 %3602, %v2743
    %v3604 = vpop.permute.xlu0 %3603
    %3606 = vset.pattern.permute.xlu0 25
    %3607 = vperm.xlu0 %3606, %v2746
    %v3608 = vpop.permute.xlu0 %3607
    %3610 = vset.pattern.permute.xlu0 25
    %3611 = vperm.xlu0 %3610, %v2748
    %v3612 = vpop.permute.xlu0 %3611
    %v3614 = vmul.f32 %v3600, %v3570
    %v3615 = vmul.f32 %v3604, %v3571
    %v3616 = vmul.f32 %v3608, %v3572
    %v3617 = vmul.f32 %v3612, %v3573
    %3622 = vrot.lane.b32.xlu0 %v3614, 64
    %v3623 = vpop.permute.xlu0 %3622
    %3624 = vrot.lane.b32.xlu0 %v3615, 64
    %v3625 = vpop.permute.xlu0 %3624
    %3626 = vrot.lane.b32.xlu0 %v3616, 64
    %v3627 = vpop.permute.xlu0 %3626
    %3628 = vrot.lane.b32.xlu0 %v3617, 64
    %v3629 = vpop.permute.xlu0 %3628
    %v3634 = vadd.f32 %v3594, %v3623
    %v3635 = vadd.f32 %v3595, %v3625
    %v3636 = vadd.f32 %v3596, %v3627
    %v3637 = vadd.f32 %v3597, %v3629
    %v3638 = vld [vmem:[#allocation2 + $0x68] sm:$0xff]
    %v3639 = vld [vmem:[#allocation2 + $0x168] sm:$0xff]
    %v3640 = vld [vmem:[#allocation2 + $0x268] sm:$0xff]
    %v3641 = vld [vmem:[#allocation2 + $0x368] sm:$0xff]
    %3642 = vset.pattern.permute.xlu0 26
    %3643 = vperm.xlu0 %3642, %v2741
    %v3644 = vpop.permute.xlu0 %3643
    %3646 = vset.pattern.permute.xlu0 26
    %3647 = vperm.xlu0 %3646, %v2743
    %v3648 = vpop.permute.xlu0 %3647
    %3650 = vset.pattern.permute.xlu0 26
    %3651 = vperm.xlu0 %3650, %v2746
    %v3652 = vpop.permute.xlu0 %3651
    %3654 = vset.pattern.permute.xlu0 26
    %3655 = vperm.xlu0 %3654, %v2748
    %v3656 = vpop.permute.xlu0 %3655
    %v3658 = vmul.f32 %v3644, %v3638
    %v3659 = vmul.f32 %v3648, %v3639
    %v3660 = vmul.f32 %v3652, %v3640
    %v3661 = vmul.f32 %v3656, %v3641
    %v3662 = vadd.f32 %v3634, %v3658
    %v3663 = vadd.f32 %v3635, %v3659
    %v3664 = vadd.f32 %v3636, %v3660
    %v3665 = vadd.f32 %v3637, %v3661
    %3666 = vset.pattern.permute.xlu0 27
    %3667 = vperm.xlu0 %3666, %v2741
    %v3668 = vpop.permute.xlu0 %3667
    %3670 = vset.pattern.permute.xlu0 27
    %3671 = vperm.xlu0 %3670, %v2743
    %v3672 = vpop.permute.xlu0 %3671
    %3674 = vset.pattern.permute.xlu0 27
    %3675 = vperm.xlu0 %3674, %v2746
    %v3676 = vpop.permute.xlu0 %3675
    %3678 = vset.pattern.permute.xlu0 27
    %3679 = vperm.xlu0 %3678, %v2748
    %v3680 = vpop.permute.xlu0 %3679
    %v3682 = vmul.f32 %v3668, %v3638
    %v3683 = vmul.f32 %v3672, %v3639
    %v3684 = vmul.f32 %v3676, %v3640
    %v3685 = vmul.f32 %v3680, %v3641
    %3690 = vrot.lane.b32.xlu0 %v3682, 64
    %v3691 = vpop.permute.xlu0 %3690
    %3692 = vrot.lane.b32.xlu0 %v3683, 64
    %v3693 = vpop.permute.xlu0 %3692
    %3694 = vrot.lane.b32.xlu0 %v3684, 64
    %v3695 = vpop.permute.xlu0 %3694
    %3696 = vrot.lane.b32.xlu0 %v3685, 64
    %v3697 = vpop.permute.xlu0 %3696
    %v3702 = vadd.f32 %v3662, %v3691
    %v3703 = vadd.f32 %v3663, %v3693
    %v3704 = vadd.f32 %v3664, %v3695
    %v3705 = vadd.f32 %v3665, %v3697
    %v3706 = vld [vmem:[#allocation2 + $0x70] sm:$0xff]
    %v3707 = vld [vmem:[#allocation2 + $0x170] sm:$0xff]
    %v3708 = vld [vmem:[#allocation2 + $0x270] sm:$0xff]
    %v3709 = vld [vmem:[#allocation2 + $0x370] sm:$0xff]
    %3710 = vset.pattern.permute.xlu0 28
    %3711 = vperm.xlu0 %3710, %v2741
    %v3712 = vpop.permute.xlu0 %3711
    %3714 = vset.pattern.permute.xlu0 28
    %3715 = vperm.xlu0 %3714, %v2743
    %v3716 = vpop.permute.xlu0 %3715
    %3718 = vset.pattern.permute.xlu0 28
    %3719 = vperm.xlu0 %3718, %v2746
    %v3720 = vpop.permute.xlu0 %3719
    %3722 = vset.pattern.permute.xlu0 28
    %3723 = vperm.xlu0 %3722, %v2748
    %v3724 = vpop.permute.xlu0 %3723
    %v3726 = vmul.f32 %v3712, %v3706
    %v3727 = vmul.f32 %v3716, %v3707
    %v3728 = vmul.f32 %v3720, %v3708
    %v3729 = vmul.f32 %v3724, %v3709
    %v3730 = vadd.f32 %v3702, %v3726
    %v3731 = vadd.f32 %v3703, %v3727
    %v3732 = vadd.f32 %v3704, %v3728
    %v3733 = vadd.f32 %v3705, %v3729
    %3734 = vset.pattern.permute.xlu0 29
    %3735 = vperm.xlu0 %3734, %v2741
    %v3736 = vpop.permute.xlu0 %3735
    %3738 = vset.pattern.permute.xlu0 29
    %3739 = vperm.xlu0 %3738, %v2743
    %v3740 = vpop.permute.xlu0 %3739
    %3742 = vset.pattern.permute.xlu0 29
    %3743 = vperm.xlu0 %3742, %v2746
    %v3744 = vpop.permute.xlu0 %3743
    %3746 = vset.pattern.permute.xlu0 29
    %3747 = vperm.xlu0 %3746, %v2748
    %v3748 = vpop.permute.xlu0 %3747
    %v3750 = vmul.f32 %v3736, %v3706
    %v3751 = vmul.f32 %v3740, %v3707
    %v3752 = vmul.f32 %v3744, %v3708
    %v3753 = vmul.f32 %v3748, %v3709
    %3758 = vrot.lane.b32.xlu0 %v3750, 64
    %v3759 = vpop.permute.xlu0 %3758
    %3760 = vrot.lane.b32.xlu0 %v3751, 64
    %v3761 = vpop.permute.xlu0 %3760
    %3762 = vrot.lane.b32.xlu0 %v3752, 64
    %v3763 = vpop.permute.xlu0 %3762
    %3764 = vrot.lane.b32.xlu0 %v3753, 64
    %v3765 = vpop.permute.xlu0 %3764
    %v3770 = vadd.f32 %v3730, %v3759
    %v3771 = vadd.f32 %v3731, %v3761
    %v3772 = vadd.f32 %v3732, %v3763
    %v3773 = vadd.f32 %v3733, %v3765
    %v3774 = vld [vmem:[#allocation2 + $0x78] sm:$0xff]
    %v3775 = vld [vmem:[#allocation2 + $0x178] sm:$0xff]
    %v3776 = vld [vmem:[#allocation2 + $0x278] sm:$0xff]
    %v3777 = vld [vmem:[#allocation2 + $0x378] sm:$0xff]
    %3778 = vset.pattern.permute.xlu0 30
    %3779 = vperm.xlu0 %3778, %v2741
    %v3780 = vpop.permute.xlu0 %3779
    %3782 = vset.pattern.permute.xlu0 30
    %3783 = vperm.xlu0 %3782, %v2743
    %v3784 = vpop.permute.xlu0 %3783
    %3786 = vset.pattern.permute.xlu0 30
    %3787 = vperm.xlu0 %3786, %v2746
    %v3788 = vpop.permute.xlu0 %3787
    %3790 = vset.pattern.permute.xlu0 30
    %3791 = vperm.xlu0 %3790, %v2748
    %v3792 = vpop.permute.xlu0 %3791
    %v3794 = vmul.f32 %v3780, %v3774
    %v3795 = vmul.f32 %v3784, %v3775
    %v3796 = vmul.f32 %v3788, %v3776
    %v3797 = vmul.f32 %v3792, %v3777
    %v3798 = vadd.f32 %v3770, %v3794
    %v3799 = vadd.f32 %v3771, %v3795
    %v3800 = vadd.f32 %v3772, %v3796
    %v3801 = vadd.f32 %v3773, %v3797
    %3802 = vset.pattern.permute.xlu0 31
    %3803 = vperm.xlu0 %3802, %v2741
    %v3804 = vpop.permute.xlu0 %3803
    %3806 = vset.pattern.permute.xlu0 31
    %3807 = vperm.xlu0 %3806, %v2743
    %v3808 = vpop.permute.xlu0 %3807
    %3810 = vset.pattern.permute.xlu0 31
    %3811 = vperm.xlu0 %3810, %v2746
    %v3812 = vpop.permute.xlu0 %3811
    %3814 = vset.pattern.permute.xlu0 31
    %3815 = vperm.xlu0 %3814, %v2748
    %v3816 = vpop.permute.xlu0 %3815
    %v3818 = vmul.f32 %v3804, %v3774
    %v3819 = vmul.f32 %v3808, %v3775
    %v3820 = vmul.f32 %v3812, %v3776
    %v3821 = vmul.f32 %v3816, %v3777
    %3826 = vrot.lane.b32.xlu0 %v3818, 64
    %v3827 = vpop.permute.xlu0 %3826
    %3828 = vrot.lane.b32.xlu0 %v3819, 64
    %v3829 = vpop.permute.xlu0 %3828
    %3830 = vrot.lane.b32.xlu0 %v3820, 64
    %v3831 = vpop.permute.xlu0 %3830
    %3832 = vrot.lane.b32.xlu0 %v3821, 64
    %v3833 = vpop.permute.xlu0 %3832
    %v3838 = vadd.f32 %v3798, %v3827
    %v3839 = vadd.f32 %v3799, %v3829
    %v3840 = vadd.f32 %v3800, %v3831
    %v3841 = vadd.f32 %v3801, %v3833
    %v3842 = vld [vmem:[#allocation2 + $0x80] sm:$0xff]
    %v3843 = vld [vmem:[#allocation2 + $0x180] sm:$0xff]
    %v3844 = vld [vmem:[#allocation2 + $0x280] sm:$0xff]
    %v3845 = vld [vmem:[#allocation2 + $0x380] sm:$0xff]
    %3846 = vset.pattern.permute.xlu0 32
    %3847 = vperm.xlu0 %3846, %v2741
    %v3848 = vpop.permute.xlu0 %3847
    %3850 = vset.pattern.permute.xlu0 32
    %3851 = vperm.xlu0 %3850, %v2743
    %v3852 = vpop.permute.xlu0 %3851
    %3854 = vset.pattern.permute.xlu0 32
    %3855 = vperm.xlu0 %3854, %v2746
    %v3856 = vpop.permute.xlu0 %3855
    %3858 = vset.pattern.permute.xlu0 32
    %3859 = vperm.xlu0 %3858, %v2748
    %v3860 = vpop.permute.xlu0 %3859
    %v3862 = vmul.f32 %v3848, %v3842
    %v3863 = vmul.f32 %v3852, %v3843
    %v3864 = vmul.f32 %v3856, %v3844
    %v3865 = vmul.f32 %v3860, %v3845
    %v3866 = vadd.f32 %v3838, %v3862
    %v3867 = vadd.f32 %v3839, %v3863
    %v3868 = vadd.f32 %v3840, %v3864
    %v3869 = vadd.f32 %v3841, %v3865
    %3870 = vset.pattern.permute.xlu0 33
    %3871 = vperm.xlu0 %3870, %v2741
    %v3872 = vpop.permute.xlu0 %3871
    %3874 = vset.pattern.permute.xlu0 33
    %3875 = vperm.xlu0 %3874, %v2743
    %v3876 = vpop.permute.xlu0 %3875
    %3878 = vset.pattern.permute.xlu0 33
    %3879 = vperm.xlu0 %3878, %v2746
    %v3880 = vpop.permute.xlu0 %3879
    %3882 = vset.pattern.permute.xlu0 33
    %3883 = vperm.xlu0 %3882, %v2748
    %v3884 = vpop.permute.xlu0 %3883
    %v3886 = vmul.f32 %v3872, %v3842
    %v3887 = vmul.f32 %v3876, %v3843
    %v3888 = vmul.f32 %v3880, %v3844
    %v3889 = vmul.f32 %v3884, %v3845
    %3894 = vrot.lane.b32.xlu0 %v3886, 64
    %v3895 = vpop.permute.xlu0 %3894
    %3896 = vrot.lane.b32.xlu0 %v3887, 64
    %v3897 = vpop.permute.xlu0 %3896
    %3898 = vrot.lane.b32.xlu0 %v3888, 64
    %v3899 = vpop.permute.xlu0 %3898
    %3900 = vrot.lane.b32.xlu0 %v3889, 64
    %v3901 = vpop.permute.xlu0 %3900
    %v3906 = vadd.f32 %v3866, %v3895
    %v3907 = vadd.f32 %v3867, %v3897
    %v3908 = vadd.f32 %v3868, %v3899
    %v3909 = vadd.f32 %v3869, %v3901
    %v3910 = vld [vmem:[#allocation2 + $0x88] sm:$0xff]
    %v3911 = vld [vmem:[#allocation2 + $0x188] sm:$0xff]
    %v3912 = vld [vmem:[#allocation2 + $0x288] sm:$0xff]
    %v3913 = vld [vmem:[#allocation2 + $0x388] sm:$0xff]
    %3914 = vset.pattern.permute.xlu0 34
    %3915 = vperm.xlu0 %3914, %v2741
    %v3916 = vpop.permute.xlu0 %3915
    %3918 = vset.pattern.permute.xlu0 34
    %3919 = vperm.xlu0 %3918, %v2743
    %v3920 = vpop.permute.xlu0 %3919
    %3922 = vset.pattern.permute.xlu0 34
    %3923 = vperm.xlu0 %3922, %v2746
    %v3924 = vpop.permute.xlu0 %3923
    %3926 = vset.pattern.permute.xlu0 34
    %3927 = vperm.xlu0 %3926, %v2748
    %v3928 = vpop.permute.xlu0 %3927
    %v3930 = vmul.f32 %v3916, %v3910
    %v3931 = vmul.f32 %v3920, %v3911
    %v3932 = vmul.f32 %v3924, %v3912
    %v3933 = vmul.f32 %v3928, %v3913
    %v3934 = vadd.f32 %v3906, %v3930
    %v3935 = vadd.f32 %v3907, %v3931
    %v3936 = vadd.f32 %v3908, %v3932
    %v3937 = vadd.f32 %v3909, %v3933
    %3938 = vset.pattern.permute.xlu0 35
    %3939 = vperm.xlu0 %3938, %v2741
    %v3940 = vpop.permute.xlu0 %3939
    %3942 = vset.pattern.permute.xlu0 35
    %3943 = vperm.xlu0 %3942, %v2743
    %v3944 = vpop.permute.xlu0 %3943
    %3946 = vset.pattern.permute.xlu0 35
    %3947 = vperm.xlu0 %3946, %v2746
    %v3948 = vpop.permute.xlu0 %3947
    %3950 = vset.pattern.permute.xlu0 35
    %3951 = vperm.xlu0 %3950, %v2748
    %v3952 = vpop.permute.xlu0 %3951
    %v3954 = vmul.f32 %v3940, %v3910
    %v3955 = vmul.f32 %v3944, %v3911
    %v3956 = vmul.f32 %v3948, %v3912
    %v3957 = vmul.f32 %v3952, %v3913
    %3962 = vrot.lane.b32.xlu0 %v3954, 64
    %v3963 = vpop.permute.xlu0 %3962
    %3964 = vrot.lane.b32.xlu0 %v3955, 64
    %v3965 = vpop.permute.xlu0 %3964
    %3966 = vrot.lane.b32.xlu0 %v3956, 64
    %v3967 = vpop.permute.xlu0 %3966
    %3968 = vrot.lane.b32.xlu0 %v3957, 64
    %v3969 = vpop.permute.xlu0 %3968
    %v3974 = vadd.f32 %v3934, %v3963
    %v3975 = vadd.f32 %v3935, %v3965
    %v3976 = vadd.f32 %v3936, %v3967
    %v3977 = vadd.f32 %v3937, %v3969
    %v3978 = vld [vmem:[#allocation2 + $0x90] sm:$0xff]
    %v3979 = vld [vmem:[#allocation2 + $0x190] sm:$0xff]
    %v3980 = vld [vmem:[#allocation2 + $0x290] sm:$0xff]
    %v3981 = vld [vmem:[#allocation2 + $0x390] sm:$0xff]
    %3982 = vset.pattern.permute.xlu0 36
    %3983 = vperm.xlu0 %3982, %v2741
    %v3984 = vpop.permute.xlu0 %3983
    %3986 = vset.pattern.permute.xlu0 36
    %3987 = vperm.xlu0 %3986, %v2743
    %v3988 = vpop.permute.xlu0 %3987
    %3990 = vset.pattern.permute.xlu0 36
    %3991 = vperm.xlu0 %3990, %v2746
    %v3992 = vpop.permute.xlu0 %3991
    %3994 = vset.pattern.permute.xlu0 36
    %3995 = vperm.xlu0 %3994, %v2748
    %v3996 = vpop.permute.xlu0 %3995
    %v3998 = vmul.f32 %v3984, %v3978
    %v3999 = vmul.f32 %v3988, %v3979
    %v4000 = vmul.f32 %v3992, %v3980
    %v4001 = vmul.f32 %v3996, %v3981
    %v4002 = vadd.f32 %v3974, %v3998
    %v4003 = vadd.f32 %v3975, %v3999
    %v4004 = vadd.f32 %v3976, %v4000
    %v4005 = vadd.f32 %v3977, %v4001
    %4006 = vset.pattern.permute.xlu0 37
    %4007 = vperm.xlu0 %4006, %v2741
    %v4008 = vpop.permute.xlu0 %4007
    %4010 = vset.pattern.permute.xlu0 37
    %4011 = vperm.xlu0 %4010, %v2743
    %v4012 = vpop.permute.xlu0 %4011
    %4014 = vset.pattern.permute.xlu0 37
    %4015 = vperm.xlu0 %4014, %v2746
    %v4016 = vpop.permute.xlu0 %4015
    %4018 = vset.pattern.permute.xlu0 37
    %4019 = vperm.xlu0 %4018, %v2748
    %v4020 = vpop.permute.xlu0 %4019
    %v4022 = vmul.f32 %v4008, %v3978
    %v4023 = vmul.f32 %v4012, %v3979
    %v4024 = vmul.f32 %v4016, %v3980
    %v4025 = vmul.f32 %v4020, %v3981
    %4030 = vrot.lane.b32.xlu0 %v4022, 64
    %v4031 = vpop.permute.xlu0 %4030
    %4032 = vrot.lane.b32.xlu0 %v4023, 64
    %v4033 = vpop.permute.xlu0 %4032
    %4034 = vrot.lane.b32.xlu0 %v4024, 64
    %v4035 = vpop.permute.xlu0 %4034
    %4036 = vrot.lane.b32.xlu0 %v4025, 64
    %v4037 = vpop.permute.xlu0 %4036
    %v4042 = vadd.f32 %v4002, %v4031
    %v4043 = vadd.f32 %v4003, %v4033
    %v4044 = vadd.f32 %v4004, %v4035
    %v4045 = vadd.f32 %v4005, %v4037
    %v4046 = vld [vmem:[#allocation2 + $0x98] sm:$0xff]
    %v4047 = vld [vmem:[#allocation2 + $0x198] sm:$0xff]
    %v4048 = vld [vmem:[#allocation2 + $0x298] sm:$0xff]
    %v4049 = vld [vmem:[#allocation2 + $0x398] sm:$0xff]
    %4050 = vset.pattern.permute.xlu0 38
    %4051 = vperm.xlu0 %4050, %v2741
    %v4052 = vpop.permute.xlu0 %4051
    %4054 = vset.pattern.permute.xlu0 38
    %4055 = vperm.xlu0 %4054, %v2743
    %v4056 = vpop.permute.xlu0 %4055
    %4058 = vset.pattern.permute.xlu0 38
    %4059 = vperm.xlu0 %4058, %v2746
    %v4060 = vpop.permute.xlu0 %4059
    %4062 = vset.pattern.permute.xlu0 38
    %4063 = vperm.xlu0 %4062, %v2748
    %v4064 = vpop.permute.xlu0 %4063
    %v4066 = vmul.f32 %v4052, %v4046
    %v4067 = vmul.f32 %v4056, %v4047
    %v4068 = vmul.f32 %v4060, %v4048
    %v4069 = vmul.f32 %v4064, %v4049
    %v4070 = vadd.f32 %v4042, %v4066
    %v4071 = vadd.f32 %v4043, %v4067
    %v4072 = vadd.f32 %v4044, %v4068
    %v4073 = vadd.f32 %v4045, %v4069
    %4074 = vset.pattern.permute.xlu0 39
    %4075 = vperm.xlu0 %4074, %v2741
    %v4076 = vpop.permute.xlu0 %4075
    %4078 = vset.pattern.permute.xlu0 39
    %4079 = vperm.xlu0 %4078, %v2743
    %v4080 = vpop.permute.xlu0 %4079
    %4082 = vset.pattern.permute.xlu0 39
    %4083 = vperm.xlu0 %4082, %v2746
    %v4084 = vpop.permute.xlu0 %4083
    %4086 = vset.pattern.permute.xlu0 39
    %4087 = vperm.xlu0 %4086, %v2748
    %v4088 = vpop.permute.xlu0 %4087
    %v4090 = vmul.f32 %v4076, %v4046
    %v4091 = vmul.f32 %v4080, %v4047
    %v4092 = vmul.f32 %v4084, %v4048
    %v4093 = vmul.f32 %v4088, %v4049
    %4098 = vrot.lane.b32.xlu0 %v4090, 64
    %v4099 = vpop.permute.xlu0 %4098
    %4100 = vrot.lane.b32.xlu0 %v4091, 64
    %v4101 = vpop.permute.xlu0 %4100
    %4102 = vrot.lane.b32.xlu0 %v4092, 64
    %v4103 = vpop.permute.xlu0 %4102
    %4104 = vrot.lane.b32.xlu0 %v4093, 64
    %v4105 = vpop.permute.xlu0 %4104
    %v4110 = vadd.f32 %v4070, %v4099
    %v4111 = vadd.f32 %v4071, %v4101
    %v4112 = vadd.f32 %v4072, %v4103
    %v4113 = vadd.f32 %v4073, %v4105
    %v4114 = vld [vmem:[#allocation2 + $0xa0] sm:$0xff]
    %v4115 = vld [vmem:[#allocation2 + $0x1a0] sm:$0xff]
    %v4116 = vld [vmem:[#allocation2 + $0x2a0] sm:$0xff]
    %v4117 = vld [vmem:[#allocation2 + $0x3a0] sm:$0xff]
    %4118 = vset.pattern.permute.xlu0 40
    %4119 = vperm.xlu0 %4118, %v2741
    %v4120 = vpop.permute.xlu0 %4119
    %4122 = vset.pattern.permute.xlu0 40
    %4123 = vperm.xlu0 %4122, %v2743
    %v4124 = vpop.permute.xlu0 %4123
    %4126 = vset.pattern.permute.xlu0 40
    %4127 = vperm.xlu0 %4126, %v2746
    %v4128 = vpop.permute.xlu0 %4127
    %4130 = vset.pattern.permute.xlu0 40
    %4131 = vperm.xlu0 %4130, %v2748
    %v4132 = vpop.permute.xlu0 %4131
    %v4134 = vmul.f32 %v4120, %v4114
    %v4135 = vmul.f32 %v4124, %v4115
    %v4136 = vmul.f32 %v4128, %v4116
    %v4137 = vmul.f32 %v4132, %v4117
    %v4138 = vadd.f32 %v4110, %v4134
    %v4139 = vadd.f32 %v4111, %v4135
    %v4140 = vadd.f32 %v4112, %v4136
    %v4141 = vadd.f32 %v4113, %v4137
    %4142 = vset.pattern.permute.xlu0 41
    %4143 = vperm.xlu0 %4142, %v2741
    %v4144 = vpop.permute.xlu0 %4143
    %4146 = vset.pattern.permute.xlu0 41
    %4147 = vperm.xlu0 %4146, %v2743
    %v4148 = vpop.permute.xlu0 %4147
    %4150 = vset.pattern.permute.xlu0 41
    %4151 = vperm.xlu0 %4150, %v2746
    %v4152 = vpop.permute.xlu0 %4151
    %4154 = vset.pattern.permute.xlu0 41
    %4155 = vperm.xlu0 %4154, %v2748
    %v4156 = vpop.permute.xlu0 %4155
    %v4158 = vmul.f32 %v4144, %v4114
    %v4159 = vmul.f32 %v4148, %v4115
    %v4160 = vmul.f32 %v4152, %v4116
    %v4161 = vmul.f32 %v4156, %v4117
    %4166 = vrot.lane.b32.xlu0 %v4158, 64
    %v4167 = vpop.permute.xlu0 %4166
    %4168 = vrot.lane.b32.xlu0 %v4159, 64
    %v4169 = vpop.permute.xlu0 %4168
    %4170 = vrot.lane.b32.xlu0 %v4160, 64
    %v4171 = vpop.permute.xlu0 %4170
    %4172 = vrot.lane.b32.xlu0 %v4161, 64
    %v4173 = vpop.permute.xlu0 %4172
    %v4178 = vadd.f32 %v4138, %v4167
    %v4179 = vadd.f32 %v4139, %v4169
    %v4180 = vadd.f32 %v4140, %v4171
    %v4181 = vadd.f32 %v4141, %v4173
    %v4182 = vld [vmem:[#allocation2 + $0xa8] sm:$0xff]
    %v4183 = vld [vmem:[#allocation2 + $0x1a8] sm:$0xff]
    %v4184 = vld [vmem:[#allocation2 + $0x2a8] sm:$0xff]
    %v4185 = vld [vmem:[#allocation2 + $0x3a8] sm:$0xff]
    %4186 = vset.pattern.permute.xlu0 42
    %4187 = vperm.xlu0 %4186, %v2741
    %v4188 = vpop.permute.xlu0 %4187
    %4190 = vset.pattern.permute.xlu0 42
    %4191 = vperm.xlu0 %4190, %v2743
    %v4192 = vpop.permute.xlu0 %4191
    %4194 = vset.pattern.permute.xlu0 42
    %4195 = vperm.xlu0 %4194, %v2746
    %v4196 = vpop.permute.xlu0 %4195
    %4198 = vset.pattern.permute.xlu0 42
    %4199 = vperm.xlu0 %4198, %v2748
    %v4200 = vpop.permute.xlu0 %4199
    %v4202 = vmul.f32 %v4188, %v4182
    %v4203 = vmul.f32 %v4192, %v4183
    %v4204 = vmul.f32 %v4196, %v4184
    %v4205 = vmul.f32 %v4200, %v4185
    %v4206 = vadd.f32 %v4178, %v4202
    %v4207 = vadd.f32 %v4179, %v4203
    %v4208 = vadd.f32 %v4180, %v4204
    %v4209 = vadd.f32 %v4181, %v4205
    %4210 = vset.pattern.permute.xlu0 43
    %4211 = vperm.xlu0 %4210, %v2741
    %v4212 = vpop.permute.xlu0 %4211
    %4214 = vset.pattern.permute.xlu0 43
    %4215 = vperm.xlu0 %4214, %v2743
    %v4216 = vpop.permute.xlu0 %4215
    %4218 = vset.pattern.permute.xlu0 43
    %4219 = vperm.xlu0 %4218, %v2746
    %v4220 = vpop.permute.xlu0 %4219
    %4222 = vset.pattern.permute.xlu0 43
    %4223 = vperm.xlu0 %4222, %v2748
    %v4224 = vpop.permute.xlu0 %4223
    %v4226 = vmul.f32 %v4212, %v4182
    %v4227 = vmul.f32 %v4216, %v4183
    %v4228 = vmul.f32 %v4220, %v4184
    %v4229 = vmul.f32 %v4224, %v4185
    %4234 = vrot.lane.b32.xlu0 %v4226, 64
    %v4235 = vpop.permute.xlu0 %4234
    %4236 = vrot.lane.b32.xlu0 %v4227, 64
    %v4237 = vpop.permute.xlu0 %4236
    %4238 = vrot.lane.b32.xlu0 %v4228, 64
    %v4239 = vpop.permute.xlu0 %4238
    %4240 = vrot.lane.b32.xlu0 %v4229, 64
    %v4241 = vpop.permute.xlu0 %4240
    %v4246 = vadd.f32 %v4206, %v4235
    %v4247 = vadd.f32 %v4207, %v4237
    %v4248 = vadd.f32 %v4208, %v4239
    %v4249 = vadd.f32 %v4209, %v4241
    %v4250 = vld [vmem:[#allocation2 + $0xb0] sm:$0xff]
    %v4251 = vld [vmem:[#allocation2 + $0x1b0] sm:$0xff]
    %v4252 = vld [vmem:[#allocation2 + $0x2b0] sm:$0xff]
    %v4253 = vld [vmem:[#allocation2 + $0x3b0] sm:$0xff]
    %4254 = vset.pattern.permute.xlu0 44
    %4255 = vperm.xlu0 %4254, %v2741
    %v4256 = vpop.permute.xlu0 %4255
    %4258 = vset.pattern.permute.xlu0 44
    %4259 = vperm.xlu0 %4258, %v2743
    %v4260 = vpop.permute.xlu0 %4259
    %4262 = vset.pattern.permute.xlu0 44
    %4263 = vperm.xlu0 %4262, %v2746
    %v4264 = vpop.permute.xlu0 %4263
    %4266 = vset.pattern.permute.xlu0 44
    %4267 = vperm.xlu0 %4266, %v2748
    %v4268 = vpop.permute.xlu0 %4267
    %v4270 = vmul.f32 %v4256, %v4250
    %v4271 = vmul.f32 %v4260, %v4251
    %v4272 = vmul.f32 %v4264, %v4252
    %v4273 = vmul.f32 %v4268, %v4253
    %v4274 = vadd.f32 %v4246, %v4270
    %v4275 = vadd.f32 %v4247, %v4271
    %v4276 = vadd.f32 %v4248, %v4272
    %v4277 = vadd.f32 %v4249, %v4273
    %4278 = vset.pattern.permute.xlu0 45
    %4279 = vperm.xlu0 %4278, %v2741
    %v4280 = vpop.permute.xlu0 %4279
    %4282 = vset.pattern.permute.xlu0 45
    %4283 = vperm.xlu0 %4282, %v2743
    %v4284 = vpop.permute.xlu0 %4283
    %4286 = vset.pattern.permute.xlu0 45
    %4287 = vperm.xlu0 %4286, %v2746
    %v4288 = vpop.permute.xlu0 %4287
    %4290 = vset.pattern.permute.xlu0 45
    %4291 = vperm.xlu0 %4290, %v2748
    %v4292 = vpop.permute.xlu0 %4291
    %v4294 = vmul.f32 %v4280, %v4250
    %v4295 = vmul.f32 %v4284, %v4251
    %v4296 = vmul.f32 %v4288, %v4252
    %v4297 = vmul.f32 %v4292, %v4253
    %4302 = vrot.lane.b32.xlu0 %v4294, 64
    %v4303 = vpop.permute.xlu0 %4302
    %4304 = vrot.lane.b32.xlu0 %v4295, 64
    %v4305 = vpop.permute.xlu0 %4304
    %4306 = vrot.lane.b32.xlu0 %v4296, 64
    %v4307 = vpop.permute.xlu0 %4306
    %4308 = vrot.lane.b32.xlu0 %v4297, 64
    %v4309 = vpop.permute.xlu0 %4308
    %v4314 = vadd.f32 %v4274, %v4303
    %v4315 = vadd.f32 %v4275, %v4305
    %v4316 = vadd.f32 %v4276, %v4307
    %v4317 = vadd.f32 %v4277, %v4309
    %v4318 = vld [vmem:[#allocation2 + $0xb8] sm:$0xff]
    %v4319 = vld [vmem:[#allocation2 + $0x1b8] sm:$0xff]
    %v4320 = vld [vmem:[#allocation2 + $0x2b8] sm:$0xff]
    %v4321 = vld [vmem:[#allocation2 + $0x3b8] sm:$0xff]
    %4322 = vset.pattern.permute.xlu0 46
    %4323 = vperm.xlu0 %4322, %v2741
    %v4324 = vpop.permute.xlu0 %4323
    %4326 = vset.pattern.permute.xlu0 46
    %4327 = vperm.xlu0 %4326, %v2743
    %v4328 = vpop.permute.xlu0 %4327
    %4330 = vset.pattern.permute.xlu0 46
    %4331 = vperm.xlu0 %4330, %v2746
    %v4332 = vpop.permute.xlu0 %4331
    %4334 = vset.pattern.permute.xlu0 46
    %4335 = vperm.xlu0 %4334, %v2748
    %v4336 = vpop.permute.xlu0 %4335
    %v4338 = vmul.f32 %v4324, %v4318
    %v4339 = vmul.f32 %v4328, %v4319
    %v4340 = vmul.f32 %v4332, %v4320
    %v4341 = vmul.f32 %v4336, %v4321
    %v4342 = vadd.f32 %v4314, %v4338
    %v4343 = vadd.f32 %v4315, %v4339
    %v4344 = vadd.f32 %v4316, %v4340
    %v4345 = vadd.f32 %v4317, %v4341
    %4346 = vset.pattern.permute.xlu0 47
    %4347 = vperm.xlu0 %4346, %v2741
    %v4348 = vpop.permute.xlu0 %4347
    %4350 = vset.pattern.permute.xlu0 47
    %4351 = vperm.xlu0 %4350, %v2743
    %v4352 = vpop.permute.xlu0 %4351
    %4354 = vset.pattern.permute.xlu0 47
    %4355 = vperm.xlu0 %4354, %v2746
    %v4356 = vpop.permute.xlu0 %4355
    %4358 = vset.pattern.permute.xlu0 47
    %4359 = vperm.xlu0 %4358, %v2748
    %v4360 = vpop.permute.xlu0 %4359
    %v4362 = vmul.f32 %v4348, %v4318
    %v4363 = vmul.f32 %v4352, %v4319
    %v4364 = vmul.f32 %v4356, %v4320
    %v4365 = vmul.f32 %v4360, %v4321
    %4370 = vrot.lane.b32.xlu0 %v4362, 64
    %v4371 = vpop.permute.xlu0 %4370
    %4372 = vrot.lane.b32.xlu0 %v4363, 64
    %v4373 = vpop.permute.xlu0 %4372
    %4374 = vrot.lane.b32.xlu0 %v4364, 64
    %v4375 = vpop.permute.xlu0 %4374
    %4376 = vrot.lane.b32.xlu0 %v4365, 64
    %v4377 = vpop.permute.xlu0 %4376
    %v4382 = vadd.f32 %v4342, %v4371
    %v4383 = vadd.f32 %v4343, %v4373
    %v4384 = vadd.f32 %v4344, %v4375
    %v4385 = vadd.f32 %v4345, %v4377
    %v4386 = vld [vmem:[#allocation2 + $0xc0] sm:$0xff]
    %v4387 = vld [vmem:[#allocation2 + $0x1c0] sm:$0xff]
    %v4388 = vld [vmem:[#allocation2 + $0x2c0] sm:$0xff]
    %v4389 = vld [vmem:[#allocation2 + $0x3c0] sm:$0xff]
    %4390 = vset.pattern.permute.xlu0 48
    %4391 = vperm.xlu0 %4390, %v2741
    %v4392 = vpop.permute.xlu0 %4391
    %4394 = vset.pattern.permute.xlu0 48
    %4395 = vperm.xlu0 %4394, %v2743
    %v4396 = vpop.permute.xlu0 %4395
    %4398 = vset.pattern.permute.xlu0 48
    %4399 = vperm.xlu0 %4398, %v2746
    %v4400 = vpop.permute.xlu0 %4399
    %4402 = vset.pattern.permute.xlu0 48
    %4403 = vperm.xlu0 %4402, %v2748
    %v4404 = vpop.permute.xlu0 %4403
    %v4406 = vmul.f32 %v4392, %v4386
    %v4407 = vmul.f32 %v4396, %v4387
    %v4408 = vmul.f32 %v4400, %v4388
    %v4409 = vmul.f32 %v4404, %v4389
    %v4410 = vadd.f32 %v4382, %v4406
    %v4411 = vadd.f32 %v4383, %v4407
    %v4412 = vadd.f32 %v4384, %v4408
    %v4413 = vadd.f32 %v4385, %v4409
    %4414 = vset.pattern.permute.xlu0 49
    %4415 = vperm.xlu0 %4414, %v2741
    %v4416 = vpop.permute.xlu0 %4415
    %4418 = vset.pattern.permute.xlu0 49
    %4419 = vperm.xlu0 %4418, %v2743
    %v4420 = vpop.permute.xlu0 %4419
    %4422 = vset.pattern.permute.xlu0 49
    %4423 = vperm.xlu0 %4422, %v2746
    %v4424 = vpop.permute.xlu0 %4423
    %4426 = vset.pattern.permute.xlu0 49
    %4427 = vperm.xlu0 %4426, %v2748
    %v4428 = vpop.permute.xlu0 %4427
    %v4430 = vmul.f32 %v4416, %v4386
    %v4431 = vmul.f32 %v4420, %v4387
    %v4432 = vmul.f32 %v4424, %v4388
    %v4433 = vmul.f32 %v4428, %v4389
    %4438 = vrot.lane.b32.xlu0 %v4430, 64
    %v4439 = vpop.permute.xlu0 %4438
    %4440 = vrot.lane.b32.xlu0 %v4431, 64
    %v4441 = vpop.permute.xlu0 %4440
    %4442 = vrot.lane.b32.xlu0 %v4432, 64
    %v4443 = vpop.permute.xlu0 %4442
    %4444 = vrot.lane.b32.xlu0 %v4433, 64
    %v4445 = vpop.permute.xlu0 %4444
    %v4450 = vadd.f32 %v4410, %v4439
    %v4451 = vadd.f32 %v4411, %v4441
    %v4452 = vadd.f32 %v4412, %v4443
    %v4453 = vadd.f32 %v4413, %v4445
    %v4454 = vld [vmem:[#allocation2 + $0xc8] sm:$0xff]
    %v4455 = vld [vmem:[#allocation2 + $0x1c8] sm:$0xff]
    %v4456 = vld [vmem:[#allocation2 + $0x2c8] sm:$0xff]
    %v4457 = vld [vmem:[#allocation2 + $0x3c8] sm:$0xff]
    %4458 = vset.pattern.permute.xlu0 50
    %4459 = vperm.xlu0 %4458, %v2741
    %v4460 = vpop.permute.xlu0 %4459
    %4462 = vset.pattern.permute.xlu0 50
    %4463 = vperm.xlu0 %4462, %v2743
    %v4464 = vpop.permute.xlu0 %4463
    %4466 = vset.pattern.permute.xlu0 50
    %4467 = vperm.xlu0 %4466, %v2746
    %v4468 = vpop.permute.xlu0 %4467
    %4470 = vset.pattern.permute.xlu0 50
    %4471 = vperm.xlu0 %4470, %v2748
    %v4472 = vpop.permute.xlu0 %4471
    %v4474 = vmul.f32 %v4460, %v4454
    %v4475 = vmul.f32 %v4464, %v4455
    %v4476 = vmul.f32 %v4468, %v4456
    %v4477 = vmul.f32 %v4472, %v4457
    %v4478 = vadd.f32 %v4450, %v4474
    %v4479 = vadd.f32 %v4451, %v4475
    %v4480 = vadd.f32 %v4452, %v4476
    %v4481 = vadd.f32 %v4453, %v4477
    %4482 = vset.pattern.permute.xlu0 51
    %4483 = vperm.xlu0 %4482, %v2741
    %v4484 = vpop.permute.xlu0 %4483
    %4486 = vset.pattern.permute.xlu0 51
    %4487 = vperm.xlu0 %4486, %v2743
    %v4488 = vpop.permute.xlu0 %4487
    %4490 = vset.pattern.permute.xlu0 51
    %4491 = vperm.xlu0 %4490, %v2746
    %v4492 = vpop.permute.xlu0 %4491
    %4494 = vset.pattern.permute.xlu0 51
    %4495 = vperm.xlu0 %4494, %v2748
    %v4496 = vpop.permute.xlu0 %4495
    %v4498 = vmul.f32 %v4484, %v4454
    %v4499 = vmul.f32 %v4488, %v4455
    %v4500 = vmul.f32 %v4492, %v4456
    %v4501 = vmul.f32 %v4496, %v4457
    %4506 = vrot.lane.b32.xlu0 %v4498, 64
    %v4507 = vpop.permute.xlu0 %4506
    %4508 = vrot.lane.b32.xlu0 %v4499, 64
    %v4509 = vpop.permute.xlu0 %4508
    %4510 = vrot.lane.b32.xlu0 %v4500, 64
    %v4511 = vpop.permute.xlu0 %4510
    %4512 = vrot.lane.b32.xlu0 %v4501, 64
    %v4513 = vpop.permute.xlu0 %4512
    %v4518 = vadd.f32 %v4478, %v4507
    %v4519 = vadd.f32 %v4479, %v4509
    %v4520 = vadd.f32 %v4480, %v4511
    %v4521 = vadd.f32 %v4481, %v4513
    %v4522 = vld [vmem:[#allocation2 + $0xd0] sm:$0xff]
    %v4523 = vld [vmem:[#allocation2 + $0x1d0] sm:$0xff]
    %v4524 = vld [vmem:[#allocation2 + $0x2d0] sm:$0xff]
    %v4525 = vld [vmem:[#allocation2 + $0x3d0] sm:$0xff]
    %4526 = vset.pattern.permute.xlu0 52
    %4527 = vperm.xlu0 %4526, %v2741
    %v4528 = vpop.permute.xlu0 %4527
    %4530 = vset.pattern.permute.xlu0 52
    %4531 = vperm.xlu0 %4530, %v2743
    %v4532 = vpop.permute.xlu0 %4531
    %4534 = vset.pattern.permute.xlu0 52
    %4535 = vperm.xlu0 %4534, %v2746
    %v4536 = vpop.permute.xlu0 %4535
    %4538 = vset.pattern.permute.xlu0 52
    %4539 = vperm.xlu0 %4538, %v2748
    %v4540 = vpop.permute.xlu0 %4539
    %v4542 = vmul.f32 %v4528, %v4522
    %v4543 = vmul.f32 %v4532, %v4523
    %v4544 = vmul.f32 %v4536, %v4524
    %v4545 = vmul.f32 %v4540, %v4525
    %v4546 = vadd.f32 %v4518, %v4542
    %v4547 = vadd.f32 %v4519, %v4543
    %v4548 = vadd.f32 %v4520, %v4544
    %v4549 = vadd.f32 %v4521, %v4545
    %4550 = vset.pattern.permute.xlu0 53
    %4551 = vperm.xlu0 %4550, %v2741
    %v4552 = vpop.permute.xlu0 %4551
    %4554 = vset.pattern.permute.xlu0 53
    %4555 = vperm.xlu0 %4554, %v2743
    %v4556 = vpop.permute.xlu0 %4555
    %4558 = vset.pattern.permute.xlu0 53
    %4559 = vperm.xlu0 %4558, %v2746
    %v4560 = vpop.permute.xlu0 %4559
    %4562 = vset.pattern.permute.xlu0 53
    %4563 = vperm.xlu0 %4562, %v2748
    %v4564 = vpop.permute.xlu0 %4563
    %v4566 = vmul.f32 %v4552, %v4522
    %v4567 = vmul.f32 %v4556, %v4523
    %v4568 = vmul.f32 %v4560, %v4524
    %v4569 = vmul.f32 %v4564, %v4525
    %4574 = vrot.lane.b32.xlu0 %v4566, 64
    %v4575 = vpop.permute.xlu0 %4574
    %4576 = vrot.lane.b32.xlu0 %v4567, 64
    %v4577 = vpop.permute.xlu0 %4576
    %4578 = vrot.lane.b32.xlu0 %v4568, 64
    %v4579 = vpop.permute.xlu0 %4578
    %4580 = vrot.lane.b32.xlu0 %v4569, 64
    %v4581 = vpop.permute.xlu0 %4580
    %v4586 = vadd.f32 %v4546, %v4575
    %v4587 = vadd.f32 %v4547, %v4577
    %v4588 = vadd.f32 %v4548, %v4579
    %v4589 = vadd.f32 %v4549, %v4581
    %v4590 = vld [vmem:[#allocation2 + $0xd8] sm:$0xff]
    %v4591 = vld [vmem:[#allocation2 + $0x1d8] sm:$0xff]
    %v4592 = vld [vmem:[#allocation2 + $0x2d8] sm:$0xff]
    %v4593 = vld [vmem:[#allocation2 + $0x3d8] sm:$0xff]
    %4594 = vset.pattern.permute.xlu0 54
    %4595 = vperm.xlu0 %4594, %v2741
    %v4596 = vpop.permute.xlu0 %4595
    %4598 = vset.pattern.permute.xlu0 54
    %4599 = vperm.xlu0 %4598, %v2743
    %v4600 = vpop.permute.xlu0 %4599
    %4602 = vset.pattern.permute.xlu0 54
    %4603 = vperm.xlu0 %4602, %v2746
    %v4604 = vpop.permute.xlu0 %4603
    %4606 = vset.pattern.permute.xlu0 54
    %4607 = vperm.xlu0 %4606, %v2748
    %v4608 = vpop.permute.xlu0 %4607
    %v4610 = vmul.f32 %v4596, %v4590
    %v4611 = vmul.f32 %v4600, %v4591
    %v4612 = vmul.f32 %v4604, %v4592
    %v4613 = vmul.f32 %v4608, %v4593
    %v4614 = vadd.f32 %v4586, %v4610
    %v4615 = vadd.f32 %v4587, %v4611
    %v4616 = vadd.f32 %v4588, %v4612
    %v4617 = vadd.f32 %v4589, %v4613
    %4618 = vset.pattern.permute.xlu0 55
    %4619 = vperm.xlu0 %4618, %v2741
    %v4620 = vpop.permute.xlu0 %4619
    %4622 = vset.pattern.permute.xlu0 55
    %4623 = vperm.xlu0 %4622, %v2743
    %v4624 = vpop.permute.xlu0 %4623
    %4626 = vset.pattern.permute.xlu0 55
    %4627 = vperm.xlu0 %4626, %v2746
    %v4628 = vpop.permute.xlu0 %4627
    %4630 = vset.pattern.permute.xlu0 55
    %4631 = vperm.xlu0 %4630, %v2748
    %v4632 = vpop.permute.xlu0 %4631
    %v4634 = vmul.f32 %v4620, %v4590
    %v4635 = vmul.f32 %v4624, %v4591
    %v4636 = vmul.f32 %v4628, %v4592
    %v4637 = vmul.f32 %v4632, %v4593
    %4642 = vrot.lane.b32.xlu0 %v4634, 64
    %v4643 = vpop.permute.xlu0 %4642
    %4644 = vrot.lane.b32.xlu0 %v4635, 64
    %v4645 = vpop.permute.xlu0 %4644
    %4646 = vrot.lane.b32.xlu0 %v4636, 64
    %v4647 = vpop.permute.xlu0 %4646
    %4648 = vrot.lane.b32.xlu0 %v4637, 64
    %v4649 = vpop.permute.xlu0 %4648
    %v4654 = vadd.f32 %v4614, %v4643
    %v4655 = vadd.f32 %v4615, %v4645
    %v4656 = vadd.f32 %v4616, %v4647
    %v4657 = vadd.f32 %v4617, %v4649
    %v4658 = vld [vmem:[#allocation2 + $0xe0] sm:$0xff]
    %v4659 = vld [vmem:[#allocation2 + $0x1e0] sm:$0xff]
    %v4660 = vld [vmem:[#allocation2 + $0x2e0] sm:$0xff]
    %v4661 = vld [vmem:[#allocation2 + $0x3e0] sm:$0xff]
    %4662 = vset.pattern.permute.xlu0 56
    %4663 = vperm.xlu0 %4662, %v2741
    %v4664 = vpop.permute.xlu0 %4663
    %4666 = vset.pattern.permute.xlu0 56
    %4667 = vperm.xlu0 %4666, %v2743
    %v4668 = vpop.permute.xlu0 %4667
    %4670 = vset.pattern.permute.xlu0 56
    %4671 = vperm.xlu0 %4670, %v2746
    %v4672 = vpop.permute.xlu0 %4671
    %4674 = vset.pattern.permute.xlu0 56
    %4675 = vperm.xlu0 %4674, %v2748
    %v4676 = vpop.permute.xlu0 %4675
    %v4678 = vmul.f32 %v4664, %v4658
    %v4679 = vmul.f32 %v4668, %v4659
    %v4680 = vmul.f32 %v4672, %v4660
    %v4681 = vmul.f32 %v4676, %v4661
    %v4682 = vadd.f32 %v4654, %v4678
    %v4683 = vadd.f32 %v4655, %v4679
    %v4684 = vadd.f32 %v4656, %v4680
    %v4685 = vadd.f32 %v4657, %v4681
    %4686 = vset.pattern.permute.xlu0 57
    %4687 = vperm.xlu0 %4686, %v2741
    %v4688 = vpop.permute.xlu0 %4687
    %4690 = vset.pattern.permute.xlu0 57
    %4691 = vperm.xlu0 %4690, %v2743
    %v4692 = vpop.permute.xlu0 %4691
    %4694 = vset.pattern.permute.xlu0 57
    %4695 = vperm.xlu0 %4694, %v2746
    %v4696 = vpop.permute.xlu0 %4695
    %4698 = vset.pattern.permute.xlu0 57
    %4699 = vperm.xlu0 %4698, %v2748
    %v4700 = vpop.permute.xlu0 %4699
    %v4702 = vmul.f32 %v4688, %v4658
    %v4703 = vmul.f32 %v4692, %v4659
    %v4704 = vmul.f32 %v4696, %v4660
    %v4705 = vmul.f32 %v4700, %v4661
    %4710 = vrot.lane.b32.xlu0 %v4702, 64
    %v4711 = vpop.permute.xlu0 %4710
    %4712 = vrot.lane.b32.xlu0 %v4703, 64
    %v4713 = vpop.permute.xlu0 %4712
    %4714 = vrot.lane.b32.xlu0 %v4704, 64
    %v4715 = vpop.permute.xlu0 %4714
    %4716 = vrot.lane.b32.xlu0 %v4705, 64
    %v4717 = vpop.permute.xlu0 %4716
    %v4722 = vadd.f32 %v4682, %v4711
    %v4723 = vadd.f32 %v4683, %v4713
    %v4724 = vadd.f32 %v4684, %v4715
    %v4725 = vadd.f32 %v4685, %v4717
    %v4726 = vld [vmem:[#allocation2 + $0xe8] sm:$0xff]
    %v4727 = vld [vmem:[#allocation2 + $0x1e8] sm:$0xff]
    %v4728 = vld [vmem:[#allocation2 + $0x2e8] sm:$0xff]
    %v4729 = vld [vmem:[#allocation2 + $0x3e8] sm:$0xff]
    %4730 = vset.pattern.permute.xlu0 58
    %4731 = vperm.xlu0 %4730, %v2741
    %v4732 = vpop.permute.xlu0 %4731
    %4734 = vset.pattern.permute.xlu0 58
    %4735 = vperm.xlu0 %4734, %v2743
    %v4736 = vpop.permute.xlu0 %4735
    %4738 = vset.pattern.permute.xlu0 58
    %4739 = vperm.xlu0 %4738, %v2746
    %v4740 = vpop.permute.xlu0 %4739
    %4742 = vset.pattern.permute.xlu0 58
    %4743 = vperm.xlu0 %4742, %v2748
    %v4744 = vpop.permute.xlu0 %4743
    %v4746 = vmul.f32 %v4732, %v4726
    %v4747 = vmul.f32 %v4736, %v4727
    %v4748 = vmul.f32 %v4740, %v4728
    %v4749 = vmul.f32 %v4744, %v4729
    %v4750 = vadd.f32 %v4722, %v4746
    %v4751 = vadd.f32 %v4723, %v4747
    %v4752 = vadd.f32 %v4724, %v4748
    %v4753 = vadd.f32 %v4725, %v4749
    %4754 = vset.pattern.permute.xlu0 59
    %4755 = vperm.xlu0 %4754, %v2741
    %v4756 = vpop.permute.xlu0 %4755
    %4758 = vset.pattern.permute.xlu0 59
    %4759 = vperm.xlu0 %4758, %v2743
    %v4760 = vpop.permute.xlu0 %4759
    %4762 = vset.pattern.permute.xlu0 59
    %4763 = vperm.xlu0 %4762, %v2746
    %v4764 = vpop.permute.xlu0 %4763
    %4766 = vset.pattern.permute.xlu0 59
    %4767 = vperm.xlu0 %4766, %v2748
    %v4768 = vpop.permute.xlu0 %4767
    %v4770 = vmul.f32 %v4756, %v4726
    %v4771 = vmul.f32 %v4760, %v4727
    %v4772 = vmul.f32 %v4764, %v4728
    %v4773 = vmul.f32 %v4768, %v4729
    %4778 = vrot.lane.b32.xlu0 %v4770, 64
    %v4779 = vpop.permute.xlu0 %4778
    %4780 = vrot.lane.b32.xlu0 %v4771, 64
    %v4781 = vpop.permute.xlu0 %4780
    %4782 = vrot.lane.b32.xlu0 %v4772, 64
    %v4783 = vpop.permute.xlu0 %4782
    %4784 = vrot.lane.b32.xlu0 %v4773, 64
    %v4785 = vpop.permute.xlu0 %4784
    %v4790 = vadd.f32 %v4750, %v4779
    %v4791 = vadd.f32 %v4751, %v4781
    %v4792 = vadd.f32 %v4752, %v4783
    %v4793 = vadd.f32 %v4753, %v4785
    %v4794 = vld [vmem:[#allocation2 + $0xf0] sm:$0xff]
    %v4795 = vld [vmem:[#allocation2 + $0x1f0] sm:$0xff]
    %v4796 = vld [vmem:[#allocation2 + $0x2f0] sm:$0xff]
    %v4797 = vld [vmem:[#allocation2 + $0x3f0] sm:$0xff]
    %4798 = vset.pattern.permute.xlu0 60
    %4799 = vperm.xlu0 %4798, %v2741
    %v4800 = vpop.permute.xlu0 %4799
    %4802 = vset.pattern.permute.xlu0 60
    %4803 = vperm.xlu0 %4802, %v2743
    %v4804 = vpop.permute.xlu0 %4803
    %4806 = vset.pattern.permute.xlu0 60
    %4807 = vperm.xlu0 %4806, %v2746
    %v4808 = vpop.permute.xlu0 %4807
    %4810 = vset.pattern.permute.xlu0 60
    %4811 = vperm.xlu0 %4810, %v2748
    %v4812 = vpop.permute.xlu0 %4811
    %v4814 = vmul.f32 %v4800, %v4794
    %v4815 = vmul.f32 %v4804, %v4795
    %v4816 = vmul.f32 %v4808, %v4796
    %v4817 = vmul.f32 %v4812, %v4797
    %v4818 = vadd.f32 %v4790, %v4814
    %v4819 = vadd.f32 %v4791, %v4815
    %v4820 = vadd.f32 %v4792, %v4816
    %v4821 = vadd.f32 %v4793, %v4817
    %4822 = vset.pattern.permute.xlu0 61
    %4823 = vperm.xlu0 %4822, %v2741
    %v4824 = vpop.permute.xlu0 %4823
    %4826 = vset.pattern.permute.xlu0 61
    %4827 = vperm.xlu0 %4826, %v2743
    %v4828 = vpop.permute.xlu0 %4827
    %4830 = vset.pattern.permute.xlu0 61
    %4831 = vperm.xlu0 %4830, %v2746
    %v4832 = vpop.permute.xlu0 %4831
    %4834 = vset.pattern.permute.xlu0 61
    %4835 = vperm.xlu0 %4834, %v2748
    %v4836 = vpop.permute.xlu0 %4835
    %v4838 = vmul.f32 %v4824, %v4794
    %v4839 = vmul.f32 %v4828, %v4795
    %v4840 = vmul.f32 %v4832, %v4796
    %v4841 = vmul.f32 %v4836, %v4797
    %4846 = vrot.lane.b32.xlu0 %v4838, 64
    %v4847 = vpop.permute.xlu0 %4846
    %4848 = vrot.lane.b32.xlu0 %v4839, 64
    %v4849 = vpop.permute.xlu0 %4848
    %4850 = vrot.lane.b32.xlu0 %v4840, 64
    %v4851 = vpop.permute.xlu0 %4850
    %4852 = vrot.lane.b32.xlu0 %v4841, 64
    %v4853 = vpop.permute.xlu0 %4852
    %v4858 = vadd.f32 %v4818, %v4847
    %v4859 = vadd.f32 %v4819, %v4849
    %v4860 = vadd.f32 %v4820, %v4851
    %v4861 = vadd.f32 %v4821, %v4853
    %v4862 = vld [vmem:[#allocation2 + $0xf8] sm:$0xff]
    %v4863 = vld [vmem:[#allocation2 + $0x1f8] sm:$0xff]
    %v4864 = vld [vmem:[#allocation2 + $0x2f8] sm:$0xff]
    %v4865 = vld [vmem:[#allocation2 + $0x3f8] sm:$0xff]
    %4866 = vset.pattern.permute.xlu0 62
    %4867 = vperm.xlu0 %4866, %v2741
    %v4868 = vpop.permute.xlu0 %4867
    %4870 = vset.pattern.permute.xlu0 62
    %4871 = vperm.xlu0 %4870, %v2743
    %v4872 = vpop.permute.xlu0 %4871
    %4874 = vset.pattern.permute.xlu0 62
    %4875 = vperm.xlu0 %4874, %v2746
    %v4876 = vpop.permute.xlu0 %4875
    %4878 = vset.pattern.permute.xlu0 62
    %4879 = vperm.xlu0 %4878, %v2748
    %v4880 = vpop.permute.xlu0 %4879
    %v4882 = vmul.f32 %v4868, %v4862
    %v4883 = vmul.f32 %v4872, %v4863
    %v4884 = vmul.f32 %v4876, %v4864
    %v4885 = vmul.f32 %v4880, %v4865
    %v4886 = vadd.f32 %v4858, %v4882
    %v4887 = vadd.f32 %v4859, %v4883
    %v4888 = vadd.f32 %v4860, %v4884
    %v4889 = vadd.f32 %v4861, %v4885
    %4890 = vset.pattern.permute.xlu0 63
    %4891 = vperm.xlu0 %4890, %v2741
    %v4892 = vpop.permute.xlu0 %4891
    %4894 = vset.pattern.permute.xlu0 63
    %4895 = vperm.xlu0 %4894, %v2743
    %v4896 = vpop.permute.xlu0 %4895
    %4898 = vset.pattern.permute.xlu0 63
    %4899 = vperm.xlu0 %4898, %v2746
    %v4900 = vpop.permute.xlu0 %4899
    %4902 = vset.pattern.permute.xlu0 63
    %4903 = vperm.xlu0 %4902, %v2748
    %v4904 = vpop.permute.xlu0 %4903
    %v4906 = vmul.f32 %v4892, %v4862
    %v4907 = vmul.f32 %v4896, %v4863
    %v4908 = vmul.f32 %v4900, %v4864
    %v4909 = vmul.f32 %v4904, %v4865
    %4914 = vrot.lane.b32.xlu0 %v4906, 64
    %v4915 = vpop.permute.xlu0 %4914
    %4916 = vrot.lane.b32.xlu0 %v4907, 64
    %v4917 = vpop.permute.xlu0 %4916
    %4918 = vrot.lane.b32.xlu0 %v4908, 64
    %v4919 = vpop.permute.xlu0 %4918
    %4920 = vrot.lane.b32.xlu0 %v4909, 64
    %v4921 = vpop.permute.xlu0 %4920
    %v4926 = vadd.f32 %v4886, %v4915
    %v4927 = vadd.f32 %v4887, %v4917
    %v4928 = vadd.f32 %v4888, %v4919
    %v4929 = vadd.f32 %v4889, %v4921
    %v4930 = vpack.c.bf16 %v4927, %v4926
    %v4931 = vpack.c.bf16 %v4929, %v4928
    %v4933 = vsel %vm213, %v256, 0
    %4935 = vmatpush.bf16.msra.mxu0 0
    %4936 = vmatpush.bf16.msra.mxu0 0
    %4937 = vmatpush.bf16.msra.mxu0 0
    %4938 = vmatpush.bf16.msra.mxu0 0
    %4939 = vmatpush.bf16.msra.mxu0 0
    %4940 = vmatpush.bf16.msra.mxu0 0
    %4941 = vmatpush.bf16.msra.mxu0 %v4931
    %4942 = vmatpush.bf16.msra.mxu0 %v4930
    %4943 = vmatmul.bf16.gmra.mxu0 %v4933
    %v4944 = vpop.f32.mrf.mxu0
    %v4945 = vadd.f32 0.0, %v4944
    %v4946 = vpop.f32.mrf.mxu0
    %v4947 = vadd.f32 0.0, %v4946
    %4948 = vdwg.mxu0
    %v4949 = vmul.f32 %v254, %v4945
    %v4950 = vmul.f32 %v255, %v4947
    %v4959 = vunpack.c.l.b16 %v2680
    %v4960 = vunpack.c.l.b16 %v2681
    %v4961 = vunpack.c.l.b16 %v2682
    %v4962 = vunpack.c.l.b16 %v2683
    %v4963 = vunpack.c.l.b16 %v2684
    %v4964 = vunpack.c.l.b16 %v2685
    %v4965 = vunpack.c.l.b16 %v2686
    %v4966 = vunpack.c.l.b16 %v2687
    %v4967 = vpack.c.b16 %v4960, %v4959
    %v4968 = vpack.c.b16 %v4962, %v4961
    %v4969 = vpack.c.b16 %v4964, %v4963
    %v4970 = vpack.c.b16 %v4966, %v4965
    %vm4975 = vcmask 523264
    %v4977 = vsel %vm4975, %v2723, 0
    %4979 = vmatpush.bf16.msra.mxu0 0
    %4980 = vmatpush.bf16.msra.mxu0 0
    %4981 = vmatpush.bf16.msra.mxu0 0
    %4982 = vmatpush.bf16.msra.mxu0 0
    %4983 = vmatpush.bf16.msra.mxu0 %v4970
    %4984 = vmatpush.bf16.msra.mxu0 %v4969
    %4985 = vmatpush.bf16.msra.mxu0 %v4968
    %4986 = vmatpush.bf16.msra.mxu0 %v4967
    %4987 = vmatmul.bf16.gmra.mxu0 %v4977
    %v4988 = vpop.f32.mrf.mxu0
    %v4989 = vadd.f32 0.0, %v4988
    %v4990 = vpop.f32.mrf.mxu0
    %v4991 = vadd.f32 0.0, %v4990
    %4992 = vdwg.mxu0
    %v4993 = vadd.f32 %v4949, %v4989
    %v4994 = vadd.f32 %v4950, %v4991
    %v4996 = vperm.slane %v2688, 0
    %v4998 = vadd.f32 %v4993, %v4996
    %v4999 = vadd.f32 %v4994, %v4996
    %v5000 = vmax.f32 %v4998, 0.0
    %v5001 = vmax.f32 %v4999, 0.0
    %v5002 = vpack.c.bf16 %v5001, %v5000
    %v5004 = vperm.slane %v2721, 0
    %v5005 = vperm.slane %v2721, 1
    %v5006 = vperm.slane %v2721, 2
    %v5026 = vunpack.c.l.b16 %v2689
    %v5027 = vunpack.c.h.b16 %v2689
    %v5028 = vunpack.c.l.b16 %v2690
    %v5029 = vunpack.c.l.b16 %v2691
    %v5030 = vunpack.c.h.b16 %v2691
    %v5031 = vunpack.c.l.b16 %v2692
    %v5032 = vunpack.c.l.b16 %v2693
    %v5033 = vunpack.c.h.b16 %v2693
    %v5034 = vunpack.c.l.b16 %v2694
    %v5035 = vunpack.c.l.b16 %v2695
    %v5036 = vunpack.c.h.b16 %v2695
    %v5037 = vunpack.c.l.b16 %v2696
    %v5038 = vunpack.c.l.b16 %v2697
    %v5039 = vunpack.c.h.b16 %v2697
    %v5040 = vunpack.c.l.b16 %v2698
    %v5041 = vunpack.c.l.b16 %v2699
    %v5042 = vunpack.c.h.b16 %v2699
    %v5043 = vunpack.c.l.b16 %v2700
    %v5044 = vunpack.c.l.b16 %v2701
    %v5045 = vunpack.c.h.b16 %v2701
    %v5046 = vunpack.c.l.b16 %v2702
    %v5047 = vunpack.c.l.b16 %v2703
    %v5048 = vunpack.c.h.b16 %v2703
    %v5049 = vunpack.c.l.b16 %v2704
    %v5050 = vpack.c.b16 %v5029, %v5026
    %v5051 = vpack.c.b16 %v5030, %v5027
    %v5052 = vpack.c.b16 %v5031, %v5028
    %v5053 = vpack.c.b16 %v5035, %v5032
    %v5054 = vpack.c.b16 %v5036, %v5033
    %v5055 = vpack.c.b16 %v5037, %v5034
    %v5056 = vpack.c.b16 %v5041, %v5038
    %v5057 = vpack.c.b16 %v5042, %v5039
    %v5058 = vpack.c.b16 %v5043, %v5040
    %v5059 = vpack.c.b16 %v5047, %v5044
    %v5060 = vpack.c.b16 %v5048, %v5045
    %v5061 = vpack.c.b16 %v5049, %v5046
    %v5075 = vsel %vm4975, %v5002, 0
    %5077 = vmatpush.bf16.msra.mxu0 0
    %5078 = vmatpush.bf16.msra.mxu0 0
    %5079 = vmatpush.bf16.msra.mxu0 0
    %5080 = vmatpush.bf16.msra.mxu0 0
    %5081 = vmatpush.bf16.msra.mxu0 %v5059
    %5082 = vmatpush.bf16.msra.mxu0 %v5056
    %5083 = vmatpush.bf16.msra.mxu0 %v5053
    %5084 = vmatpush.bf16.msra.mxu0 %v5050
    %5085 = vmatmul.bf16.gmra.mxu0 %v5075
    %v5086 = vpop.f32.mrf.mxu0
    %v5087 = vadd.f32 %v5004, %v5086
    %v5088 = vpop.f32.mrf.mxu0
    %v5089 = vadd.f32 %v5004, %v5088
    %5090 = vdwg.mxu0
    %5091 = vmatpush.bf16.msra.mxu0 0
    %5092 = vmatpush.bf16.msra.mxu0 0
    %5093 = vmatpush.bf16.msra.mxu0 0
    %5094 = vmatpush.bf16.msra.mxu0 0
    %5095 = vmatpush.bf16.msra.mxu0 %v5060
    %5096 = vmatpush.bf16.msra.mxu0 %v5057
    %5097 = vmatpush.bf16.msra.mxu0 %v5054
    %5098 = vmatpush.bf16.msra.mxu0 %v5051
    %5099 = vmatmul.bf16.gmra.mxu0 %v5075
    %v5100 = vpop.f32.mrf.mxu0
    %v5101 = vadd.f32 %v5005, %v5100
    %v5102 = vpop.f32.mrf.mxu0
    %v5103 = vadd.f32 %v5005, %v5102
    %5104 = vdwg.mxu0
    %5105 = vmatpush.bf16.msra.mxu0 0
    %5106 = vmatpush.bf16.msra.mxu0 0
    %5107 = vmatpush.bf16.msra.mxu0 0
    %5108 = vmatpush.bf16.msra.mxu0 0
    %5109 = vmatpush.bf16.msra.mxu0 %v5061
    %5110 = vmatpush.bf16.msra.mxu0 %v5058
    %5111 = vmatpush.bf16.msra.mxu0 %v5055
    %5112 = vmatpush.bf16.msra.mxu0 %v5052
    %5113 = vmatmul.bf16.gmra.mxu0 %v5075
    %v5114 = vpop.f32.mrf.mxu0
    %v5115 = vadd.f32 %v5006, %v5114
    %v5116 = vpop.f32.mrf.mxu0
    %v5117 = vadd.f32 %v5006, %v5116
    %5118 = vdwg.mxu0
    %v5120 = vperm.slane %v2722, 0
    %v5121 = vperm.slane %v2722, 1
    %v5122 = vperm.slane %v2722, 2
    %v5142 = vunpack.c.l.b16 %v2705
    %v5143 = vunpack.c.h.b16 %v2705
    %v5144 = vunpack.c.l.b16 %v2706
    %v5145 = vunpack.c.l.b16 %v2707
    %v5146 = vunpack.c.h.b16 %v2707
    %v5147 = vunpack.c.l.b16 %v2708
    %v5148 = vunpack.c.l.b16 %v2709
    %v5149 = vunpack.c.h.b16 %v2709
    %v5150 = vunpack.c.l.b16 %v2710
    %v5151 = vunpack.c.l.b16 %v2711
    %v5152 = vunpack.c.h.b16 %v2711
    %v5153 = vunpack.c.l.b16 %v2712
    %v5154 = vunpack.c.l.b16 %v2713
    %v5155 = vunpack.c.h.b16 %v2713
    %v5156 = vunpack.c.l.b16 %v2714
    %v5157 = vunpack.c.l.b16 %v2715
    %v5158 = vunpack.c.h.b16 %v2715
    %v5159 = vunpack.c.l.b16 %v2716
    %v5160 = vunpack.c.l.b16 %v2717
    %v5161 = vunpack.c.h.b16 %v2717
    %v5162 = vunpack.c.l.b16 %v2718
    %v5163 = vunpack.c.l.b16 %v2719
    %v5164 = vunpack.c.h.b16 %v2719
    %v5165 = vunpack.c.l.b16 %v2720
    %v5166 = vpack.c.b16 %v5145, %v5142
    %v5167 = vpack.c.b16 %v5146, %v5143
    %v5168 = vpack.c.b16 %v5147, %v5144
    %v5169 = vpack.c.b16 %v5151, %v5148
    %v5170 = vpack.c.b16 %v5152, %v5149
    %v5171 = vpack.c.b16 %v5153, %v5150
    %v5172 = vpack.c.b16 %v5157, %v5154
    %v5173 = vpack.c.b16 %v5158, %v5155
    %v5174 = vpack.c.b16 %v5159, %v5156
    %v5175 = vpack.c.b16 %v5163, %v5160
    %v5176 = vpack.c.b16 %v5164, %v5161
    %v5177 = vpack.c.b16 %v5165, %v5162
    %5190 = vmatpush.bf16.msra.mxu0 0
    %5191 = vmatpush.bf16.msra.mxu0 0
    %5192 = vmatpush.bf16.msra.mxu0 0
    %5193 = vmatpush.bf16.msra.mxu0 0
    %5194 = vmatpush.bf16.msra.mxu0 %v5175
    %5195 = vmatpush.bf16.msra.mxu0 %v5172
    %5196 = vmatpush.bf16.msra.mxu0 %v5169
    %5197 = vmatpush.bf16.msra.mxu0 %v5166
    %5198 = vmatmul.bf16.gmra.mxu0 %v4977
    %v5199 = vpop.f32.mrf.mxu0
    %v5200 = vadd.f32 %v5120, %v5199
    %v5201 = vpop.f32.mrf.mxu0
    %v5202 = vadd.f32 %v5120, %v5201
    %5203 = vdwg.mxu0
    %5204 = vmatpush.bf16.msra.mxu0 0
    %5205 = vmatpush.bf16.msra.mxu0 0
    %5206 = vmatpush.bf16.msra.mxu0 0
    %5207 = vmatpush.bf16.msra.mxu0 0
    %5208 = vmatpush.bf16.msra.mxu0 %v5176
    %5209 = vmatpush.bf16.msra.mxu0 %v5173
    %5210 = vmatpush.bf16.msra.mxu0 %v5170
    %5211 = vmatpush.bf16.msra.mxu0 %v5167
    %5212 = vmatmul.bf16.gmra.mxu0 %v4977
    %v5213 = vpop.f32.mrf.mxu0
    %v5214 = vadd.f32 %v5121, %v5213
    %v5215 = vpop.f32.mrf.mxu0
    %v5216 = vadd.f32 %v5121, %v5215
    %5217 = vdwg.mxu0
    %5218 = vmatpush.bf16.msra.mxu0 0
    %5219 = vmatpush.bf16.msra.mxu0 0
    %5220 = vmatpush.bf16.msra.mxu0 0
    %5221 = vmatpush.bf16.msra.mxu0 0
    %5222 = vmatpush.bf16.msra.mxu0 %v5177
    %5223 = vmatpush.bf16.msra.mxu0 %v5174
    %5224 = vmatpush.bf16.msra.mxu0 %v5171
    %5225 = vmatpush.bf16.msra.mxu0 %v5168
    %5226 = vmatmul.bf16.gmra.mxu0 %v4977
    %v5227 = vpop.f32.mrf.mxu0
    %v5228 = vadd.f32 %v5122, %v5227
    %v5229 = vpop.f32.mrf.mxu0
    %v5230 = vadd.f32 %v5122, %v5229
    %5231 = vdwg.mxu0
    %v5232 = vadd.f32 %v5087, %v5200
    %v5233 = vadd.f32 %v5089, %v5202
    %v5234 = vxor.u32 %v5232, 2147483648
    %v5235 = vxor.u32 %v5233, 2147483648
    %v5236 = vmul.f32 %v5234, 1.442695
    %v5237 = vpow.pop %v5236
    %v5238 = vmul.f32 %v5235, 1.442695
    %v5239 = vpow.pop %v5238
    %v5240 = vadd.f32 %v5237, 1.0
    %v5241 = vadd.f32 %v5239, 1.0
    %v5242 = vrcp.pop %v5240
    %v5243 = vmul.f32 %v5240, %v5242
    %v5244 = vsub.f32 1.0, %v5243
    %v5245 = vmul.f32 %v5242, %v5244
    %v5246 = vadd.f32 %v5242, %v5245
    %vm5247 = vweird.f32 %v5240
    %vm5248 = vweird.f32 %v5242
    %vm5249 = vmor %vm5247, %vm5248
    %v5250 = vsel %vm5249, %v5242, %v5246
    %v5251 = vand.u32 2147483647, %v5240
    %vm5252 = vcmp.eq.f32.partialorder %v5251, 8.507059e+37
    %v5253 = vand.u32 %v5240, 2147483648
    %v5254 = vor.u32 1.1754944e-38, %v5253
    %v5255 = vsel %vm5252, %v5254, %v5250
    %v5256 = vmul.f32 1.0, %v5255
    %v5257 = vrcp.pop %v5241
    %v5258 = vmul.f32 %v5241, %v5257
    %v5259 = vsub.f32 1.0, %v5258
    %v5260 = vmul.f32 %v5257, %v5259
    %v5261 = vadd.f32 %v5257, %v5260
    %vm5262 = vweird.f32 %v5241
    %vm5263 = vweird.f32 %v5257
    %vm5264 = vmor %vm5262, %vm5263
    %v5265 = vsel %vm5264, %v5257, %v5261
    %v5266 = vand.u32 2147483647, %v5241
    %vm5267 = vcmp.eq.f32.partialorder %v5266, 8.507059e+37
    %v5268 = vand.u32 %v5241, 2147483648
    %v5269 = vor.u32 1.1754944e-38, %v5268
    %v5270 = vsel %vm5267, %v5269, %v5265
    %v5271 = vmul.f32 1.0, %v5270
    %v5272 = vadd.f32 %v5101, %v5214
    %v5273 = vadd.f32 %v5103, %v5216
    %v5274 = vxor.u32 %v5272, 2147483648
    %v5275 = vxor.u32 %v5273, 2147483648
    %v5276 = vmul.f32 %v5274, 1.442695
    %v5277 = vpow.pop %v5276
    %v5278 = vmul.f32 %v5275, 1.442695
    %v5279 = vpow.pop %v5278
    %v5280 = vadd.f32 %v5277, 1.0
    %v5281 = vadd.f32 %v5279, 1.0
    %v5282 = vrcp.pop %v5280
    %v5283 = vmul.f32 %v5280, %v5282
    %v5284 = vsub.f32 1.0, %v5283
    %v5285 = vmul.f32 %v5282, %v5284
    %v5286 = vadd.f32 %v5282, %v5285
    %vm5287 = vweird.f32 %v5280
    %vm5288 = vweird.f32 %v5282
    %vm5289 = vmor %vm5287, %vm5288
    %v5290 = vsel %vm5289, %v5282, %v5286
    %v5291 = vand.u32 2147483647, %v5280
    %vm5292 = vcmp.eq.f32.partialorder %v5291, 8.507059e+37
    %v5293 = vand.u32 %v5280, 2147483648
    %v5294 = vor.u32 1.1754944e-38, %v5293
    %v5295 = vsel %vm5292, %v5294, %v5290
    %v5296 = vmul.f32 1.0, %v5295
    %v5297 = vrcp.pop %v5281
    %v5298 = vmul.f32 %v5281, %v5297
    %v5299 = vsub.f32 1.0, %v5298
    %v5300 = vmul.f32 %v5297, %v5299
    %v5301 = vadd.f32 %v5297, %v5300
    %vm5302 = vweird.f32 %v5281
    %vm5303 = vweird.f32 %v5297
    %vm5304 = vmor %vm5302, %vm5303
    %v5305 = vsel %vm5304, %v5297, %v5301
    %v5306 = vand.u32 2147483647, %v5281
    %vm5307 = vcmp.eq.f32.partialorder %v5306, 8.507059e+37
    %v5308 = vand.u32 %v5281, 2147483648
    %v5309 = vor.u32 1.1754944e-38, %v5308
    %v5310 = vsel %vm5307, %v5309, %v5305
    %v5311 = vmul.f32 1.0, %v5310
    %v5312 = vmul.f32 %v5256, %v5228
    %v5313 = vmul.f32 %v5271, %v5230
    %v5314 = vadd.f32 %v5115, %v5312
    %v5315 = vadd.f32 %v5117, %v5313
    %v5316 = vtanh.pop %v5314
    %v5317 = vtanh.pop %v5315
    %v5318 = vsub.f32 1.0, %v5296
    %v5319 = vsub.f32 1.0, %v5311
    %v5320 = vmul.f32 %v5318, %v5316
    %v5321 = vmul.f32 %v5319, %v5317
    %v5322 = vmul.f32 %v5296, %v2678
    %v5323 = vmul.f32 %v5311, %v2679
    %v5324 = vadd.f32 %v5320, %v5322
    %v5325 = vadd.f32 %v5321, %v5323
    %v5326 = vpack.c.bf16 %v5325, %v5324
    %5327 = vmatpush.bf16.msra.mxu0 0
    %5328 = vmatpush.bf16.msra.mxu0 0
    %5329 = vmatpush.bf16.msra.mxu0 0
    %5330 = vmatpush.bf16.msra.mxu0 0
    %5331 = vmatpush.bf16.msra.mxu0 0
    %5332 = vmatpush.bf16.msra.mxu0 0
    %5333 = vmatpush.bf16.msra.mxu0 0
    %5334 = vmatpush.bf16.msra.mxu0 %v5326
    %5335 = vmatmul.bf16.gmra.mxu0 %v2726
    %v5336 = vpop.f32.mrf.mxu0
    %v5337 = vadd.f32 0.0, %v5336
    %v5338 = vpop.f32.mrf.mxu0
    %v5339 = vadd.f32 0.0, %v5338
    %5340 = vmatmul.bf16.gmra.mxu0 %v2729
    %v5341 = vpop.f32.mrf.mxu0
    %v5342 = vadd.f32 0.0, %v5341
    %v5343 = vpop.f32.mrf.mxu0
    %v5344 = vadd.f32 0.0, %v5343
    %5345 = vdwg.mxu0
    %5347 = vset.pattern.permute.xlu0 0
    %5348 = vperm.xlu0 %5347, %v5337
    %v5349 = vpop.permute.xlu0 %5348
    %5352 = vset.pattern.permute.xlu0 0
    %5353 = vperm.xlu0 %5352, %v5339
    %v5354 = vpop.permute.xlu0 %5353
    %5357 = vset.pattern.permute.xlu0 0
    %5358 = vperm.xlu0 %5357, %v5342
    %v5359 = vpop.permute.xlu0 %5358
    %5362 = vset.pattern.permute.xlu0 0
    %5363 = vperm.xlu0 %5362, %v5344
    %v5364 = vpop.permute.xlu0 %5363
    %v5366 = vmul.f32 %v5349, %v2750
    %v5367 = vmul.f32 %v5354, %v2751
    %v5368 = vmul.f32 %v5359, %v2752
    %v5369 = vmul.f32 %v5364, %v2753
    %v5370 = vadd.f32 %v5366, 0.0
    %v5371 = vadd.f32 %v5367, 0.0
    %v5372 = vadd.f32 %v5368, 0.0
    %v5373 = vadd.f32 %v5369, 0.0
    %5374 = vset.pattern.permute.xlu0 1
    %5375 = vperm.xlu0 %5374, %v5337
    %v5376 = vpop.permute.xlu0 %5375
    %5378 = vset.pattern.permute.xlu0 1
    %5379 = vperm.xlu0 %5378, %v5339
    %v5380 = vpop.permute.xlu0 %5379
    %5382 = vset.pattern.permute.xlu0 1
    %5383 = vperm.xlu0 %5382, %v5342
    %v5384 = vpop.permute.xlu0 %5383
    %5386 = vset.pattern.permute.xlu0 1
    %5387 = vperm.xlu0 %5386, %v5344
    %v5388 = vpop.permute.xlu0 %5387
    %v5390 = vmul.f32 %v5376, %v2750
    %v5391 = vmul.f32 %v5380, %v2751
    %v5392 = vmul.f32 %v5384, %v2752
    %v5393 = vmul.f32 %v5388, %v2753
    %5398 = vrot.lane.b32.xlu0 %v5390, 64
    %v5399 = vpop.permute.xlu0 %5398
    %5400 = vrot.lane.b32.xlu0 %v5391, 64
    %v5401 = vpop.permute.xlu0 %5400
    %5402 = vrot.lane.b32.xlu0 %v5392, 64
    %v5403 = vpop.permute.xlu0 %5402
    %5404 = vrot.lane.b32.xlu0 %v5393, 64
    %v5405 = vpop.permute.xlu0 %5404
    %v5410 = vadd.f32 %v5370, %v5399
    %v5411 = vadd.f32 %v5371, %v5401
    %v5412 = vadd.f32 %v5372, %v5403
    %v5413 = vadd.f32 %v5373, %v5405
    %5414 = vset.pattern.permute.xlu0 2
    %5415 = vperm.xlu0 %5414, %v5337
    %v5416 = vpop.permute.xlu0 %5415
    %5418 = vset.pattern.permute.xlu0 2
    %5419 = vperm.xlu0 %5418, %v5339
    %v5420 = vpop.permute.xlu0 %5419
    %5422 = vset.pattern.permute.xlu0 2
    %5423 = vperm.xlu0 %5422, %v5342
    %v5424 = vpop.permute.xlu0 %5423
    %5426 = vset.pattern.permute.xlu0 2
    %5427 = vperm.xlu0 %5426, %v5344
    %v5428 = vpop.permute.xlu0 %5427
    %v5430 = vmul.f32 %v5416, %v2822
    %v5431 = vmul.f32 %v5420, %v2823
    %v5432 = vmul.f32 %v5424, %v2824
    %v5433 = vmul.f32 %v5428, %v2825
    %v5434 = vadd.f32 %v5410, %v5430
    %v5435 = vadd.f32 %v5411, %v5431
    %v5436 = vadd.f32 %v5412, %v5432
    %v5437 = vadd.f32 %v5413, %v5433
    %5438 = vset.pattern.permute.xlu0 3
    %5439 = vperm.xlu0 %5438, %v5337
    %v5440 = vpop.permute.xlu0 %5439
    %5442 = vset.pattern.permute.xlu0 3
    %5443 = vperm.xlu0 %5442, %v5339
    %v5444 = vpop.permute.xlu0 %5443
    %5446 = vset.pattern.permute.xlu0 3
    %5447 = vperm.xlu0 %5446, %v5342
    %v5448 = vpop.permute.xlu0 %5447
    %5450 = vset.pattern.permute.xlu0 3
    %5451 = vperm.xlu0 %5450, %v5344
    %v5452 = vpop.permute.xlu0 %5451
    %v5454 = vmul.f32 %v5440, %v2822
    %v5455 = vmul.f32 %v5444, %v2823
    %v5456 = vmul.f32 %v5448, %v2824
    %v5457 = vmul.f32 %v5452, %v2825
    %5462 = vrot.lane.b32.xlu0 %v5454, 64
    %v5463 = vpop.permute.xlu0 %5462
    %5464 = vrot.lane.b32.xlu0 %v5455, 64
    %v5465 = vpop.permute.xlu0 %5464
    %5466 = vrot.lane.b32.xlu0 %v5456, 64
    %v5467 = vpop.permute.xlu0 %5466
    %5468 = vrot.lane.b32.xlu0 %v5457, 64
    %v5469 = vpop.permute.xlu0 %5468
    %v5474 = vadd.f32 %v5434, %v5463
    %v5475 = vadd.f32 %v5435, %v5465
    %v5476 = vadd.f32 %v5436, %v5467
    %v5477 = vadd.f32 %v5437, %v5469
    %5478 = vset.pattern.permute.xlu0 4
    %5479 = vperm.xlu0 %5478, %v5337
    %v5480 = vpop.permute.xlu0 %5479
    %5482 = vset.pattern.permute.xlu0 4
    %5483 = vperm.xlu0 %5482, %v5339
    %v5484 = vpop.permute.xlu0 %5483
    %5486 = vset.pattern.permute.xlu0 4
    %5487 = vperm.xlu0 %5486, %v5342
    %v5488 = vpop.permute.xlu0 %5487
    %5490 = vset.pattern.permute.xlu0 4
    %5491 = vperm.xlu0 %5490, %v5344
    %v5492 = vpop.permute.xlu0 %5491
    %v5494 = vmul.f32 %v5480, %v2890
    %v5495 = vmul.f32 %v5484, %v2891
    %v5496 = vmul.f32 %v5488, %v2892
    %v5497 = vmul.f32 %v5492, %v2893
    %v5498 = vadd.f32 %v5474, %v5494
    %v5499 = vadd.f32 %v5475, %v5495
    %v5500 = vadd.f32 %v5476, %v5496
    %v5501 = vadd.f32 %v5477, %v5497
    %5502 = vset.pattern.permute.xlu0 5
    %5503 = vperm.xlu0 %5502, %v5337
    %v5504 = vpop.permute.xlu0 %5503
    %5506 = vset.pattern.permute.xlu0 5
    %5507 = vperm.xlu0 %5506, %v5339
    %v5508 = vpop.permute.xlu0 %5507
    %5510 = vset.pattern.permute.xlu0 5
    %5511 = vperm.xlu0 %5510, %v5342
    %v5512 = vpop.permute.xlu0 %5511
    %5514 = vset.pattern.permute.xlu0 5
    %5515 = vperm.xlu0 %5514, %v5344
    %v5516 = vpop.permute.xlu0 %5515
    %v5518 = vmul.f32 %v5504, %v2890
    %v5519 = vmul.f32 %v5508, %v2891
    %v5520 = vmul.f32 %v5512, %v2892
    %v5521 = vmul.f32 %v5516, %v2893
    %5526 = vrot.lane.b32.xlu0 %v5518, 64
    %v5527 = vpop.permute.xlu0 %5526
    %5528 = vrot.lane.b32.xlu0 %v5519, 64
    %v5529 = vpop.permute.xlu0 %5528
    %5530 = vrot.lane.b32.xlu0 %v5520, 64
    %v5531 = vpop.permute.xlu0 %5530
    %5532 = vrot.lane.b32.xlu0 %v5521, 64
    %v5533 = vpop.permute.xlu0 %5532
    %v5538 = vadd.f32 %v5498, %v5527
    %v5539 = vadd.f32 %v5499, %v5529
    %v5540 = vadd.f32 %v5500, %v5531
    %v5541 = vadd.f32 %v5501, %v5533
    %5542 = vset.pattern.permute.xlu0 6
    %5543 = vperm.xlu0 %5542, %v5337
    %v5544 = vpop.permute.xlu0 %5543
    %5546 = vset.pattern.permute.xlu0 6
    %5547 = vperm.xlu0 %5546, %v5339
    %v5548 = vpop.permute.xlu0 %5547
    %5550 = vset.pattern.permute.xlu0 6
    %5551 = vperm.xlu0 %5550, %v5342
    %v5552 = vpop.permute.xlu0 %5551
    %5554 = vset.pattern.permute.xlu0 6
    %5555 = vperm.xlu0 %5554, %v5344
    %v5556 = vpop.permute.xlu0 %5555
    %v5558 = vmul.f32 %v5544, %v2958
    %v5559 = vmul.f32 %v5548, %v2959
    %v5560 = vmul.f32 %v5552, %v2960
    %v5561 = vmul.f32 %v5556, %v2961
    %v5562 = vadd.f32 %v5538, %v5558
    %v5563 = vadd.f32 %v5539, %v5559
    %v5564 = vadd.f32 %v5540, %v5560
    %v5565 = vadd.f32 %v5541, %v5561
    %5566 = vset.pattern.permute.xlu0 7
    %5567 = vperm.xlu0 %5566, %v5337
    %v5568 = vpop.permute.xlu0 %5567
    %5570 = vset.pattern.permute.xlu0 7
    %5571 = vperm.xlu0 %5570, %v5339
    %v5572 = vpop.permute.xlu0 %5571
    %5574 = vset.pattern.permute.xlu0 7
    %5575 = vperm.xlu0 %5574, %v5342
    %v5576 = vpop.permute.xlu0 %5575
    %5578 = vset.pattern.permute.xlu0 7
    %5579 = vperm.xlu0 %5578, %v5344
    %v5580 = vpop.permute.xlu0 %5579
    %v5582 = vmul.f32 %v5568, %v2958
    %v5583 = vmul.f32 %v5572, %v2959
    %v5584 = vmul.f32 %v5576, %v2960
    %v5585 = vmul.f32 %v5580, %v2961
    %5590 = vrot.lane.b32.xlu0 %v5582, 64
    %v5591 = vpop.permute.xlu0 %5590
    %5592 = vrot.lane.b32.xlu0 %v5583, 64
    %v5593 = vpop.permute.xlu0 %5592
    %5594 = vrot.lane.b32.xlu0 %v5584, 64
    %v5595 = vpop.permute.xlu0 %5594
    %5596 = vrot.lane.b32.xlu0 %v5585, 64
    %v5597 = vpop.permute.xlu0 %5596
    %v5602 = vadd.f32 %v5562, %v5591
    %v5603 = vadd.f32 %v5563, %v5593
    %v5604 = vadd.f32 %v5564, %v5595
    %v5605 = vadd.f32 %v5565, %v5597
    %5606 = vset.pattern.permute.xlu0 8
    %5607 = vperm.xlu0 %5606, %v5337
    %v5608 = vpop.permute.xlu0 %5607
    %5610 = vset.pattern.permute.xlu0 8
    %5611 = vperm.xlu0 %5610, %v5339
    %v5612 = vpop.permute.xlu0 %5611
    %5614 = vset.pattern.permute.xlu0 8
    %5615 = vperm.xlu0 %5614, %v5342
    %v5616 = vpop.permute.xlu0 %5615
    %5618 = vset.pattern.permute.xlu0 8
    %5619 = vperm.xlu0 %5618, %v5344
    %v5620 = vpop.permute.xlu0 %5619
    %v5622 = vmul.f32 %v5608, %v3026
    %v5623 = vmul.f32 %v5612, %v3027
    %v5624 = vmul.f32 %v5616, %v3028
    %v5625 = vmul.f32 %v5620, %v3029
    %v5626 = vadd.f32 %v5602, %v5622
    %v5627 = vadd.f32 %v5603, %v5623
    %v5628 = vadd.f32 %v5604, %v5624
    %v5629 = vadd.f32 %v5605, %v5625
    %5630 = vset.pattern.permute.xlu0 9
    %5631 = vperm.xlu0 %5630, %v5337
    %v5632 = vpop.permute.xlu0 %5631
    %5634 = vset.pattern.permute.xlu0 9
    %5635 = vperm.xlu0 %5634, %v5339
    %v5636 = vpop.permute.xlu0 %5635
    %5638 = vset.pattern.permute.xlu0 9
    %5639 = vperm.xlu0 %5638, %v5342
    %v5640 = vpop.permute.xlu0 %5639
    %5642 = vset.pattern.permute.xlu0 9
    %5643 = vperm.xlu0 %5642, %v5344
    %v5644 = vpop.permute.xlu0 %5643
    %v5646 = vmul.f32 %v5632, %v3026
    %v5647 = vmul.f32 %v5636, %v3027
    %v5648 = vmul.f32 %v5640, %v3028
    %v5649 = vmul.f32 %v5644, %v3029
    %5654 = vrot.lane.b32.xlu0 %v5646, 64
    %v5655 = vpop.permute.xlu0 %5654
    %5656 = vrot.lane.b32.xlu0 %v5647, 64
    %v5657 = vpop.permute.xlu0 %5656
    %5658 = vrot.lane.b32.xlu0 %v5648, 64
    %v5659 = vpop.permute.xlu0 %5658
    %5660 = vrot.lane.b32.xlu0 %v5649, 64
    %v5661 = vpop.permute.xlu0 %5660
    %v5666 = vadd.f32 %v5626, %v5655
    %v5667 = vadd.f32 %v5627, %v5657
    %v5668 = vadd.f32 %v5628, %v5659
    %v5669 = vadd.f32 %v5629, %v5661
    %5670 = vset.pattern.permute.xlu0 10
    %5671 = vperm.xlu0 %5670, %v5337
    %v5672 = vpop.permute.xlu0 %5671
    %5674 = vset.pattern.permute.xlu0 10
    %5675 = vperm.xlu0 %5674, %v5339
    %v5676 = vpop.permute.xlu0 %5675
    %5678 = vset.pattern.permute.xlu0 10
    %5679 = vperm.xlu0 %5678, %v5342
    %v5680 = vpop.permute.xlu0 %5679
    %5682 = vset.pattern.permute.xlu0 10
    %5683 = vperm.xlu0 %5682, %v5344
    %v5684 = vpop.permute.xlu0 %5683
    %v5686 = vmul.f32 %v5672, %v3094
    %v5687 = vmul.f32 %v5676, %v3095
    %v5688 = vmul.f32 %v5680, %v3096
    %v5689 = vmul.f32 %v5684, %v3097
    %v5690 = vadd.f32 %v5666, %v5686
    %v5691 = vadd.f32 %v5667, %v5687
    %v5692 = vadd.f32 %v5668, %v5688
    %v5693 = vadd.f32 %v5669, %v5689
    %5694 = vset.pattern.permute.xlu0 11
    %5695 = vperm.xlu0 %5694, %v5337
    %v5696 = vpop.permute.xlu0 %5695
    %5698 = vset.pattern.permute.xlu0 11
    %5699 = vperm.xlu0 %5698, %v5339
    %v5700 = vpop.permute.xlu0 %5699
    %5702 = vset.pattern.permute.xlu0 11
    %5703 = vperm.xlu0 %5702, %v5342
    %v5704 = vpop.permute.xlu0 %5703
    %5706 = vset.pattern.permute.xlu0 11
    %5707 = vperm.xlu0 %5706, %v5344
    %v5708 = vpop.permute.xlu0 %5707
    %v5710 = vmul.f32 %v5696, %v3094
    %v5711 = vmul.f32 %v5700, %v3095
    %v5712 = vmul.f32 %v5704, %v3096
    %v5713 = vmul.f32 %v5708, %v3097
    %5718 = vrot.lane.b32.xlu0 %v5710, 64
    %v5719 = vpop.permute.xlu0 %5718
    %5720 = vrot.lane.b32.xlu0 %v5711, 64
    %v5721 = vpop.permute.xlu0 %5720
    %5722 = vrot.lane.b32.xlu0 %v5712, 64
    %v5723 = vpop.permute.xlu0 %5722
    %5724 = vrot.lane.b32.xlu0 %v5713, 64
    %v5725 = vpop.permute.xlu0 %5724
    %v5730 = vadd.f32 %v5690, %v5719
    %v5731 = vadd.f32 %v5691, %v5721
    %v5732 = vadd.f32 %v5692, %v5723
    %v5733 = vadd.f32 %v5693, %v5725
    %5734 = vset.pattern.permute.xlu0 12
    %5735 = vperm.xlu0 %5734, %v5337
    %v5736 = vpop.permute.xlu0 %5735
    %5738 = vset.pattern.permute.xlu0 12
    %5739 = vperm.xlu0 %5738, %v5339
    %v5740 = vpop.permute.xlu0 %5739
    %5742 = vset.pattern.permute.xlu0 12
    %5743 = vperm.xlu0 %5742, %v5342
    %v5744 = vpop.permute.xlu0 %5743
    %5746 = vset.pattern.permute.xlu0 12
    %5747 = vperm.xlu0 %5746, %v5344
    %v5748 = vpop.permute.xlu0 %5747
    %v5750 = vmul.f32 %v5736, %v3162
    %v5751 = vmul.f32 %v5740, %v3163
    %v5752 = vmul.f32 %v5744, %v3164
    %v5753 = vmul.f32 %v5748, %v3165
    %v5754 = vadd.f32 %v5730, %v5750
    %v5755 = vadd.f32 %v5731, %v5751
    %v5756 = vadd.f32 %v5732, %v5752
    %v5757 = vadd.f32 %v5733, %v5753
    %5758 = vset.pattern.permute.xlu0 13
    %5759 = vperm.xlu0 %5758, %v5337
    %v5760 = vpop.permute.xlu0 %5759
    %5762 = vset.pattern.permute.xlu0 13
    %5763 = vperm.xlu0 %5762, %v5339
    %v5764 = vpop.permute.xlu0 %5763
    %5766 = vset.pattern.permute.xlu0 13
    %5767 = vperm.xlu0 %5766, %v5342
    %v5768 = vpop.permute.xlu0 %5767
    %5770 = vset.pattern.permute.xlu0 13
    %5771 = vperm.xlu0 %5770, %v5344
    %v5772 = vpop.permute.xlu0 %5771
    %v5774 = vmul.f32 %v5760, %v3162
    %v5775 = vmul.f32 %v5764, %v3163
    %v5776 = vmul.f32 %v5768, %v3164
    %v5777 = vmul.f32 %v5772, %v3165
    %5782 = vrot.lane.b32.xlu0 %v5774, 64
    %v5783 = vpop.permute.xlu0 %5782
    %5784 = vrot.lane.b32.xlu0 %v5775, 64
    %v5785 = vpop.permute.xlu0 %5784
    %5786 = vrot.lane.b32.xlu0 %v5776, 64
    %v5787 = vpop.permute.xlu0 %5786
    %5788 = vrot.lane.b32.xlu0 %v5777, 64
    %v5789 = vpop.permute.xlu0 %5788
    %v5794 = vadd.f32 %v5754, %v5783
    %v5795 = vadd.f32 %v5755, %v5785
    %v5796 = vadd.f32 %v5756, %v5787
    %v5797 = vadd.f32 %v5757, %v5789
    %5798 = vset.pattern.permute.xlu0 14
    %5799 = vperm.xlu0 %5798, %v5337
    %v5800 = vpop.permute.xlu0 %5799
    %5802 = vset.pattern.permute.xlu0 14
    %5803 = vperm.xlu0 %5802, %v5339
    %v5804 = vpop.permute.xlu0 %5803
    %5806 = vset.pattern.permute.xlu0 14
    %5807 = vperm.xlu0 %5806, %v5342
    %v5808 = vpop.permute.xlu0 %5807
    %5810 = vset.pattern.permute.xlu0 14
    %5811 = vperm.xlu0 %5810, %v5344
    %v5812 = vpop.permute.xlu0 %5811
    %v5814 = vmul.f32 %v5800, %v3230
    %v5815 = vmul.f32 %v5804, %v3231
    %v5816 = vmul.f32 %v5808, %v3232
    %v5817 = vmul.f32 %v5812, %v3233
    %v5818 = vadd.f32 %v5794, %v5814
    %v5819 = vadd.f32 %v5795, %v5815
    %v5820 = vadd.f32 %v5796, %v5816
    %v5821 = vadd.f32 %v5797, %v5817
    %5822 = vset.pattern.permute.xlu0 15
    %5823 = vperm.xlu0 %5822, %v5337
    %v5824 = vpop.permute.xlu0 %5823
    %5826 = vset.pattern.permute.xlu0 15
    %5827 = vperm.xlu0 %5826, %v5339
    %v5828 = vpop.permute.xlu0 %5827
    %5830 = vset.pattern.permute.xlu0 15
    %5831 = vperm.xlu0 %5830, %v5342
    %v5832 = vpop.permute.xlu0 %5831
    %5834 = vset.pattern.permute.xlu0 15
    %5835 = vperm.xlu0 %5834, %v5344
    %v5836 = vpop.permute.xlu0 %5835
    %v5838 = vmul.f32 %v5824, %v3230
    %v5839 = vmul.f32 %v5828, %v3231
    %v5840 = vmul.f32 %v5832, %v3232
    %v5841 = vmul.f32 %v5836, %v3233
    %5846 = vrot.lane.b32.xlu0 %v5838, 64
    %v5847 = vpop.permute.xlu0 %5846
    %5848 = vrot.lane.b32.xlu0 %v5839, 64
    %v5849 = vpop.permute.xlu0 %5848
    %5850 = vrot.lane.b32.xlu0 %v5840, 64
    %v5851 = vpop.permute.xlu0 %5850
    %5852 = vrot.lane.b32.xlu0 %v5841, 64
    %v5853 = vpop.permute.xlu0 %5852
    %v5858 = vadd.f32 %v5818, %v5847
    %v5859 = vadd.f32 %v5819, %v5849
    %v5860 = vadd.f32 %v5820, %v5851
    %v5861 = vadd.f32 %v5821, %v5853
    %5862 = vset.pattern.permute.xlu0 16
    %5863 = vperm.xlu0 %5862, %v5337
    %v5864 = vpop.permute.xlu0 %5863
    %5866 = vset.pattern.permute.xlu0 16
    %5867 = vperm.xlu0 %5866, %v5339
    %v5868 = vpop.permute.xlu0 %5867
    %5870 = vset.pattern.permute.xlu0 16
    %5871 = vperm.xlu0 %5870, %v5342
    %v5872 = vpop.permute.xlu0 %5871
    %5874 = vset.pattern.permute.xlu0 16
    %5875 = vperm.xlu0 %5874, %v5344
    %v5876 = vpop.permute.xlu0 %5875
    %v5878 = vmul.f32 %v5864, %v3298
    %v5879 = vmul.f32 %v5868, %v3299
    %v5880 = vmul.f32 %v5872, %v3300
    %v5881 = vmul.f32 %v5876, %v3301
    %v5882 = vadd.f32 %v5858, %v5878
    %v5883 = vadd.f32 %v5859, %v5879
    %v5884 = vadd.f32 %v5860, %v5880
    %v5885 = vadd.f32 %v5861, %v5881
    %5886 = vset.pattern.permute.xlu0 17
    %5887 = vperm.xlu0 %5886, %v5337
    %v5888 = vpop.permute.xlu0 %5887
    %5890 = vset.pattern.permute.xlu0 17
    %5891 = vperm.xlu0 %5890, %v5339
    %v5892 = vpop.permute.xlu0 %5891
    %5894 = vset.pattern.permute.xlu0 17
    %5895 = vperm.xlu0 %5894, %v5342
    %v5896 = vpop.permute.xlu0 %5895
    %5898 = vset.pattern.permute.xlu0 17
    %5899 = vperm.xlu0 %5898, %v5344
    %v5900 = vpop.permute.xlu0 %5899
    %v5902 = vmul.f32 %v5888, %v3298
    %v5903 = vmul.f32 %v5892, %v3299
    %v5904 = vmul.f32 %v5896, %v3300
    %v5905 = vmul.f32 %v5900, %v3301
    %5910 = vrot.lane.b32.xlu0 %v5902, 64
    %v5911 = vpop.permute.xlu0 %5910
    %5912 = vrot.lane.b32.xlu0 %v5903, 64
    %v5913 = vpop.permute.xlu0 %5912
    %5914 = vrot.lane.b32.xlu0 %v5904, 64
    %v5915 = vpop.permute.xlu0 %5914
    %5916 = vrot.lane.b32.xlu0 %v5905, 64
    %v5917 = vpop.permute.xlu0 %5916
    %v5922 = vadd.f32 %v5882, %v5911
    %v5923 = vadd.f32 %v5883, %v5913
    %v5924 = vadd.f32 %v5884, %v5915
    %v5925 = vadd.f32 %v5885, %v5917
    %5926 = vset.pattern.permute.xlu0 18
    %5927 = vperm.xlu0 %5926, %v5337
    %v5928 = vpop.permute.xlu0 %5927
    %5930 = vset.pattern.permute.xlu0 18
    %5931 = vperm.xlu0 %5930, %v5339
    %v5932 = vpop.permute.xlu0 %5931
    %5934 = vset.pattern.permute.xlu0 18
    %5935 = vperm.xlu0 %5934, %v5342
    %v5936 = vpop.permute.xlu0 %5935
    %5938 = vset.pattern.permute.xlu0 18
    %5939 = vperm.xlu0 %5938, %v5344
    %v5940 = vpop.permute.xlu0 %5939
    %v5942 = vmul.f32 %v5928, %v3366
    %v5943 = vmul.f32 %v5932, %v3367
    %v5944 = vmul.f32 %v5936, %v3368
    %v5945 = vmul.f32 %v5940, %v3369
    %v5946 = vadd.f32 %v5922, %v5942
    %v5947 = vadd.f32 %v5923, %v5943
    %v5948 = vadd.f32 %v5924, %v5944
    %v5949 = vadd.f32 %v5925, %v5945
    %5950 = vset.pattern.permute.xlu0 19
    %5951 = vperm.xlu0 %5950, %v5337
    %v5952 = vpop.permute.xlu0 %5951
    %5954 = vset.pattern.permute.xlu0 19
    %5955 = vperm.xlu0 %5954, %v5339
    %v5956 = vpop.permute.xlu0 %5955
    %5958 = vset.pattern.permute.xlu0 19
    %5959 = vperm.xlu0 %5958, %v5342
    %v5960 = vpop.permute.xlu0 %5959
    %5962 = vset.pattern.permute.xlu0 19
    %5963 = vperm.xlu0 %5962, %v5344
    %v5964 = vpop.permute.xlu0 %5963
    %v5966 = vmul.f32 %v5952, %v3366
    %v5967 = vmul.f32 %v5956, %v3367
    %v5968 = vmul.f32 %v5960, %v3368
    %v5969 = vmul.f32 %v5964, %v3369
    %5974 = vrot.lane.b32.xlu0 %v5966, 64
    %v5975 = vpop.permute.xlu0 %5974
    %5976 = vrot.lane.b32.xlu0 %v5967, 64
    %v5977 = vpop.permute.xlu0 %5976
    %5978 = vrot.lane.b32.xlu0 %v5968, 64
    %v5979 = vpop.permute.xlu0 %5978
    %5980 = vrot.lane.b32.xlu0 %v5969, 64
    %v5981 = vpop.permute.xlu0 %5980
    %v5986 = vadd.f32 %v5946, %v5975
    %v5987 = vadd.f32 %v5947, %v5977
    %v5988 = vadd.f32 %v5948, %v5979
    %v5989 = vadd.f32 %v5949, %v5981
    %5990 = vset.pattern.permute.xlu0 20
    %5991 = vperm.xlu0 %5990, %v5337
    %v5992 = vpop.permute.xlu0 %5991
    %5994 = vset.pattern.permute.xlu0 20
    %5995 = vperm.xlu0 %5994, %v5339
    %v5996 = vpop.permute.xlu0 %5995
    %5998 = vset.pattern.permute.xlu0 20
    %5999 = vperm.xlu0 %5998, %v5342
    %v6000 = vpop.permute.xlu0 %5999
    %6002 = vset.pattern.permute.xlu0 20
    %6003 = vperm.xlu0 %6002, %v5344
    %v6004 = vpop.permute.xlu0 %6003
    %v6006 = vmul.f32 %v5992, %v3434
    %v6007 = vmul.f32 %v5996, %v3435
    %v6008 = vmul.f32 %v6000, %v3436
    %v6009 = vmul.f32 %v6004, %v3437
    %v6010 = vadd.f32 %v5986, %v6006
    %v6011 = vadd.f32 %v5987, %v6007
    %v6012 = vadd.f32 %v5988, %v6008
    %v6013 = vadd.f32 %v5989, %v6009
    %6014 = vset.pattern.permute.xlu0 21
    %6015 = vperm.xlu0 %6014, %v5337
    %v6016 = vpop.permute.xlu0 %6015
    %6018 = vset.pattern.permute.xlu0 21
    %6019 = vperm.xlu0 %6018, %v5339
    %v6020 = vpop.permute.xlu0 %6019
    %6022 = vset.pattern.permute.xlu0 21
    %6023 = vperm.xlu0 %6022, %v5342
    %v6024 = vpop.permute.xlu0 %6023
    %6026 = vset.pattern.permute.xlu0 21
    %6027 = vperm.xlu0 %6026, %v5344
    %v6028 = vpop.permute.xlu0 %6027
    %v6030 = vmul.f32 %v6016, %v3434
    %v6031 = vmul.f32 %v6020, %v3435
    %v6032 = vmul.f32 %v6024, %v3436
    %v6033 = vmul.f32 %v6028, %v3437
    %6038 = vrot.lane.b32.xlu0 %v6030, 64
    %v6039 = vpop.permute.xlu0 %6038
    %6040 = vrot.lane.b32.xlu0 %v6031, 64
    %v6041 = vpop.permute.xlu0 %6040
    %6042 = vrot.lane.b32.xlu0 %v6032, 64
    %v6043 = vpop.permute.xlu0 %6042
    %6044 = vrot.lane.b32.xlu0 %v6033, 64
    %v6045 = vpop.permute.xlu0 %6044
    %v6050 = vadd.f32 %v6010, %v6039
    %v6051 = vadd.f32 %v6011, %v6041
    %v6052 = vadd.f32 %v6012, %v6043
    %v6053 = vadd.f32 %v6013, %v6045
    %6054 = vset.pattern.permute.xlu0 22
    %6055 = vperm.xlu0 %6054, %v5337
    %v6056 = vpop.permute.xlu0 %6055
    %6058 = vset.pattern.permute.xlu0 22
    %6059 = vperm.xlu0 %6058, %v5339
    %v6060 = vpop.permute.xlu0 %6059
    %6062 = vset.pattern.permute.xlu0 22
    %6063 = vperm.xlu0 %6062, %v5342
    %v6064 = vpop.permute.xlu0 %6063
    %6066 = vset.pattern.permute.xlu0 22
    %6067 = vperm.xlu0 %6066, %v5344
    %v6068 = vpop.permute.xlu0 %6067
    %v6070 = vmul.f32 %v6056, %v3502
    %v6071 = vmul.f32 %v6060, %v3503
    %v6072 = vmul.f32 %v6064, %v3504
    %v6073 = vmul.f32 %v6068, %v3505
    %v6074 = vadd.f32 %v6050, %v6070
    %v6075 = vadd.f32 %v6051, %v6071
    %v6076 = vadd.f32 %v6052, %v6072
    %v6077 = vadd.f32 %v6053, %v6073
    %6078 = vset.pattern.permute.xlu0 23
    %6079 = vperm.xlu0 %6078, %v5337
    %v6080 = vpop.permute.xlu0 %6079
    %6082 = vset.pattern.permute.xlu0 23
    %6083 = vperm.xlu0 %6082, %v5339
    %v6084 = vpop.permute.xlu0 %6083
    %6086 = vset.pattern.permute.xlu0 23
    %6087 = vperm.xlu0 %6086, %v5342
    %v6088 = vpop.permute.xlu0 %6087
    %6090 = vset.pattern.permute.xlu0 23
    %6091 = vperm.xlu0 %6090, %v5344
    %v6092 = vpop.permute.xlu0 %6091
    %v6094 = vmul.f32 %v6080, %v3502
    %v6095 = vmul.f32 %v6084, %v3503
    %v6096 = vmul.f32 %v6088, %v3504
    %v6097 = vmul.f32 %v6092, %v3505
    %6102 = vrot.lane.b32.xlu0 %v6094, 64
    %v6103 = vpop.permute.xlu0 %6102
    %6104 = vrot.lane.b32.xlu0 %v6095, 64
    %v6105 = vpop.permute.xlu0 %6104
    %6106 = vrot.lane.b32.xlu0 %v6096, 64
    %v6107 = vpop.permute.xlu0 %6106
    %6108 = vrot.lane.b32.xlu0 %v6097, 64
    %v6109 = vpop.permute.xlu0 %6108
    %v6114 = vadd.f32 %v6074, %v6103
    %v6115 = vadd.f32 %v6075, %v6105
    %v6116 = vadd.f32 %v6076, %v6107
    %v6117 = vadd.f32 %v6077, %v6109
    %6118 = vset.pattern.permute.xlu0 24
    %6119 = vperm.xlu0 %6118, %v5337
    %v6120 = vpop.permute.xlu0 %6119
    %6122 = vset.pattern.permute.xlu0 24
    %6123 = vperm.xlu0 %6122, %v5339
    %v6124 = vpop.permute.xlu0 %6123
    %6126 = vset.pattern.permute.xlu0 24
    %6127 = vperm.xlu0 %6126, %v5342
    %v6128 = vpop.permute.xlu0 %6127
    %6130 = vset.pattern.permute.xlu0 24
    %6131 = vperm.xlu0 %6130, %v5344
    %v6132 = vpop.permute.xlu0 %6131
    %v6134 = vmul.f32 %v6120, %v3570
    %v6135 = vmul.f32 %v6124, %v3571
    %v6136 = vmul.f32 %v6128, %v3572
    %v6137 = vmul.f32 %v6132, %v3573
    %v6138 = vadd.f32 %v6114, %v6134
    %v6139 = vadd.f32 %v6115, %v6135
    %v6140 = vadd.f32 %v6116, %v6136
    %v6141 = vadd.f32 %v6117, %v6137
    %6142 = vset.pattern.permute.xlu0 25
    %6143 = vperm.xlu0 %6142, %v5337
    %v6144 = vpop.permute.xlu0 %6143
    %6146 = vset.pattern.permute.xlu0 25
    %6147 = vperm.xlu0 %6146, %v5339
    %v6148 = vpop.permute.xlu0 %6147
    %6150 = vset.pattern.permute.xlu0 25
    %6151 = vperm.xlu0 %6150, %v5342
    %v6152 = vpop.permute.xlu0 %6151
    %6154 = vset.pattern.permute.xlu0 25
    %6155 = vperm.xlu0 %6154, %v5344
    %v6156 = vpop.permute.xlu0 %6155
    %v6158 = vmul.f32 %v6144, %v3570
    %v6159 = vmul.f32 %v6148, %v3571
    %v6160 = vmul.f32 %v6152, %v3572
    %v6161 = vmul.f32 %v6156, %v3573
    %6166 = vrot.lane.b32.xlu0 %v6158, 64
    %v6167 = vpop.permute.xlu0 %6166
    %6168 = vrot.lane.b32.xlu0 %v6159, 64
    %v6169 = vpop.permute.xlu0 %6168
    %6170 = vrot.lane.b32.xlu0 %v6160, 64
    %v6171 = vpop.permute.xlu0 %6170
    %6172 = vrot.lane.b32.xlu0 %v6161, 64
    %v6173 = vpop.permute.xlu0 %6172
    %v6178 = vadd.f32 %v6138, %v6167
    %v6179 = vadd.f32 %v6139, %v6169
    %v6180 = vadd.f32 %v6140, %v6171
    %v6181 = vadd.f32 %v6141, %v6173
    %6182 = vset.pattern.permute.xlu0 26
    %6183 = vperm.xlu0 %6182, %v5337
    %v6184 = vpop.permute.xlu0 %6183
    %6186 = vset.pattern.permute.xlu0 26
    %6187 = vperm.xlu0 %6186, %v5339
    %v6188 = vpop.permute.xlu0 %6187
    %6190 = vset.pattern.permute.xlu0 26
    %6191 = vperm.xlu0 %6190, %v5342
    %v6192 = vpop.permute.xlu0 %6191
    %6194 = vset.pattern.permute.xlu0 26
    %6195 = vperm.xlu0 %6194, %v5344
    %v6196 = vpop.permute.xlu0 %6195
    %v6198 = vmul.f32 %v6184, %v3638
    %v6199 = vmul.f32 %v6188, %v3639
    %v6200 = vmul.f32 %v6192, %v3640
    %v6201 = vmul.f32 %v6196, %v3641
    %v6202 = vadd.f32 %v6178, %v6198
    %v6203 = vadd.f32 %v6179, %v6199
    %v6204 = vadd.f32 %v6180, %v6200
    %v6205 = vadd.f32 %v6181, %v6201
    %6206 = vset.pattern.permute.xlu0 27
    %6207 = vperm.xlu0 %6206, %v5337
    %v6208 = vpop.permute.xlu0 %6207
    %6210 = vset.pattern.permute.xlu0 27
    %6211 = vperm.xlu0 %6210, %v5339
    %v6212 = vpop.permute.xlu0 %6211
    %6214 = vset.pattern.permute.xlu0 27
    %6215 = vperm.xlu0 %6214, %v5342
    %v6216 = vpop.permute.xlu0 %6215
    %6218 = vset.pattern.permute.xlu0 27
    %6219 = vperm.xlu0 %6218, %v5344
    %v6220 = vpop.permute.xlu0 %6219
    %v6222 = vmul.f32 %v6208, %v3638
    %v6223 = vmul.f32 %v6212, %v3639
    %v6224 = vmul.f32 %v6216, %v3640
    %v6225 = vmul.f32 %v6220, %v3641
    %6230 = vrot.lane.b32.xlu0 %v6222, 64
    %v6231 = vpop.permute.xlu0 %6230
    %6232 = vrot.lane.b32.xlu0 %v6223, 64
    %v6233 = vpop.permute.xlu0 %6232
    %6234 = vrot.lane.b32.xlu0 %v6224, 64
    %v6235 = vpop.permute.xlu0 %6234
    %6236 = vrot.lane.b32.xlu0 %v6225, 64
    %v6237 = vpop.permute.xlu0 %6236
    %v6242 = vadd.f32 %v6202, %v6231
    %v6243 = vadd.f32 %v6203, %v6233
    %v6244 = vadd.f32 %v6204, %v6235
    %v6245 = vadd.f32 %v6205, %v6237
    %6246 = vset.pattern.permute.xlu0 28
    %6247 = vperm.xlu0 %6246, %v5337
    %v6248 = vpop.permute.xlu0 %6247
    %6250 = vset.pattern.permute.xlu0 28
    %6251 = vperm.xlu0 %6250, %v5339
    %v6252 = vpop.permute.xlu0 %6251
    %6254 = vset.pattern.permute.xlu0 28
    %6255 = vperm.xlu0 %6254, %v5342
    %v6256 = vpop.permute.xlu0 %6255
    %6258 = vset.pattern.permute.xlu0 28
    %6259 = vperm.xlu0 %6258, %v5344
    %v6260 = vpop.permute.xlu0 %6259
    %v6262 = vmul.f32 %v6248, %v3706
    %v6263 = vmul.f32 %v6252, %v3707
    %v6264 = vmul.f32 %v6256, %v3708
    %v6265 = vmul.f32 %v6260, %v3709
    %v6266 = vadd.f32 %v6242, %v6262
    %v6267 = vadd.f32 %v6243, %v6263
    %v6268 = vadd.f32 %v6244, %v6264
    %v6269 = vadd.f32 %v6245, %v6265
    %6270 = vset.pattern.permute.xlu0 29
    %6271 = vperm.xlu0 %6270, %v5337
    %v6272 = vpop.permute.xlu0 %6271
    %6274 = vset.pattern.permute.xlu0 29
    %6275 = vperm.xlu0 %6274, %v5339
    %v6276 = vpop.permute.xlu0 %6275
    %6278 = vset.pattern.permute.xlu0 29
    %6279 = vperm.xlu0 %6278, %v5342
    %v6280 = vpop.permute.xlu0 %6279
    %6282 = vset.pattern.permute.xlu0 29
    %6283 = vperm.xlu0 %6282, %v5344
    %v6284 = vpop.permute.xlu0 %6283
    %v6286 = vmul.f32 %v6272, %v3706
    %v6287 = vmul.f32 %v6276, %v3707
    %v6288 = vmul.f32 %v6280, %v3708
    %v6289 = vmul.f32 %v6284, %v3709
    %6294 = vrot.lane.b32.xlu0 %v6286, 64
    %v6295 = vpop.permute.xlu0 %6294
    %6296 = vrot.lane.b32.xlu0 %v6287, 64
    %v6297 = vpop.permute.xlu0 %6296
    %6298 = vrot.lane.b32.xlu0 %v6288, 64
    %v6299 = vpop.permute.xlu0 %6298
    %6300 = vrot.lane.b32.xlu0 %v6289, 64
    %v6301 = vpop.permute.xlu0 %6300
    %v6306 = vadd.f32 %v6266, %v6295
    %v6307 = vadd.f32 %v6267, %v6297
    %v6308 = vadd.f32 %v6268, %v6299
    %v6309 = vadd.f32 %v6269, %v6301
    %6310 = vset.pattern.permute.xlu0 30
    %6311 = vperm.xlu0 %6310, %v5337
    %v6312 = vpop.permute.xlu0 %6311
    %6314 = vset.pattern.permute.xlu0 30
    %6315 = vperm.xlu0 %6314, %v5339
    %v6316 = vpop.permute.xlu0 %6315
    %6318 = vset.pattern.permute.xlu0 30
    %6319 = vperm.xlu0 %6318, %v5342
    %v6320 = vpop.permute.xlu0 %6319
    %6322 = vset.pattern.permute.xlu0 30
    %6323 = vperm.xlu0 %6322, %v5344
    %v6324 = vpop.permute.xlu0 %6323
    %v6326 = vmul.f32 %v6312, %v3774
    %v6327 = vmul.f32 %v6316, %v3775
    %v6328 = vmul.f32 %v6320, %v3776
    %v6329 = vmul.f32 %v6324, %v3777
    %v6330 = vadd.f32 %v6306, %v6326
    %v6331 = vadd.f32 %v6307, %v6327
    %v6332 = vadd.f32 %v6308, %v6328
    %v6333 = vadd.f32 %v6309, %v6329
    %6334 = vset.pattern.permute.xlu0 31
    %6335 = vperm.xlu0 %6334, %v5337
    %v6336 = vpop.permute.xlu0 %6335
    %6338 = vset.pattern.permute.xlu0 31
    %6339 = vperm.xlu0 %6338, %v5339
    %v6340 = vpop.permute.xlu0 %6339
    %6342 = vset.pattern.permute.xlu0 31
    %6343 = vperm.xlu0 %6342, %v5342
    %v6344 = vpop.permute.xlu0 %6343
    %6346 = vset.pattern.permute.xlu0 31
    %6347 = vperm.xlu0 %6346, %v5344
    %v6348 = vpop.permute.xlu0 %6347
    %v6350 = vmul.f32 %v6336, %v3774
    %v6351 = vmul.f32 %v6340, %v3775
    %v6352 = vmul.f32 %v6344, %v3776
    %v6353 = vmul.f32 %v6348, %v3777
    %6358 = vrot.lane.b32.xlu0 %v6350, 64
    %v6359 = vpop.permute.xlu0 %6358
    %6360 = vrot.lane.b32.xlu0 %v6351, 64
    %v6361 = vpop.permute.xlu0 %6360
    %6362 = vrot.lane.b32.xlu0 %v6352, 64
    %v6363 = vpop.permute.xlu0 %6362
    %6364 = vrot.lane.b32.xlu0 %v6353, 64
    %v6365 = vpop.permute.xlu0 %6364
    %v6370 = vadd.f32 %v6330, %v6359
    %v6371 = vadd.f32 %v6331, %v6361
    %v6372 = vadd.f32 %v6332, %v6363
    %v6373 = vadd.f32 %v6333, %v6365
    %6374 = vset.pattern.permute.xlu0 32
    %6375 = vperm.xlu0 %6374, %v5337
    %v6376 = vpop.permute.xlu0 %6375
    %6378 = vset.pattern.permute.xlu0 32
    %6379 = vperm.xlu0 %6378, %v5339
    %v6380 = vpop.permute.xlu0 %6379
    %6382 = vset.pattern.permute.xlu0 32
    %6383 = vperm.xlu0 %6382, %v5342
    %v6384 = vpop.permute.xlu0 %6383
    %6386 = vset.pattern.permute.xlu0 32
    %6387 = vperm.xlu0 %6386, %v5344
    %v6388 = vpop.permute.xlu0 %6387
    %v6390 = vmul.f32 %v6376, %v3842
    %v6391 = vmul.f32 %v6380, %v3843
    %v6392 = vmul.f32 %v6384, %v3844
    %v6393 = vmul.f32 %v6388, %v3845
    %v6394 = vadd.f32 %v6370, %v6390
    %v6395 = vadd.f32 %v6371, %v6391
    %v6396 = vadd.f32 %v6372, %v6392
    %v6397 = vadd.f32 %v6373, %v6393
    %6398 = vset.pattern.permute.xlu0 33
    %6399 = vperm.xlu0 %6398, %v5337
    %v6400 = vpop.permute.xlu0 %6399
    %6402 = vset.pattern.permute.xlu0 33
    %6403 = vperm.xlu0 %6402, %v5339
    %v6404 = vpop.permute.xlu0 %6403
    %6406 = vset.pattern.permute.xlu0 33
    %6407 = vperm.xlu0 %6406, %v5342
    %v6408 = vpop.permute.xlu0 %6407
    %6410 = vset.pattern.permute.xlu0 33
    %6411 = vperm.xlu0 %6410, %v5344
    %v6412 = vpop.permute.xlu0 %6411
    %v6414 = vmul.f32 %v6400, %v3842
    %v6415 = vmul.f32 %v6404, %v3843
    %v6416 = vmul.f32 %v6408, %v3844
    %v6417 = vmul.f32 %v6412, %v3845
    %6422 = vrot.lane.b32.xlu0 %v6414, 64
    %v6423 = vpop.permute.xlu0 %6422
    %6424 = vrot.lane.b32.xlu0 %v6415, 64
    %v6425 = vpop.permute.xlu0 %6424
    %6426 = vrot.lane.b32.xlu0 %v6416, 64
    %v6427 = vpop.permute.xlu0 %6426
    %6428 = vrot.lane.b32.xlu0 %v6417, 64
    %v6429 = vpop.permute.xlu0 %6428
    %v6434 = vadd.f32 %v6394, %v6423
    %v6435 = vadd.f32 %v6395, %v6425
    %v6436 = vadd.f32 %v6396, %v6427
    %v6437 = vadd.f32 %v6397, %v6429
    %6438 = vset.pattern.permute.xlu0 34
    %6439 = vperm.xlu0 %6438, %v5337
    %v6440 = vpop.permute.xlu0 %6439
    %6442 = vset.pattern.permute.xlu0 34
    %6443 = vperm.xlu0 %6442, %v5339
    %v6444 = vpop.permute.xlu0 %6443
    %6446 = vset.pattern.permute.xlu0 34
    %6447 = vperm.xlu0 %6446, %v5342
    %v6448 = vpop.permute.xlu0 %6447
    %6450 = vset.pattern.permute.xlu0 34
    %6451 = vperm.xlu0 %6450, %v5344
    %v6452 = vpop.permute.xlu0 %6451
    %v6454 = vmul.f32 %v6440, %v3910
    %v6455 = vmul.f32 %v6444, %v3911
    %v6456 = vmul.f32 %v6448, %v3912
    %v6457 = vmul.f32 %v6452, %v3913
    %v6458 = vadd.f32 %v6434, %v6454
    %v6459 = vadd.f32 %v6435, %v6455
    %v6460 = vadd.f32 %v6436, %v6456
    %v6461 = vadd.f32 %v6437, %v6457
    %6462 = vset.pattern.permute.xlu0 35
    %6463 = vperm.xlu0 %6462, %v5337
    %v6464 = vpop.permute.xlu0 %6463
    %6466 = vset.pattern.permute.xlu0 35
    %6467 = vperm.xlu0 %6466, %v5339
    %v6468 = vpop.permute.xlu0 %6467
    %6470 = vset.pattern.permute.xlu0 35
    %6471 = vperm.xlu0 %6470, %v5342
    %v6472 = vpop.permute.xlu0 %6471
    %6474 = vset.pattern.permute.xlu0 35
    %6475 = vperm.xlu0 %6474, %v5344
    %v6476 = vpop.permute.xlu0 %6475
    %v6478 = vmul.f32 %v6464, %v3910
    %v6479 = vmul.f32 %v6468, %v3911
    %v6480 = vmul.f32 %v6472, %v3912
    %v6481 = vmul.f32 %v6476, %v3913
    %6486 = vrot.lane.b32.xlu0 %v6478, 64
    %v6487 = vpop.permute.xlu0 %6486
    %6488 = vrot.lane.b32.xlu0 %v6479, 64
    %v6489 = vpop.permute.xlu0 %6488
    %6490 = vrot.lane.b32.xlu0 %v6480, 64
    %v6491 = vpop.permute.xlu0 %6490
    %6492 = vrot.lane.b32.xlu0 %v6481, 64
    %v6493 = vpop.permute.xlu0 %6492
    %v6498 = vadd.f32 %v6458, %v6487
    %v6499 = vadd.f32 %v6459, %v6489
    %v6500 = vadd.f32 %v6460, %v6491
    %v6501 = vadd.f32 %v6461, %v6493
    %6502 = vset.pattern.permute.xlu0 36
    %6503 = vperm.xlu0 %6502, %v5337
    %v6504 = vpop.permute.xlu0 %6503
    %6506 = vset.pattern.permute.xlu0 36
    %6507 = vperm.xlu0 %6506, %v5339
    %v6508 = vpop.permute.xlu0 %6507
    %6510 = vset.pattern.permute.xlu0 36
    %6511 = vperm.xlu0 %6510, %v5342
    %v6512 = vpop.permute.xlu0 %6511
    %6514 = vset.pattern.permute.xlu0 36
    %6515 = vperm.xlu0 %6514, %v5344
    %v6516 = vpop.permute.xlu0 %6515
    %v6518 = vmul.f32 %v6504, %v3978
    %v6519 = vmul.f32 %v6508, %v3979
    %v6520 = vmul.f32 %v6512, %v3980
    %v6521 = vmul.f32 %v6516, %v3981
    %v6522 = vadd.f32 %v6498, %v6518
    %v6523 = vadd.f32 %v6499, %v6519
    %v6524 = vadd.f32 %v6500, %v6520
    %v6525 = vadd.f32 %v6501, %v6521
    %6526 = vset.pattern.permute.xlu0 37
    %6527 = vperm.xlu0 %6526, %v5337
    %v6528 = vpop.permute.xlu0 %6527
    %6530 = vset.pattern.permute.xlu0 37
    %6531 = vperm.xlu0 %6530, %v5339
    %v6532 = vpop.permute.xlu0 %6531
    %6534 = vset.pattern.permute.xlu0 37
    %6535 = vperm.xlu0 %6534, %v5342
    %v6536 = vpop.permute.xlu0 %6535
    %6538 = vset.pattern.permute.xlu0 37
    %6539 = vperm.xlu0 %6538, %v5344
    %v6540 = vpop.permute.xlu0 %6539
    %v6542 = vmul.f32 %v6528, %v3978
    %v6543 = vmul.f32 %v6532, %v3979
    %v6544 = vmul.f32 %v6536, %v3980
    %v6545 = vmul.f32 %v6540, %v3981
    %6550 = vrot.lane.b32.xlu0 %v6542, 64
    %v6551 = vpop.permute.xlu0 %6550
    %6552 = vrot.lane.b32.xlu0 %v6543, 64
    %v6553 = vpop.permute.xlu0 %6552
    %6554 = vrot.lane.b32.xlu0 %v6544, 64
    %v6555 = vpop.permute.xlu0 %6554
    %6556 = vrot.lane.b32.xlu0 %v6545, 64
    %v6557 = vpop.permute.xlu0 %6556
    %v6562 = vadd.f32 %v6522, %v6551
    %v6563 = vadd.f32 %v6523, %v6553
    %v6564 = vadd.f32 %v6524, %v6555
    %v6565 = vadd.f32 %v6525, %v6557
    %6566 = vset.pattern.permute.xlu0 38
    %6567 = vperm.xlu0 %6566, %v5337
    %v6568 = vpop.permute.xlu0 %6567
    %6570 = vset.pattern.permute.xlu0 38
    %6571 = vperm.xlu0 %6570, %v5339
    %v6572 = vpop.permute.xlu0 %6571
    %6574 = vset.pattern.permute.xlu0 38
    %6575 = vperm.xlu0 %6574, %v5342
    %v6576 = vpop.permute.xlu0 %6575
    %6578 = vset.pattern.permute.xlu0 38
    %6579 = vperm.xlu0 %6578, %v5344
    %v6580 = vpop.permute.xlu0 %6579
    %v6582 = vmul.f32 %v6568, %v4046
    %v6583 = vmul.f32 %v6572, %v4047
    %v6584 = vmul.f32 %v6576, %v4048
    %v6585 = vmul.f32 %v6580, %v4049
    %v6586 = vadd.f32 %v6562, %v6582
    %v6587 = vadd.f32 %v6563, %v6583
    %v6588 = vadd.f32 %v6564, %v6584
    %v6589 = vadd.f32 %v6565, %v6585
    %6590 = vset.pattern.permute.xlu0 39
    %6591 = vperm.xlu0 %6590, %v5337
    %v6592 = vpop.permute.xlu0 %6591
    %6594 = vset.pattern.permute.xlu0 39
    %6595 = vperm.xlu0 %6594, %v5339
    %v6596 = vpop.permute.xlu0 %6595
    %6598 = vset.pattern.permute.xlu0 39
    %6599 = vperm.xlu0 %6598, %v5342
    %v6600 = vpop.permute.xlu0 %6599
    %6602 = vset.pattern.permute.xlu0 39
    %6603 = vperm.xlu0 %6602, %v5344
    %v6604 = vpop.permute.xlu0 %6603
    %v6606 = vmul.f32 %v6592, %v4046
    %v6607 = vmul.f32 %v6596, %v4047
    %v6608 = vmul.f32 %v6600, %v4048
    %v6609 = vmul.f32 %v6604, %v4049
    %6614 = vrot.lane.b32.xlu0 %v6606, 64
    %v6615 = vpop.permute.xlu0 %6614
    %6616 = vrot.lane.b32.xlu0 %v6607, 64
    %v6617 = vpop.permute.xlu0 %6616
    %6618 = vrot.lane.b32.xlu0 %v6608, 64
    %v6619 = vpop.permute.xlu0 %6618
    %6620 = vrot.lane.b32.xlu0 %v6609, 64
    %v6621 = vpop.permute.xlu0 %6620
    %v6626 = vadd.f32 %v6586, %v6615
    %v6627 = vadd.f32 %v6587, %v6617
    %v6628 = vadd.f32 %v6588, %v6619
    %v6629 = vadd.f32 %v6589, %v6621
    %6630 = vset.pattern.permute.xlu0 40
    %6631 = vperm.xlu0 %6630, %v5337
    %v6632 = vpop.permute.xlu0 %6631
    %6634 = vset.pattern.permute.xlu0 40
    %6635 = vperm.xlu0 %6634, %v5339
    %v6636 = vpop.permute.xlu0 %6635
    %6638 = vset.pattern.permute.xlu0 40
    %6639 = vperm.xlu0 %6638, %v5342
    %v6640 = vpop.permute.xlu0 %6639
    %6642 = vset.pattern.permute.xlu0 40
    %6643 = vperm.xlu0 %6642, %v5344
    %v6644 = vpop.permute.xlu0 %6643
    %v6646 = vmul.f32 %v6632, %v4114
    %v6647 = vmul.f32 %v6636, %v4115
    %v6648 = vmul.f32 %v6640, %v4116
    %v6649 = vmul.f32 %v6644, %v4117
    %v6650 = vadd.f32 %v6626, %v6646
    %v6651 = vadd.f32 %v6627, %v6647
    %v6652 = vadd.f32 %v6628, %v6648
    %v6653 = vadd.f32 %v6629, %v6649
    %6654 = vset.pattern.permute.xlu0 41
    %6655 = vperm.xlu0 %6654, %v5337
    %v6656 = vpop.permute.xlu0 %6655
    %6658 = vset.pattern.permute.xlu0 41
    %6659 = vperm.xlu0 %6658, %v5339
    %v6660 = vpop.permute.xlu0 %6659
    %6662 = vset.pattern.permute.xlu0 41
    %6663 = vperm.xlu0 %6662, %v5342
    %v6664 = vpop.permute.xlu0 %6663
    %6666 = vset.pattern.permute.xlu0 41
    %6667 = vperm.xlu0 %6666, %v5344
    %v6668 = vpop.permute.xlu0 %6667
    %v6670 = vmul.f32 %v6656, %v4114
    %v6671 = vmul.f32 %v6660, %v4115
    %v6672 = vmul.f32 %v6664, %v4116
    %v6673 = vmul.f32 %v6668, %v4117
    %6678 = vrot.lane.b32.xlu0 %v6670, 64
    %v6679 = vpop.permute.xlu0 %6678
    %6680 = vrot.lane.b32.xlu0 %v6671, 64
    %v6681 = vpop.permute.xlu0 %6680
    %6682 = vrot.lane.b32.xlu0 %v6672, 64
    %v6683 = vpop.permute.xlu0 %6682
    %6684 = vrot.lane.b32.xlu0 %v6673, 64
    %v6685 = vpop.permute.xlu0 %6684
    %v6690 = vadd.f32 %v6650, %v6679
    %v6691 = vadd.f32 %v6651, %v6681
    %v6692 = vadd.f32 %v6652, %v6683
    %v6693 = vadd.f32 %v6653, %v6685
    %6694 = vset.pattern.permute.xlu0 42
    %6695 = vperm.xlu0 %6694, %v5337
    %v6696 = vpop.permute.xlu0 %6695
    %6698 = vset.pattern.permute.xlu0 42
    %6699 = vperm.xlu0 %6698, %v5339
    %v6700 = vpop.permute.xlu0 %6699
    %6702 = vset.pattern.permute.xlu0 42
    %6703 = vperm.xlu0 %6702, %v5342
    %v6704 = vpop.permute.xlu0 %6703
    %6706 = vset.pattern.permute.xlu0 42
    %6707 = vperm.xlu0 %6706, %v5344
    %v6708 = vpop.permute.xlu0 %6707
    %v6710 = vmul.f32 %v6696, %v4182
    %v6711 = vmul.f32 %v6700, %v4183
    %v6712 = vmul.f32 %v6704, %v4184
    %v6713 = vmul.f32 %v6708, %v4185
    %v6714 = vadd.f32 %v6690, %v6710
    %v6715 = vadd.f32 %v6691, %v6711
    %v6716 = vadd.f32 %v6692, %v6712
    %v6717 = vadd.f32 %v6693, %v6713
    %6718 = vset.pattern.permute.xlu0 43
    %6719 = vperm.xlu0 %6718, %v5337
    %v6720 = vpop.permute.xlu0 %6719
    %6722 = vset.pattern.permute.xlu0 43
    %6723 = vperm.xlu0 %6722, %v5339
    %v6724 = vpop.permute.xlu0 %6723
    %6726 = vset.pattern.permute.xlu0 43
    %6727 = vperm.xlu0 %6726, %v5342
    %v6728 = vpop.permute.xlu0 %6727
    %6730 = vset.pattern.permute.xlu0 43
    %6731 = vperm.xlu0 %6730, %v5344
    %v6732 = vpop.permute.xlu0 %6731
    %v6734 = vmul.f32 %v6720, %v4182
    %v6735 = vmul.f32 %v6724, %v4183
    %v6736 = vmul.f32 %v6728, %v4184
    %v6737 = vmul.f32 %v6732, %v4185
    %6742 = vrot.lane.b32.xlu0 %v6734, 64
    %v6743 = vpop.permute.xlu0 %6742
    %6744 = vrot.lane.b32.xlu0 %v6735, 64
    %v6745 = vpop.permute.xlu0 %6744
    %6746 = vrot.lane.b32.xlu0 %v6736, 64
    %v6747 = vpop.permute.xlu0 %6746
    %6748 = vrot.lane.b32.xlu0 %v6737, 64
    %v6749 = vpop.permute.xlu0 %6748
    %v6754 = vadd.f32 %v6714, %v6743
    %v6755 = vadd.f32 %v6715, %v6745
    %v6756 = vadd.f32 %v6716, %v6747
    %v6757 = vadd.f32 %v6717, %v6749
    %6758 = vset.pattern.permute.xlu0 44
    %6759 = vperm.xlu0 %6758, %v5337
    %v6760 = vpop.permute.xlu0 %6759
    %6762 = vset.pattern.permute.xlu0 44
    %6763 = vperm.xlu0 %6762, %v5339
    %v6764 = vpop.permute.xlu0 %6763
    %6766 = vset.pattern.permute.xlu0 44
    %6767 = vperm.xlu0 %6766, %v5342
    %v6768 = vpop.permute.xlu0 %6767
    %6770 = vset.pattern.permute.xlu0 44
    %6771 = vperm.xlu0 %6770, %v5344
    %v6772 = vpop.permute.xlu0 %6771
    %v6774 = vmul.f32 %v6760, %v4250
    %v6775 = vmul.f32 %v6764, %v4251
    %v6776 = vmul.f32 %v6768, %v4252
    %v6777 = vmul.f32 %v6772, %v4253
    %v6778 = vadd.f32 %v6754, %v6774
    %v6779 = vadd.f32 %v6755, %v6775
    %v6780 = vadd.f32 %v6756, %v6776
    %v6781 = vadd.f32 %v6757, %v6777
    %6782 = vset.pattern.permute.xlu0 45
    %6783 = vperm.xlu0 %6782, %v5337
    %v6784 = vpop.permute.xlu0 %6783
    %6786 = vset.pattern.permute.xlu0 45
    %6787 = vperm.xlu0 %6786, %v5339
    %v6788 = vpop.permute.xlu0 %6787
    %6790 = vset.pattern.permute.xlu0 45
    %6791 = vperm.xlu0 %6790, %v5342
    %v6792 = vpop.permute.xlu0 %6791
    %6794 = vset.pattern.permute.xlu0 45
    %6795 = vperm.xlu0 %6794, %v5344
    %v6796 = vpop.permute.xlu0 %6795
    %v6798 = vmul.f32 %v6784, %v4250
    %v6799 = vmul.f32 %v6788, %v4251
    %v6800 = vmul.f32 %v6792, %v4252
    %v6801 = vmul.f32 %v6796, %v4253
    %6806 = vrot.lane.b32.xlu0 %v6798, 64
    %v6807 = vpop.permute.xlu0 %6806
    %6808 = vrot.lane.b32.xlu0 %v6799, 64
    %v6809 = vpop.permute.xlu0 %6808
    %6810 = vrot.lane.b32.xlu0 %v6800, 64
    %v6811 = vpop.permute.xlu0 %6810
    %6812 = vrot.lane.b32.xlu0 %v6801, 64
    %v6813 = vpop.permute.xlu0 %6812
    %v6818 = vadd.f32 %v6778, %v6807
    %v6819 = vadd.f32 %v6779, %v6809
    %v6820 = vadd.f32 %v6780, %v6811
    %v6821 = vadd.f32 %v6781, %v6813
    %6822 = vset.pattern.permute.xlu0 46
    %6823 = vperm.xlu0 %6822, %v5337
    %v6824 = vpop.permute.xlu0 %6823
    %6826 = vset.pattern.permute.xlu0 46
    %6827 = vperm.xlu0 %6826, %v5339
    %v6828 = vpop.permute.xlu0 %6827
    %6830 = vset.pattern.permute.xlu0 46
    %6831 = vperm.xlu0 %6830, %v5342
    %v6832 = vpop.permute.xlu0 %6831
    %6834 = vset.pattern.permute.xlu0 46
    %6835 = vperm.xlu0 %6834, %v5344
    %v6836 = vpop.permute.xlu0 %6835
    %v6838 = vmul.f32 %v6824, %v4318
    %v6839 = vmul.f32 %v6828, %v4319
    %v6840 = vmul.f32 %v6832, %v4320
    %v6841 = vmul.f32 %v6836, %v4321
    %v6842 = vadd.f32 %v6818, %v6838
    %v6843 = vadd.f32 %v6819, %v6839
    %v6844 = vadd.f32 %v6820, %v6840
    %v6845 = vadd.f32 %v6821, %v6841
    %6846 = vset.pattern.permute.xlu0 47
    %6847 = vperm.xlu0 %6846, %v5337
    %v6848 = vpop.permute.xlu0 %6847
    %6850 = vset.pattern.permute.xlu0 47
    %6851 = vperm.xlu0 %6850, %v5339
    %v6852 = vpop.permute.xlu0 %6851
    %6854 = vset.pattern.permute.xlu0 47
    %6855 = vperm.xlu0 %6854, %v5342
    %v6856 = vpop.permute.xlu0 %6855
    %6858 = vset.pattern.permute.xlu0 47
    %6859 = vperm.xlu0 %6858, %v5344
    %v6860 = vpop.permute.xlu0 %6859
    %v6862 = vmul.f32 %v6848, %v4318
    %v6863 = vmul.f32 %v6852, %v4319
    %v6864 = vmul.f32 %v6856, %v4320
    %v6865 = vmul.f32 %v6860, %v4321
    %6870 = vrot.lane.b32.xlu0 %v6862, 64
    %v6871 = vpop.permute.xlu0 %6870
    %6872 = vrot.lane.b32.xlu0 %v6863, 64
    %v6873 = vpop.permute.xlu0 %6872
    %6874 = vrot.lane.b32.xlu0 %v6864, 64
    %v6875 = vpop.permute.xlu0 %6874
    %6876 = vrot.lane.b32.xlu0 %v6865, 64
    %v6877 = vpop.permute.xlu0 %6876
    %v6882 = vadd.f32 %v6842, %v6871
    %v6883 = vadd.f32 %v6843, %v6873
    %v6884 = vadd.f32 %v6844, %v6875
    %v6885 = vadd.f32 %v6845, %v6877
    %6886 = vset.pattern.permute.xlu0 48
    %6887 = vperm.xlu0 %6886, %v5337
    %v6888 = vpop.permute.xlu0 %6887
    %6890 = vset.pattern.permute.xlu0 48
    %6891 = vperm.xlu0 %6890, %v5339
    %v6892 = vpop.permute.xlu0 %6891
    %6894 = vset.pattern.permute.xlu0 48
    %6895 = vperm.xlu0 %6894, %v5342
    %v6896 = vpop.permute.xlu0 %6895
    %6898 = vset.pattern.permute.xlu0 48
    %6899 = vperm.xlu0 %6898, %v5344
    %v6900 = vpop.permute.xlu0 %6899
    %v6902 = vmul.f32 %v6888, %v4386
    %v6903 = vmul.f32 %v6892, %v4387
    %v6904 = vmul.f32 %v6896, %v4388
    %v6905 = vmul.f32 %v6900, %v4389
    %v6906 = vadd.f32 %v6882, %v6902
    %v6907 = vadd.f32 %v6883, %v6903
    %v6908 = vadd.f32 %v6884, %v6904
    %v6909 = vadd.f32 %v6885, %v6905
    %6910 = vset.pattern.permute.xlu0 49
    %6911 = vperm.xlu0 %6910, %v5337
    %v6912 = vpop.permute.xlu0 %6911
    %6914 = vset.pattern.permute.xlu0 49
    %6915 = vperm.xlu0 %6914, %v5339
    %v6916 = vpop.permute.xlu0 %6915
    %6918 = vset.pattern.permute.xlu0 49
    %6919 = vperm.xlu0 %6918, %v5342
    %v6920 = vpop.permute.xlu0 %6919
    %6922 = vset.pattern.permute.xlu0 49
    %6923 = vperm.xlu0 %6922, %v5344
    %v6924 = vpop.permute.xlu0 %6923
    %v6926 = vmul.f32 %v6912, %v4386
    %v6927 = vmul.f32 %v6916, %v4387
    %v6928 = vmul.f32 %v6920, %v4388
    %v6929 = vmul.f32 %v6924, %v4389
    %6934 = vrot.lane.b32.xlu0 %v6926, 64
    %v6935 = vpop.permute.xlu0 %6934
    %6936 = vrot.lane.b32.xlu0 %v6927, 64
    %v6937 = vpop.permute.xlu0 %6936
    %6938 = vrot.lane.b32.xlu0 %v6928, 64
    %v6939 = vpop.permute.xlu0 %6938
    %6940 = vrot.lane.b32.xlu0 %v6929, 64
    %v6941 = vpop.permute.xlu0 %6940
    %v6946 = vadd.f32 %v6906, %v6935
    %v6947 = vadd.f32 %v6907, %v6937
    %v6948 = vadd.f32 %v6908, %v6939
    %v6949 = vadd.f32 %v6909, %v6941
    %6950 = vset.pattern.permute.xlu0 50
    %6951 = vperm.xlu0 %6950, %v5337
    %v6952 = vpop.permute.xlu0 %6951
    %6954 = vset.pattern.permute.xlu0 50
    %6955 = vperm.xlu0 %6954, %v5339
    %v6956 = vpop.permute.xlu0 %6955
    %6958 = vset.pattern.permute.xlu0 50
    %6959 = vperm.xlu0 %6958, %v5342
    %v6960 = vpop.permute.xlu0 %6959
    %6962 = vset.pattern.permute.xlu0 50
    %6963 = vperm.xlu0 %6962, %v5344
    %v6964 = vpop.permute.xlu0 %6963
    %v6966 = vmul.f32 %v6952, %v4454
    %v6967 = vmul.f32 %v6956, %v4455
    %v6968 = vmul.f32 %v6960, %v4456
    %v6969 = vmul.f32 %v6964, %v4457
    %v6970 = vadd.f32 %v6946, %v6966
    %v6971 = vadd.f32 %v6947, %v6967
    %v6972 = vadd.f32 %v6948, %v6968
    %v6973 = vadd.f32 %v6949, %v6969
    %6974 = vset.pattern.permute.xlu0 51
    %6975 = vperm.xlu0 %6974, %v5337
    %v6976 = vpop.permute.xlu0 %6975
    %6978 = vset.pattern.permute.xlu0 51
    %6979 = vperm.xlu0 %6978, %v5339
    %v6980 = vpop.permute.xlu0 %6979
    %6982 = vset.pattern.permute.xlu0 51
    %6983 = vperm.xlu0 %6982, %v5342
    %v6984 = vpop.permute.xlu0 %6983
    %6986 = vset.pattern.permute.xlu0 51
    %6987 = vperm.xlu0 %6986, %v5344
    %v6988 = vpop.permute.xlu0 %6987
    %v6990 = vmul.f32 %v6976, %v4454
    %v6991 = vmul.f32 %v6980, %v4455
    %v6992 = vmul.f32 %v6984, %v4456
    %v6993 = vmul.f32 %v6988, %v4457
    %6998 = vrot.lane.b32.xlu0 %v6990, 64
    %v6999 = vpop.permute.xlu0 %6998
    %7000 = vrot.lane.b32.xlu0 %v6991, 64
    %v7001 = vpop.permute.xlu0 %7000
    %7002 = vrot.lane.b32.xlu0 %v6992, 64
    %v7003 = vpop.permute.xlu0 %7002
    %7004 = vrot.lane.b32.xlu0 %v6993, 64
    %v7005 = vpop.permute.xlu0 %7004
    %v7010 = vadd.f32 %v6970, %v6999
    %v7011 = vadd.f32 %v6971, %v7001
    %v7012 = vadd.f32 %v6972, %v7003
    %v7013 = vadd.f32 %v6973, %v7005
    %7014 = vset.pattern.permute.xlu0 52
    %7015 = vperm.xlu0 %7014, %v5337
    %v7016 = vpop.permute.xlu0 %7015
    %7018 = vset.pattern.permute.xlu0 52
    %7019 = vperm.xlu0 %7018, %v5339
    %v7020 = vpop.permute.xlu0 %7019
    %7022 = vset.pattern.permute.xlu0 52
    %7023 = vperm.xlu0 %7022, %v5342
    %v7024 = vpop.permute.xlu0 %7023
    %7026 = vset.pattern.permute.xlu0 52
    %7027 = vperm.xlu0 %7026, %v5344
    %v7028 = vpop.permute.xlu0 %7027
    %v7030 = vmul.f32 %v7016, %v4522
    %v7031 = vmul.f32 %v7020, %v4523
    %v7032 = vmul.f32 %v7024, %v4524
    %v7033 = vmul.f32 %v7028, %v4525
    %v7034 = vadd.f32 %v7010, %v7030
    %v7035 = vadd.f32 %v7011, %v7031
    %v7036 = vadd.f32 %v7012, %v7032
    %v7037 = vadd.f32 %v7013, %v7033
    %7038 = vset.pattern.permute.xlu0 53
    %7039 = vperm.xlu0 %7038, %v5337
    %v7040 = vpop.permute.xlu0 %7039
    %7042 = vset.pattern.permute.xlu0 53
    %7043 = vperm.xlu0 %7042, %v5339
    %v7044 = vpop.permute.xlu0 %7043
    %7046 = vset.pattern.permute.xlu0 53
    %7047 = vperm.xlu0 %7046, %v5342
    %v7048 = vpop.permute.xlu0 %7047
    %7050 = vset.pattern.permute.xlu0 53
    %7051 = vperm.xlu0 %7050, %v5344
    %v7052 = vpop.permute.xlu0 %7051
    %v7054 = vmul.f32 %v7040, %v4522
    %v7055 = vmul.f32 %v7044, %v4523
    %v7056 = vmul.f32 %v7048, %v4524
    %v7057 = vmul.f32 %v7052, %v4525
    %7062 = vrot.lane.b32.xlu0 %v7054, 64
    %v7063 = vpop.permute.xlu0 %7062
    %7064 = vrot.lane.b32.xlu0 %v7055, 64
    %v7065 = vpop.permute.xlu0 %7064
    %7066 = vrot.lane.b32.xlu0 %v7056, 64
    %v7067 = vpop.permute.xlu0 %7066
    %7068 = vrot.lane.b32.xlu0 %v7057, 64
    %v7069 = vpop.permute.xlu0 %7068
    %v7074 = vadd.f32 %v7034, %v7063
    %v7075 = vadd.f32 %v7035, %v7065
    %v7076 = vadd.f32 %v7036, %v7067
    %v7077 = vadd.f32 %v7037, %v7069
    %7078 = vset.pattern.permute.xlu0 54
    %7079 = vperm.xlu0 %7078, %v5337
    %v7080 = vpop.permute.xlu0 %7079
    %7082 = vset.pattern.permute.xlu0 54
    %7083 = vperm.xlu0 %7082, %v5339
    %v7084 = vpop.permute.xlu0 %7083
    %7086 = vset.pattern.permute.xlu0 54
    %7087 = vperm.xlu0 %7086, %v5342
    %v7088 = vpop.permute.xlu0 %7087
    %7090 = vset.pattern.permute.xlu0 54
    %7091 = vperm.xlu0 %7090, %v5344
    %v7092 = vpop.permute.xlu0 %7091
    %v7094 = vmul.f32 %v7080, %v4590
    %v7095 = vmul.f32 %v7084, %v4591
    %v7096 = vmul.f32 %v7088, %v4592
    %v7097 = vmul.f32 %v7092, %v4593
    %v7098 = vadd.f32 %v7074, %v7094
    %v7099 = vadd.f32 %v7075, %v7095
    %v7100 = vadd.f32 %v7076, %v7096
    %v7101 = vadd.f32 %v7077, %v7097
    %7102 = vset.pattern.permute.xlu0 55
    %7103 = vperm.xlu0 %7102, %v5337
    %v7104 = vpop.permute.xlu0 %7103
    %7106 = vset.pattern.permute.xlu0 55
    %7107 = vperm.xlu0 %7106, %v5339
    %v7108 = vpop.permute.xlu0 %7107
    %7110 = vset.pattern.permute.xlu0 55
    %7111 = vperm.xlu0 %7110, %v5342
    %v7112 = vpop.permute.xlu0 %7111
    %7114 = vset.pattern.permute.xlu0 55
    %7115 = vperm.xlu0 %7114, %v5344
    %v7116 = vpop.permute.xlu0 %7115
    %v7118 = vmul.f32 %v7104, %v4590
    %v7119 = vmul.f32 %v7108, %v4591
    %v7120 = vmul.f32 %v7112, %v4592
    %v7121 = vmul.f32 %v7116, %v4593
    %7126 = vrot.lane.b32.xlu0 %v7118, 64
    %v7127 = vpop.permute.xlu0 %7126
    %7128 = vrot.lane.b32.xlu0 %v7119, 64
    %v7129 = vpop.permute.xlu0 %7128
    %7130 = vrot.lane.b32.xlu0 %v7120, 64
    %v7131 = vpop.permute.xlu0 %7130
    %7132 = vrot.lane.b32.xlu0 %v7121, 64
    %v7133 = vpop.permute.xlu0 %7132
    %v7138 = vadd.f32 %v7098, %v7127
    %v7139 = vadd.f32 %v7099, %v7129
    %v7140 = vadd.f32 %v7100, %v7131
    %v7141 = vadd.f32 %v7101, %v7133
    %7142 = vset.pattern.permute.xlu0 56
    %7143 = vperm.xlu0 %7142, %v5337
    %v7144 = vpop.permute.xlu0 %7143
    %7146 = vset.pattern.permute.xlu0 56
    %7147 = vperm.xlu0 %7146, %v5339
    %v7148 = vpop.permute.xlu0 %7147
    %7150 = vset.pattern.permute.xlu0 56
    %7151 = vperm.xlu0 %7150, %v5342
    %v7152 = vpop.permute.xlu0 %7151
    %7154 = vset.pattern.permute.xlu0 56
    %7155 = vperm.xlu0 %7154, %v5344
    %v7156 = vpop.permute.xlu0 %7155
    %v7158 = vmul.f32 %v7144, %v4658
    %v7159 = vmul.f32 %v7148, %v4659
    %v7160 = vmul.f32 %v7152, %v4660
    %v7161 = vmul.f32 %v7156, %v4661
    %v7162 = vadd.f32 %v7138, %v7158
    %v7163 = vadd.f32 %v7139, %v7159
    %v7164 = vadd.f32 %v7140, %v7160
    %v7165 = vadd.f32 %v7141, %v7161
    %7166 = vset.pattern.permute.xlu0 57
    %7167 = vperm.xlu0 %7166, %v5337
    %v7168 = vpop.permute.xlu0 %7167
    %7170 = vset.pattern.permute.xlu0 57
    %7171 = vperm.xlu0 %7170, %v5339
    %v7172 = vpop.permute.xlu0 %7171
    %7174 = vset.pattern.permute.xlu0 57
    %7175 = vperm.xlu0 %7174, %v5342
    %v7176 = vpop.permute.xlu0 %7175
    %7178 = vset.pattern.permute.xlu0 57
    %7179 = vperm.xlu0 %7178, %v5344
    %v7180 = vpop.permute.xlu0 %7179
    %v7182 = vmul.f32 %v7168, %v4658
    %v7183 = vmul.f32 %v7172, %v4659
    %v7184 = vmul.f32 %v7176, %v4660
    %v7185 = vmul.f32 %v7180, %v4661
    %7190 = vrot.lane.b32.xlu0 %v7182, 64
    %v7191 = vpop.permute.xlu0 %7190
    %7192 = vrot.lane.b32.xlu0 %v7183, 64
    %v7193 = vpop.permute.xlu0 %7192
    %7194 = vrot.lane.b32.xlu0 %v7184, 64
    %v7195 = vpop.permute.xlu0 %7194
    %7196 = vrot.lane.b32.xlu0 %v7185, 64
    %v7197 = vpop.permute.xlu0 %7196
    %v7202 = vadd.f32 %v7162, %v7191
    %v7203 = vadd.f32 %v7163, %v7193
    %v7204 = vadd.f32 %v7164, %v7195
    %v7205 = vadd.f32 %v7165, %v7197
    %7206 = vset.pattern.permute.xlu0 58
    %7207 = vperm.xlu0 %7206, %v5337
    %v7208 = vpop.permute.xlu0 %7207
    %7210 = vset.pattern.permute.xlu0 58
    %7211 = vperm.xlu0 %7210, %v5339
    %v7212 = vpop.permute.xlu0 %7211
    %7214 = vset.pattern.permute.xlu0 58
    %7215 = vperm.xlu0 %7214, %v5342
    %v7216 = vpop.permute.xlu0 %7215
    %7218 = vset.pattern.permute.xlu0 58
    %7219 = vperm.xlu0 %7218, %v5344
    %v7220 = vpop.permute.xlu0 %7219
    %v7222 = vmul.f32 %v7208, %v4726
    %v7223 = vmul.f32 %v7212, %v4727
    %v7224 = vmul.f32 %v7216, %v4728
    %v7225 = vmul.f32 %v7220, %v4729
    %v7226 = vadd.f32 %v7202, %v7222
    %v7227 = vadd.f32 %v7203, %v7223
    %v7228 = vadd.f32 %v7204, %v7224
    %v7229 = vadd.f32 %v7205, %v7225
    %7230 = vset.pattern.permute.xlu0 59
    %7231 = vperm.xlu0 %7230, %v5337
    %v7232 = vpop.permute.xlu0 %7231
    %7234 = vset.pattern.permute.xlu0 59
    %7235 = vperm.xlu0 %7234, %v5339
    %v7236 = vpop.permute.xlu0 %7235
    %7238 = vset.pattern.permute.xlu0 59
    %7239 = vperm.xlu0 %7238, %v5342
    %v7240 = vpop.permute.xlu0 %7239
    %7242 = vset.pattern.permute.xlu0 59
    %7243 = vperm.xlu0 %7242, %v5344
    %v7244 = vpop.permute.xlu0 %7243
    %v7246 = vmul.f32 %v7232, %v4726
    %v7247 = vmul.f32 %v7236, %v4727
    %v7248 = vmul.f32 %v7240, %v4728
    %v7249 = vmul.f32 %v7244, %v4729
    %7254 = vrot.lane.b32.xlu0 %v7246, 64
    %v7255 = vpop.permute.xlu0 %7254
    %7256 = vrot.lane.b32.xlu0 %v7247, 64
    %v7257 = vpop.permute.xlu0 %7256
    %7258 = vrot.lane.b32.xlu0 %v7248, 64
    %v7259 = vpop.permute.xlu0 %7258
    %7260 = vrot.lane.b32.xlu0 %v7249, 64
    %v7261 = vpop.permute.xlu0 %7260
    %v7266 = vadd.f32 %v7226, %v7255
    %v7267 = vadd.f32 %v7227, %v7257
    %v7268 = vadd.f32 %v7228, %v7259
    %v7269 = vadd.f32 %v7229, %v7261
    %7270 = vset.pattern.permute.xlu0 60
    %7271 = vperm.xlu0 %7270, %v5337
    %v7272 = vpop.permute.xlu0 %7271
    %7274 = vset.pattern.permute.xlu0 60
    %7275 = vperm.xlu0 %7274, %v5339
    %v7276 = vpop.permute.xlu0 %7275
    %7278 = vset.pattern.permute.xlu0 60
    %7279 = vperm.xlu0 %7278, %v5342
    %v7280 = vpop.permute.xlu0 %7279
    %7282 = vset.pattern.permute.xlu0 60
    %7283 = vperm.xlu0 %7282, %v5344
    %v7284 = vpop.permute.xlu0 %7283
    %v7286 = vmul.f32 %v7272, %v4794
    %v7287 = vmul.f32 %v7276, %v4795
    %v7288 = vmul.f32 %v7280, %v4796
    %v7289 = vmul.f32 %v7284, %v4797
    %v7290 = vadd.f32 %v7266, %v7286
    %v7291 = vadd.f32 %v7267, %v7287
    %v7292 = vadd.f32 %v7268, %v7288
    %v7293 = vadd.f32 %v7269, %v7289
    %7294 = vset.pattern.permute.xlu0 61
    %7295 = vperm.xlu0 %7294, %v5337
    %v7296 = vpop.permute.xlu0 %7295
    %7298 = vset.pattern.permute.xlu0 61
    %7299 = vperm.xlu0 %7298, %v5339
    %v7300 = vpop.permute.xlu0 %7299
    %7302 = vset.pattern.permute.xlu0 61
    %7303 = vperm.xlu0 %7302, %v5342
    %v7304 = vpop.permute.xlu0 %7303
    %7306 = vset.pattern.permute.xlu0 61
    %7307 = vperm.xlu0 %7306, %v5344
    %v7308 = vpop.permute.xlu0 %7307
    %v7310 = vmul.f32 %v7296, %v4794
    %v7311 = vmul.f32 %v7300, %v4795
    %v7312 = vmul.f32 %v7304, %v4796
    %v7313 = vmul.f32 %v7308, %v4797
    %7318 = vrot.lane.b32.xlu0 %v7310, 64
    %v7319 = vpop.permute.xlu0 %7318
    %7320 = vrot.lane.b32.xlu0 %v7311, 64
    %v7321 = vpop.permute.xlu0 %7320
    %7322 = vrot.lane.b32.xlu0 %v7312, 64
    %v7323 = vpop.permute.xlu0 %7322
    %7324 = vrot.lane.b32.xlu0 %v7313, 64
    %v7325 = vpop.permute.xlu0 %7324
    %v7330 = vadd.f32 %v7290, %v7319
    %v7331 = vadd.f32 %v7291, %v7321
    %v7332 = vadd.f32 %v7292, %v7323
    %v7333 = vadd.f32 %v7293, %v7325
    %7334 = vset.pattern.permute.xlu0 62
    %7335 = vperm.xlu0 %7334, %v5337
    %v7336 = vpop.permute.xlu0 %7335
    %7338 = vset.pattern.permute.xlu0 62
    %7339 = vperm.xlu0 %7338, %v5339
    %v7340 = vpop.permute.xlu0 %7339
    %7342 = vset.pattern.permute.xlu0 62
    %7343 = vperm.xlu0 %7342, %v5342
    %v7344 = vpop.permute.xlu0 %7343
    %7346 = vset.pattern.permute.xlu0 62
    %7347 = vperm.xlu0 %7346, %v5344
    %v7348 = vpop.permute.xlu0 %7347
    %v7350 = vmul.f32 %v7336, %v4862
    %v7351 = vmul.f32 %v7340, %v4863
    %v7352 = vmul.f32 %v7344, %v4864
    %v7353 = vmul.f32 %v7348, %v4865
    %v7354 = vadd.f32 %v7330, %v7350
    %v7355 = vadd.f32 %v7331, %v7351
    %v7356 = vadd.f32 %v7332, %v7352
    %v7357 = vadd.f32 %v7333, %v7353
    %7358 = vset.pattern.permute.xlu0 63
    %7359 = vperm.xlu0 %7358, %v5337
    %v7360 = vpop.permute.xlu0 %7359
    %7362 = vset.pattern.permute.xlu0 63
    %7363 = vperm.xlu0 %7362, %v5339
    %v7364 = vpop.permute.xlu0 %7363
    %7366 = vset.pattern.permute.xlu0 63
    %7367 = vperm.xlu0 %7366, %v5342
    %v7368 = vpop.permute.xlu0 %7367
    %7370 = vset.pattern.permute.xlu0 63
    %7371 = vperm.xlu0 %7370, %v5344
    %v7372 = vpop.permute.xlu0 %7371
    %v7374 = vmul.f32 %v7360, %v4862
    %v7375 = vmul.f32 %v7364, %v4863
    %v7376 = vmul.f32 %v7368, %v4864
    %v7377 = vmul.f32 %v7372, %v4865
    %7382 = vrot.lane.b32.xlu0 %v7374, 64
    %v7383 = vpop.permute.xlu0 %7382
    %7384 = vrot.lane.b32.xlu0 %v7375, 64
    %v7385 = vpop.permute.xlu0 %7384
    %7386 = vrot.lane.b32.xlu0 %v7376, 64
    %v7387 = vpop.permute.xlu0 %7386
    %7388 = vrot.lane.b32.xlu0 %v7377, 64
    %v7389 = vpop.permute.xlu0 %7388
    %v7394 = vadd.f32 %v7354, %v7383
    %v7395 = vadd.f32 %v7355, %v7385
    %v7396 = vadd.f32 %v7356, %v7387
    %v7397 = vadd.f32 %v7357, %v7389
    %v7398 = vpack.c.bf16 %v7395, %v7394
    %v7399 = vpack.c.bf16 %v7397, %v7396
    %7400 = vmatpush.bf16.msra.mxu0 0
    %7401 = vmatpush.bf16.msra.mxu0 0
    %7402 = vmatpush.bf16.msra.mxu0 0
    %7403 = vmatpush.bf16.msra.mxu0 0
    %7404 = vmatpush.bf16.msra.mxu0 0
    %7405 = vmatpush.bf16.msra.mxu0 0
    %7406 = vmatpush.bf16.msra.mxu0 %v7399
    %7407 = vmatpush.bf16.msra.mxu0 %v7398
    %7408 = vmatmul.bf16.gmra.mxu0 %v4933
    %v7409 = vpop.f32.mrf.mxu0
    %v7410 = vadd.f32 0.0, %v7409
    %v7411 = vpop.f32.mrf.mxu0
    %v7412 = vadd.f32 0.0, %v7411
    %7413 = vdwg.mxu0
    %v7414 = vmul.f32 %v254, %v7410
    %v7415 = vmul.f32 %v255, %v7412
    %v7417 = vsel %vm4975, %v5326, 0
    %7419 = vmatpush.bf16.msra.mxu0 0
    %7420 = vmatpush.bf16.msra.mxu0 0
    %7421 = vmatpush.bf16.msra.mxu0 0
    %7422 = vmatpush.bf16.msra.mxu0 0
    %7423 = vmatpush.bf16.msra.mxu0 %v4970
    %7424 = vmatpush.bf16.msra.mxu0 %v4969
    %7425 = vmatpush.bf16.msra.mxu0 %v4968
    %7426 = vmatpush.bf16.msra.mxu0 %v4967
    %7427 = vmatmul.bf16.gmra.mxu0 %v7417
    %v7428 = vpop.f32.mrf.mxu0
    %v7429 = vadd.f32 0.0, %v7428
    %v7430 = vpop.f32.mrf.mxu0
    %v7431 = vadd.f32 0.0, %v7430
    %7432 = vdwg.mxu0
    %v7433 = vadd.f32 %v7414, %v7429
    %v7434 = vadd.f32 %v7415, %v7431
    %v7435 = vadd.f32 %v7433, %v4996
    %v7436 = vadd.f32 %v7434, %v4996
    %v7437 = vmax.f32 %v7435, 0.0
    %v7438 = vmax.f32 %v7436, 0.0
    %v7439 = vpack.c.bf16 %v7438, %v7437
    %v7441 = vsel %vm4975, %v7439, 0
    %7443 = vmatpush.bf16.msra.mxu0 0
    %7444 = vmatpush.bf16.msra.mxu0 0
    %7445 = vmatpush.bf16.msra.mxu0 0
    %7446 = vmatpush.bf16.msra.mxu0 0
    %7447 = vmatpush.bf16.msra.mxu0 %v5059
    %7448 = vmatpush.bf16.msra.mxu0 %v5056
    %7449 = vmatpush.bf16.msra.mxu0 %v5053
    %7450 = vmatpush.bf16.msra.mxu0 %v5050
    %7451 = vmatmul.bf16.gmra.mxu0 %v7441
    %v7452 = vpop.f32.mrf.mxu0
    %v7453 = vadd.f32 %v5004, %v7452
    %v7454 = vpop.f32.mrf.mxu0
    %v7455 = vadd.f32 %v5004, %v7454
    %7456 = vdwg.mxu0
    %7457 = vmatpush.bf16.msra.mxu0 0
    %7458 = vmatpush.bf16.msra.mxu0 0
    %7459 = vmatpush.bf16.msra.mxu0 0
    %7460 = vmatpush.bf16.msra.mxu0 0
    %7461 = vmatpush.bf16.msra.mxu0 %v5060
    %7462 = vmatpush.bf16.msra.mxu0 %v5057
    %7463 = vmatpush.bf16.msra.mxu0 %v5054
    %7464 = vmatpush.bf16.msra.mxu0 %v5051
    %7465 = vmatmul.bf16.gmra.mxu0 %v7441
    %v7466 = vpop.f32.mrf.mxu0
    %v7467 = vadd.f32 %v5005, %v7466
    %v7468 = vpop.f32.mrf.mxu0
    %v7469 = vadd.f32 %v5005, %v7468
    %7470 = vdwg.mxu0
    %7471 = vmatpush.bf16.msra.mxu0 0
    %7472 = vmatpush.bf16.msra.mxu0 0
    %7473 = vmatpush.bf16.msra.mxu0 0
    %7474 = vmatpush.bf16.msra.mxu0 0
    %7475 = vmatpush.bf16.msra.mxu0 %v5061
    %7476 = vmatpush.bf16.msra.mxu0 %v5058
    %7477 = vmatpush.bf16.msra.mxu0 %v5055
    %7478 = vmatpush.bf16.msra.mxu0 %v5052
    %7479 = vmatmul.bf16.gmra.mxu0 %v7441
    %v7480 = vpop.f32.mrf.mxu0
    %v7481 = vadd.f32 %v5006, %v7480
    %v7482 = vpop.f32.mrf.mxu0
    %v7483 = vadd.f32 %v5006, %v7482
    %7484 = vdwg.mxu0
    %7485 = vmatpush.bf16.msra.mxu0 0
    %7486 = vmatpush.bf16.msra.mxu0 0
    %7487 = vmatpush.bf16.msra.mxu0 0
    %7488 = vmatpush.bf16.msra.mxu0 0
    %7489 = vmatpush.bf16.msra.mxu0 %v5175
    %7490 = vmatpush.bf16.msra.mxu0 %v5172
    %7491 = vmatpush.bf16.msra.mxu0 %v5169
    %7492 = vmatpush.bf16.msra.mxu0 %v5166
    %7493 = vmatmul.bf16.gmra.mxu0 %v7417
    %v7494 = vpop.f32.mrf.mxu0
    %v7495 = vadd.f32 %v5120, %v7494
    %v7496 = vpop.f32.mrf.mxu0
    %v7497 = vadd.f32 %v5120, %v7496
    %7498 = vdwg.mxu0
    %7499 = vmatpush.bf16.msra.mxu0 0
    %7500 = vmatpush.bf16.msra.mxu0 0
    %7501 = vmatpush.bf16.msra.mxu0 0
    %7502 = vmatpush.bf16.msra.mxu0 0
    %7503 = vmatpush.bf16.msra.mxu0 %v5176
    %7504 = vmatpush.bf16.msra.mxu0 %v5173
    %7505 = vmatpush.bf16.msra.mxu0 %v5170
    %7506 = vmatpush.bf16.msra.mxu0 %v5167
    %7507 = vmatmul.bf16.gmra.mxu0 %v7417
    %v7508 = vpop.f32.mrf.mxu0
    %v7509 = vadd.f32 %v5121, %v7508
    %v7510 = vpop.f32.mrf.mxu0
    %v7511 = vadd.f32 %v5121, %v7510
    %7512 = vdwg.mxu0
    %7513 = vmatpush.bf16.msra.mxu0 0
    %7514 = vmatpush.bf16.msra.mxu0 0
    %7515 = vmatpush.bf16.msra.mxu0 0
    %7516 = vmatpush.bf16.msra.mxu0 0
    %7517 = vmatpush.bf16.msra.mxu0 %v5177
    %7518 = vmatpush.bf16.msra.mxu0 %v5174
    %7519 = vmatpush.bf16.msra.mxu0 %v5171
    %7520 = vmatpush.bf16.msra.mxu0 %v5168
    %7521 = vmatmul.bf16.gmra.mxu0 %v7417
    %v7522 = vpop.f32.mrf.mxu0
    %v7523 = vadd.f32 %v5122, %v7522
    %v7524 = vpop.f32.mrf.mxu0
    %v7525 = vadd.f32 %v5122, %v7524
    %7526 = vdwg.mxu0
    %v7527 = vadd.f32 %v7453, %v7495
    %v7528 = vadd.f32 %v7455, %v7497
    %v7529 = vxor.u32 %v7527, 2147483648
    %v7530 = vxor.u32 %v7528, 2147483648
    %v7531 = vmul.f32 %v7529, 1.442695
    %v7532 = vpow.pop %v7531
    %v7533 = vmul.f32 %v7530, 1.442695
    %v7534 = vpow.pop %v7533
    %v7535 = vadd.f32 %v7532, 1.0
    %v7536 = vadd.f32 %v7534, 1.0
    %v7537 = vrcp.pop %v7535
    %v7538 = vmul.f32 %v7535, %v7537
    %v7539 = vsub.f32 1.0, %v7538
    %v7540 = vmul.f32 %v7537, %v7539
    %v7541 = vadd.f32 %v7537, %v7540
    %vm7542 = vweird.f32 %v7535
    %vm7543 = vweird.f32 %v7537
    %vm7544 = vmor %vm7542, %vm7543
    %v7545 = vsel %vm7544, %v7537, %v7541
    %v7546 = vand.u32 2147483647, %v7535
    %vm7547 = vcmp.eq.f32.partialorder %v7546, 8.507059e+37
    %v7548 = vand.u32 %v7535, 2147483648
    %v7549 = vor.u32 1.1754944e-38, %v7548
    %v7550 = vsel %vm7547, %v7549, %v7545
    %v7551 = vmul.f32 1.0, %v7550
    %v7552 = vrcp.pop %v7536
    %v7553 = vmul.f32 %v7536, %v7552
    %v7554 = vsub.f32 1.0, %v7553
    %v7555 = vmul.f32 %v7552, %v7554
    %v7556 = vadd.f32 %v7552, %v7555
    %vm7557 = vweird.f32 %v7536
    %vm7558 = vweird.f32 %v7552
    %vm7559 = vmor %vm7557, %vm7558
    %v7560 = vsel %vm7559, %v7552, %v7556
    %v7561 = vand.u32 2147483647, %v7536
    %vm7562 = vcmp.eq.f32.partialorder %v7561, 8.507059e+37
    %v7563 = vand.u32 %v7536, 2147483648
    %v7564 = vor.u32 1.1754944e-38, %v7563
    %v7565 = vsel %vm7562, %v7564, %v7560
    %v7566 = vmul.f32 1.0, %v7565
    %v7567 = vadd.f32 %v7467, %v7509
    %v7568 = vadd.f32 %v7469, %v7511
    %v7569 = vxor.u32 %v7567, 2147483648
    %v7570 = vxor.u32 %v7568, 2147483648
    %v7571 = vmul.f32 %v7569, 1.442695
    %v7572 = vpow.pop %v7571
    %v7573 = vmul.f32 %v7570, 1.442695
    %v7574 = vpow.pop %v7573
    %v7575 = vadd.f32 %v7572, 1.0
    %v7576 = vadd.f32 %v7574, 1.0
    %v7577 = vrcp.pop %v7575
    %v7578 = vmul.f32 %v7575, %v7577
    %v7579 = vsub.f32 1.0, %v7578
    %v7580 = vmul.f32 %v7577, %v7579
    %v7581 = vadd.f32 %v7577, %v7580
    %vm7582 = vweird.f32 %v7575
    %vm7583 = vweird.f32 %v7577
    %vm7584 = vmor %vm7582, %vm7583
    %v7585 = vsel %vm7584, %v7577, %v7581
    %v7586 = vand.u32 2147483647, %v7575
    %vm7587 = vcmp.eq.f32.partialorder %v7586, 8.507059e+37
    %v7588 = vand.u32 %v7575, 2147483648
    %v7589 = vor.u32 1.1754944e-38, %v7588
    %v7590 = vsel %vm7587, %v7589, %v7585
    %v7591 = vmul.f32 1.0, %v7590
    %v7592 = vrcp.pop %v7576
    %v7593 = vmul.f32 %v7576, %v7592
    %v7594 = vsub.f32 1.0, %v7593
    %v7595 = vmul.f32 %v7592, %v7594
    %v7596 = vadd.f32 %v7592, %v7595
    %vm7597 = vweird.f32 %v7576
    %vm7598 = vweird.f32 %v7592
    %vm7599 = vmor %vm7597, %vm7598
    %v7600 = vsel %vm7599, %v7592, %v7596
    %v7601 = vand.u32 2147483647, %v7576
    %vm7602 = vcmp.eq.f32.partialorder %v7601, 8.507059e+37
    %v7603 = vand.u32 %v7576, 2147483648
    %v7604 = vor.u32 1.1754944e-38, %v7603
    %v7605 = vsel %vm7602, %v7604, %v7600
    %v7606 = vmul.f32 1.0, %v7605
    %v7607 = vmul.f32 %v7551, %v7523
    %v7608 = vmul.f32 %v7566, %v7525
    %v7609 = vadd.f32 %v7481, %v7607
    %v7610 = vadd.f32 %v7483, %v7608
    %v7611 = vtanh.pop %v7609
    %v7612 = vtanh.pop %v7610
    %v7613 = vsub.f32 1.0, %v7591
    %v7614 = vsub.f32 1.0, %v7606
    %v7615 = vmul.f32 %v7613, %v7611
    %v7616 = vmul.f32 %v7614, %v7612
    %v7617 = vmul.f32 %v7591, %v5324
    %v7618 = vmul.f32 %v7606, %v5325
    %v7619 = vadd.f32 %v7615, %v7617
    %v7620 = vadd.f32 %v7616, %v7618
    %v7621 = vpack.c.bf16 %v7620, %v7619
    %7622 = vmatpush.bf16.msra.mxu0 0
    %7623 = vmatpush.bf16.msra.mxu0 0
    %7624 = vmatpush.bf16.msra.mxu0 0
    %7625 = vmatpush.bf16.msra.mxu0 0
    %7626 = vmatpush.bf16.msra.mxu0 0
    %7627 = vmatpush.bf16.msra.mxu0 0
    %7628 = vmatpush.bf16.msra.mxu0 0
    %7629 = vmatpush.bf16.msra.mxu0 %v7621
    %7630 = vmatmul.bf16.gmra.mxu0 %v2726
    %v7631 = vpop.f32.mrf.mxu0
    %v7632 = vadd.f32 0.0, %v7631
    %v7633 = vpop.f32.mrf.mxu0
    %v7634 = vadd.f32 0.0, %v7633
    %7635 = vmatmul.bf16.gmra.mxu0 %v2729
    %v7636 = vpop.f32.mrf.mxu0
    %v7637 = vadd.f32 0.0, %v7636
    %v7638 = vpop.f32.mrf.mxu0
    %v7639 = vadd.f32 0.0, %v7638
    %7640 = vdwg.mxu0
    %7642 = vset.pattern.permute.xlu0 0
    %7643 = vperm.xlu0 %7642, %v7632
    %v7644 = vpop.permute.xlu0 %7643
    %7647 = vset.pattern.permute.xlu0 0
    %7648 = vperm.xlu0 %7647, %v7634
    %v7649 = vpop.permute.xlu0 %7648
    %7652 = vset.pattern.permute.xlu0 0
    %7653 = vperm.xlu0 %7652, %v7637
    %v7654 = vpop.permute.xlu0 %7653
    %7657 = vset.pattern.permute.xlu0 0
    %7658 = vperm.xlu0 %7657, %v7639
    %v7659 = vpop.permute.xlu0 %7658
    %v7661 = vmul.f32 %v7644, %v2750
    %v7662 = vmul.f32 %v7649, %v2751
    %v7663 = vmul.f32 %v7654, %v2752
    %v7664 = vmul.f32 %v7659, %v2753
    %v7665 = vadd.f32 %v7661, 0.0
    %v7666 = vadd.f32 %v7662, 0.0
    %v7667 = vadd.f32 %v7663, 0.0
    %v7668 = vadd.f32 %v7664, 0.0
    %7669 = vset.pattern.permute.xlu0 1
    %7670 = vperm.xlu0 %7669, %v7632
    %v7671 = vpop.permute.xlu0 %7670
    %7673 = vset.pattern.permute.xlu0 1
    %7674 = vperm.xlu0 %7673, %v7634
    %v7675 = vpop.permute.xlu0 %7674
    %7677 = vset.pattern.permute.xlu0 1
    %7678 = vperm.xlu0 %7677, %v7637
    %v7679 = vpop.permute.xlu0 %7678
    %7681 = vset.pattern.permute.xlu0 1
    %7682 = vperm.xlu0 %7681, %v7639
    %v7683 = vpop.permute.xlu0 %7682
    %v7685 = vmul.f32 %v7671, %v2750
    %v7686 = vmul.f32 %v7675, %v2751
    %v7687 = vmul.f32 %v7679, %v2752
    %v7688 = vmul.f32 %v7683, %v2753
    %7693 = vrot.lane.b32.xlu0 %v7685, 64
    %v7694 = vpop.permute.xlu0 %7693
    %7695 = vrot.lane.b32.xlu0 %v7686, 64
    %v7696 = vpop.permute.xlu0 %7695
    %7697 = vrot.lane.b32.xlu0 %v7687, 64
    %v7698 = vpop.permute.xlu0 %7697
    %7699 = vrot.lane.b32.xlu0 %v7688, 64
    %v7700 = vpop.permute.xlu0 %7699
    %v7705 = vadd.f32 %v7665, %v7694
    %v7706 = vadd.f32 %v7666, %v7696
    %v7707 = vadd.f32 %v7667, %v7698
    %v7708 = vadd.f32 %v7668, %v7700
    %7709 = vset.pattern.permute.xlu0 2
    %7710 = vperm.xlu0 %7709, %v7632
    %v7711 = vpop.permute.xlu0 %7710
    %7713 = vset.pattern.permute.xlu0 2
    %7714 = vperm.xlu0 %7713, %v7634
    %v7715 = vpop.permute.xlu0 %7714
    %7717 = vset.pattern.permute.xlu0 2
    %7718 = vperm.xlu0 %7717, %v7637
    %v7719 = vpop.permute.xlu0 %7718
    %7721 = vset.pattern.permute.xlu0 2
    %7722 = vperm.xlu0 %7721, %v7639
    %v7723 = vpop.permute.xlu0 %7722
    %v7725 = vmul.f32 %v7711, %v2822
    %v7726 = vmul.f32 %v7715, %v2823
    %v7727 = vmul.f32 %v7719, %v2824
    %v7728 = vmul.f32 %v7723, %v2825
    %v7729 = vadd.f32 %v7705, %v7725
    %v7730 = vadd.f32 %v7706, %v7726
    %v7731 = vadd.f32 %v7707, %v7727
    %v7732 = vadd.f32 %v7708, %v7728
    %7733 = vset.pattern.permute.xlu0 3
    %7734 = vperm.xlu0 %7733, %v7632
    %v7735 = vpop.permute.xlu0 %7734
    %7737 = vset.pattern.permute.xlu0 3
    %7738 = vperm.xlu0 %7737, %v7634
    %v7739 = vpop.permute.xlu0 %7738
    %7741 = vset.pattern.permute.xlu0 3
    %7742 = vperm.xlu0 %7741, %v7637
    %v7743 = vpop.permute.xlu0 %7742
    %7745 = vset.pattern.permute.xlu0 3
    %7746 = vperm.xlu0 %7745, %v7639
    %v7747 = vpop.permute.xlu0 %7746
    %v7749 = vmul.f32 %v7735, %v2822
    %v7750 = vmul.f32 %v7739, %v2823
    %v7751 = vmul.f32 %v7743, %v2824
    %v7752 = vmul.f32 %v7747, %v2825
    %7757 = vrot.lane.b32.xlu0 %v7749, 64
    %v7758 = vpop.permute.xlu0 %7757
    %7759 = vrot.lane.b32.xlu0 %v7750, 64
    %v7760 = vpop.permute.xlu0 %7759
    %7761 = vrot.lane.b32.xlu0 %v7751, 64
    %v7762 = vpop.permute.xlu0 %7761
    %7763 = vrot.lane.b32.xlu0 %v7752, 64
    %v7764 = vpop.permute.xlu0 %7763
    %v7769 = vadd.f32 %v7729, %v7758
    %v7770 = vadd.f32 %v7730, %v7760
    %v7771 = vadd.f32 %v7731, %v7762
    %v7772 = vadd.f32 %v7732, %v7764
    %7773 = vset.pattern.permute.xlu0 4
    %7774 = vperm.xlu0 %7773, %v7632
    %v7775 = vpop.permute.xlu0 %7774
    %7777 = vset.pattern.permute.xlu0 4
    %7778 = vperm.xlu0 %7777, %v7634
    %v7779 = vpop.permute.xlu0 %7778
    %7781 = vset.pattern.permute.xlu0 4
    %7782 = vperm.xlu0 %7781, %v7637
    %v7783 = vpop.permute.xlu0 %7782
    %7785 = vset.pattern.permute.xlu0 4
    %7786 = vperm.xlu0 %7785, %v7639
    %v7787 = vpop.permute.xlu0 %7786
    %v7789 = vmul.f32 %v7775, %v2890
    %v7790 = vmul.f32 %v7779, %v2891
    %v7791 = vmul.f32 %v7783, %v2892
    %v7792 = vmul.f32 %v7787, %v2893
    %v7793 = vadd.f32 %v7769, %v7789
    %v7794 = vadd.f32 %v7770, %v7790
    %v7795 = vadd.f32 %v7771, %v7791
    %v7796 = vadd.f32 %v7772, %v7792
    %7797 = vset.pattern.permute.xlu0 5
    %7798 = vperm.xlu0 %7797, %v7632
    %v7799 = vpop.permute.xlu0 %7798
    %7801 = vset.pattern.permute.xlu0 5
    %7802 = vperm.xlu0 %7801, %v7634
    %v7803 = vpop.permute.xlu0 %7802
    %7805 = vset.pattern.permute.xlu0 5
    %7806 = vperm.xlu0 %7805, %v7637
    %v7807 = vpop.permute.xlu0 %7806
    %7809 = vset.pattern.permute.xlu0 5
    %7810 = vperm.xlu0 %7809, %v7639
    %v7811 = vpop.permute.xlu0 %7810
    %v7813 = vmul.f32 %v7799, %v2890
    %v7814 = vmul.f32 %v7803, %v2891
    %v7815 = vmul.f32 %v7807, %v2892
    %v7816 = vmul.f32 %v7811, %v2893
    %7821 = vrot.lane.b32.xlu0 %v7813, 64
    %v7822 = vpop.permute.xlu0 %7821
    %7823 = vrot.lane.b32.xlu0 %v7814, 64
    %v7824 = vpop.permute.xlu0 %7823
    %7825 = vrot.lane.b32.xlu0 %v7815, 64
    %v7826 = vpop.permute.xlu0 %7825
    %7827 = vrot.lane.b32.xlu0 %v7816, 64
    %v7828 = vpop.permute.xlu0 %7827
    %v7833 = vadd.f32 %v7793, %v7822
    %v7834 = vadd.f32 %v7794, %v7824
    %v7835 = vadd.f32 %v7795, %v7826
    %v7836 = vadd.f32 %v7796, %v7828
    %7837 = vset.pattern.permute.xlu0 6
    %7838 = vperm.xlu0 %7837, %v7632
    %v7839 = vpop.permute.xlu0 %7838
    %7841 = vset.pattern.permute.xlu0 6
    %7842 = vperm.xlu0 %7841, %v7634
    %v7843 = vpop.permute.xlu0 %7842
    %7845 = vset.pattern.permute.xlu0 6
    %7846 = vperm.xlu0 %7845, %v7637
    %v7847 = vpop.permute.xlu0 %7846
    %7849 = vset.pattern.permute.xlu0 6
    %7850 = vperm.xlu0 %7849, %v7639
    %v7851 = vpop.permute.xlu0 %7850
    %v7853 = vmul.f32 %v7839, %v2958
    %v7854 = vmul.f32 %v7843, %v2959
    %v7855 = vmul.f32 %v7847, %v2960
    %v7856 = vmul.f32 %v7851, %v2961
    %v7857 = vadd.f32 %v7833, %v7853
    %v7858 = vadd.f32 %v7834, %v7854
    %v7859 = vadd.f32 %v7835, %v7855
    %v7860 = vadd.f32 %v7836, %v7856
    %7861 = vset.pattern.permute.xlu0 7
    %7862 = vperm.xlu0 %7861, %v7632
    %v7863 = vpop.permute.xlu0 %7862
    %7865 = vset.pattern.permute.xlu0 7
    %7866 = vperm.xlu0 %7865, %v7634
    %v7867 = vpop.permute.xlu0 %7866
    %7869 = vset.pattern.permute.xlu0 7
    %7870 = vperm.xlu0 %7869, %v7637
    %v7871 = vpop.permute.xlu0 %7870
    %7873 = vset.pattern.permute.xlu0 7
    %7874 = vperm.xlu0 %7873, %v7639
    %v7875 = vpop.permute.xlu0 %7874
    %v7877 = vmul.f32 %v7863, %v2958
    %v7878 = vmul.f32 %v7867, %v2959
    %v7879 = vmul.f32 %v7871, %v2960
    %v7880 = vmul.f32 %v7875, %v2961
    %7885 = vrot.lane.b32.xlu0 %v7877, 64
    %v7886 = vpop.permute.xlu0 %7885
    %7887 = vrot.lane.b32.xlu0 %v7878, 64
    %v7888 = vpop.permute.xlu0 %7887
    %7889 = vrot.lane.b32.xlu0 %v7879, 64
    %v7890 = vpop.permute.xlu0 %7889
    %7891 = vrot.lane.b32.xlu0 %v7880, 64
    %v7892 = vpop.permute.xlu0 %7891
    %v7897 = vadd.f32 %v7857, %v7886
    %v7898 = vadd.f32 %v7858, %v7888
    %v7899 = vadd.f32 %v7859, %v7890
    %v7900 = vadd.f32 %v7860, %v7892
    %7901 = vset.pattern.permute.xlu0 8
    %7902 = vperm.xlu0 %7901, %v7632
    %v7903 = vpop.permute.xlu0 %7902
    %7905 = vset.pattern.permute.xlu0 8
    %7906 = vperm.xlu0 %7905, %v7634
    %v7907 = vpop.permute.xlu0 %7906
    %7909 = vset.pattern.permute.xlu0 8
    %7910 = vperm.xlu0 %7909, %v7637
    %v7911 = vpop.permute.xlu0 %7910
    %7913 = vset.pattern.permute.xlu0 8
    %7914 = vperm.xlu0 %7913, %v7639
    %v7915 = vpop.permute.xlu0 %7914
    %v7917 = vmul.f32 %v7903, %v3026
    %v7918 = vmul.f32 %v7907, %v3027
    %v7919 = vmul.f32 %v7911, %v3028
    %v7920 = vmul.f32 %v7915, %v3029
    %v7921 = vadd.f32 %v7897, %v7917
    %v7922 = vadd.f32 %v7898, %v7918
    %v7923 = vadd.f32 %v7899, %v7919
    %v7924 = vadd.f32 %v7900, %v7920
    %7925 = vset.pattern.permute.xlu0 9
    %7926 = vperm.xlu0 %7925, %v7632
    %v7927 = vpop.permute.xlu0 %7926
    %7929 = vset.pattern.permute.xlu0 9
    %7930 = vperm.xlu0 %7929, %v7634
    %v7931 = vpop.permute.xlu0 %7930
    %7933 = vset.pattern.permute.xlu0 9
    %7934 = vperm.xlu0 %7933, %v7637
    %v7935 = vpop.permute.xlu0 %7934
    %7937 = vset.pattern.permute.xlu0 9
    %7938 = vperm.xlu0 %7937, %v7639
    %v7939 = vpop.permute.xlu0 %7938
    %v7941 = vmul.f32 %v7927, %v3026
    %v7942 = vmul.f32 %v7931, %v3027
    %v7943 = vmul.f32 %v7935, %v3028
    %v7944 = vmul.f32 %v7939, %v3029
    %7949 = vrot.lane.b32.xlu0 %v7941, 64
    %v7950 = vpop.permute.xlu0 %7949
    %7951 = vrot.lane.b32.xlu0 %v7942, 64
    %v7952 = vpop.permute.xlu0 %7951
    %7953 = vrot.lane.b32.xlu0 %v7943, 64
    %v7954 = vpop.permute.xlu0 %7953
    %7955 = vrot.lane.b32.xlu0 %v7944, 64
    %v7956 = vpop.permute.xlu0 %7955
    %v7961 = vadd.f32 %v7921, %v7950
    %v7962 = vadd.f32 %v7922, %v7952
    %v7963 = vadd.f32 %v7923, %v7954
    %v7964 = vadd.f32 %v7924, %v7956
    %7965 = vset.pattern.permute.xlu0 10
    %7966 = vperm.xlu0 %7965, %v7632
    %v7967 = vpop.permute.xlu0 %7966
    %7969 = vset.pattern.permute.xlu0 10
    %7970 = vperm.xlu0 %7969, %v7634
    %v7971 = vpop.permute.xlu0 %7970
    %7973 = vset.pattern.permute.xlu0 10
    %7974 = vperm.xlu0 %7973, %v7637
    %v7975 = vpop.permute.xlu0 %7974
    %7977 = vset.pattern.permute.xlu0 10
    %7978 = vperm.xlu0 %7977, %v7639
    %v7979 = vpop.permute.xlu0 %7978
    %v7981 = vmul.f32 %v7967, %v3094
    %v7982 = vmul.f32 %v7971, %v3095
    %v7983 = vmul.f32 %v7975, %v3096
    %v7984 = vmul.f32 %v7979, %v3097
    %v7985 = vadd.f32 %v7961, %v7981
    %v7986 = vadd.f32 %v7962, %v7982
    %v7987 = vadd.f32 %v7963, %v7983
    %v7988 = vadd.f32 %v7964, %v7984
    %7989 = vset.pattern.permute.xlu0 11
    %7990 = vperm.xlu0 %7989, %v7632
    %v7991 = vpop.permute.xlu0 %7990
    %7993 = vset.pattern.permute.xlu0 11
    %7994 = vperm.xlu0 %7993, %v7634
    %v7995 = vpop.permute.xlu0 %7994
    %7997 = vset.pattern.permute.xlu0 11
    %7998 = vperm.xlu0 %7997, %v7637
    %v7999 = vpop.permute.xlu0 %7998
    %8001 = vset.pattern.permute.xlu0 11
    %8002 = vperm.xlu0 %8001, %v7639
    %v8003 = vpop.permute.xlu0 %8002
    %v8005 = vmul.f32 %v7991, %v3094
    %v8006 = vmul.f32 %v7995, %v3095
    %v8007 = vmul.f32 %v7999, %v3096
    %v8008 = vmul.f32 %v8003, %v3097
    %8013 = vrot.lane.b32.xlu0 %v8005, 64
    %v8014 = vpop.permute.xlu0 %8013
    %8015 = vrot.lane.b32.xlu0 %v8006, 64
    %v8016 = vpop.permute.xlu0 %8015
    %8017 = vrot.lane.b32.xlu0 %v8007, 64
    %v8018 = vpop.permute.xlu0 %8017
    %8019 = vrot.lane.b32.xlu0 %v8008, 64
    %v8020 = vpop.permute.xlu0 %8019
    %v8025 = vadd.f32 %v7985, %v8014
    %v8026 = vadd.f32 %v7986, %v8016
    %v8027 = vadd.f32 %v7987, %v8018
    %v8028 = vadd.f32 %v7988, %v8020
    %8029 = vset.pattern.permute.xlu0 12
    %8030 = vperm.xlu0 %8029, %v7632
    %v8031 = vpop.permute.xlu0 %8030
    %8033 = vset.pattern.permute.xlu0 12
    %8034 = vperm.xlu0 %8033, %v7634
    %v8035 = vpop.permute.xlu0 %8034
    %8037 = vset.pattern.permute.xlu0 12
    %8038 = vperm.xlu0 %8037, %v7637
    %v8039 = vpop.permute.xlu0 %8038
    %8041 = vset.pattern.permute.xlu0 12
    %8042 = vperm.xlu0 %8041, %v7639
    %v8043 = vpop.permute.xlu0 %8042
    %v8045 = vmul.f32 %v8031, %v3162
    %v8046 = vmul.f32 %v8035, %v3163
    %v8047 = vmul.f32 %v8039, %v3164
    %v8048 = vmul.f32 %v8043, %v3165
    %v8049 = vadd.f32 %v8025, %v8045
    %v8050 = vadd.f32 %v8026, %v8046
    %v8051 = vadd.f32 %v8027, %v8047
    %v8052 = vadd.f32 %v8028, %v8048
    %8053 = vset.pattern.permute.xlu0 13
    %8054 = vperm.xlu0 %8053, %v7632
    %v8055 = vpop.permute.xlu0 %8054
    %8057 = vset.pattern.permute.xlu0 13
    %8058 = vperm.xlu0 %8057, %v7634
    %v8059 = vpop.permute.xlu0 %8058
    %8061 = vset.pattern.permute.xlu0 13
    %8062 = vperm.xlu0 %8061, %v7637
    %v8063 = vpop.permute.xlu0 %8062
    %8065 = vset.pattern.permute.xlu0 13
    %8066 = vperm.xlu0 %8065, %v7639
    %v8067 = vpop.permute.xlu0 %8066
    %v8069 = vmul.f32 %v8055, %v3162
    %v8070 = vmul.f32 %v8059, %v3163
    %v8071 = vmul.f32 %v8063, %v3164
    %v8072 = vmul.f32 %v8067, %v3165
    %8077 = vrot.lane.b32.xlu0 %v8069, 64
    %v8078 = vpop.permute.xlu0 %8077
    %8079 = vrot.lane.b32.xlu0 %v8070, 64
    %v8080 = vpop.permute.xlu0 %8079
    %8081 = vrot.lane.b32.xlu0 %v8071, 64
    %v8082 = vpop.permute.xlu0 %8081
    %8083 = vrot.lane.b32.xlu0 %v8072, 64
    %v8084 = vpop.permute.xlu0 %8083
    %v8089 = vadd.f32 %v8049, %v8078
    %v8090 = vadd.f32 %v8050, %v8080
    %v8091 = vadd.f32 %v8051, %v8082
    %v8092 = vadd.f32 %v8052, %v8084
    %8093 = vset.pattern.permute.xlu0 14
    %8094 = vperm.xlu0 %8093, %v7632
    %v8095 = vpop.permute.xlu0 %8094
    %8097 = vset.pattern.permute.xlu0 14
    %8098 = vperm.xlu0 %8097, %v7634
    %v8099 = vpop.permute.xlu0 %8098
    %8101 = vset.pattern.permute.xlu0 14
    %8102 = vperm.xlu0 %8101, %v7637
    %v8103 = vpop.permute.xlu0 %8102
    %8105 = vset.pattern.permute.xlu0 14
    %8106 = vperm.xlu0 %8105, %v7639
    %v8107 = vpop.permute.xlu0 %8106
    %v8109 = vmul.f32 %v8095, %v3230
    %v8110 = vmul.f32 %v8099, %v3231
    %v8111 = vmul.f32 %v8103, %v3232
    %v8112 = vmul.f32 %v8107, %v3233
    %v8113 = vadd.f32 %v8089, %v8109
    %v8114 = vadd.f32 %v8090, %v8110
    %v8115 = vadd.f32 %v8091, %v8111
    %v8116 = vadd.f32 %v8092, %v8112
    %8117 = vset.pattern.permute.xlu0 15
    %8118 = vperm.xlu0 %8117, %v7632
    %v8119 = vpop.permute.xlu0 %8118
    %8121 = vset.pattern.permute.xlu0 15
    %8122 = vperm.xlu0 %8121, %v7634
    %v8123 = vpop.permute.xlu0 %8122
    %8125 = vset.pattern.permute.xlu0 15
    %8126 = vperm.xlu0 %8125, %v7637
    %v8127 = vpop.permute.xlu0 %8126
    %8129 = vset.pattern.permute.xlu0 15
    %8130 = vperm.xlu0 %8129, %v7639
    %v8131 = vpop.permute.xlu0 %8130
    %v8133 = vmul.f32 %v8119, %v3230
    %v8134 = vmul.f32 %v8123, %v3231
    %v8135 = vmul.f32 %v8127, %v3232
    %v8136 = vmul.f32 %v8131, %v3233
    %8141 = vrot.lane.b32.xlu0 %v8133, 64
    %v8142 = vpop.permute.xlu0 %8141
    %8143 = vrot.lane.b32.xlu0 %v8134, 64
    %v8144 = vpop.permute.xlu0 %8143
    %8145 = vrot.lane.b32.xlu0 %v8135, 64
    %v8146 = vpop.permute.xlu0 %8145
    %8147 = vrot.lane.b32.xlu0 %v8136, 64
    %v8148 = vpop.permute.xlu0 %8147
    %v8153 = vadd.f32 %v8113, %v8142
    %v8154 = vadd.f32 %v8114, %v8144
    %v8155 = vadd.f32 %v8115, %v8146
    %v8156 = vadd.f32 %v8116, %v8148
    %8157 = vset.pattern.permute.xlu0 16
    %8158 = vperm.xlu0 %8157, %v7632
    %v8159 = vpop.permute.xlu0 %8158
    %8161 = vset.pattern.permute.xlu0 16
    %8162 = vperm.xlu0 %8161, %v7634
    %v8163 = vpop.permute.xlu0 %8162
    %8165 = vset.pattern.permute.xlu0 16
    %8166 = vperm.xlu0 %8165, %v7637
    %v8167 = vpop.permute.xlu0 %8166
    %8169 = vset.pattern.permute.xlu0 16
    %8170 = vperm.xlu0 %8169, %v7639
    %v8171 = vpop.permute.xlu0 %8170
    %v8173 = vmul.f32 %v8159, %v3298
    %v8174 = vmul.f32 %v8163, %v3299
    %v8175 = vmul.f32 %v8167, %v3300
    %v8176 = vmul.f32 %v8171, %v3301
    %v8177 = vadd.f32 %v8153, %v8173
    %v8178 = vadd.f32 %v8154, %v8174
    %v8179 = vadd.f32 %v8155, %v8175
    %v8180 = vadd.f32 %v8156, %v8176
    %8181 = vset.pattern.permute.xlu0 17
    %8182 = vperm.xlu0 %8181, %v7632
    %v8183 = vpop.permute.xlu0 %8182
    %8185 = vset.pattern.permute.xlu0 17
    %8186 = vperm.xlu0 %8185, %v7634
    %v8187 = vpop.permute.xlu0 %8186
    %8189 = vset.pattern.permute.xlu0 17
    %8190 = vperm.xlu0 %8189, %v7637
    %v8191 = vpop.permute.xlu0 %8190
    %8193 = vset.pattern.permute.xlu0 17
    %8194 = vperm.xlu0 %8193, %v7639
    %v8195 = vpop.permute.xlu0 %8194
    %v8197 = vmul.f32 %v8183, %v3298
    %v8198 = vmul.f32 %v8187, %v3299
    %v8199 = vmul.f32 %v8191, %v3300
    %v8200 = vmul.f32 %v8195, %v3301
    %8205 = vrot.lane.b32.xlu0 %v8197, 64
    %v8206 = vpop.permute.xlu0 %8205
    %8207 = vrot.lane.b32.xlu0 %v8198, 64
    %v8208 = vpop.permute.xlu0 %8207
    %8209 = vrot.lane.b32.xlu0 %v8199, 64
    %v8210 = vpop.permute.xlu0 %8209
    %8211 = vrot.lane.b32.xlu0 %v8200, 64
    %v8212 = vpop.permute.xlu0 %8211
    %v8217 = vadd.f32 %v8177, %v8206
    %v8218 = vadd.f32 %v8178, %v8208
    %v8219 = vadd.f32 %v8179, %v8210
    %v8220 = vadd.f32 %v8180, %v8212
    %8221 = vset.pattern.permute.xlu0 18
    %8222 = vperm.xlu0 %8221, %v7632
    %v8223 = vpop.permute.xlu0 %8222
    %8225 = vset.pattern.permute.xlu0 18
    %8226 = vperm.xlu0 %8225, %v7634
    %v8227 = vpop.permute.xlu0 %8226
    %8229 = vset.pattern.permute.xlu0 18
    %8230 = vperm.xlu0 %8229, %v7637
    %v8231 = vpop.permute.xlu0 %8230
    %8233 = vset.pattern.permute.xlu0 18
    %8234 = vperm.xlu0 %8233, %v7639
    %v8235 = vpop.permute.xlu0 %8234
    %v8237 = vmul.f32 %v8223, %v3366
    %v8238 = vmul.f32 %v8227, %v3367
    %v8239 = vmul.f32 %v8231, %v3368
    %v8240 = vmul.f32 %v8235, %v3369
    %v8241 = vadd.f32 %v8217, %v8237
    %v8242 = vadd.f32 %v8218, %v8238
    %v8243 = vadd.f32 %v8219, %v8239
    %v8244 = vadd.f32 %v8220, %v8240
    %8245 = vset.pattern.permute.xlu0 19
    %8246 = vperm.xlu0 %8245, %v7632
    %v8247 = vpop.permute.xlu0 %8246
    %8249 = vset.pattern.permute.xlu0 19
    %8250 = vperm.xlu0 %8249, %v7634
    %v8251 = vpop.permute.xlu0 %8250
    %8253 = vset.pattern.permute.xlu0 19
    %8254 = vperm.xlu0 %8253, %v7637
    %v8255 = vpop.permute.xlu0 %8254
    %8257 = vset.pattern.permute.xlu0 19
    %8258 = vperm.xlu0 %8257, %v7639
    %v8259 = vpop.permute.xlu0 %8258
    %v8261 = vmul.f32 %v8247, %v3366
    %v8262 = vmul.f32 %v8251, %v3367
    %v8263 = vmul.f32 %v8255, %v3368
    %v8264 = vmul.f32 %v8259, %v3369
    %8269 = vrot.lane.b32.xlu0 %v8261, 64
    %v8270 = vpop.permute.xlu0 %8269
    %8271 = vrot.lane.b32.xlu0 %v8262, 64
    %v8272 = vpop.permute.xlu0 %8271
    %8273 = vrot.lane.b32.xlu0 %v8263, 64
    %v8274 = vpop.permute.xlu0 %8273
    %8275 = vrot.lane.b32.xlu0 %v8264, 64
    %v8276 = vpop.permute.xlu0 %8275
    %v8281 = vadd.f32 %v8241, %v8270
    %v8282 = vadd.f32 %v8242, %v8272
    %v8283 = vadd.f32 %v8243, %v8274
    %v8284 = vadd.f32 %v8244, %v8276
    %8285 = vset.pattern.permute.xlu0 20
    %8286 = vperm.xlu0 %8285, %v7632
    %v8287 = vpop.permute.xlu0 %8286
    %8289 = vset.pattern.permute.xlu0 20
    %8290 = vperm.xlu0 %8289, %v7634
    %v8291 = vpop.permute.xlu0 %8290
    %8293 = vset.pattern.permute.xlu0 20
    %8294 = vperm.xlu0 %8293, %v7637
    %v8295 = vpop.permute.xlu0 %8294
    %8297 = vset.pattern.permute.xlu0 20
    %8298 = vperm.xlu0 %8297, %v7639
    %v8299 = vpop.permute.xlu0 %8298
    %v8301 = vmul.f32 %v8287, %v3434
    %v8302 = vmul.f32 %v8291, %v3435
    %v8303 = vmul.f32 %v8295, %v3436
    %v8304 = vmul.f32 %v8299, %v3437
    %v8305 = vadd.f32 %v8281, %v8301
    %v8306 = vadd.f32 %v8282, %v8302
    %v8307 = vadd.f32 %v8283, %v8303
    %v8308 = vadd.f32 %v8284, %v8304
    %8309 = vset.pattern.permute.xlu0 21
    %8310 = vperm.xlu0 %8309, %v7632
    %v8311 = vpop.permute.xlu0 %8310
    %8313 = vset.pattern.permute.xlu0 21
    %8314 = vperm.xlu0 %8313, %v7634
    %v8315 = vpop.permute.xlu0 %8314
    %8317 = vset.pattern.permute.xlu0 21
    %8318 = vperm.xlu0 %8317, %v7637
    %v8319 = vpop.permute.xlu0 %8318
    %8321 = vset.pattern.permute.xlu0 21
    %8322 = vperm.xlu0 %8321, %v7639
    %v8323 = vpop.permute.xlu0 %8322
    %v8325 = vmul.f32 %v8311, %v3434
    %v8326 = vmul.f32 %v8315, %v3435
    %v8327 = vmul.f32 %v8319, %v3436
    %v8328 = vmul.f32 %v8323, %v3437
    %8333 = vrot.lane.b32.xlu0 %v8325, 64
    %v8334 = vpop.permute.xlu0 %8333
    %8335 = vrot.lane.b32.xlu0 %v8326, 64
    %v8336 = vpop.permute.xlu0 %8335
    %8337 = vrot.lane.b32.xlu0 %v8327, 64
    %v8338 = vpop.permute.xlu0 %8337
    %8339 = vrot.lane.b32.xlu0 %v8328, 64
    %v8340 = vpop.permute.xlu0 %8339
    %v8345 = vadd.f32 %v8305, %v8334
    %v8346 = vadd.f32 %v8306, %v8336
    %v8347 = vadd.f32 %v8307, %v8338
    %v8348 = vadd.f32 %v8308, %v8340
    %8349 = vset.pattern.permute.xlu0 22
    %8350 = vperm.xlu0 %8349, %v7632
    %v8351 = vpop.permute.xlu0 %8350
    %8353 = vset.pattern.permute.xlu0 22
    %8354 = vperm.xlu0 %8353, %v7634
    %v8355 = vpop.permute.xlu0 %8354
    %8357 = vset.pattern.permute.xlu0 22
    %8358 = vperm.xlu0 %8357, %v7637
    %v8359 = vpop.permute.xlu0 %8358
    %8361 = vset.pattern.permute.xlu0 22
    %8362 = vperm.xlu0 %8361, %v7639
    %v8363 = vpop.permute.xlu0 %8362
    %v8365 = vmul.f32 %v8351, %v3502
    %v8366 = vmul.f32 %v8355, %v3503
    %v8367 = vmul.f32 %v8359, %v3504
    %v8368 = vmul.f32 %v8363, %v3505
    %v8369 = vadd.f32 %v8345, %v8365
    %v8370 = vadd.f32 %v8346, %v8366
    %v8371 = vadd.f32 %v8347, %v8367
    %v8372 = vadd.f32 %v8348, %v8368
    %8373 = vset.pattern.permute.xlu0 23
    %8374 = vperm.xlu0 %8373, %v7632
    %v8375 = vpop.permute.xlu0 %8374
    %8377 = vset.pattern.permute.xlu0 23
    %8378 = vperm.xlu0 %8377, %v7634
    %v8379 = vpop.permute.xlu0 %8378
    %8381 = vset.pattern.permute.xlu0 23
    %8382 = vperm.xlu0 %8381, %v7637
    %v8383 = vpop.permute.xlu0 %8382
    %8385 = vset.pattern.permute.xlu0 23
    %8386 = vperm.xlu0 %8385, %v7639
    %v8387 = vpop.permute.xlu0 %8386
    %v8389 = vmul.f32 %v8375, %v3502
    %v8390 = vmul.f32 %v8379, %v3503
    %v8391 = vmul.f32 %v8383, %v3504
    %v8392 = vmul.f32 %v8387, %v3505
    %8397 = vrot.lane.b32.xlu0 %v8389, 64
    %v8398 = vpop.permute.xlu0 %8397
    %8399 = vrot.lane.b32.xlu0 %v8390, 64
    %v8400 = vpop.permute.xlu0 %8399
    %8401 = vrot.lane.b32.xlu0 %v8391, 64
    %v8402 = vpop.permute.xlu0 %8401
    %8403 = vrot.lane.b32.xlu0 %v8392, 64
    %v8404 = vpop.permute.xlu0 %8403
    %v8409 = vadd.f32 %v8369, %v8398
    %v8410 = vadd.f32 %v8370, %v8400
    %v8411 = vadd.f32 %v8371, %v8402
    %v8412 = vadd.f32 %v8372, %v8404
    %8413 = vset.pattern.permute.xlu0 24
    %8414 = vperm.xlu0 %8413, %v7632
    %v8415 = vpop.permute.xlu0 %8414
    %8417 = vset.pattern.permute.xlu0 24
    %8418 = vperm.xlu0 %8417, %v7634
    %v8419 = vpop.permute.xlu0 %8418
    %8421 = vset.pattern.permute.xlu0 24
    %8422 = vperm.xlu0 %8421, %v7637
    %v8423 = vpop.permute.xlu0 %8422
    %8425 = vset.pattern.permute.xlu0 24
    %8426 = vperm.xlu0 %8425, %v7639
    %v8427 = vpop.permute.xlu0 %8426
    %v8429 = vmul.f32 %v8415, %v3570
    %v8430 = vmul.f32 %v8419, %v3571
    %v8431 = vmul.f32 %v8423, %v3572
    %v8432 = vmul.f32 %v8427, %v3573
    %v8433 = vadd.f32 %v8409, %v8429
    %v8434 = vadd.f32 %v8410, %v8430
    %v8435 = vadd.f32 %v8411, %v8431
    %v8436 = vadd.f32 %v8412, %v8432
    %8437 = vset.pattern.permute.xlu0 25
    %8438 = vperm.xlu0 %8437, %v7632
    %v8439 = vpop.permute.xlu0 %8438
    %8441 = vset.pattern.permute.xlu0 25
    %8442 = vperm.xlu0 %8441, %v7634
    %v8443 = vpop.permute.xlu0 %8442
    %8445 = vset.pattern.permute.xlu0 25
    %8446 = vperm.xlu0 %8445, %v7637
    %v8447 = vpop.permute.xlu0 %8446
    %8449 = vset.pattern.permute.xlu0 25
    %8450 = vperm.xlu0 %8449, %v7639
    %v8451 = vpop.permute.xlu0 %8450
    %v8453 = vmul.f32 %v8439, %v3570
    %v8454 = vmul.f32 %v8443, %v3571
    %v8455 = vmul.f32 %v8447, %v3572
    %v8456 = vmul.f32 %v8451, %v3573
    %8461 = vrot.lane.b32.xlu0 %v8453, 64
    %v8462 = vpop.permute.xlu0 %8461
    %8463 = vrot.lane.b32.xlu0 %v8454, 64
    %v8464 = vpop.permute.xlu0 %8463
    %8465 = vrot.lane.b32.xlu0 %v8455, 64
    %v8466 = vpop.permute.xlu0 %8465
    %8467 = vrot.lane.b32.xlu0 %v8456, 64
    %v8468 = vpop.permute.xlu0 %8467
    %v8473 = vadd.f32 %v8433, %v8462
    %v8474 = vadd.f32 %v8434, %v8464
    %v8475 = vadd.f32 %v8435, %v8466
    %v8476 = vadd.f32 %v8436, %v8468
    %8477 = vset.pattern.permute.xlu0 26
    %8478 = vperm.xlu0 %8477, %v7632
    %v8479 = vpop.permute.xlu0 %8478
    %8481 = vset.pattern.permute.xlu0 26
    %8482 = vperm.xlu0 %8481, %v7634
    %v8483 = vpop.permute.xlu0 %8482
    %8485 = vset.pattern.permute.xlu0 26
    %8486 = vperm.xlu0 %8485, %v7637
    %v8487 = vpop.permute.xlu0 %8486
    %8489 = vset.pattern.permute.xlu0 26
    %8490 = vperm.xlu0 %8489, %v7639
    %v8491 = vpop.permute.xlu0 %8490
    %v8493 = vmul.f32 %v8479, %v3638
    %v8494 = vmul.f32 %v8483, %v3639
    %v8495 = vmul.f32 %v8487, %v3640
    %v8496 = vmul.f32 %v8491, %v3641
    %v8497 = vadd.f32 %v8473, %v8493
    %v8498 = vadd.f32 %v8474, %v8494
    %v8499 = vadd.f32 %v8475, %v8495
    %v8500 = vadd.f32 %v8476, %v8496
    %8501 = vset.pattern.permute.xlu0 27
    %8502 = vperm.xlu0 %8501, %v7632
    %v8503 = vpop.permute.xlu0 %8502
    %8505 = vset.pattern.permute.xlu0 27
    %8506 = vperm.xlu0 %8505, %v7634
    %v8507 = vpop.permute.xlu0 %8506
    %8509 = vset.pattern.permute.xlu0 27
    %8510 = vperm.xlu0 %8509, %v7637
    %v8511 = vpop.permute.xlu0 %8510
    %8513 = vset.pattern.permute.xlu0 27
    %8514 = vperm.xlu0 %8513, %v7639
    %v8515 = vpop.permute.xlu0 %8514
    %v8517 = vmul.f32 %v8503, %v3638
    %v8518 = vmul.f32 %v8507, %v3639
    %v8519 = vmul.f32 %v8511, %v3640
    %v8520 = vmul.f32 %v8515, %v3641
    %8525 = vrot.lane.b32.xlu0 %v8517, 64
    %v8526 = vpop.permute.xlu0 %8525
    %8527 = vrot.lane.b32.xlu0 %v8518, 64
    %v8528 = vpop.permute.xlu0 %8527
    %8529 = vrot.lane.b32.xlu0 %v8519, 64
    %v8530 = vpop.permute.xlu0 %8529
    %8531 = vrot.lane.b32.xlu0 %v8520, 64
    %v8532 = vpop.permute.xlu0 %8531
    %v8537 = vadd.f32 %v8497, %v8526
    %v8538 = vadd.f32 %v8498, %v8528
    %v8539 = vadd.f32 %v8499, %v8530
    %v8540 = vadd.f32 %v8500, %v8532
    %8541 = vset.pattern.permute.xlu0 28
    %8542 = vperm.xlu0 %8541, %v7632
    %v8543 = vpop.permute.xlu0 %8542
    %8545 = vset.pattern.permute.xlu0 28
    %8546 = vperm.xlu0 %8545, %v7634
    %v8547 = vpop.permute.xlu0 %8546
    %8549 = vset.pattern.permute.xlu0 28
    %8550 = vperm.xlu0 %8549, %v7637
    %v8551 = vpop.permute.xlu0 %8550
    %8553 = vset.pattern.permute.xlu0 28
    %8554 = vperm.xlu0 %8553, %v7639
    %v8555 = vpop.permute.xlu0 %8554
    %v8557 = vmul.f32 %v8543, %v3706
    %v8558 = vmul.f32 %v8547, %v3707
    %v8559 = vmul.f32 %v8551, %v3708
    %v8560 = vmul.f32 %v8555, %v3709
    %v8561 = vadd.f32 %v8537, %v8557
    %v8562 = vadd.f32 %v8538, %v8558
    %v8563 = vadd.f32 %v8539, %v8559
    %v8564 = vadd.f32 %v8540, %v8560
    %8565 = vset.pattern.permute.xlu0 29
    %8566 = vperm.xlu0 %8565, %v7632
    %v8567 = vpop.permute.xlu0 %8566
    %8569 = vset.pattern.permute.xlu0 29
    %8570 = vperm.xlu0 %8569, %v7634
    %v8571 = vpop.permute.xlu0 %8570
    %8573 = vset.pattern.permute.xlu0 29
    %8574 = vperm.xlu0 %8573, %v7637
    %v8575 = vpop.permute.xlu0 %8574
    %8577 = vset.pattern.permute.xlu0 29
    %8578 = vperm.xlu0 %8577, %v7639
    %v8579 = vpop.permute.xlu0 %8578
    %v8581 = vmul.f32 %v8567, %v3706
    %v8582 = vmul.f32 %v8571, %v3707
    %v8583 = vmul.f32 %v8575, %v3708
    %v8584 = vmul.f32 %v8579, %v3709
    %8589 = vrot.lane.b32.xlu0 %v8581, 64
    %v8590 = vpop.permute.xlu0 %8589
    %8591 = vrot.lane.b32.xlu0 %v8582, 64
    %v8592 = vpop.permute.xlu0 %8591
    %8593 = vrot.lane.b32.xlu0 %v8583, 64
    %v8594 = vpop.permute.xlu0 %8593
    %8595 = vrot.lane.b32.xlu0 %v8584, 64
    %v8596 = vpop.permute.xlu0 %8595
    %v8601 = vadd.f32 %v8561, %v8590
    %v8602 = vadd.f32 %v8562, %v8592
    %v8603 = vadd.f32 %v8563, %v8594
    %v8604 = vadd.f32 %v8564, %v8596
    %8605 = vset.pattern.permute.xlu0 30
    %8606 = vperm.xlu0 %8605, %v7632
    %v8607 = vpop.permute.xlu0 %8606
    %8609 = vset.pattern.permute.xlu0 30
    %8610 = vperm.xlu0 %8609, %v7634
    %v8611 = vpop.permute.xlu0 %8610
    %8613 = vset.pattern.permute.xlu0 30
    %8614 = vperm.xlu0 %8613, %v7637
    %v8615 = vpop.permute.xlu0 %8614
    %8617 = vset.pattern.permute.xlu0 30
    %8618 = vperm.xlu0 %8617, %v7639
    %v8619 = vpop.permute.xlu0 %8618
    %v8621 = vmul.f32 %v8607, %v3774
    %v8622 = vmul.f32 %v8611, %v3775
    %v8623 = vmul.f32 %v8615, %v3776
    %v8624 = vmul.f32 %v8619, %v3777
    %v8625 = vadd.f32 %v8601, %v8621
    %v8626 = vadd.f32 %v8602, %v8622
    %v8627 = vadd.f32 %v8603, %v8623
    %v8628 = vadd.f32 %v8604, %v8624
    %8629 = vset.pattern.permute.xlu0 31
    %8630 = vperm.xlu0 %8629, %v7632
    %v8631 = vpop.permute.xlu0 %8630
    %8633 = vset.pattern.permute.xlu0 31
    %8634 = vperm.xlu0 %8633, %v7634
    %v8635 = vpop.permute.xlu0 %8634
    %8637 = vset.pattern.permute.xlu0 31
    %8638 = vperm.xlu0 %8637, %v7637
    %v8639 = vpop.permute.xlu0 %8638
    %8641 = vset.pattern.permute.xlu0 31
    %8642 = vperm.xlu0 %8641, %v7639
    %v8643 = vpop.permute.xlu0 %8642
    %v8645 = vmul.f32 %v8631, %v3774
    %v8646 = vmul.f32 %v8635, %v3775
    %v8647 = vmul.f32 %v8639, %v3776
    %v8648 = vmul.f32 %v8643, %v3777
    %8653 = vrot.lane.b32.xlu0 %v8645, 64
    %v8654 = vpop.permute.xlu0 %8653
    %8655 = vrot.lane.b32.xlu0 %v8646, 64
    %v8656 = vpop.permute.xlu0 %8655
    %8657 = vrot.lane.b32.xlu0 %v8647, 64
    %v8658 = vpop.permute.xlu0 %8657
    %8659 = vrot.lane.b32.xlu0 %v8648, 64
    %v8660 = vpop.permute.xlu0 %8659
    %v8665 = vadd.f32 %v8625, %v8654
    %v8666 = vadd.f32 %v8626, %v8656
    %v8667 = vadd.f32 %v8627, %v8658
    %v8668 = vadd.f32 %v8628, %v8660
    %8669 = vset.pattern.permute.xlu0 32
    %8670 = vperm.xlu0 %8669, %v7632
    %v8671 = vpop.permute.xlu0 %8670
    %8673 = vset.pattern.permute.xlu0 32
    %8674 = vperm.xlu0 %8673, %v7634
    %v8675 = vpop.permute.xlu0 %8674
    %8677 = vset.pattern.permute.xlu0 32
    %8678 = vperm.xlu0 %8677, %v7637
    %v8679 = vpop.permute.xlu0 %8678
    %8681 = vset.pattern.permute.xlu0 32
    %8682 = vperm.xlu0 %8681, %v7639
    %v8683 = vpop.permute.xlu0 %8682
    %v8685 = vmul.f32 %v8671, %v3842
    %v8686 = vmul.f32 %v8675, %v3843
    %v8687 = vmul.f32 %v8679, %v3844
    %v8688 = vmul.f32 %v8683, %v3845
    %v8689 = vadd.f32 %v8665, %v8685
    %v8690 = vadd.f32 %v8666, %v8686
    %v8691 = vadd.f32 %v8667, %v8687
    %v8692 = vadd.f32 %v8668, %v8688
    %8693 = vset.pattern.permute.xlu0 33
    %8694 = vperm.xlu0 %8693, %v7632
    %v8695 = vpop.permute.xlu0 %8694
    %8697 = vset.pattern.permute.xlu0 33
    %8698 = vperm.xlu0 %8697, %v7634
    %v8699 = vpop.permute.xlu0 %8698
    %8701 = vset.pattern.permute.xlu0 33
    %8702 = vperm.xlu0 %8701, %v7637
    %v8703 = vpop.permute.xlu0 %8702
    %8705 = vset.pattern.permute.xlu0 33
    %8706 = vperm.xlu0 %8705, %v7639
    %v8707 = vpop.permute.xlu0 %8706
    %v8709 = vmul.f32 %v8695, %v3842
    %v8710 = vmul.f32 %v8699, %v3843
    %v8711 = vmul.f32 %v8703, %v3844
    %v8712 = vmul.f32 %v8707, %v3845
    %8717 = vrot.lane.b32.xlu0 %v8709, 64
    %v8718 = vpop.permute.xlu0 %8717
    %8719 = vrot.lane.b32.xlu0 %v8710, 64
    %v8720 = vpop.permute.xlu0 %8719
    %8721 = vrot.lane.b32.xlu0 %v8711, 64
    %v8722 = vpop.permute.xlu0 %8721
    %8723 = vrot.lane.b32.xlu0 %v8712, 64
    %v8724 = vpop.permute.xlu0 %8723
    %v8729 = vadd.f32 %v8689, %v8718
    %v8730 = vadd.f32 %v8690, %v8720
    %v8731 = vadd.f32 %v8691, %v8722
    %v8732 = vadd.f32 %v8692, %v8724
    %8733 = vset.pattern.permute.xlu0 34
    %8734 = vperm.xlu0 %8733, %v7632
    %v8735 = vpop.permute.xlu0 %8734
    %8737 = vset.pattern.permute.xlu0 34
    %8738 = vperm.xlu0 %8737, %v7634
    %v8739 = vpop.permute.xlu0 %8738
    %8741 = vset.pattern.permute.xlu0 34
    %8742 = vperm.xlu0 %8741, %v7637
    %v8743 = vpop.permute.xlu0 %8742
    %8745 = vset.pattern.permute.xlu0 34
    %8746 = vperm.xlu0 %8745, %v7639
    %v8747 = vpop.permute.xlu0 %8746
    %v8749 = vmul.f32 %v8735, %v3910
    %v8750 = vmul.f32 %v8739, %v3911
    %v8751 = vmul.f32 %v8743, %v3912
    %v8752 = vmul.f32 %v8747, %v3913
    %v8753 = vadd.f32 %v8729, %v8749
    %v8754 = vadd.f32 %v8730, %v8750
    %v8755 = vadd.f32 %v8731, %v8751
    %v8756 = vadd.f32 %v8732, %v8752
    %8757 = vset.pattern.permute.xlu0 35
    %8758 = vperm.xlu0 %8757, %v7632
    %v8759 = vpop.permute.xlu0 %8758
    %8761 = vset.pattern.permute.xlu0 35
    %8762 = vperm.xlu0 %8761, %v7634
    %v8763 = vpop.permute.xlu0 %8762
    %8765 = vset.pattern.permute.xlu0 35
    %8766 = vperm.xlu0 %8765, %v7637
    %v8767 = vpop.permute.xlu0 %8766
    %8769 = vset.pattern.permute.xlu0 35
    %8770 = vperm.xlu0 %8769, %v7639
    %v8771 = vpop.permute.xlu0 %8770
    %v8773 = vmul.f32 %v8759, %v3910
    %v8774 = vmul.f32 %v8763, %v3911
    %v8775 = vmul.f32 %v8767, %v3912
    %v8776 = vmul.f32 %v8771, %v3913
    %8781 = vrot.lane.b32.xlu0 %v8773, 64
    %v8782 = vpop.permute.xlu0 %8781
    %8783 = vrot.lane.b32.xlu0 %v8774, 64
    %v8784 = vpop.permute.xlu0 %8783
    %8785 = vrot.lane.b32.xlu0 %v8775, 64
    %v8786 = vpop.permute.xlu0 %8785
    %8787 = vrot.lane.b32.xlu0 %v8776, 64
    %v8788 = vpop.permute.xlu0 %8787
    %v8793 = vadd.f32 %v8753, %v8782
    %v8794 = vadd.f32 %v8754, %v8784
    %v8795 = vadd.f32 %v8755, %v8786
    %v8796 = vadd.f32 %v8756, %v8788
    %8797 = vset.pattern.permute.xlu0 36
    %8798 = vperm.xlu0 %8797, %v7632
    %v8799 = vpop.permute.xlu0 %8798
    %8801 = vset.pattern.permute.xlu0 36
    %8802 = vperm.xlu0 %8801, %v7634
    %v8803 = vpop.permute.xlu0 %8802
    %8805 = vset.pattern.permute.xlu0 36
    %8806 = vperm.xlu0 %8805, %v7637
    %v8807 = vpop.permute.xlu0 %8806
    %8809 = vset.pattern.permute.xlu0 36
    %8810 = vperm.xlu0 %8809, %v7639
    %v8811 = vpop.permute.xlu0 %8810
    %v8813 = vmul.f32 %v8799, %v3978
    %v8814 = vmul.f32 %v8803, %v3979
    %v8815 = vmul.f32 %v8807, %v3980
    %v8816 = vmul.f32 %v8811, %v3981
    %v8817 = vadd.f32 %v8793, %v8813
    %v8818 = vadd.f32 %v8794, %v8814
    %v8819 = vadd.f32 %v8795, %v8815
    %v8820 = vadd.f32 %v8796, %v8816
    %8821 = vset.pattern.permute.xlu0 37
    %8822 = vperm.xlu0 %8821, %v7632
    %v8823 = vpop.permute.xlu0 %8822
    %8825 = vset.pattern.permute.xlu0 37
    %8826 = vperm.xlu0 %8825, %v7634
    %v8827 = vpop.permute.xlu0 %8826
    %8829 = vset.pattern.permute.xlu0 37
    %8830 = vperm.xlu0 %8829, %v7637
    %v8831 = vpop.permute.xlu0 %8830
    %8833 = vset.pattern.permute.xlu0 37
    %8834 = vperm.xlu0 %8833, %v7639
    %v8835 = vpop.permute.xlu0 %8834
    %v8837 = vmul.f32 %v8823, %v3978
    %v8838 = vmul.f32 %v8827, %v3979
    %v8839 = vmul.f32 %v8831, %v3980
    %v8840 = vmul.f32 %v8835, %v3981
    %8845 = vrot.lane.b32.xlu0 %v8837, 64
    %v8846 = vpop.permute.xlu0 %8845
    %8847 = vrot.lane.b32.xlu0 %v8838, 64
    %v8848 = vpop.permute.xlu0 %8847
    %8849 = vrot.lane.b32.xlu0 %v8839, 64
    %v8850 = vpop.permute.xlu0 %8849
    %8851 = vrot.lane.b32.xlu0 %v8840, 64
    %v8852 = vpop.permute.xlu0 %8851
    %v8857 = vadd.f32 %v8817, %v8846
    %v8858 = vadd.f32 %v8818, %v8848
    %v8859 = vadd.f32 %v8819, %v8850
    %v8860 = vadd.f32 %v8820, %v8852
    %8861 = vset.pattern.permute.xlu0 38
    %8862 = vperm.xlu0 %8861, %v7632
    %v8863 = vpop.permute.xlu0 %8862
    %8865 = vset.pattern.permute.xlu0 38
    %8866 = vperm.xlu0 %8865, %v7634
    %v8867 = vpop.permute.xlu0 %8866
    %8869 = vset.pattern.permute.xlu0 38
    %8870 = vperm.xlu0 %8869, %v7637
    %v8871 = vpop.permute.xlu0 %8870
    %8873 = vset.pattern.permute.xlu0 38
    %8874 = vperm.xlu0 %8873, %v7639
    %v8875 = vpop.permute.xlu0 %8874
    %v8877 = vmul.f32 %v8863, %v4046
    %v8878 = vmul.f32 %v8867, %v4047
    %v8879 = vmul.f32 %v8871, %v4048
    %v8880 = vmul.f32 %v8875, %v4049
    %v8881 = vadd.f32 %v8857, %v8877
    %v8882 = vadd.f32 %v8858, %v8878
    %v8883 = vadd.f32 %v8859, %v8879
    %v8884 = vadd.f32 %v8860, %v8880
    %8885 = vset.pattern.permute.xlu0 39
    %8886 = vperm.xlu0 %8885, %v7632
    %v8887 = vpop.permute.xlu0 %8886
    %8889 = vset.pattern.permute.xlu0 39
    %8890 = vperm.xlu0 %8889, %v7634
    %v8891 = vpop.permute.xlu0 %8890
    %8893 = vset.pattern.permute.xlu0 39
    %8894 = vperm.xlu0 %8893, %v7637
    %v8895 = vpop.permute.xlu0 %8894
    %8897 = vset.pattern.permute.xlu0 39
    %8898 = vperm.xlu0 %8897, %v7639
    %v8899 = vpop.permute.xlu0 %8898
    %v8901 = vmul.f32 %v8887, %v4046
    %v8902 = vmul.f32 %v8891, %v4047
    %v8903 = vmul.f32 %v8895, %v4048
    %v8904 = vmul.f32 %v8899, %v4049
    %8909 = vrot.lane.b32.xlu0 %v8901, 64
    %v8910 = vpop.permute.xlu0 %8909
    %8911 = vrot.lane.b32.xlu0 %v8902, 64
    %v8912 = vpop.permute.xlu0 %8911
    %8913 = vrot.lane.b32.xlu0 %v8903, 64
    %v8914 = vpop.permute.xlu0 %8913
    %8915 = vrot.lane.b32.xlu0 %v8904, 64
    %v8916 = vpop.permute.xlu0 %8915
    %v8921 = vadd.f32 %v8881, %v8910
    %v8922 = vadd.f32 %v8882, %v8912
    %v8923 = vadd.f32 %v8883, %v8914
    %v8924 = vadd.f32 %v8884, %v8916
    %8925 = vset.pattern.permute.xlu0 40
    %8926 = vperm.xlu0 %8925, %v7632
    %v8927 = vpop.permute.xlu0 %8926
    %8929 = vset.pattern.permute.xlu0 40
    %8930 = vperm.xlu0 %8929, %v7634
    %v8931 = vpop.permute.xlu0 %8930
    %8933 = vset.pattern.permute.xlu0 40
    %8934 = vperm.xlu0 %8933, %v7637
    %v8935 = vpop.permute.xlu0 %8934
    %8937 = vset.pattern.permute.xlu0 40
    %8938 = vperm.xlu0 %8937, %v7639
    %v8939 = vpop.permute.xlu0 %8938
    %v8941 = vmul.f32 %v8927, %v4114
    %v8942 = vmul.f32 %v8931, %v4115
    %v8943 = vmul.f32 %v8935, %v4116
    %v8944 = vmul.f32 %v8939, %v4117
    %v8945 = vadd.f32 %v8921, %v8941
    %v8946 = vadd.f32 %v8922, %v8942
    %v8947 = vadd.f32 %v8923, %v8943
    %v8948 = vadd.f32 %v8924, %v8944
    %8949 = vset.pattern.permute.xlu0 41
    %8950 = vperm.xlu0 %8949, %v7632
    %v8951 = vpop.permute.xlu0 %8950
    %8953 = vset.pattern.permute.xlu0 41
    %8954 = vperm.xlu0 %8953, %v7634
    %v8955 = vpop.permute.xlu0 %8954
    %8957 = vset.pattern.permute.xlu0 41
    %8958 = vperm.xlu0 %8957, %v7637
    %v8959 = vpop.permute.xlu0 %8958
    %8961 = vset.pattern.permute.xlu0 41
    %8962 = vperm.xlu0 %8961, %v7639
    %v8963 = vpop.permute.xlu0 %8962
    %v8965 = vmul.f32 %v8951, %v4114
    %v8966 = vmul.f32 %v8955, %v4115
    %v8967 = vmul.f32 %v8959, %v4116
    %v8968 = vmul.f32 %v8963, %v4117
    %8973 = vrot.lane.b32.xlu0 %v8965, 64
    %v8974 = vpop.permute.xlu0 %8973
    %8975 = vrot.lane.b32.xlu0 %v8966, 64
    %v8976 = vpop.permute.xlu0 %8975
    %8977 = vrot.lane.b32.xlu0 %v8967, 64
    %v8978 = vpop.permute.xlu0 %8977
    %8979 = vrot.lane.b32.xlu0 %v8968, 64
    %v8980 = vpop.permute.xlu0 %8979
    %v8985 = vadd.f32 %v8945, %v8974
    %v8986 = vadd.f32 %v8946, %v8976
    %v8987 = vadd.f32 %v8947, %v8978
    %v8988 = vadd.f32 %v8948, %v8980
    %8989 = vset.pattern.permute.xlu0 42
    %8990 = vperm.xlu0 %8989, %v7632
    %v8991 = vpop.permute.xlu0 %8990
    %8993 = vset.pattern.permute.xlu0 42
    %8994 = vperm.xlu0 %8993, %v7634
    %v8995 = vpop.permute.xlu0 %8994
    %8997 = vset.pattern.permute.xlu0 42
    %8998 = vperm.xlu0 %8997, %v7637
    %v8999 = vpop.permute.xlu0 %8998
    %9001 = vset.pattern.permute.xlu0 42
    %9002 = vperm.xlu0 %9001, %v7639
    %v9003 = vpop.permute.xlu0 %9002
    %v9005 = vmul.f32 %v8991, %v4182
    %v9006 = vmul.f32 %v8995, %v4183
    %v9007 = vmul.f32 %v8999, %v4184
    %v9008 = vmul.f32 %v9003, %v4185
    %v9009 = vadd.f32 %v8985, %v9005
    %v9010 = vadd.f32 %v8986, %v9006
    %v9011 = vadd.f32 %v8987, %v9007
    %v9012 = vadd.f32 %v8988, %v9008
    %9013 = vset.pattern.permute.xlu0 43
    %9014 = vperm.xlu0 %9013, %v7632
    %v9015 = vpop.permute.xlu0 %9014
    %9017 = vset.pattern.permute.xlu0 43
    %9018 = vperm.xlu0 %9017, %v7634
    %v9019 = vpop.permute.xlu0 %9018
    %9021 = vset.pattern.permute.xlu0 43
    %9022 = vperm.xlu0 %9021, %v7637
    %v9023 = vpop.permute.xlu0 %9022
    %9025 = vset.pattern.permute.xlu0 43
    %9026 = vperm.xlu0 %9025, %v7639
    %v9027 = vpop.permute.xlu0 %9026
    %v9029 = vmul.f32 %v9015, %v4182
    %v9030 = vmul.f32 %v9019, %v4183
    %v9031 = vmul.f32 %v9023, %v4184
    %v9032 = vmul.f32 %v9027, %v4185
    %9037 = vrot.lane.b32.xlu0 %v9029, 64
    %v9038 = vpop.permute.xlu0 %9037
    %9039 = vrot.lane.b32.xlu0 %v9030, 64
    %v9040 = vpop.permute.xlu0 %9039
    %9041 = vrot.lane.b32.xlu0 %v9031, 64
    %v9042 = vpop.permute.xlu0 %9041
    %9043 = vrot.lane.b32.xlu0 %v9032, 64
    %v9044 = vpop.permute.xlu0 %9043
    %v9049 = vadd.f32 %v9009, %v9038
    %v9050 = vadd.f32 %v9010, %v9040
    %v9051 = vadd.f32 %v9011, %v9042
    %v9052 = vadd.f32 %v9012, %v9044
    %9053 = vset.pattern.permute.xlu0 44
    %9054 = vperm.xlu0 %9053, %v7632
    %v9055 = vpop.permute.xlu0 %9054
    %9057 = vset.pattern.permute.xlu0 44
    %9058 = vperm.xlu0 %9057, %v7634
    %v9059 = vpop.permute.xlu0 %9058
    %9061 = vset.pattern.permute.xlu0 44
    %9062 = vperm.xlu0 %9061, %v7637
    %v9063 = vpop.permute.xlu0 %9062
    %9065 = vset.pattern.permute.xlu0 44
    %9066 = vperm.xlu0 %9065, %v7639
    %v9067 = vpop.permute.xlu0 %9066
    %v9069 = vmul.f32 %v9055, %v4250
    %v9070 = vmul.f32 %v9059, %v4251
    %v9071 = vmul.f32 %v9063, %v4252
    %v9072 = vmul.f32 %v9067, %v4253
    %v9073 = vadd.f32 %v9049, %v9069
    %v9074 = vadd.f32 %v9050, %v9070
    %v9075 = vadd.f32 %v9051, %v9071
    %v9076 = vadd.f32 %v9052, %v9072
    %9077 = vset.pattern.permute.xlu0 45
    %9078 = vperm.xlu0 %9077, %v7632
    %v9079 = vpop.permute.xlu0 %9078
    %9081 = vset.pattern.permute.xlu0 45
    %9082 = vperm.xlu0 %9081, %v7634
    %v9083 = vpop.permute.xlu0 %9082
    %9085 = vset.pattern.permute.xlu0 45
    %9086 = vperm.xlu0 %9085, %v7637
    %v9087 = vpop.permute.xlu0 %9086
    %9089 = vset.pattern.permute.xlu0 45
    %9090 = vperm.xlu0 %9089, %v7639
    %v9091 = vpop.permute.xlu0 %9090
    %v9093 = vmul.f32 %v9079, %v4250
    %v9094 = vmul.f32 %v9083, %v4251
    %v9095 = vmul.f32 %v9087, %v4252
    %v9096 = vmul.f32 %v9091, %v4253
    %9101 = vrot.lane.b32.xlu0 %v9093, 64
    %v9102 = vpop.permute.xlu0 %9101
    %9103 = vrot.lane.b32.xlu0 %v9094, 64
    %v9104 = vpop.permute.xlu0 %9103
    %9105 = vrot.lane.b32.xlu0 %v9095, 64
    %v9106 = vpop.permute.xlu0 %9105
    %9107 = vrot.lane.b32.xlu0 %v9096, 64
    %v9108 = vpop.permute.xlu0 %9107
    %v9113 = vadd.f32 %v9073, %v9102
    %v9114 = vadd.f32 %v9074, %v9104
    %v9115 = vadd.f32 %v9075, %v9106
    %v9116 = vadd.f32 %v9076, %v9108
    %9117 = vset.pattern.permute.xlu0 46
    %9118 = vperm.xlu0 %9117, %v7632
    %v9119 = vpop.permute.xlu0 %9118
    %9121 = vset.pattern.permute.xlu0 46
    %9122 = vperm.xlu0 %9121, %v7634
    %v9123 = vpop.permute.xlu0 %9122
    %9125 = vset.pattern.permute.xlu0 46
    %9126 = vperm.xlu0 %9125, %v7637
    %v9127 = vpop.permute.xlu0 %9126
    %9129 = vset.pattern.permute.xlu0 46
    %9130 = vperm.xlu0 %9129, %v7639
    %v9131 = vpop.permute.xlu0 %9130
    %v9133 = vmul.f32 %v9119, %v4318
    %v9134 = vmul.f32 %v9123, %v4319
    %v9135 = vmul.f32 %v9127, %v4320
    %v9136 = vmul.f32 %v9131, %v4321
    %v9137 = vadd.f32 %v9113, %v9133
    %v9138 = vadd.f32 %v9114, %v9134
    %v9139 = vadd.f32 %v9115, %v9135
    %v9140 = vadd.f32 %v9116, %v9136
    %9141 = vset.pattern.permute.xlu0 47
    %9142 = vperm.xlu0 %9141, %v7632
    %v9143 = vpop.permute.xlu0 %9142
    %9145 = vset.pattern.permute.xlu0 47
    %9146 = vperm.xlu0 %9145, %v7634
    %v9147 = vpop.permute.xlu0 %9146
    %9149 = vset.pattern.permute.xlu0 47
    %9150 = vperm.xlu0 %9149, %v7637
    %v9151 = vpop.permute.xlu0 %9150
    %9153 = vset.pattern.permute.xlu0 47
    %9154 = vperm.xlu0 %9153, %v7639
    %v9155 = vpop.permute.xlu0 %9154
    %v9157 = vmul.f32 %v9143, %v4318
    %v9158 = vmul.f32 %v9147, %v4319
    %v9159 = vmul.f32 %v9151, %v4320
    %v9160 = vmul.f32 %v9155, %v4321
    %9165 = vrot.lane.b32.xlu0 %v9157, 64
    %v9166 = vpop.permute.xlu0 %9165
    %9167 = vrot.lane.b32.xlu0 %v9158, 64
    %v9168 = vpop.permute.xlu0 %9167
    %9169 = vrot.lane.b32.xlu0 %v9159, 64
    %v9170 = vpop.permute.xlu0 %9169
    %9171 = vrot.lane.b32.xlu0 %v9160, 64
    %v9172 = vpop.permute.xlu0 %9171
    %v9177 = vadd.f32 %v9137, %v9166
    %v9178 = vadd.f32 %v9138, %v9168
    %v9179 = vadd.f32 %v9139, %v9170
    %v9180 = vadd.f32 %v9140, %v9172
    %9181 = vset.pattern.permute.xlu0 48
    %9182 = vperm.xlu0 %9181, %v7632
    %v9183 = vpop.permute.xlu0 %9182
    %9185 = vset.pattern.permute.xlu0 48
    %9186 = vperm.xlu0 %9185, %v7634
    %v9187 = vpop.permute.xlu0 %9186
    %9189 = vset.pattern.permute.xlu0 48
    %9190 = vperm.xlu0 %9189, %v7637
    %v9191 = vpop.permute.xlu0 %9190
    %9193 = vset.pattern.permute.xlu0 48
    %9194 = vperm.xlu0 %9193, %v7639
    %v9195 = vpop.permute.xlu0 %9194
    %v9197 = vmul.f32 %v9183, %v4386
    %v9198 = vmul.f32 %v9187, %v4387
    %v9199 = vmul.f32 %v9191, %v4388
    %v9200 = vmul.f32 %v9195, %v4389
    %v9201 = vadd.f32 %v9177, %v9197
    %v9202 = vadd.f32 %v9178, %v9198
    %v9203 = vadd.f32 %v9179, %v9199
    %v9204 = vadd.f32 %v9180, %v9200
    %9205 = vset.pattern.permute.xlu0 49
    %9206 = vperm.xlu0 %9205, %v7632
    %v9207 = vpop.permute.xlu0 %9206
    %9209 = vset.pattern.permute.xlu0 49
    %9210 = vperm.xlu0 %9209, %v7634
    %v9211 = vpop.permute.xlu0 %9210
    %9213 = vset.pattern.permute.xlu0 49
    %9214 = vperm.xlu0 %9213, %v7637
    %v9215 = vpop.permute.xlu0 %9214
    %9217 = vset.pattern.permute.xlu0 49
    %9218 = vperm.xlu0 %9217, %v7639
    %v9219 = vpop.permute.xlu0 %9218
    %v9221 = vmul.f32 %v9207, %v4386
    %v9222 = vmul.f32 %v9211, %v4387
    %v9223 = vmul.f32 %v9215, %v4388
    %v9224 = vmul.f32 %v9219, %v4389
    %9229 = vrot.lane.b32.xlu0 %v9221, 64
    %v9230 = vpop.permute.xlu0 %9229
    %9231 = vrot.lane.b32.xlu0 %v9222, 64
    %v9232 = vpop.permute.xlu0 %9231
    %9233 = vrot.lane.b32.xlu0 %v9223, 64
    %v9234 = vpop.permute.xlu0 %9233
    %9235 = vrot.lane.b32.xlu0 %v9224, 64
    %v9236 = vpop.permute.xlu0 %9235
    %v9241 = vadd.f32 %v9201, %v9230
    %v9242 = vadd.f32 %v9202, %v9232
    %v9243 = vadd.f32 %v9203, %v9234
    %v9244 = vadd.f32 %v9204, %v9236
    %9245 = vset.pattern.permute.xlu0 50
    %9246 = vperm.xlu0 %9245, %v7632
    %v9247 = vpop.permute.xlu0 %9246
    %9249 = vset.pattern.permute.xlu0 50
    %9250 = vperm.xlu0 %9249, %v7634
    %v9251 = vpop.permute.xlu0 %9250
    %9253 = vset.pattern.permute.xlu0 50
    %9254 = vperm.xlu0 %9253, %v7637
    %v9255 = vpop.permute.xlu0 %9254
    %9257 = vset.pattern.permute.xlu0 50
    %9258 = vperm.xlu0 %9257, %v7639
    %v9259 = vpop.permute.xlu0 %9258
    %v9261 = vmul.f32 %v9247, %v4454
    %v9262 = vmul.f32 %v9251, %v4455
    %v9263 = vmul.f32 %v9255, %v4456
    %v9264 = vmul.f32 %v9259, %v4457
    %v9265 = vadd.f32 %v9241, %v9261
    %v9266 = vadd.f32 %v9242, %v9262
    %v9267 = vadd.f32 %v9243, %v9263
    %v9268 = vadd.f32 %v9244, %v9264
    %9269 = vset.pattern.permute.xlu0 51
    %9270 = vperm.xlu0 %9269, %v7632
    %v9271 = vpop.permute.xlu0 %9270
    %9273 = vset.pattern.permute.xlu0 51
    %9274 = vperm.xlu0 %9273, %v7634
    %v9275 = vpop.permute.xlu0 %9274
    %9277 = vset.pattern.permute.xlu0 51
    %9278 = vperm.xlu0 %9277, %v7637
    %v9279 = vpop.permute.xlu0 %9278
    %9281 = vset.pattern.permute.xlu0 51
    %9282 = vperm.xlu0 %9281, %v7639
    %v9283 = vpop.permute.xlu0 %9282
    %v9285 = vmul.f32 %v9271, %v4454
    %v9286 = vmul.f32 %v9275, %v4455
    %v9287 = vmul.f32 %v9279, %v4456
    %v9288 = vmul.f32 %v9283, %v4457
    %9293 = vrot.lane.b32.xlu0 %v9285, 64
    %v9294 = vpop.permute.xlu0 %9293
    %9295 = vrot.lane.b32.xlu0 %v9286, 64
    %v9296 = vpop.permute.xlu0 %9295
    %9297 = vrot.lane.b32.xlu0 %v9287, 64
    %v9298 = vpop.permute.xlu0 %9297
    %9299 = vrot.lane.b32.xlu0 %v9288, 64
    %v9300 = vpop.permute.xlu0 %9299
    %v9305 = vadd.f32 %v9265, %v9294
    %v9306 = vadd.f32 %v9266, %v9296
    %v9307 = vadd.f32 %v9267, %v9298
    %v9308 = vadd.f32 %v9268, %v9300
    %9309 = vset.pattern.permute.xlu0 52
    %9310 = vperm.xlu0 %9309, %v7632
    %v9311 = vpop.permute.xlu0 %9310
    %9313 = vset.pattern.permute.xlu0 52
    %9314 = vperm.xlu0 %9313, %v7634
    %v9315 = vpop.permute.xlu0 %9314
    %9317 = vset.pattern.permute.xlu0 52
    %9318 = vperm.xlu0 %9317, %v7637
    %v9319 = vpop.permute.xlu0 %9318
    %9321 = vset.pattern.permute.xlu0 52
    %9322 = vperm.xlu0 %9321, %v7639
    %v9323 = vpop.permute.xlu0 %9322
    %v9325 = vmul.f32 %v9311, %v4522
    %v9326 = vmul.f32 %v9315, %v4523
    %v9327 = vmul.f32 %v9319, %v4524
    %v9328 = vmul.f32 %v9323, %v4525
    %v9329 = vadd.f32 %v9305, %v9325
    %v9330 = vadd.f32 %v9306, %v9326
    %v9331 = vadd.f32 %v9307, %v9327
    %v9332 = vadd.f32 %v9308, %v9328
    %9333 = vset.pattern.permute.xlu0 53
    %9334 = vperm.xlu0 %9333, %v7632
    %v9335 = vpop.permute.xlu0 %9334
    %9337 = vset.pattern.permute.xlu0 53
    %9338 = vperm.xlu0 %9337, %v7634
    %v9339 = vpop.permute.xlu0 %9338
    %9341 = vset.pattern.permute.xlu0 53
    %9342 = vperm.xlu0 %9341, %v7637
    %v9343 = vpop.permute.xlu0 %9342
    %9345 = vset.pattern.permute.xlu0 53
    %9346 = vperm.xlu0 %9345, %v7639
    %v9347 = vpop.permute.xlu0 %9346
    %v9349 = vmul.f32 %v9335, %v4522
    %v9350 = vmul.f32 %v9339, %v4523
    %v9351 = vmul.f32 %v9343, %v4524
    %v9352 = vmul.f32 %v9347, %v4525
    %9357 = vrot.lane.b32.xlu0 %v9349, 64
    %v9358 = vpop.permute.xlu0 %9357
    %9359 = vrot.lane.b32.xlu0 %v9350, 64
    %v9360 = vpop.permute.xlu0 %9359
    %9361 = vrot.lane.b32.xlu0 %v9351, 64
    %v9362 = vpop.permute.xlu0 %9361
    %9363 = vrot.lane.b32.xlu0 %v9352, 64
    %v9364 = vpop.permute.xlu0 %9363
    %v9369 = vadd.f32 %v9329, %v9358
    %v9370 = vadd.f32 %v9330, %v9360
    %v9371 = vadd.f32 %v9331, %v9362
    %v9372 = vadd.f32 %v9332, %v9364
    %9373 = vset.pattern.permute.xlu0 54
    %9374 = vperm.xlu0 %9373, %v7632
    %v9375 = vpop.permute.xlu0 %9374
    %9377 = vset.pattern.permute.xlu0 54
    %9378 = vperm.xlu0 %9377, %v7634
    %v9379 = vpop.permute.xlu0 %9378
    %9381 = vset.pattern.permute.xlu0 54
    %9382 = vperm.xlu0 %9381, %v7637
    %v9383 = vpop.permute.xlu0 %9382
    %9385 = vset.pattern.permute.xlu0 54
    %9386 = vperm.xlu0 %9385, %v7639
    %v9387 = vpop.permute.xlu0 %9386
    %v9389 = vmul.f32 %v9375, %v4590
    %v9390 = vmul.f32 %v9379, %v4591
    %v9391 = vmul.f32 %v9383, %v4592
    %v9392 = vmul.f32 %v9387, %v4593
    %v9393 = vadd.f32 %v9369, %v9389
    %v9394 = vadd.f32 %v9370, %v9390
    %v9395 = vadd.f32 %v9371, %v9391
    %v9396 = vadd.f32 %v9372, %v9392
    %9397 = vset.pattern.permute.xlu0 55
    %9398 = vperm.xlu0 %9397, %v7632
    %v9399 = vpop.permute.xlu0 %9398
    %9401 = vset.pattern.permute.xlu0 55
    %9402 = vperm.xlu0 %9401, %v7634
    %v9403 = vpop.permute.xlu0 %9402
    %9405 = vset.pattern.permute.xlu0 55
    %9406 = vperm.xlu0 %9405, %v7637
    %v9407 = vpop.permute.xlu0 %9406
    %9409 = vset.pattern.permute.xlu0 55
    %9410 = vperm.xlu0 %9409, %v7639
    %v9411 = vpop.permute.xlu0 %9410
    %v9413 = vmul.f32 %v9399, %v4590
    %v9414 = vmul.f32 %v9403, %v4591
    %v9415 = vmul.f32 %v9407, %v4592
    %v9416 = vmul.f32 %v9411, %v4593
    %9421 = vrot.lane.b32.xlu0 %v9413, 64
    %v9422 = vpop.permute.xlu0 %9421
    %9423 = vrot.lane.b32.xlu0 %v9414, 64
    %v9424 = vpop.permute.xlu0 %9423
    %9425 = vrot.lane.b32.xlu0 %v9415, 64
    %v9426 = vpop.permute.xlu0 %9425
    %9427 = vrot.lane.b32.xlu0 %v9416, 64
    %v9428 = vpop.permute.xlu0 %9427
    %v9433 = vadd.f32 %v9393, %v9422
    %v9434 = vadd.f32 %v9394, %v9424
    %v9435 = vadd.f32 %v9395, %v9426
    %v9436 = vadd.f32 %v9396, %v9428
    %9437 = vset.pattern.permute.xlu0 56
    %9438 = vperm.xlu0 %9437, %v7632
    %v9439 = vpop.permute.xlu0 %9438
    %9441 = vset.pattern.permute.xlu0 56
    %9442 = vperm.xlu0 %9441, %v7634
    %v9443 = vpop.permute.xlu0 %9442
    %9445 = vset.pattern.permute.xlu0 56
    %9446 = vperm.xlu0 %9445, %v7637
    %v9447 = vpop.permute.xlu0 %9446
    %9449 = vset.pattern.permute.xlu0 56
    %9450 = vperm.xlu0 %9449, %v7639
    %v9451 = vpop.permute.xlu0 %9450
    %v9453 = vmul.f32 %v9439, %v4658
    %v9454 = vmul.f32 %v9443, %v4659
    %v9455 = vmul.f32 %v9447, %v4660
    %v9456 = vmul.f32 %v9451, %v4661
    %v9457 = vadd.f32 %v9433, %v9453
    %v9458 = vadd.f32 %v9434, %v9454
    %v9459 = vadd.f32 %v9435, %v9455
    %v9460 = vadd.f32 %v9436, %v9456
    %9461 = vset.pattern.permute.xlu0 57
    %9462 = vperm.xlu0 %9461, %v7632
    %v9463 = vpop.permute.xlu0 %9462
    %9465 = vset.pattern.permute.xlu0 57
    %9466 = vperm.xlu0 %9465, %v7634
    %v9467 = vpop.permute.xlu0 %9466
    %9469 = vset.pattern.permute.xlu0 57
    %9470 = vperm.xlu0 %9469, %v7637
    %v9471 = vpop.permute.xlu0 %9470
    %9473 = vset.pattern.permute.xlu0 57
    %9474 = vperm.xlu0 %9473, %v7639
    %v9475 = vpop.permute.xlu0 %9474
    %v9477 = vmul.f32 %v9463, %v4658
    %v9478 = vmul.f32 %v9467, %v4659
    %v9479 = vmul.f32 %v9471, %v4660
    %v9480 = vmul.f32 %v9475, %v4661
    %9485 = vrot.lane.b32.xlu0 %v9477, 64
    %v9486 = vpop.permute.xlu0 %9485
    %9487 = vrot.lane.b32.xlu0 %v9478, 64
    %v9488 = vpop.permute.xlu0 %9487
    %9489 = vrot.lane.b32.xlu0 %v9479, 64
    %v9490 = vpop.permute.xlu0 %9489
    %9491 = vrot.lane.b32.xlu0 %v9480, 64
    %v9492 = vpop.permute.xlu0 %9491
    %v9497 = vadd.f32 %v9457, %v9486
    %v9498 = vadd.f32 %v9458, %v9488
    %v9499 = vadd.f32 %v9459, %v9490
    %v9500 = vadd.f32 %v9460, %v9492
    %9501 = vset.pattern.permute.xlu0 58
    %9502 = vperm.xlu0 %9501, %v7632
    %v9503 = vpop.permute.xlu0 %9502
    %9505 = vset.pattern.permute.xlu0 58
    %9506 = vperm.xlu0 %9505, %v7634
    %v9507 = vpop.permute.xlu0 %9506
    %9509 = vset.pattern.permute.xlu0 58
    %9510 = vperm.xlu0 %9509, %v7637
    %v9511 = vpop.permute.xlu0 %9510
    %9513 = vset.pattern.permute.xlu0 58
    %9514 = vperm.xlu0 %9513, %v7639
    %v9515 = vpop.permute.xlu0 %9514
    %v9517 = vmul.f32 %v9503, %v4726
    %v9518 = vmul.f32 %v9507, %v4727
    %v9519 = vmul.f32 %v9511, %v4728
    %v9520 = vmul.f32 %v9515, %v4729
    %v9521 = vadd.f32 %v9497, %v9517
    %v9522 = vadd.f32 %v9498, %v9518
    %v9523 = vadd.f32 %v9499, %v9519
    %v9524 = vadd.f32 %v9500, %v9520
    %9525 = vset.pattern.permute.xlu0 59
    %9526 = vperm.xlu0 %9525, %v7632
    %v9527 = vpop.permute.xlu0 %9526
    %9529 = vset.pattern.permute.xlu0 59
    %9530 = vperm.xlu0 %9529, %v7634
    %v9531 = vpop.permute.xlu0 %9530
    %9533 = vset.pattern.permute.xlu0 59
    %9534 = vperm.xlu0 %9533, %v7637
    %v9535 = vpop.permute.xlu0 %9534
    %9537 = vset.pattern.permute.xlu0 59
    %9538 = vperm.xlu0 %9537, %v7639
    %v9539 = vpop.permute.xlu0 %9538
    %v9541 = vmul.f32 %v9527, %v4726
    %v9542 = vmul.f32 %v9531, %v4727
    %v9543 = vmul.f32 %v9535, %v4728
    %v9544 = vmul.f32 %v9539, %v4729
    %9549 = vrot.lane.b32.xlu0 %v9541, 64
    %v9550 = vpop.permute.xlu0 %9549
    %9551 = vrot.lane.b32.xlu0 %v9542, 64
    %v9552 = vpop.permute.xlu0 %9551
    %9553 = vrot.lane.b32.xlu0 %v9543, 64
    %v9554 = vpop.permute.xlu0 %9553
    %9555 = vrot.lane.b32.xlu0 %v9544, 64
    %v9556 = vpop.permute.xlu0 %9555
    %v9561 = vadd.f32 %v9521, %v9550
    %v9562 = vadd.f32 %v9522, %v9552
    %v9563 = vadd.f32 %v9523, %v9554
    %v9564 = vadd.f32 %v9524, %v9556
    %9565 = vset.pattern.permute.xlu0 60
    %9566 = vperm.xlu0 %9565, %v7632
    %v9567 = vpop.permute.xlu0 %9566
    %9569 = vset.pattern.permute.xlu0 60
    %9570 = vperm.xlu0 %9569, %v7634
    %v9571 = vpop.permute.xlu0 %9570
    %9573 = vset.pattern.permute.xlu0 60
    %9574 = vperm.xlu0 %9573, %v7637
    %v9575 = vpop.permute.xlu0 %9574
    %9577 = vset.pattern.permute.xlu0 60
    %9578 = vperm.xlu0 %9577, %v7639
    %v9579 = vpop.permute.xlu0 %9578
    %v9581 = vmul.f32 %v9567, %v4794
    %v9582 = vmul.f32 %v9571, %v4795
    %v9583 = vmul.f32 %v9575, %v4796
    %v9584 = vmul.f32 %v9579, %v4797
    %v9585 = vadd.f32 %v9561, %v9581
    %v9586 = vadd.f32 %v9562, %v9582
    %v9587 = vadd.f32 %v9563, %v9583
    %v9588 = vadd.f32 %v9564, %v9584
    %9589 = vset.pattern.permute.xlu0 61
    %9590 = vperm.xlu0 %9589, %v7632
    %v9591 = vpop.permute.xlu0 %9590
    %9593 = vset.pattern.permute.xlu0 61
    %9594 = vperm.xlu0 %9593, %v7634
    %v9595 = vpop.permute.xlu0 %9594
    %9597 = vset.pattern.permute.xlu0 61
    %9598 = vperm.xlu0 %9597, %v7637
    %v9599 = vpop.permute.xlu0 %9598
    %9601 = vset.pattern.permute.xlu0 61
    %9602 = vperm.xlu0 %9601, %v7639
    %v9603 = vpop.permute.xlu0 %9602
    %v9605 = vmul.f32 %v9591, %v4794
    %v9606 = vmul.f32 %v9595, %v4795
    %v9607 = vmul.f32 %v9599, %v4796
    %v9608 = vmul.f32 %v9603, %v4797
    %9613 = vrot.lane.b32.xlu0 %v9605, 64
    %v9614 = vpop.permute.xlu0 %9613
    %9615 = vrot.lane.b32.xlu0 %v9606, 64
    %v9616 = vpop.permute.xlu0 %9615
    %9617 = vrot.lane.b32.xlu0 %v9607, 64
    %v9618 = vpop.permute.xlu0 %9617
    %9619 = vrot.lane.b32.xlu0 %v9608, 64
    %v9620 = vpop.permute.xlu0 %9619
    %v9625 = vadd.f32 %v9585, %v9614
    %v9626 = vadd.f32 %v9586, %v9616
    %v9627 = vadd.f32 %v9587, %v9618
    %v9628 = vadd.f32 %v9588, %v9620
    %9629 = vset.pattern.permute.xlu0 62
    %9630 = vperm.xlu0 %9629, %v7632
    %v9631 = vpop.permute.xlu0 %9630
    %9633 = vset.pattern.permute.xlu0 62
    %9634 = vperm.xlu0 %9633, %v7634
    %v9635 = vpop.permute.xlu0 %9634
    %9637 = vset.pattern.permute.xlu0 62
    %9638 = vperm.xlu0 %9637, %v7637
    %v9639 = vpop.permute.xlu0 %9638
    %9641 = vset.pattern.permute.xlu0 62
    %9642 = vperm.xlu0 %9641, %v7639
    %v9643 = vpop.permute.xlu0 %9642
    %v9645 = vmul.f32 %v9631, %v4862
    %v9646 = vmul.f32 %v9635, %v4863
    %v9647 = vmul.f32 %v9639, %v4864
    %v9648 = vmul.f32 %v9643, %v4865
    %v9649 = vadd.f32 %v9625, %v9645
    %v9650 = vadd.f32 %v9626, %v9646
    %v9651 = vadd.f32 %v9627, %v9647
    %v9652 = vadd.f32 %v9628, %v9648
    %9653 = vset.pattern.permute.xlu0 63
    %9654 = vperm.xlu0 %9653, %v7632
    %v9655 = vpop.permute.xlu0 %9654
    %9657 = vset.pattern.permute.xlu0 63
    %9658 = vperm.xlu0 %9657, %v7634
    %v9659 = vpop.permute.xlu0 %9658
    %9661 = vset.pattern.permute.xlu0 63
    %9662 = vperm.xlu0 %9661, %v7637
    %v9663 = vpop.permute.xlu0 %9662
    %9665 = vset.pattern.permute.xlu0 63
    %9666 = vperm.xlu0 %9665, %v7639
    %v9667 = vpop.permute.xlu0 %9666
    %v9669 = vmul.f32 %v9655, %v4862
    %v9670 = vmul.f32 %v9659, %v4863
    %v9671 = vmul.f32 %v9663, %v4864
    %v9672 = vmul.f32 %v9667, %v4865
    %9677 = vrot.lane.b32.xlu0 %v9669, 64
    %v9678 = vpop.permute.xlu0 %9677
    %9679 = vrot.lane.b32.xlu0 %v9670, 64
    %v9680 = vpop.permute.xlu0 %9679
    %9681 = vrot.lane.b32.xlu0 %v9671, 64
    %v9682 = vpop.permute.xlu0 %9681
    %9683 = vrot.lane.b32.xlu0 %v9672, 64
    %v9684 = vpop.permute.xlu0 %9683
    %v9689 = vadd.f32 %v9649, %v9678
    %v9690 = vadd.f32 %v9650, %v9680
    %v9691 = vadd.f32 %v9651, %v9682
    %v9692 = vadd.f32 %v9652, %v9684
    %v9693 = vpack.c.bf16 %v9690, %v9689
    %v9694 = vpack.c.bf16 %v9692, %v9691
    %9695 = vmatpush.bf16.msra.mxu0 0
    %9696 = vmatpush.bf16.msra.mxu0 0
    %9697 = vmatpush.bf16.msra.mxu0 0
    %9698 = vmatpush.bf16.msra.mxu0 0
    %9699 = vmatpush.bf16.msra.mxu0 0
    %9700 = vmatpush.bf16.msra.mxu0 0
    %9701 = vmatpush.bf16.msra.mxu0 %v9694
    %9702 = vmatpush.bf16.msra.mxu0 %v9693
    %9703 = vmatmul.bf16.gmra.mxu0 %v4933
    %v9704 = vpop.f32.mrf.mxu0
    %v9705 = vadd.f32 0.0, %v9704
    %v9706 = vpop.f32.mrf.mxu0
    %v9707 = vadd.f32 0.0, %v9706
    %9708 = vdwg.mxu0
    %v9709 = vmul.f32 %v254, %v9705
    %v9710 = vmul.f32 %v255, %v9707
    %v9712 = vsel %vm4975, %v7621, 0
    %9714 = vmatpush.bf16.msra.mxu0 0
    %9715 = vmatpush.bf16.msra.mxu0 0
    %9716 = vmatpush.bf16.msra.mxu0 0
    %9717 = vmatpush.bf16.msra.mxu0 0
    %9718 = vmatpush.bf16.msra.mxu0 %v4970
    %9719 = vmatpush.bf16.msra.mxu0 %v4969
    %9720 = vmatpush.bf16.msra.mxu0 %v4968
    %9721 = vmatpush.bf16.msra.mxu0 %v4967
    %9722 = vmatmul.bf16.gmra.mxu0 %v9712
    %v9723 = vpop.f32.mrf.mxu0
    %v9724 = vadd.f32 0.0, %v9723
    %v9725 = vpop.f32.mrf.mxu0
    %v9726 = vadd.f32 0.0, %v9725
    %9727 = vdwg.mxu0
    %v9728 = vadd.f32 %v9709, %v9724
    %v9729 = vadd.f32 %v9710, %v9726
    %v9730 = vadd.f32 %v9728, %v4996
    %v9731 = vadd.f32 %v9729, %v4996
    %v9732 = vmax.f32 %v9730, 0.0
    %v9733 = vmax.f32 %v9731, 0.0
    %v9734 = vpack.c.bf16 %v9733, %v9732
    %v9736 = vsel %vm4975, %v9734, 0
    %9738 = vmatpush.bf16.msra.mxu0 0
    %9739 = vmatpush.bf16.msra.mxu0 0
    %9740 = vmatpush.bf16.msra.mxu0 0
    %9741 = vmatpush.bf16.msra.mxu0 0
    %9742 = vmatpush.bf16.msra.mxu0 %v5059
    %9743 = vmatpush.bf16.msra.mxu0 %v5056
    %9744 = vmatpush.bf16.msra.mxu0 %v5053
    %9745 = vmatpush.bf16.msra.mxu0 %v5050
    %9746 = vmatmul.bf16.gmra.mxu0 %v9736
    %v9747 = vpop.f32.mrf.mxu0
    %v9748 = vadd.f32 %v5004, %v9747
    %v9749 = vpop.f32.mrf.mxu0
    %v9750 = vadd.f32 %v5004, %v9749
    %9751 = vdwg.mxu0
    %9752 = vmatpush.bf16.msra.mxu0 0
    %9753 = vmatpush.bf16.msra.mxu0 0
    %9754 = vmatpush.bf16.msra.mxu0 0
    %9755 = vmatpush.bf16.msra.mxu0 0
    %9756 = vmatpush.bf16.msra.mxu0 %v5060
    %9757 = vmatpush.bf16.msra.mxu0 %v5057
    %9758 = vmatpush.bf16.msra.mxu0 %v5054
    %9759 = vmatpush.bf16.msra.mxu0 %v5051
    %9760 = vmatmul.bf16.gmra.mxu0 %v9736
    %v9761 = vpop.f32.mrf.mxu0
    %v9762 = vadd.f32 %v5005, %v9761
    %v9763 = vpop.f32.mrf.mxu0
    %v9764 = vadd.f32 %v5005, %v9763
    %9765 = vdwg.mxu0
    %9766 = vmatpush.bf16.msra.mxu0 0
    %9767 = vmatpush.bf16.msra.mxu0 0
    %9768 = vmatpush.bf16.msra.mxu0 0
    %9769 = vmatpush.bf16.msra.mxu0 0
    %9770 = vmatpush.bf16.msra.mxu0 %v5061
    %9771 = vmatpush.bf16.msra.mxu0 %v5058
    %9772 = vmatpush.bf16.msra.mxu0 %v5055
    %9773 = vmatpush.bf16.msra.mxu0 %v5052
    %9774 = vmatmul.bf16.gmra.mxu0 %v9736
    %v9775 = vpop.f32.mrf.mxu0
    %v9776 = vadd.f32 %v5006, %v9775
    %v9777 = vpop.f32.mrf.mxu0
    %v9778 = vadd.f32 %v5006, %v9777
    %9779 = vdwg.mxu0
    %9780 = vmatpush.bf16.msra.mxu0 0
    %9781 = vmatpush.bf16.msra.mxu0 0
    %9782 = vmatpush.bf16.msra.mxu0 0
    %9783 = vmatpush.bf16.msra.mxu0 0
    %9784 = vmatpush.bf16.msra.mxu0 %v5175
    %9785 = vmatpush.bf16.msra.mxu0 %v5172
    %9786 = vmatpush.bf16.msra.mxu0 %v5169
    %9787 = vmatpush.bf16.msra.mxu0 %v5166
    %9788 = vmatmul.bf16.gmra.mxu0 %v9712
    %v9789 = vpop.f32.mrf.mxu0
    %v9790 = vadd.f32 %v5120, %v9789
    %v9791 = vpop.f32.mrf.mxu0
    %v9792 = vadd.f32 %v5120, %v9791
    %9793 = vdwg.mxu0
    %9794 = vmatpush.bf16.msra.mxu0 0
    %9795 = vmatpush.bf16.msra.mxu0 0
    %9796 = vmatpush.bf16.msra.mxu0 0
    %9797 = vmatpush.bf16.msra.mxu0 0
    %9798 = vmatpush.bf16.msra.mxu0 %v5176
    %9799 = vmatpush.bf16.msra.mxu0 %v5173
    %9800 = vmatpush.bf16.msra.mxu0 %v5170
    %9801 = vmatpush.bf16.msra.mxu0 %v5167
    %9802 = vmatmul.bf16.gmra.mxu0 %v9712
    %v9803 = vpop.f32.mrf.mxu0
    %v9804 = vadd.f32 %v5121, %v9803
    %v9805 = vpop.f32.mrf.mxu0
    %v9806 = vadd.f32 %v5121, %v9805
    %9807 = vdwg.mxu0
    %9808 = vmatpush.bf16.msra.mxu0 0
    %9809 = vmatpush.bf16.msra.mxu0 0
    %9810 = vmatpush.bf16.msra.mxu0 0
    %9811 = vmatpush.bf16.msra.mxu0 0
    %9812 = vmatpush.bf16.msra.mxu0 %v5177
    %9813 = vmatpush.bf16.msra.mxu0 %v5174
    %9814 = vmatpush.bf16.msra.mxu0 %v5171
    %9815 = vmatpush.bf16.msra.mxu0 %v5168
    %9816 = vmatmul.bf16.gmra.mxu0 %v9712
    %v9817 = vpop.f32.mrf.mxu0
    %v9818 = vadd.f32 %v5122, %v9817
    %v9819 = vpop.f32.mrf.mxu0
    %v9820 = vadd.f32 %v5122, %v9819
    %9821 = vdwg.mxu0
    %v9822 = vadd.f32 %v9748, %v9790
    %v9823 = vadd.f32 %v9750, %v9792
    %v9824 = vxor.u32 %v9822, 2147483648
    %v9825 = vxor.u32 %v9823, 2147483648
    %v9826 = vmul.f32 %v9824, 1.442695
    %v9827 = vpow.pop %v9826
    %v9828 = vmul.f32 %v9825, 1.442695
    %v9829 = vpow.pop %v9828
    %v9830 = vadd.f32 %v9827, 1.0
    %v9831 = vadd.f32 %v9829, 1.0
    %v9832 = vrcp.pop %v9830
    %v9833 = vmul.f32 %v9830, %v9832
    %v9834 = vsub.f32 1.0, %v9833
    %v9835 = vmul.f32 %v9832, %v9834
    %v9836 = vadd.f32 %v9832, %v9835
    %vm9837 = vweird.f32 %v9830
    %vm9838 = vweird.f32 %v9832
    %vm9839 = vmor %vm9837, %vm9838
    %v9840 = vsel %vm9839, %v9832, %v9836
    %v9841 = vand.u32 2147483647, %v9830
    %vm9842 = vcmp.eq.f32.partialorder %v9841, 8.507059e+37
    %v9843 = vand.u32 %v9830, 2147483648
    %v9844 = vor.u32 1.1754944e-38, %v9843
    %v9845 = vsel %vm9842, %v9844, %v9840
    %v9846 = vmul.f32 1.0, %v9845
    %v9847 = vrcp.pop %v9831
    %v9848 = vmul.f32 %v9831, %v9847
    %v9849 = vsub.f32 1.0, %v9848
    %v9850 = vmul.f32 %v9847, %v9849
    %v9851 = vadd.f32 %v9847, %v9850
    %vm9852 = vweird.f32 %v9831
    %vm9853 = vweird.f32 %v9847
    %vm9854 = vmor %vm9852, %vm9853
    %v9855 = vsel %vm9854, %v9847, %v9851
    %v9856 = vand.u32 2147483647, %v9831
    %vm9857 = vcmp.eq.f32.partialorder %v9856, 8.507059e+37
    %v9858 = vand.u32 %v9831, 2147483648
    %v9859 = vor.u32 1.1754944e-38, %v9858
    %v9860 = vsel %vm9857, %v9859, %v9855
    %v9861 = vmul.f32 1.0, %v9860
    %v9862 = vadd.f32 %v9762, %v9804
    %v9863 = vadd.f32 %v9764, %v9806
    %v9864 = vxor.u32 %v9862, 2147483648
    %v9865 = vxor.u32 %v9863, 2147483648
    %v9866 = vmul.f32 %v9864, 1.442695
    %v9867 = vpow.pop %v9866
    %v9868 = vmul.f32 %v9865, 1.442695
    %v9869 = vpow.pop %v9868
    %v9870 = vadd.f32 %v9867, 1.0
    %v9871 = vadd.f32 %v9869, 1.0
    %v9872 = vrcp.pop %v9870
    %v9873 = vmul.f32 %v9870, %v9872
    %v9874 = vsub.f32 1.0, %v9873
    %v9875 = vmul.f32 %v9872, %v9874
    %v9876 = vadd.f32 %v9872, %v9875
    %vm9877 = vweird.f32 %v9870
    %vm9878 = vweird.f32 %v9872
    %vm9879 = vmor %vm9877, %vm9878
    %v9880 = vsel %vm9879, %v9872, %v9876
    %v9881 = vand.u32 2147483647, %v9870
    %vm9882 = vcmp.eq.f32.partialorder %v9881, 8.507059e+37
    %v9883 = vand.u32 %v9870, 2147483648
    %v9884 = vor.u32 1.1754944e-38, %v9883
    %v9885 = vsel %vm9882, %v9884, %v9880
    %v9886 = vmul.f32 1.0, %v9885
    %v9887 = vrcp.pop %v9871
    %v9888 = vmul.f32 %v9871, %v9887
    %v9889 = vsub.f32 1.0, %v9888
    %v9890 = vmul.f32 %v9887, %v9889
    %v9891 = vadd.f32 %v9887, %v9890
    %vm9892 = vweird.f32 %v9871
    %vm9893 = vweird.f32 %v9887
    %vm9894 = vmor %vm9892, %vm9893
    %v9895 = vsel %vm9894, %v9887, %v9891
    %v9896 = vand.u32 2147483647, %v9871
    %vm9897 = vcmp.eq.f32.partialorder %v9896, 8.507059e+37
    %v9898 = vand.u32 %v9871, 2147483648
    %v9899 = vor.u32 1.1754944e-38, %v9898
    %v9900 = vsel %vm9897, %v9899, %v9895
    %v9901 = vmul.f32 1.0, %v9900
    %v9902 = vmul.f32 %v9846, %v9818
    %v9903 = vmul.f32 %v9861, %v9820
    %v9904 = vadd.f32 %v9776, %v9902
    %v9905 = vadd.f32 %v9778, %v9903
    %v9906 = vtanh.pop %v9904
    %v9907 = vtanh.pop %v9905
    %v9908 = vsub.f32 1.0, %v9886
    %v9909 = vsub.f32 1.0, %v9901
    %v9910 = vmul.f32 %v9908, %v9906
    %v9911 = vmul.f32 %v9909, %v9907
    %v9912 = vmul.f32 %v9886, %v7619
    %v9913 = vmul.f32 %v9901, %v7620
    %v9914 = vadd.f32 %v9910, %v9912
    %v9915 = vadd.f32 %v9911, %v9913
    %9916 = vst.msk [vmem:[#allocation17] sm:$0xff] %vm4975, %v9914
    %9917 = vst.msk [vmem:[#allocation17 + $0x8] sm:$0xff] %vm4975, %v9915
    // Predicated region
    $region98: #{tpu_custom_call.1} parent=1 // pred_check
      _
    $region99: #{tpu_custom_call.1} parent=1 // pred_check_branch
      %9919 = sbr.rel (0) target = $region101
    $region100: #{tpu_custom_call.1} parent=1 // pred_region
      %9921 = vsyncadd [#allocation5], 0
      %s9922 = sshll.u32 [#allocation17], 4
      %s9923 = int_to_ptr.vmem [resolvable:$true] %s9922
      %s9924 = sshll.u32 %s16, 4
      %s9925 = int_to_ptr.hbm [resolvable:$true] %s9924
      %9930 = dma.vmem_to_hbm [thread:$0]  %s9923, 256, %s9925, [#allocation5], 128, 128, 8
    $region101: #{tpu_custom_call.1} parent=1 // pred_fallthru
      _
    // Predicated region
    $region102: #{tpu_custom_call.1} parent=1 // pred_check
      _
    $region103: #{tpu_custom_call.1} parent=1 // pred_check_branch
      %9932 = sbr.rel (0) target = $region105
    $region104: #{tpu_custom_call.1} parent=1 // pred_region
      %9934 = dma.done [#allocation5], 256
    $region105: #{tpu_custom_call.1} parent=1 // pred_fallthru
      _
    %9935 = vsyncpa [#allocation4], 1
    %9936 = vsyncpa [#allocation7], 1
    %9937 = vsyncpa [#allocation10], 1
    %9938 = vsyncpa [#allocation13], 1
    %9939 = vsyncpa [#allocation16], 1
    %9940 = vsyncpa [#allocation5], 1

</llo_original>
